<compile_context>
chip_gen: v7x
topology: tpu7x:2x2x1
jax: 0.10.0
libtpu: 0.0.40
codegen_flags: <defaults>
</compile_context>

<pallas_src>
import functools

import jax
import jax.numpy as jnp
from jax.experimental import pallas as pl
from jax.experimental.pallas import tpu as pltpu


def _round_up(x, m):
    return (x + m - 1) // m * m


def _num_tensorcores():
    """Static (build-time) TensorCore count of the local chip (2 on v7x)."""
    try:
        info = pltpu.get_tpu_info()
        for attr in ("num_cores", "num_tensorcores", "tensorcore_count",
                     "core_count", "num_cores_per_chip"):
            n = getattr(info, attr, None)
            if isinstance(n, int) and n > 0:
                return n
    except Exception:
        pass
    try:
        kind = jax.devices()[0].device_kind.lower()
        if "v7" in kind or "7x" in kind:
            return 2
    except Exception:
        pass
    return 1


_NUM_TC = _num_tensorcores()
# Only split the lane (M) axis across cores when the layer has enough FLOPs to
# amortize the duplicated weight/bias DMA + extra grid step.
_SPLIT_MIN_FLOPS = 8_000_000


# ----------------------------------------------------------------------------
# Pallas kernel: o = act(a @ b + bias)    (single dot, bias + ReLU fused)
# a/b may be bf16; accumulation and the bias/ReLU epilogue stay f32.
# ----------------------------------------------------------------------------
def _matmul_bias_act_kernel(a_ref, b_ref, bias_ref, o_ref, *, apply_relu):
    acc = jnp.dot(a_ref[...], b_ref[...], preferred_element_type=jnp.float32)
    acc = acc + bias_ref[...]          # bias broadcasts over rows or lanes
    if apply_relu:
        acc = jnp.maximum(acc, 0.0)
    o_ref[...] = acc.astype(o_ref.dtype)


def linear_relu(x, w, b):
    """x: (B, L), w: (L, N) [compute dtype], b: (1, N) f32 -> relu(x@w+b)."""
    B = x.shape[0]
    N = w.shape[1]
    kernel = functools.partial(_matmul_bias_act_kernel, apply_relu=True)
    # No grid: whole operands live in VMEM; output last dim N = 3136 lane-dense.
    return pl.pallas_call(
        kernel,
        out_shape=jax.ShapeDtypeStruct((B, N), w.dtype),
    )(x.astype(w.dtype), w, b)


def gemm_T_bias_act(w_t, p_t, b, *, apply_relu, out_dtype):
    """Lane-dense transposed GEMM: (Cout,Kc)@(Kc,M) + b[:,None] -> (Cout,M)."""
    Cout, Kc = w_t.shape
    M = p_t.shape[1]
    flops = 2 * Cout * Kc * M
    # Split the lane (M) axis into 2 "parallel" tiles only on 2-TensorCore
    # parts (v7x) and only when the layer is big enough to amortize it.
    n_tiles = 2 if (_NUM_TC >= 2 and M >= 512 and flops >= _SPLIT_MIN_FLOPS) else 1
    M_pad = _round_up(M, 128 * n_tiles)
    if M_pad != M:
        p_t = jnp.pad(p_t, ((0, 0), (0, M_pad - M)))
    tile = M_pad // n_tiles

    kernel = functools.partial(_matmul_bias_act_kernel, apply_relu=apply_relu)
    out = pl.pallas_call(
        kernel,
        out_shape=jax.ShapeDtypeStruct((Cout, M_pad), out_dtype),
        grid=(n_tiles,),
        in_specs=[
            pl.BlockSpec((Cout, Kc), lambda i: (0, 0)),   # weights: resident
            pl.BlockSpec((Kc, tile), lambda i: (0, i)),   # patches: lane-tiled
            pl.BlockSpec((Cout, 1), lambda i: (0, 0)),    # bias: resident
        ],
        out_specs=pl.BlockSpec((Cout, tile), lambda i: (0, i)),
        compiler_params=pltpu.CompilerParams(
            dimension_semantics=("parallel",)),
    )(w_t, p_t, b)
    return out[:, :M]


# ----------------------------------------------------------------------------
# Layer wrappers (XLA glue is data movement only; all FLOPs in Pallas)
# ----------------------------------------------------------------------------
def _im2col_T(x_cbhw, kH, kW):
    """x: (C, B, Hp, Wp) -> patches^T of shape (kH*kW*C, B*Ho*Wo)."""
    C, B, Hp, Wp = x_cbhw.shape
    Ho, Wo = Hp - kH + 1, Wp - kW + 1
    blocks = []
    for i in range(kH):
        for j in range(kW):
            blocks.append(
                x_cbhw[:, :, i:i + Ho, j:j + Wo].reshape(C, B * Ho * Wo))
    return jnp.concatenate(blocks, axis=0)          # row order: (kh, kw, c)


def conv2d_T(x_cbhw, w_t, b, kH, kW, *, apply_relu, out_dtype):
    """VALID stride-1 conv. x: (Cin,B,Hp,Wp); w_t: (Cout, kH*kW*Cin) pre-baked.

    Returns (Cout, B, Ho, Wo)."""
    C, B, Hp, Wp = x_cbhw.shape
    Cout = w_t.shape[0]
    Ho, Wo = Hp - kH + 1, Wp - kW + 1
    p_t = _im2col_T(x_cbhw, kH, kW)                 # (kH*kW*Cin, M)
    y_t = gemm_T_bias_act(w_t, p_t, b, apply_relu=apply_relu,
                          out_dtype=out_dtype)      # (Cout, M)
    return y_t.reshape(Cout, B, Ho, Wo)


def conv_transpose2d_T(x_cbhw, w_t, b, *, kH, kW, stride, apply_relu,
                       out_dtype):
    """PyTorch-semantics ConvTranspose2d (padding=0) on (Cin,B,H,W) input.

    w_t is the pre-flipped, pre-transposed (Cout, kH*kW*Cin) weight."""
    Cin, B, H, W = x_cbhw.shape
    Hu, Wu = (H - 1) * stride + 1, (W - 1) * stride + 1
    Hp, Wp = Hu + 2 * (kH - 1), Wu + 2 * (kW - 1)
    # Fused zero-insertion + full padding: one strided scatter into a single
    # pre-zeroed buffer (no separate upsampled intermediate, no jnp.pad copy).
    x_pad = jnp.zeros((Cin, B, Hp, Wp), x_cbhw.dtype)
    x_pad = x_pad.at[:, :, kH - 1:kH - 1 + Hu:stride,
                     kW - 1:kW - 1 + Wu:stride].set(x_cbhw)
    return conv2d_T(x_pad, w_t, b, kH, kW, apply_relu=apply_relu,
                    out_dtype=out_dtype)


# ----------------------------------------------------------------------------
# Generator forward  (matches the PyTorch module; weights pre-baked)
# ----------------------------------------------------------------------------
def generator_forward(x, prep):
    B = x.shape[0]
    cdt = prep["lin1_w"].dtype                       # inter-layer compute dtype
    h = linear_relu(x, prep["lin1_w"], prep["lin1_b"])           # (B, 3136)
    h = h.reshape(B, 64, 7, 7).transpose(1, 0, 2, 3)             # (64, B, 7, 7)
    h = conv_transpose2d_T(h, prep["ct1_wt"], prep["ct1_b"],
                           kH=4, kW=4, stride=2, apply_relu=True,
                           out_dtype=cdt)                        # (32, B, 16, 16)
    h = conv_transpose2d_T(h, prep["ct2_wt"], prep["ct2_b"],
                           kH=4, kW=4, stride=2, apply_relu=True,
                           out_dtype=cdt)                        # (16, B, 34, 34)
    h = conv2d_T(h, prep["conv_wt"], prep["conv_b"], 7, 7,
                 apply_relu=False, out_dtype=jnp.float32)        # (1, B, 28, 28)
    return h.transpose(1, 0, 2, 3)                               # (B, 1, 28, 28)


# ----------------------------------------------------------------------------
# Parameter preparation: all layout transforms + dtype casts done ONCE here,
# outside the jitted forward (hoisted per perf review).
# ----------------------------------------------------------------------------
def prepare_params(params, compute_dtype=jnp.bfloat16):
    def ct_weight(w_torch):       # (Cin, Cout, kH, kW) -> (Cout, kH*kW*Cin)
        Cin, Cout, kH, kW = w_torch.shape
        w_hwio = jnp.transpose(w_torch[:, :, ::-1, ::-1], (2, 3, 0, 1))
        return w_hwio.reshape(kH * kW * Cin, Cout).T.astype(compute_dtype)

    def conv_weight(w_torch):     # (Cout, Cin, kH, kW) -> (Cout, kH*kW*Cin)
        Cout, Cin, kH, kW = w_torch.shape
        w_hwio = jnp.transpose(w_torch, (2, 3, 1, 0))
        return w_hwio.reshape(kH * kW * Cin, Cout).T.astype(compute_dtype)

    return {
        "lin1_w": params["lin1_w"].astype(compute_dtype),
        "lin1_b": params["lin1_b"].reshape(1, -1).astype(jnp.float32),
        "ct1_wt": ct_weight(params["ct1_w"]),
        "ct1_b": params["ct1_b"].reshape(-1, 1).astype(jnp.float32),
        "ct2_wt": ct_weight(params["ct2_w"]),
        "ct2_b": params["ct2_b"].reshape(-1, 1).astype(jnp.float32),
        "conv_wt": conv_weight(params["conv_w"]),
        "conv_b": params["conv_b"].reshape(-1, 1).astype(jnp.float32),
    }


# ----------------------------------------------------------------------------
# Pure-JAX (XLA conv, f32) reference for numerical cross-check
# ----------------------------------------------------------------------------
def reference_forward(x, params):
    h = jnp.maximum(x @ params["lin1_w"] + params["lin1_b"], 0.0)
    h = h.reshape(-1, 64, 7, 7)

    def conv_t(x_nchw, w_t, b, stride, k):
        w = jnp.transpose(w_t, (1, 0, 2, 3))[:, :, ::-1, ::-1]      # OIHW, flipped
        y = jax.lax.conv_general_dilated(
            x_nchw, w, window_strides=(1, 1),
            padding=[(k - 1, k - 1), (k - 1, k - 1)],
            lhs_dilation=(stride, stride),
            dimension_numbers=("NCHW", "OIHW", "NCHW"))
        return y + b[None, :, None, None]

    h = jnp.maximum(conv_t(h, params["ct1_w"], params["ct1_b"], 2, 4), 0.0)
    h = jnp.maximum(conv_t(h, params["ct2_w"], params["ct2_b"], 2, 4), 0.0)
    h = jax.lax.conv_general_dilated(
        h, params["conv_w"], (1, 1), "VALID",
        dimension_numbers=("NCHW", "OIHW", "NCHW"))
    return h + params["conv_b"][None, :, None, None]


# ----------------------------------------------------------------------------
# Deterministic parameter initialization (shapes from Generator.__init__)
# ----------------------------------------------------------------------------
def init_params(key, latent_dim):
    ks = jax.random.split(key, 8)
    s = 0.05
    return {
        # nn.Linear(latent_dim, 7*7*64): stored already transposed (L, 3136)
        "lin1_w": s * jax.random.normal(ks[0], (latent_dim, 7 * 7 * 64), jnp.float32),
        "lin1_b": s * jax.random.normal(ks[1], (7 * 7 * 64,), jnp.float32),
        # nn.ConvTranspose2d(64, 32, 4, stride=2): weight (Cin, Cout, kH, kW)
        "ct1_w": s * jax.random.normal(ks[2], (64, 32, 4, 4), jnp.float32),
        "ct1_b": s * jax.random.normal(ks[3], (32,), jnp.float32),
        # nn.ConvTranspose2d(32, 16, 4, stride=2)
        "ct2_w": s * jax.random.normal(ks[4], (32, 16, 4, 4), jnp.float32),
        "ct2_b": s * jax.random.normal(ks[5], (16,), jnp.float32),
        # nn.Conv2d(16, 1, kernel_size=7): weight (Cout, Cin, kH, kW)
        "conv_w": s * jax.random.normal(ks[6], (1, 16, 7, 7), jnp.float32),
        "conv_b": s * jax.random.normal(ks[7], (1,), jnp.float32),
    }


if __name__ == "__main__":
    latent_dim = 32
    batch = 2
    key = jax.random.PRNGKey(0)
    k_param, k_x = jax.random.split(key)
    params = init_params(k_param, latent_dim)
    x = jax.random.normal(k_x, (batch, latent_dim), jnp.float32)

    fwd = jax.jit(generator_forward)
    ref = jax.block_until_ready(reference_forward(x, params))

    # 1) f32 Pallas path: validates kernel structure / layout plumbing tightly.
    prep_f32 = prepare_params(params, compute_dtype=jnp.float32)
    out_f32 = jax.block_until_ready(fwd(x, prep_f32))
    assert out_f32.shape == (batch, 1, 28, 28), out_f32.shape
    assert jnp.allclose(out_f32, ref, atol=2e-3, rtol=2e-3), \
        float(jnp.max(jnp.abs(out_f32 - ref)))

    # 2) bf16-operand fast path (default): f32 accumulation + f32 epilogue;
    #    tolerance sized for bf16 input/activation rounding across 4 layers.
    prep_bf16 = prepare_params(params, compute_dtype=jnp.bfloat16)
    out = jax.block_until_ready(fwd(x, prep_bf16))
    assert out.shape == (batch, 1, 28, 28), out.shape
    assert jnp.allclose(out, ref, atol=3e-2, rtol=3e-2), \
        float(jnp.max(jnp.abs(out - ref)))

    print("KERNEL_OK")
</pallas_src>

<mosaic_0001>
module attributes {stable_mosaic.version = 11 : i64} {
  func.func @_matmul_bias_act_kernel(%arg0: memref<2x32xf32, #tpu.memory_space<vmem>>, %arg1: memref<32x3136xf32, #tpu.memory_space<vmem>>, %arg2: memref<1x3136xf32, #tpu.memory_space<vmem>>, %arg3: memref<2x3136xf32, #tpu.memory_space<vmem>>) attributes {dimension_semantics = [], scalar_prefetch = 0 : i64, scratch_operands = 0 : i64, tpu.core_type = #tpu.core_type<tc>} {
    %c0 = arith.constant 0 : index
    %c0_0 = arith.constant 0 : index
    %0 = vector.load %arg0[%c0, %c0_0] : memref<2x32xf32, #tpu.memory_space<vmem>>, vector<2x32xf32>
    %c0_1 = arith.constant 0 : index
    %c0_2 = arith.constant 0 : index
    %1 = vector.load %arg1[%c0_1, %c0_2] : memref<32x3136xf32, #tpu.memory_space<vmem>>, vector<32x3136xf32>
    %cst = arith.constant dense<0.000000e+00> : vector<2x3136xf32>
    %2 = tpu.matmul %0, %1, %cst {dimension_numbers = #tpu.dot_dimension_numbers<[1], [0], [0], [1], [0, 0, 1, 1], [], []>} : vector<2x32xf32>, vector<32x3136xf32>, vector<2x3136xf32> -> vector<2x3136xf32>
    %c0_3 = arith.constant 0 : index
    %c0_4 = arith.constant 0 : index
    %3 = vector.load %arg2[%c0_3, %c0_4] : memref<1x3136xf32, #tpu.memory_space<vmem>>, vector<1x3136xf32>
    %4 = vector.broadcast %3 : vector<1x3136xf32> to vector<2x3136xf32>
    %5 = arith.addf %2, %4 : vector<2x3136xf32>
    %cst_5 = arith.constant 0.000000e+00 : f32
    %6 = vector.broadcast %cst_5 : f32 to vector<2x3136xf32>
    %7 = arith.maximumf %5, %6 : vector<2x3136xf32>
    %c0_6 = arith.constant 0 : index
    %c0_7 = arith.constant 0 : index
    %8 = vector.load %arg3[%c0_6, %c0_7] : memref<2x3136xf32, #tpu.memory_space<vmem>>, vector<2x3136xf32>
    tpu.vector_store %arg3[%c0_6, %c0_7], %7 {strides = array<i32>} : memref<2x3136xf32, #tpu.memory_space<vmem>>, vector<2x3136xf32>,
    return
  }
}

module attributes {stable_mosaic.version = 11 : i64} {
  func.func @_matmul_bias_act_kernel(%arg0: i32, %arg1: memref<32x1024xf32, #tpu.memory_space<vmem>>, %arg2: memref<1024x512xf32, #tpu.memory_space<vmem>>, %arg3: memref<32x1xf32, #tpu.memory_space<vmem>>, %arg4: memref<32x512xf32, #tpu.memory_space<vmem>>) attributes {dimension_semantics = [#tpu.dimension_semantics<parallel>], iteration_bounds = array<i64: 1>, scalar_prefetch = 0 : i64, scratch_operands = 0 : i64, tpu.core_type = #tpu.core_type<tc>, window_params = [{pipeline_mode = #tpu.pipeline_mode<synchronous>, transform_indices = @transform_0, window_bounds = array<i64: 32, 1024>}, {transform_indices = @transform_1, window_bounds = array<i64: 1024, 512>}, {pipeline_mode = #tpu.pipeline_mode<synchronous>, transform_indices = @transform_2, window_bounds = array<i64: 32, 1>}, {transform_indices = @transform_3, window_bounds = array<i64: 32, 512>}]} {
    %c0 = arith.constant 0 : index
    %c0_0 = arith.constant 0 : index
    %0 = vector.load %arg1[%c0, %c0_0] : memref<32x1024xf32, #tpu.memory_space<vmem>>, vector<32x1024xf32>
    %c0_1 = arith.constant 0 : index
    %c0_2 = arith.constant 0 : index
    %1 = vector.load %arg2[%c0_1, %c0_2] : memref<1024x512xf32, #tpu.memory_space<vmem>>, vector<1024x512xf32>
    %cst = arith.constant dense<0.000000e+00> : vector<32x512xf32>
    %2 = tpu.matmul %0, %1, %cst {dimension_numbers = #tpu.dot_dimension_numbers<[1], [0], [0], [1], [0, 0, 1, 1], [], []>} : vector<32x1024xf32>, vector<1024x512xf32>, vector<32x512xf32> -> vector<32x512xf32>
    %c0_3 = arith.constant 0 : index
    %c0_4 = arith.constant 0 : index
    %3 = vector.load %arg3[%c0_3, %c0_4] : memref<32x1xf32, #tpu.memory_space<vmem>>, vector<32x1xf32>
    %4 = vector.broadcast %3 : vector<32x1xf32> to vector<32x512xf32>
    %5 = arith.addf %2, %4 : vector<32x512xf32>
    %cst_5 = arith.constant 0.000000e+00 : f32
    %6 = vector.broadcast %cst_5 : f32 to vector<32x512xf32>
    %7 = arith.maximumf %5, %6 : vector<32x512xf32>
    %c0_6 = arith.constant 0 : index
    %c0_7 = arith.constant 0 : index
    %8 = vector.load %arg4[%c0_6, %c0_7] : memref<32x512xf32, #tpu.memory_space<vmem>>, vector<32x512xf32>
    tpu.vector_store %arg4[%c0_6, %c0_7], %7 {strides = array<i32>} : memref<32x512xf32, #tpu.memory_space<vmem>>, vector<32x512xf32>,
    return
  }
  func.func @transform_0(%arg0: i32) -> (i32, i32) {
    %c0_i32 = arith.constant 0 : i32
    %c0_i32_0 = arith.constant 0 : i32
    %c0_i32_1 = arith.constant 0 : i32
    return %c0_i32, %c0_i32_0 : i32, i32
  }
  func.func @transform_1(%arg0: i32) -> (i32, i32) {
    %c0_i32 = arith.constant 0 : i32
    %c0_i32_0 = arith.constant 0 : i32
    return %c0_i32, %arg0 : i32, i32
  }
  func.func @transform_2(%arg0: i32) -> (i32, i32) {
    %c0_i32 = arith.constant 0 : i32
    %c0_i32_0 = arith.constant 0 : i32
    %c0_i32_1 = arith.constant 0 : i32
    return %c0_i32, %c0_i32_0 : i32, i32
  }
  func.func @transform_3(%arg0: i32) -> (i32, i32) {
    %c0_i32 = arith.constant 0 : i32
    %c0_i32_0 = arith.constant 0 : i32
    return %c0_i32, %arg0 : i32, i32
  }
}

module attributes {stable_mosaic.version = 11 : i64} {
  func.func @_matmul_bias_act_kernel(%arg0: i32, %arg1: memref<16x512xf32, #tpu.memory_space<vmem>>, %arg2: memref<512x2432xf32, #tpu.memory_space<vmem>>, %arg3: memref<16x1xf32, #tpu.memory_space<vmem>>, %arg4: memref<16x2432xf32, #tpu.memory_space<vmem>>) attributes {dimension_semantics = [#tpu.dimension_semantics<parallel>], iteration_bounds = array<i64: 1>, scalar_prefetch = 0 : i64, scratch_operands = 0 : i64, tpu.core_type = #tpu.core_type<tc>, window_params = [{pipeline_mode = #tpu.pipeline_mode<synchronous>, transform_indices = @transform_0, window_bounds = array<i64: 16, 512>}, {transform_indices = @transform_1, window_bounds = array<i64: 512, 2432>}, {pipeline_mode = #tpu.pipeline_mode<synchronous>, transform_indices = @transform_2, window_bounds = array<i64: 16, 1>}, {transform_indices = @transform_3, window_bounds = array<i64: 16, 2432>}]} {
    %c0 = arith.constant 0 : index
    %c0_0 = arith.constant 0 : index
    %0 = vector.load %arg1[%c0, %c0_0] : memref<16x512xf32, #tpu.memory_space<vmem>>, vector<16x512xf32>
    %c0_1 = arith.constant 0 : index
    %c0_2 = arith.constant 0 : index
    %1 = vector.load %arg2[%c0_1, %c0_2] : memref<512x2432xf32, #tpu.memory_space<vmem>>, vector<512x2432xf32>
    %cst = arith.constant dense<0.000000e+00> : vector<16x2432xf32>
    %2 = tpu.matmul %0, %1, %cst {dimension_numbers = #tpu.dot_dimension_numbers<[1], [0], [0], [1], [0, 0, 1, 1], [], []>} : vector<16x512xf32>, vector<512x2432xf32>, vector<16x2432xf32> -> vector<16x2432xf32>
    %c0_3 = arith.constant 0 : index
    %c0_4 = arith.constant 0 : index
    %3 = vector.load %arg3[%c0_3, %c0_4] : memref<16x1xf32, #tpu.memory_space<vmem>>, vector<16x1xf32>
    %4 = vector.broadcast %3 : vector<16x1xf32> to vector<16x2432xf32>
    %5 = arith.addf %2, %4 : vector<16x2432xf32>
    %cst_5 = arith.constant 0.000000e+00 : f32
    %6 = vector.broadcast %cst_5 : f32 to vector<16x2432xf32>
    %7 = arith.maximumf %5, %6 : vector<16x2432xf32>
    %c0_6 = arith.constant 0 : index
    %c0_7 = arith.constant 0 : index
    %8 = vector.load %arg4[%c0_6, %c0_7] : memref<16x2432xf32, #tpu.memory_space<vmem>>, vector<16x2432xf32>
    tpu.vector_store %arg4[%c0_6, %c0_7], %7 {strides = array<i32>} : memref<16x2432xf32, #tpu.memory_space<vmem>>, vector<16x2432xf32>,
    return
  }
  func.func @transform_0(%arg0: i32) -> (i32, i32) {
    %c0_i32 = arith.constant 0 : i32
    %c0_i32_0 = arith.constant 0 : i32
    %c0_i32_1 = arith.constant 0 : i32
    return %c0_i32, %c0_i32_0 : i32, i32
  }
  func.func @transform_1(%arg0: i32) -> (i32, i32) {
    %c0_i32 = arith.constant 0 : i32
    %c0_i32_0 = arith.constant 0 : i32
    return %c0_i32, %arg0 : i32, i32
  }
  func.func @transform_2(%arg0: i32) -> (i32, i32) {
    %c0_i32 = arith.constant 0 : i32
    %c0_i32_0 = arith.constant 0 : i32
    %c0_i32_1 = arith.constant 0 : i32
    return %c0_i32, %c0_i32_0 : i32, i32
  }
  func.func @transform_3(%arg0: i32) -> (i32, i32) {
    %c0_i32 = arith.constant 0 : i32
    %c0_i32_0 = arith.constant 0 : i32
    return %c0_i32, %arg0 : i32, i32
  }
}

module attributes {stable_mosaic.version = 11 : i64} {
  func.func @_matmul_bias_act_kernel(%arg0: i32, %arg1: memref<1x784xf32, #tpu.memory_space<vmem>>, %arg2: memref<784x1664xf32, #tpu.memory_space<vmem>>, %arg3: memref<1x1xf32, #tpu.memory_space<vmem>>, %arg4: memref<1x1664xf32, #tpu.memory_space<vmem>>) attributes {dimension_semantics = [#tpu.dimension_semantics<parallel>], iteration_bounds = array<i64: 1>, scalar_prefetch = 0 : i64, scratch_operands = 0 : i64, tpu.core_type = #tpu.core_type<tc>, window_params = [{pipeline_mode = #tpu.pipeline_mode<synchronous>, transform_indices = @transform_0, window_bounds = array<i64: 1, 784>}, {transform_indices = @transform_1, window_bounds = array<i64: 784, 1664>}, {pipeline_mode = #tpu.pipeline_mode<synchronous>, transform_indices = @transform_2, window_bounds = array<i64: 1, 1>}, {transform_indices = @transform_3, window_bounds = array<i64: 1, 1664>}]} {
    %c0 = arith.constant 0 : index
    %c0_0 = arith.constant 0 : index
    %0 = vector.load %arg1[%c0, %c0_0] : memref<1x784xf32, #tpu.memory_space<vmem>>, vector<1x784xf32>
    %c0_1 = arith.constant 0 : index
    %c0_2 = arith.constant 0 : index
    %1 = vector.load %arg2[%c0_1, %c0_2] : memref<784x1664xf32, #tpu.memory_space<vmem>>, vector<784x1664xf32>
    %cst = arith.constant dense<0.000000e+00> : vector<1x1664xf32>
    %2 = tpu.matmul %0, %1, %cst {dimension_numbers = #tpu.dot_dimension_numbers<[1], [0], [0], [1], [0, 0, 1, 1], [], []>} : vector<1x784xf32>, vector<784x1664xf32>, vector<1x1664xf32> -> vector<1x1664xf32>
    %c0_3 = arith.constant 0 : index
    %c0_4 = arith.constant 0 : index
    %3 = vector.load %arg3[%c0_3, %c0_4] : memref<1x1xf32, #tpu.memory_space<vmem>>, vector<1x1xf32>
    %4 = vector.broadcast %3 : vector<1x1xf32> to vector<1x1664xf32>
    %5 = arith.addf %2, %4 : vector<1x1664xf32>
    %c0_5 = arith.constant 0 : index
    %c0_6 = arith.constant 0 : index
    %6 = vector.load %arg4[%c0_5, %c0_6] : memref<1x1664xf32, #tpu.memory_space<vmem>>, vector<1x1664xf32>
    tpu.vector_store %arg4[%c0_5, %c0_6], %5 {strides = array<i32>} : memref<1x1664xf32, #tpu.memory_space<vmem>>, vector<1x1664xf32>,
    return
  }
  func.func @transform_0(%arg0: i32) -> (i32, i32) {
    %c0_i32 = arith.constant 0 : i32
    %c0_i32_0 = arith.constant 0 : i32
    %c0_i32_1 = arith.constant 0 : i32
    return %c0_i32, %c0_i32_0 : i32, i32
  }
  func.func @transform_1(%arg0: i32) -> (i32, i32) {
    %c0_i32 = arith.constant 0 : i32
    %c0_i32_0 = arith.constant 0 : i32
    return %c0_i32, %arg0 : i32, i32
  }
  func.func @transform_2(%arg0: i32) -> (i32, i32) {
    %c0_i32 = arith.constant 0 : i32
    %c0_i32_0 = arith.constant 0 : i32
    %c0_i32_1 = arith.constant 0 : i32
    return %c0_i32, %c0_i32_0 : i32, i32
  }
  func.func @transform_3(%arg0: i32) -> (i32, i32) {
    %c0_i32 = arith.constant 0 : i32
    %c0_i32_0 = arith.constant 0 : i32
    return %c0_i32, %arg0 : i32, i32
  }
}

</mosaic_0001>

<llo_original>
// kernel: generator_forward.4
$region0: #{generator_forward.4}
  #allocation0 [shape = 'u32[]', space=smem, size = 0x4, offset = 0x4, fixed_abs, tag = 'smem constant byte address 0x4 - core index']
  #allocation1 [shape = 'u32[144,128]{1,0:T(1,128)}', space=vmem, size = 0x12000, scoped, tag = 'internal scratch']
  %s0 = inlined_call_operand.hbm [shape: f32[2,32], index: 0, kind: input, shape index: {}]
  %s1 = inlined_call_operand.hbm [shape: f32[32,3136], index: 1, kind: input, shape index: {}]
  %s2 = inlined_call_operand.hbm [shape: f32[1,3136], index: 2, kind: input, shape index: {}]
  %s3 = inlined_call_operand.vmem [shape: f32[2,3136], index: 3, kind: output, shape index: {}]
  %s4 = sld [smem:[#allocation0]]
  $region34: #{generator_forward.4} parent=0
    _
  %s6 = ssub.s32 1, %s4
  %s7 = scalar_select 0, %s6, %s4
  $region1: #{generator_forward.4} parent=0
    #allocation2 [shape = 'u8[1024]{0}', space=vmem, size = 0x400, scoped, tag = 'input window, operand 0, single buffered']
    #allocation3 [shape = 's32[1]{0}', space=sflag, size = 0x4, scoped, tag = 'scoped memory for generator_forward.4']
    #allocation4 [shape = 'u8[409600]{0}', space=vmem, size = 0x64000, scoped, tag = 'input window, operand 1, single buffered']
    #allocation5 [shape = 's32[1]{0}', space=sflag, size = 0x4, scoped, tag = 'scoped memory for generator_forward.4']
    #allocation6 [shape = 'u8[12800]{0}', space=vmem, size = 0x3400, scoped, tag = 'input window, operand 2, single buffered']
    %8 = vsyncpa [#allocation3], 0
    %9 = vsyncpa [#allocation5], 0
    // Predicated region
    $region2: #{generator_forward.4} parent=1 // pred_check
      _
    $region3: #{generator_forward.4} parent=1 // pred_check_branch
      %11 = sbr.rel (0) target = $region5
    $region4: #{generator_forward.4} parent=1 // pred_region
      %s13 = ssub.s32 32, 32
      %14 = vsyncadd [#allocation3], %s13
      %s16 = sshll.u32 [#allocation2], 4
      %s17 = int_to_ptr.vmem [resolvable:$true] %s16
      %19 = dma.hbm_to_vmem [thread:$0]  %s0, 32, %s17, [#allocation3]
    $region5: #{generator_forward.4} parent=1 // pred_fallthru
      _
    // Predicated region
    $region6: #{generator_forward.4} parent=1 // pred_check
      _
    $region7: #{generator_forward.4} parent=1 // pred_check_branch
      %21 = sbr.rel (0) target = $region9
    $region8: #{generator_forward.4} parent=1 // pred_region
      %s23 = ssub.s32 12800, 12800
      %24 = vsyncadd [#allocation5], %s23
      %s25 = sshll.u32 [#allocation4], 4
      %s26 = int_to_ptr.vmem [resolvable:$true] %s25
      %31 = dma.hbm_to_vmem [thread:$0]  %s1, 12800, %s26, [#allocation5], 3200, 3200, 200
    $region9: #{generator_forward.4} parent=1 // pred_fallthru
      _
    // Predicated region
    $region10: #{generator_forward.4} parent=1 // pred_check
      _
    $region11: #{generator_forward.4} parent=1 // pred_check_branch
      %33 = sbr.rel (0) target = $region13
    $region12: #{generator_forward.4} parent=1 // pred_region
      %s35 = ssub.s32 400, 400
      %36 = vsyncadd [#allocation5], %s35
      %s38 = sshll.u32 [#allocation6], 4
      %s39 = int_to_ptr.vmem [resolvable:$true] %s38
      %41 = dma.hbm_to_vmem [thread:$0]  %s2, 400, %s39, [#allocation5]
    $region13: #{generator_forward.4} parent=1 // pred_fallthru
      _
    // Predicated region
    $region14: #{generator_forward.4} parent=1 // pred_check
      _
    $region15: #{generator_forward.4} parent=1 // pred_check_branch
      %43 = sbr.rel (0) target = $region17
    $region16: #{generator_forward.4} parent=1 // pred_region
      %44 = dma.done [#allocation3], 32
    $region17: #{generator_forward.4} parent=1 // pred_fallthru
      _
    // Predicated region
    $region18: #{generator_forward.4} parent=1 // pred_check
      _
    $region19: #{generator_forward.4} parent=1 // pred_check_branch
      %46 = sbr.rel (0) target = $region21
    $region20: #{generator_forward.4} parent=1 // pred_region
      %47 = dma.done [#allocation5], 12800
    $region21: #{generator_forward.4} parent=1 // pred_fallthru
      _
    // Predicated region
    $region22: #{generator_forward.4} parent=1 // pred_check
      _
    $region23: #{generator_forward.4} parent=1 // pred_check_branch
      %49 = sbr.rel (0) target = $region25
    $region24: #{generator_forward.4} parent=1 // pred_region
      %50 = dma.done [#allocation5], 400
    $region25: #{generator_forward.4} parent=1 // pred_fallthru
      _
    %v51 = vld [vmem:[#allocation2] sm:$0x3]
    %v52 = vld [vmem:[#allocation4] sm:$0xff]
    %v53 = vld [vmem:[#allocation4 + $0x8] sm:$0xff]
    %v54 = vld [vmem:[#allocation4 + $0x10] sm:$0xff]
    %v55 = vld [vmem:[#allocation4 + $0x18] sm:$0xff]
    %v56 = vld [vmem:[#allocation4 + $0x20] sm:$0xff]
    %v57 = vld [vmem:[#allocation4 + $0x28] sm:$0xff]
    %v58 = vld [vmem:[#allocation4 + $0x30] sm:$0xff]
    %v59 = vld [vmem:[#allocation4 + $0x38] sm:$0xff]
    %v60 = vld [vmem:[#allocation4 + $0x40] sm:$0xff]
    %v61 = vld [vmem:[#allocation4 + $0x48] sm:$0xff]
    %v62 = vld [vmem:[#allocation4 + $0x50] sm:$0xff]
    %v63 = vld [vmem:[#allocation4 + $0x58] sm:$0xff]
    %v64 = vld [vmem:[#allocation4 + $0x60] sm:$0xff]
    %v65 = vld [vmem:[#allocation4 + $0x68] sm:$0xff]
    %v66 = vld [vmem:[#allocation4 + $0x70] sm:$0xff]
    %v67 = vld [vmem:[#allocation4 + $0x78] sm:$0xff]
    %v68 = vld [vmem:[#allocation4 + $0x80] sm:$0xff]
    %v69 = vld [vmem:[#allocation4 + $0x88] sm:$0xff]
    %v70 = vld [vmem:[#allocation4 + $0x90] sm:$0xff]
    %v71 = vld [vmem:[#allocation4 + $0x98] sm:$0xff]
    %v72 = vld [vmem:[#allocation4 + $0xa0] sm:$0xff]
    %v73 = vld [vmem:[#allocation4 + $0xa8] sm:$0xff]
    %v74 = vld [vmem:[#allocation4 + $0xb0] sm:$0xff]
    %v75 = vld [vmem:[#allocation4 + $0xb8] sm:$0xff]
    %v76 = vld [vmem:[#allocation4 + $0xc0] sm:$0xff]
    %v77 = vld [vmem:[#allocation4 + $0xc8] sm:$0xff]
    %v78 = vld [vmem:[#allocation4 + $0xd0] sm:$0xff]
    %v79 = vld [vmem:[#allocation4 + $0xd8] sm:$0xff]
    %v80 = vld [vmem:[#allocation4 + $0xe0] sm:$0xff]
    %v81 = vld [vmem:[#allocation4 + $0xe8] sm:$0xff]
    %v82 = vld [vmem:[#allocation4 + $0xf0] sm:$0xff]
    %v83 = vld [vmem:[#allocation4 + $0xf8] sm:$0xff]
    %v84 = vld [vmem:[#allocation4 + $0x100] sm:$0xff]
    %v85 = vld [vmem:[#allocation4 + $0x108] sm:$0xff]
    %v86 = vld [vmem:[#allocation4 + $0x110] sm:$0xff]
    %v87 = vld [vmem:[#allocation4 + $0x118] sm:$0xff]
    %v88 = vld [vmem:[#allocation4 + $0x120] sm:$0xff]
    %v89 = vld [vmem:[#allocation4 + $0x128] sm:$0xff]
    %v90 = vld [vmem:[#allocation4 + $0x130] sm:$0xff]
    %v91 = vld [vmem:[#allocation4 + $0x138] sm:$0xff]
    %v92 = vld [vmem:[#allocation4 + $0x140] sm:$0xff]
    %v93 = vld [vmem:[#allocation4 + $0x148] sm:$0xff]
    %v94 = vld [vmem:[#allocation4 + $0x150] sm:$0xff]
    %v95 = vld [vmem:[#allocation4 + $0x158] sm:$0xff]
    %v96 = vld [vmem:[#allocation4 + $0x160] sm:$0xff]
    %v97 = vld [vmem:[#allocation4 + $0x168] sm:$0xff]
    %v98 = vld [vmem:[#allocation4 + $0x170] sm:$0xff]
    %v99 = vld [vmem:[#allocation4 + $0x178] sm:$0xff]
    %v100 = vld [vmem:[#allocation4 + $0x180] sm:$0xff]
    %v101 = vld [vmem:[#allocation4 + $0x188] sm:$0xff]
    %v102 = vld [vmem:[#allocation4 + $0x190] sm:$0xff]
    %v103 = vld [vmem:[#allocation4 + $0x198] sm:$0xff]
    %v104 = vld [vmem:[#allocation4 + $0x1a0] sm:$0xff]
    %v105 = vld [vmem:[#allocation4 + $0x1a8] sm:$0xff]
    %v106 = vld [vmem:[#allocation4 + $0x1b0] sm:$0xff]
    %v107 = vld [vmem:[#allocation4 + $0x1b8] sm:$0xff]
    %v108 = vld [vmem:[#allocation4 + $0x1c0] sm:$0xff]
    %v109 = vld [vmem:[#allocation4 + $0x1c8] sm:$0xff]
    %v110 = vld [vmem:[#allocation4 + $0x1d0] sm:$0xff]
    %v111 = vld [vmem:[#allocation4 + $0x1d8] sm:$0xff]
    %v112 = vld [vmem:[#allocation4 + $0x1e0] sm:$0xff]
    %v113 = vld [vmem:[#allocation4 + $0x1e8] sm:$0xff]
    %v114 = vld [vmem:[#allocation4 + $0x1f0] sm:$0xff]
    %v115 = vld [vmem:[#allocation4 + $0x1f8] sm:$0xff]
    %v116 = vld [vmem:[#allocation4 + $0x200] sm:$0xff]
    %v117 = vld [vmem:[#allocation4 + $0x208] sm:$0xff]
    %v118 = vld [vmem:[#allocation4 + $0x210] sm:$0xff]
    %v119 = vld [vmem:[#allocation4 + $0x218] sm:$0xff]
    %v120 = vld [vmem:[#allocation4 + $0x220] sm:$0xff]
    %v121 = vld [vmem:[#allocation4 + $0x228] sm:$0xff]
    %v122 = vld [vmem:[#allocation4 + $0x230] sm:$0xff]
    %v123 = vld [vmem:[#allocation4 + $0x238] sm:$0xff]
    %v124 = vld [vmem:[#allocation4 + $0x240] sm:$0xff]
    %v125 = vld [vmem:[#allocation4 + $0x248] sm:$0xff]
    %v126 = vld [vmem:[#allocation4 + $0x250] sm:$0xff]
    %v127 = vld [vmem:[#allocation4 + $0x258] sm:$0xff]
    %v128 = vld [vmem:[#allocation4 + $0x260] sm:$0xff]
    %v129 = vld [vmem:[#allocation4 + $0x268] sm:$0xff]
    %v130 = vld [vmem:[#allocation4 + $0x270] sm:$0xff]
    %v131 = vld [vmem:[#allocation4 + $0x278] sm:$0xff]
    %v132 = vld [vmem:[#allocation4 + $0x280] sm:$0xff]
    %v133 = vld [vmem:[#allocation4 + $0x288] sm:$0xff]
    %v134 = vld [vmem:[#allocation4 + $0x290] sm:$0xff]
    %v135 = vld [vmem:[#allocation4 + $0x298] sm:$0xff]
    %v136 = vld [vmem:[#allocation4 + $0x2a0] sm:$0xff]
    %v137 = vld [vmem:[#allocation4 + $0x2a8] sm:$0xff]
    %v138 = vld [vmem:[#allocation4 + $0x2b0] sm:$0xff]
    %v139 = vld [vmem:[#allocation4 + $0x2b8] sm:$0xff]
    %v140 = vld [vmem:[#allocation4 + $0x2c0] sm:$0xff]
    %v141 = vld [vmem:[#allocation4 + $0x2c8] sm:$0xff]
    %v142 = vld [vmem:[#allocation4 + $0x2d0] sm:$0xff]
    %v143 = vld [vmem:[#allocation4 + $0x2d8] sm:$0xff]
    %v144 = vld [vmem:[#allocation4 + $0x2e0] sm:$0xff]
    %v145 = vld [vmem:[#allocation4 + $0x2e8] sm:$0xff]
    %v146 = vld [vmem:[#allocation4 + $0x2f0] sm:$0xff]
    %v147 = vld [vmem:[#allocation4 + $0x2f8] sm:$0xff]
    %v148 = vld [vmem:[#allocation4 + $0x300] sm:$0xff]
    %v149 = vld [vmem:[#allocation4 + $0x308] sm:$0xff]
    %v150 = vld [vmem:[#allocation4 + $0x310] sm:$0xff]
    %v151 = vld [vmem:[#allocation4 + $0x318] sm:$0xff]
    %v152 = vld [vmem:[#allocation6] sm:$0xff]
    %v153 = vld [vmem:[#allocation6 + $0x8] sm:$0xff]
    %v154 = vld [vmem:[#allocation6 + $0x10] sm:$0xff]
    %v155 = vld [vmem:[#allocation6 + $0x18] sm:$0x1]
    %v160 = vlaneseq
    %v161 = vshrl.u32 %v160, 7
    %v162 = vsub.s32 0, %v161
    %v163 = vrot.slane %v152, %v162
    %v164 = vlaneseq
    %v165 = vshrl.u32 %v164, 7
    %v166 = vsub.s32 1, %v165
    %v167 = vrot.slane %v152, %v166
    %v168 = vlaneseq
    %v169 = vshrl.u32 %v168, 7
    %v170 = vsub.s32 2, %v169
    %v171 = vrot.slane %v152, %v170
    %v172 = vlaneseq
    %v173 = vshrl.u32 %v172, 7
    %v174 = vsub.s32 3, %v173
    %v175 = vrot.slane %v152, %v174
    %v176 = vlaneseq
    %v177 = vshrl.u32 %v176, 7
    %v178 = vsub.s32 4, %v177
    %v179 = vrot.slane %v152, %v178
    %v180 = vlaneseq
    %v181 = vshrl.u32 %v180, 7
    %v182 = vsub.s32 5, %v181
    %v183 = vrot.slane %v152, %v182
    %v184 = vlaneseq
    %v185 = vshrl.u32 %v184, 7
    %v186 = vsub.s32 6, %v185
    %v187 = vrot.slane %v152, %v186
    %v188 = vlaneseq
    %v189 = vshrl.u32 %v188, 7
    %v190 = vsub.s32 7, %v189
    %v191 = vrot.slane %v152, %v190
    %v192 = vlaneseq
    %v193 = vshrl.u32 %v192, 7
    %v194 = vsub.s32 0, %v193
    %v195 = vrot.slane %v153, %v194
    %v196 = vlaneseq
    %v197 = vshrl.u32 %v196, 7
    %v198 = vsub.s32 1, %v197
    %v199 = vrot.slane %v153, %v198
    %v200 = vlaneseq
    %v201 = vshrl.u32 %v200, 7
    %v202 = vsub.s32 2, %v201
    %v203 = vrot.slane %v153, %v202
    %v204 = vlaneseq
    %v205 = vshrl.u32 %v204, 7
    %v206 = vsub.s32 3, %v205
    %v207 = vrot.slane %v153, %v206
    %v208 = vlaneseq
    %v209 = vshrl.u32 %v208, 7
    %v210 = vsub.s32 4, %v209
    %v211 = vrot.slane %v153, %v210
    %v212 = vlaneseq
    %v213 = vshrl.u32 %v212, 7
    %v214 = vsub.s32 5, %v213
    %v215 = vrot.slane %v153, %v214
    %v216 = vlaneseq
    %v217 = vshrl.u32 %v216, 7
    %v218 = vsub.s32 6, %v217
    %v219 = vrot.slane %v153, %v218
    %v220 = vlaneseq
    %v221 = vshrl.u32 %v220, 7
    %v222 = vsub.s32 7, %v221
    %v223 = vrot.slane %v153, %v222
    %v224 = vlaneseq
    %v225 = vshrl.u32 %v224, 7
    %v226 = vsub.s32 0, %v225
    %v227 = vrot.slane %v154, %v226
    %v228 = vlaneseq
    %v229 = vshrl.u32 %v228, 7
    %v230 = vsub.s32 1, %v229
    %v231 = vrot.slane %v154, %v230
    %v232 = vlaneseq
    %v233 = vshrl.u32 %v232, 7
    %v234 = vsub.s32 2, %v233
    %v235 = vrot.slane %v154, %v234
    %v236 = vlaneseq
    %v237 = vshrl.u32 %v236, 7
    %v238 = vsub.s32 3, %v237
    %v239 = vrot.slane %v154, %v238
    %v240 = vlaneseq
    %v241 = vshrl.u32 %v240, 7
    %v242 = vsub.s32 4, %v241
    %v243 = vrot.slane %v154, %v242
    %v244 = vlaneseq
    %v245 = vshrl.u32 %v244, 7
    %v246 = vsub.s32 5, %v245
    %v247 = vrot.slane %v154, %v246
    %v248 = vlaneseq
    %v249 = vshrl.u32 %v248, 7
    %v250 = vsub.s32 6, %v249
    %v251 = vrot.slane %v154, %v250
    %v252 = vlaneseq
    %v253 = vshrl.u32 %v252, 7
    %v254 = vsub.s32 7, %v253
    %v255 = vrot.slane %v154, %v254
    %v256 = vlaneseq
    %v257 = vshrl.u32 %v256, 7
    %v258 = vsub.s32 0, %v257
    %v259 = vrot.slane %v155, %v258
    %vm285 = vcmask 261120
    %v287 = vsel %vm285, %v51, 0
    %289 = vmatprep.subr.mxu0 %v53
    %290 = vmatpush1.msra.mxu0 %v52
    %291 = vmatprep.subr.mxu0 %v78
    %292 = vmatpush1.msra.mxu0 %v77
    %293 = vmatprep.subr.mxu0 %v103
    %294 = vmatpush1.msra.mxu0 %v102
    %295 = vmatprep.subr.mxu0 %v128
    %296 = vmatpush1.msra.mxu0 %v127
    %297 = vmatprep.subr.mxu0 0.0
    %298 = vmatpush1.msra.mxu0 0.0
    %299 = vmatprep.subr.mxu0 0.0
    %300 = vmatpush1.msra.mxu0 0.0
    %301 = vmatprep.subr.mxu0 0.0
    %302 = vmatpush1.msra.mxu0 0.0
    %303 = vmatprep.subr.mxu0 0.0
    %304 = vmatpush1.msra.mxu0 0.0
    %305 = vmatprep.subr.mxu0 0.0
    %306 = vmatpush1.msra.mxu0 0.0
    %307 = vmatprep.subr.mxu0 0.0
    %308 = vmatpush1.msra.mxu0 0.0
    %309 = vmatprep.subr.mxu0 0.0
    %310 = vmatpush1.msra.mxu0 0.0
    %311 = vmatprep.subr.mxu0 0.0
    %312 = vmatpush1.msra.mxu0 0.0
    %313 = vmatprep.subr.mxu0 0.0
    %314 = vmatpush1.msra.mxu0 0.0
    %315 = vmatprep.subr.mxu0 0.0
    %316 = vmatpush1.msra.mxu0 0.0
    %317 = vmatprep.subr.mxu0 0.0
    %318 = vmatpush1.msra.mxu0 0.0
    %319 = vmatprep.subr.mxu0 0.0
    %320 = vmatpush1.msra.mxu0 0.0
    %321 = vmatprep.subr.mxu0 0.0
    %322 = vmatpush1.msra.mxu0 0.0
    %323 = vmatprep.subr.mxu0 0.0
    %324 = vmatpush1.msra.mxu0 0.0
    %325 = vmatprep.subr.mxu0 0.0
    %326 = vmatpush1.msra.mxu0 0.0
    %327 = vmatprep.subr.mxu0 0.0
    %328 = vmatpush1.msra.mxu0 0.0
    %329 = vmatprep.subr.mxu0 0.0
    %330 = vmatpush1.msra.mxu0 0.0
    %331 = vmatprep.subr.mxu0 0.0
    %332 = vmatpush1.msra.mxu0 0.0
    %333 = vmatprep.subr.mxu0 0.0
    %334 = vmatpush1.msra.mxu0 0.0
    %335 = vmatprep.subr.mxu0 0.0
    %336 = vmatpush1.msra.mxu0 0.0
    %337 = vmatprep.subr.mxu0 0.0
    %338 = vmatpush1.msra.mxu0 0.0
    %339 = vmatprep.subr.mxu0 0.0
    %340 = vmatpush1.msra.mxu0 0.0
    %341 = vmatprep.subr.mxu0 0.0
    %342 = vmatpush1.msra.mxu0 0.0
    %343 = vmatprep.subr.mxu0 0.0
    %344 = vmatpush1.msra.mxu0 0.0
    %345 = vmatprep.subr.mxu0 0.0
    %346 = vmatpush1.msra.mxu0 0.0
    %347 = vmatprep.subr.mxu0 0.0
    %348 = vmatpush1.msra.mxu0 0.0
    %349 = vmatprep.subr.mxu0 0.0
    %350 = vmatpush1.msra.mxu0 0.0
    %351 = vmatprep.subr.mxu0 0.0
    %352 = vmatpush1.msra.mxu0 0.0
    %353 = vmatprep.mubr.f32.mxu0 0.0
    %354 = vmatmul.mubr.f32.gmra.mrb[0].mxu0 %v287
    %v355 = vpop.f32.mrb[0].mxu0
    %v356 = vadd.f32 %v163, %v355
    %v357 = vpop.f32.mrb[0].mxu0
    %v358 = vadd.f32 %v167, %v357
    %359 = vdwg.mxu0
    %360 = vmatprep.subr.mxu0 %v55
    %361 = vmatpush1.msra.mxu0 %v54
    %362 = vmatprep.subr.mxu0 %v80
    %363 = vmatpush1.msra.mxu0 %v79
    %364 = vmatprep.subr.mxu0 %v105
    %365 = vmatpush1.msra.mxu0 %v104
    %366 = vmatprep.subr.mxu0 %v130
    %367 = vmatpush1.msra.mxu0 %v129
    %368 = vmatprep.subr.mxu0 0.0
    %369 = vmatpush1.msra.mxu0 0.0
    %370 = vmatprep.subr.mxu0 0.0
    %371 = vmatpush1.msra.mxu0 0.0
    %372 = vmatprep.subr.mxu0 0.0
    %373 = vmatpush1.msra.mxu0 0.0
    %374 = vmatprep.subr.mxu0 0.0
    %375 = vmatpush1.msra.mxu0 0.0
    %376 = vmatprep.subr.mxu0 0.0
    %377 = vmatpush1.msra.mxu0 0.0
    %378 = vmatprep.subr.mxu0 0.0
    %379 = vmatpush1.msra.mxu0 0.0
    %380 = vmatprep.subr.mxu0 0.0
    %381 = vmatpush1.msra.mxu0 0.0
    %382 = vmatprep.subr.mxu0 0.0
    %383 = vmatpush1.msra.mxu0 0.0
    %384 = vmatprep.subr.mxu0 0.0
    %385 = vmatpush1.msra.mxu0 0.0
    %386 = vmatprep.subr.mxu0 0.0
    %387 = vmatpush1.msra.mxu0 0.0
    %388 = vmatprep.subr.mxu0 0.0
    %389 = vmatpush1.msra.mxu0 0.0
    %390 = vmatprep.subr.mxu0 0.0
    %391 = vmatpush1.msra.mxu0 0.0
    %392 = vmatprep.subr.mxu0 0.0
    %393 = vmatpush1.msra.mxu0 0.0
    %394 = vmatprep.subr.mxu0 0.0
    %395 = vmatpush1.msra.mxu0 0.0
    %396 = vmatprep.subr.mxu0 0.0
    %397 = vmatpush1.msra.mxu0 0.0
    %398 = vmatprep.subr.mxu0 0.0
    %399 = vmatpush1.msra.mxu0 0.0
    %400 = vmatprep.subr.mxu0 0.0
    %401 = vmatpush1.msra.mxu0 0.0
    %402 = vmatprep.subr.mxu0 0.0
    %403 = vmatpush1.msra.mxu0 0.0
    %404 = vmatprep.subr.mxu0 0.0
    %405 = vmatpush1.msra.mxu0 0.0
    %406 = vmatprep.subr.mxu0 0.0
    %407 = vmatpush1.msra.mxu0 0.0
    %408 = vmatprep.subr.mxu0 0.0
    %409 = vmatpush1.msra.mxu0 0.0
    %410 = vmatprep.subr.mxu0 0.0
    %411 = vmatpush1.msra.mxu0 0.0
    %412 = vmatprep.subr.mxu0 0.0
    %413 = vmatpush1.msra.mxu0 0.0
    %414 = vmatprep.subr.mxu0 0.0
    %415 = vmatpush1.msra.mxu0 0.0
    %416 = vmatprep.subr.mxu0 0.0
    %417 = vmatpush1.msra.mxu0 0.0
    %418 = vmatprep.subr.mxu0 0.0
    %419 = vmatpush1.msra.mxu0 0.0
    %420 = vmatprep.subr.mxu0 0.0
    %421 = vmatpush1.msra.mxu0 0.0
    %422 = vmatprep.subr.mxu0 0.0
    %423 = vmatpush1.msra.mxu0 0.0
    %424 = vmatprep.mubr.f32.mxu0 0.0
    %425 = vmatmul.mubr.f32.gmra.mrb[0].mxu0 %v287
    %v426 = vpop.f32.mrb[0].mxu0
    %v427 = vadd.f32 %v171, %v426
    %v428 = vpop.f32.mrb[0].mxu0
    %v429 = vadd.f32 %v175, %v428
    %430 = vdwg.mxu0
    %431 = vmatprep.subr.mxu0 %v57
    %432 = vmatpush1.msra.mxu0 %v56
    %433 = vmatprep.subr.mxu0 %v82
    %434 = vmatpush1.msra.mxu0 %v81
    %435 = vmatprep.subr.mxu0 %v107
    %436 = vmatpush1.msra.mxu0 %v106
    %437 = vmatprep.subr.mxu0 %v132
    %438 = vmatpush1.msra.mxu0 %v131
    %439 = vmatprep.subr.mxu0 0.0
    %440 = vmatpush1.msra.mxu0 0.0
    %441 = vmatprep.subr.mxu0 0.0
    %442 = vmatpush1.msra.mxu0 0.0
    %443 = vmatprep.subr.mxu0 0.0
    %444 = vmatpush1.msra.mxu0 0.0
    %445 = vmatprep.subr.mxu0 0.0
    %446 = vmatpush1.msra.mxu0 0.0
    %447 = vmatprep.subr.mxu0 0.0
    %448 = vmatpush1.msra.mxu0 0.0
    %449 = vmatprep.subr.mxu0 0.0
    %450 = vmatpush1.msra.mxu0 0.0
    %451 = vmatprep.subr.mxu0 0.0
    %452 = vmatpush1.msra.mxu0 0.0
    %453 = vmatprep.subr.mxu0 0.0
    %454 = vmatpush1.msra.mxu0 0.0
    %455 = vmatprep.subr.mxu0 0.0
    %456 = vmatpush1.msra.mxu0 0.0
    %457 = vmatprep.subr.mxu0 0.0
    %458 = vmatpush1.msra.mxu0 0.0
    %459 = vmatprep.subr.mxu0 0.0
    %460 = vmatpush1.msra.mxu0 0.0
    %461 = vmatprep.subr.mxu0 0.0
    %462 = vmatpush1.msra.mxu0 0.0
    %463 = vmatprep.subr.mxu0 0.0
    %464 = vmatpush1.msra.mxu0 0.0
    %465 = vmatprep.subr.mxu0 0.0
    %466 = vmatpush1.msra.mxu0 0.0
    %467 = vmatprep.subr.mxu0 0.0
    %468 = vmatpush1.msra.mxu0 0.0
    %469 = vmatprep.subr.mxu0 0.0
    %470 = vmatpush1.msra.mxu0 0.0
    %471 = vmatprep.subr.mxu0 0.0
    %472 = vmatpush1.msra.mxu0 0.0
    %473 = vmatprep.subr.mxu0 0.0
    %474 = vmatpush1.msra.mxu0 0.0
    %475 = vmatprep.subr.mxu0 0.0
    %476 = vmatpush1.msra.mxu0 0.0
    %477 = vmatprep.subr.mxu0 0.0
    %478 = vmatpush1.msra.mxu0 0.0
    %479 = vmatprep.subr.mxu0 0.0
    %480 = vmatpush1.msra.mxu0 0.0
    %481 = vmatprep.subr.mxu0 0.0
    %482 = vmatpush1.msra.mxu0 0.0
    %483 = vmatprep.subr.mxu0 0.0
    %484 = vmatpush1.msra.mxu0 0.0
    %485 = vmatprep.subr.mxu0 0.0
    %486 = vmatpush1.msra.mxu0 0.0
    %487 = vmatprep.subr.mxu0 0.0
    %488 = vmatpush1.msra.mxu0 0.0
    %489 = vmatprep.subr.mxu0 0.0
    %490 = vmatpush1.msra.mxu0 0.0
    %491 = vmatprep.subr.mxu0 0.0
    %492 = vmatpush1.msra.mxu0 0.0
    %493 = vmatprep.subr.mxu0 0.0
    %494 = vmatpush1.msra.mxu0 0.0
    %495 = vmatprep.mubr.f32.mxu0 0.0
    %496 = vmatmul.mubr.f32.gmra.mrb[0].mxu0 %v287
    %v497 = vpop.f32.mrb[0].mxu0
    %v498 = vadd.f32 %v179, %v497
    %v499 = vpop.f32.mrb[0].mxu0
    %v500 = vadd.f32 %v183, %v499
    %501 = vdwg.mxu0
    %502 = vmatprep.subr.mxu0 %v59
    %503 = vmatpush1.msra.mxu0 %v58
    %504 = vmatprep.subr.mxu0 %v84
    %505 = vmatpush1.msra.mxu0 %v83
    %506 = vmatprep.subr.mxu0 %v109
    %507 = vmatpush1.msra.mxu0 %v108
    %508 = vmatprep.subr.mxu0 %v134
    %509 = vmatpush1.msra.mxu0 %v133
    %510 = vmatprep.subr.mxu0 0.0
    %511 = vmatpush1.msra.mxu0 0.0
    %512 = vmatprep.subr.mxu0 0.0
    %513 = vmatpush1.msra.mxu0 0.0
    %514 = vmatprep.subr.mxu0 0.0
    %515 = vmatpush1.msra.mxu0 0.0
    %516 = vmatprep.subr.mxu0 0.0
    %517 = vmatpush1.msra.mxu0 0.0
    %518 = vmatprep.subr.mxu0 0.0
    %519 = vmatpush1.msra.mxu0 0.0
    %520 = vmatprep.subr.mxu0 0.0
    %521 = vmatpush1.msra.mxu0 0.0
    %522 = vmatprep.subr.mxu0 0.0
    %523 = vmatpush1.msra.mxu0 0.0
    %524 = vmatprep.subr.mxu0 0.0
    %525 = vmatpush1.msra.mxu0 0.0
    %526 = vmatprep.subr.mxu0 0.0
    %527 = vmatpush1.msra.mxu0 0.0
    %528 = vmatprep.subr.mxu0 0.0
    %529 = vmatpush1.msra.mxu0 0.0
    %530 = vmatprep.subr.mxu0 0.0
    %531 = vmatpush1.msra.mxu0 0.0
    %532 = vmatprep.subr.mxu0 0.0
    %533 = vmatpush1.msra.mxu0 0.0
    %534 = vmatprep.subr.mxu0 0.0
    %535 = vmatpush1.msra.mxu0 0.0
    %536 = vmatprep.subr.mxu0 0.0
    %537 = vmatpush1.msra.mxu0 0.0
    %538 = vmatprep.subr.mxu0 0.0
    %539 = vmatpush1.msra.mxu0 0.0
    %540 = vmatprep.subr.mxu0 0.0
    %541 = vmatpush1.msra.mxu0 0.0
    %542 = vmatprep.subr.mxu0 0.0
    %543 = vmatpush1.msra.mxu0 0.0
    %544 = vmatprep.subr.mxu0 0.0
    %545 = vmatpush1.msra.mxu0 0.0
    %546 = vmatprep.subr.mxu0 0.0
    %547 = vmatpush1.msra.mxu0 0.0
    %548 = vmatprep.subr.mxu0 0.0
    %549 = vmatpush1.msra.mxu0 0.0
    %550 = vmatprep.subr.mxu0 0.0
    %551 = vmatpush1.msra.mxu0 0.0
    %552 = vmatprep.subr.mxu0 0.0
    %553 = vmatpush1.msra.mxu0 0.0
    %554 = vmatprep.subr.mxu0 0.0
    %555 = vmatpush1.msra.mxu0 0.0
    %556 = vmatprep.subr.mxu0 0.0
    %557 = vmatpush1.msra.mxu0 0.0
    %558 = vmatprep.subr.mxu0 0.0
    %559 = vmatpush1.msra.mxu0 0.0
    %560 = vmatprep.subr.mxu0 0.0
    %561 = vmatpush1.msra.mxu0 0.0
    %562 = vmatprep.subr.mxu0 0.0
    %563 = vmatpush1.msra.mxu0 0.0
    %564 = vmatprep.subr.mxu0 0.0
    %565 = vmatpush1.msra.mxu0 0.0
    %566 = vmatprep.mubr.f32.mxu0 0.0
    %567 = vmatmul.mubr.f32.gmra.mrb[0].mxu0 %v287
    %v568 = vpop.f32.mrb[0].mxu0
    %v569 = vadd.f32 %v187, %v568
    %v570 = vpop.f32.mrb[0].mxu0
    %v571 = vadd.f32 %v191, %v570
    %572 = vdwg.mxu0
    %573 = vmatprep.subr.mxu0 %v61
    %574 = vmatpush1.msra.mxu0 %v60
    %575 = vmatprep.subr.mxu0 %v86
    %576 = vmatpush1.msra.mxu0 %v85
    %577 = vmatprep.subr.mxu0 %v111
    %578 = vmatpush1.msra.mxu0 %v110
    %579 = vmatprep.subr.mxu0 %v136
    %580 = vmatpush1.msra.mxu0 %v135
    %581 = vmatprep.subr.mxu0 0.0
    %582 = vmatpush1.msra.mxu0 0.0
    %583 = vmatprep.subr.mxu0 0.0
    %584 = vmatpush1.msra.mxu0 0.0
    %585 = vmatprep.subr.mxu0 0.0
    %586 = vmatpush1.msra.mxu0 0.0
    %587 = vmatprep.subr.mxu0 0.0
    %588 = vmatpush1.msra.mxu0 0.0
    %589 = vmatprep.subr.mxu0 0.0
    %590 = vmatpush1.msra.mxu0 0.0
    %591 = vmatprep.subr.mxu0 0.0
    %592 = vmatpush1.msra.mxu0 0.0
    %593 = vmatprep.subr.mxu0 0.0
    %594 = vmatpush1.msra.mxu0 0.0
    %595 = vmatprep.subr.mxu0 0.0
    %596 = vmatpush1.msra.mxu0 0.0
    %597 = vmatprep.subr.mxu0 0.0
    %598 = vmatpush1.msra.mxu0 0.0
    %599 = vmatprep.subr.mxu0 0.0
    %600 = vmatpush1.msra.mxu0 0.0
    %601 = vmatprep.subr.mxu0 0.0
    %602 = vmatpush1.msra.mxu0 0.0
    %603 = vmatprep.subr.mxu0 0.0
    %604 = vmatpush1.msra.mxu0 0.0
    %605 = vmatprep.subr.mxu0 0.0
    %606 = vmatpush1.msra.mxu0 0.0
    %607 = vmatprep.subr.mxu0 0.0
    %608 = vmatpush1.msra.mxu0 0.0
    %609 = vmatprep.subr.mxu0 0.0
    %610 = vmatpush1.msra.mxu0 0.0
    %611 = vmatprep.subr.mxu0 0.0
    %612 = vmatpush1.msra.mxu0 0.0
    %613 = vmatprep.subr.mxu0 0.0
    %614 = vmatpush1.msra.mxu0 0.0
    %615 = vmatprep.subr.mxu0 0.0
    %616 = vmatpush1.msra.mxu0 0.0
    %617 = vmatprep.subr.mxu0 0.0
    %618 = vmatpush1.msra.mxu0 0.0
    %619 = vmatprep.subr.mxu0 0.0
    %620 = vmatpush1.msra.mxu0 0.0
    %621 = vmatprep.subr.mxu0 0.0
    %622 = vmatpush1.msra.mxu0 0.0
    %623 = vmatprep.subr.mxu0 0.0
    %624 = vmatpush1.msra.mxu0 0.0
    %625 = vmatprep.subr.mxu0 0.0
    %626 = vmatpush1.msra.mxu0 0.0
    %627 = vmatprep.subr.mxu0 0.0
    %628 = vmatpush1.msra.mxu0 0.0
    %629 = vmatprep.subr.mxu0 0.0
    %630 = vmatpush1.msra.mxu0 0.0
    %631 = vmatprep.subr.mxu0 0.0
    %632 = vmatpush1.msra.mxu0 0.0
    %633 = vmatprep.subr.mxu0 0.0
    %634 = vmatpush1.msra.mxu0 0.0
    %635 = vmatprep.subr.mxu0 0.0
    %636 = vmatpush1.msra.mxu0 0.0
    %637 = vmatprep.mubr.f32.mxu0 0.0
    %638 = vmatmul.mubr.f32.gmra.mrb[0].mxu0 %v287
    %v639 = vpop.f32.mrb[0].mxu0
    %v640 = vadd.f32 %v195, %v639
    %v641 = vpop.f32.mrb[0].mxu0
    %v642 = vadd.f32 %v199, %v641
    %643 = vdwg.mxu0
    %644 = vmatprep.subr.mxu0 %v63
    %645 = vmatpush1.msra.mxu0 %v62
    %646 = vmatprep.subr.mxu0 %v88
    %647 = vmatpush1.msra.mxu0 %v87
    %648 = vmatprep.subr.mxu0 %v113
    %649 = vmatpush1.msra.mxu0 %v112
    %650 = vmatprep.subr.mxu0 %v138
    %651 = vmatpush1.msra.mxu0 %v137
    %652 = vmatprep.subr.mxu0 0.0
    %653 = vmatpush1.msra.mxu0 0.0
    %654 = vmatprep.subr.mxu0 0.0
    %655 = vmatpush1.msra.mxu0 0.0
    %656 = vmatprep.subr.mxu0 0.0
    %657 = vmatpush1.msra.mxu0 0.0
    %658 = vmatprep.subr.mxu0 0.0
    %659 = vmatpush1.msra.mxu0 0.0
    %660 = vmatprep.subr.mxu0 0.0
    %661 = vmatpush1.msra.mxu0 0.0
    %662 = vmatprep.subr.mxu0 0.0
    %663 = vmatpush1.msra.mxu0 0.0
    %664 = vmatprep.subr.mxu0 0.0
    %665 = vmatpush1.msra.mxu0 0.0
    %666 = vmatprep.subr.mxu0 0.0
    %667 = vmatpush1.msra.mxu0 0.0
    %668 = vmatprep.subr.mxu0 0.0
    %669 = vmatpush1.msra.mxu0 0.0
    %670 = vmatprep.subr.mxu0 0.0
    %671 = vmatpush1.msra.mxu0 0.0
    %672 = vmatprep.subr.mxu0 0.0
    %673 = vmatpush1.msra.mxu0 0.0
    %674 = vmatprep.subr.mxu0 0.0
    %675 = vmatpush1.msra.mxu0 0.0
    %676 = vmatprep.subr.mxu0 0.0
    %677 = vmatpush1.msra.mxu0 0.0
    %678 = vmatprep.subr.mxu0 0.0
    %679 = vmatpush1.msra.mxu0 0.0
    %680 = vmatprep.subr.mxu0 0.0
    %681 = vmatpush1.msra.mxu0 0.0
    %682 = vmatprep.subr.mxu0 0.0
    %683 = vmatpush1.msra.mxu0 0.0
    %684 = vmatprep.subr.mxu0 0.0
    %685 = vmatpush1.msra.mxu0 0.0
    %686 = vmatprep.subr.mxu0 0.0
    %687 = vmatpush1.msra.mxu0 0.0
    %688 = vmatprep.subr.mxu0 0.0
    %689 = vmatpush1.msra.mxu0 0.0
    %690 = vmatprep.subr.mxu0 0.0
    %691 = vmatpush1.msra.mxu0 0.0
    %692 = vmatprep.subr.mxu0 0.0
    %693 = vmatpush1.msra.mxu0 0.0
    %694 = vmatprep.subr.mxu0 0.0
    %695 = vmatpush1.msra.mxu0 0.0
    %696 = vmatprep.subr.mxu0 0.0
    %697 = vmatpush1.msra.mxu0 0.0
    %698 = vmatprep.subr.mxu0 0.0
    %699 = vmatpush1.msra.mxu0 0.0
    %700 = vmatprep.subr.mxu0 0.0
    %701 = vmatpush1.msra.mxu0 0.0
    %702 = vmatprep.subr.mxu0 0.0
    %703 = vmatpush1.msra.mxu0 0.0
    %704 = vmatprep.subr.mxu0 0.0
    %705 = vmatpush1.msra.mxu0 0.0
    %706 = vmatprep.subr.mxu0 0.0
    %707 = vmatpush1.msra.mxu0 0.0
    %708 = vmatprep.mubr.f32.mxu0 0.0
    %709 = vmatmul.mubr.f32.gmra.mrb[0].mxu0 %v287
    %v710 = vpop.f32.mrb[0].mxu0
    %v711 = vadd.f32 %v203, %v710
    %v712 = vpop.f32.mrb[0].mxu0
    %v713 = vadd.f32 %v207, %v712
    %714 = vdwg.mxu0
    %715 = vmatprep.subr.mxu0 %v65
    %716 = vmatpush1.msra.mxu0 %v64
    %717 = vmatprep.subr.mxu0 %v90
    %718 = vmatpush1.msra.mxu0 %v89
    %719 = vmatprep.subr.mxu0 %v115
    %720 = vmatpush1.msra.mxu0 %v114
    %721 = vmatprep.subr.mxu0 %v140
    %722 = vmatpush1.msra.mxu0 %v139
    %723 = vmatprep.subr.mxu0 0.0
    %724 = vmatpush1.msra.mxu0 0.0
    %725 = vmatprep.subr.mxu0 0.0
    %726 = vmatpush1.msra.mxu0 0.0
    %727 = vmatprep.subr.mxu0 0.0
    %728 = vmatpush1.msra.mxu0 0.0
    %729 = vmatprep.subr.mxu0 0.0
    %730 = vmatpush1.msra.mxu0 0.0
    %731 = vmatprep.subr.mxu0 0.0
    %732 = vmatpush1.msra.mxu0 0.0
    %733 = vmatprep.subr.mxu0 0.0
    %734 = vmatpush1.msra.mxu0 0.0
    %735 = vmatprep.subr.mxu0 0.0
    %736 = vmatpush1.msra.mxu0 0.0
    %737 = vmatprep.subr.mxu0 0.0
    %738 = vmatpush1.msra.mxu0 0.0
    %739 = vmatprep.subr.mxu0 0.0
    %740 = vmatpush1.msra.mxu0 0.0
    %741 = vmatprep.subr.mxu0 0.0
    %742 = vmatpush1.msra.mxu0 0.0
    %743 = vmatprep.subr.mxu0 0.0
    %744 = vmatpush1.msra.mxu0 0.0
    %745 = vmatprep.subr.mxu0 0.0
    %746 = vmatpush1.msra.mxu0 0.0
    %747 = vmatprep.subr.mxu0 0.0
    %748 = vmatpush1.msra.mxu0 0.0
    %749 = vmatprep.subr.mxu0 0.0
    %750 = vmatpush1.msra.mxu0 0.0
    %751 = vmatprep.subr.mxu0 0.0
    %752 = vmatpush1.msra.mxu0 0.0
    %753 = vmatprep.subr.mxu0 0.0
    %754 = vmatpush1.msra.mxu0 0.0
    %755 = vmatprep.subr.mxu0 0.0
    %756 = vmatpush1.msra.mxu0 0.0
    %757 = vmatprep.subr.mxu0 0.0
    %758 = vmatpush1.msra.mxu0 0.0
    %759 = vmatprep.subr.mxu0 0.0
    %760 = vmatpush1.msra.mxu0 0.0
    %761 = vmatprep.subr.mxu0 0.0
    %762 = vmatpush1.msra.mxu0 0.0
    %763 = vmatprep.subr.mxu0 0.0
    %764 = vmatpush1.msra.mxu0 0.0
    %765 = vmatprep.subr.mxu0 0.0
    %766 = vmatpush1.msra.mxu0 0.0
    %767 = vmatprep.subr.mxu0 0.0
    %768 = vmatpush1.msra.mxu0 0.0
    %769 = vmatprep.subr.mxu0 0.0
    %770 = vmatpush1.msra.mxu0 0.0
    %771 = vmatprep.subr.mxu0 0.0
    %772 = vmatpush1.msra.mxu0 0.0
    %773 = vmatprep.subr.mxu0 0.0
    %774 = vmatpush1.msra.mxu0 0.0
    %775 = vmatprep.subr.mxu0 0.0
    %776 = vmatpush1.msra.mxu0 0.0
    %777 = vmatprep.subr.mxu0 0.0
    %778 = vmatpush1.msra.mxu0 0.0
    %779 = vmatprep.mubr.f32.mxu0 0.0
    %780 = vmatmul.mubr.f32.gmra.mrb[0].mxu0 %v287
    %v781 = vpop.f32.mrb[0].mxu0
    %v782 = vadd.f32 %v211, %v781
    %v783 = vpop.f32.mrb[0].mxu0
    %v784 = vadd.f32 %v215, %v783
    %785 = vdwg.mxu0
    %786 = vmatprep.subr.mxu0 %v67
    %787 = vmatpush1.msra.mxu0 %v66
    %788 = vmatprep.subr.mxu0 %v92
    %789 = vmatpush1.msra.mxu0 %v91
    %790 = vmatprep.subr.mxu0 %v117
    %791 = vmatpush1.msra.mxu0 %v116
    %792 = vmatprep.subr.mxu0 %v142
    %793 = vmatpush1.msra.mxu0 %v141
    %794 = vmatprep.subr.mxu0 0.0
    %795 = vmatpush1.msra.mxu0 0.0
    %796 = vmatprep.subr.mxu0 0.0
    %797 = vmatpush1.msra.mxu0 0.0
    %798 = vmatprep.subr.mxu0 0.0
    %799 = vmatpush1.msra.mxu0 0.0
    %800 = vmatprep.subr.mxu0 0.0
    %801 = vmatpush1.msra.mxu0 0.0
    %802 = vmatprep.subr.mxu0 0.0
    %803 = vmatpush1.msra.mxu0 0.0
    %804 = vmatprep.subr.mxu0 0.0
    %805 = vmatpush1.msra.mxu0 0.0
    %806 = vmatprep.subr.mxu0 0.0
    %807 = vmatpush1.msra.mxu0 0.0
    %808 = vmatprep.subr.mxu0 0.0
    %809 = vmatpush1.msra.mxu0 0.0
    %810 = vmatprep.subr.mxu0 0.0
    %811 = vmatpush1.msra.mxu0 0.0
    %812 = vmatprep.subr.mxu0 0.0
    %813 = vmatpush1.msra.mxu0 0.0
    %814 = vmatprep.subr.mxu0 0.0
    %815 = vmatpush1.msra.mxu0 0.0
    %816 = vmatprep.subr.mxu0 0.0
    %817 = vmatpush1.msra.mxu0 0.0
    %818 = vmatprep.subr.mxu0 0.0
    %819 = vmatpush1.msra.mxu0 0.0
    %820 = vmatprep.subr.mxu0 0.0
    %821 = vmatpush1.msra.mxu0 0.0
    %822 = vmatprep.subr.mxu0 0.0
    %823 = vmatpush1.msra.mxu0 0.0
    %824 = vmatprep.subr.mxu0 0.0
    %825 = vmatpush1.msra.mxu0 0.0
    %826 = vmatprep.subr.mxu0 0.0
    %827 = vmatpush1.msra.mxu0 0.0
    %828 = vmatprep.subr.mxu0 0.0
    %829 = vmatpush1.msra.mxu0 0.0
    %830 = vmatprep.subr.mxu0 0.0
    %831 = vmatpush1.msra.mxu0 0.0
    %832 = vmatprep.subr.mxu0 0.0
    %833 = vmatpush1.msra.mxu0 0.0
    %834 = vmatprep.subr.mxu0 0.0
    %835 = vmatpush1.msra.mxu0 0.0
    %836 = vmatprep.subr.mxu0 0.0
    %837 = vmatpush1.msra.mxu0 0.0
    %838 = vmatprep.subr.mxu0 0.0
    %839 = vmatpush1.msra.mxu0 0.0
    %840 = vmatprep.subr.mxu0 0.0
    %841 = vmatpush1.msra.mxu0 0.0
    %842 = vmatprep.subr.mxu0 0.0
    %843 = vmatpush1.msra.mxu0 0.0
    %844 = vmatprep.subr.mxu0 0.0
    %845 = vmatpush1.msra.mxu0 0.0
    %846 = vmatprep.subr.mxu0 0.0
    %847 = vmatpush1.msra.mxu0 0.0
    %848 = vmatprep.subr.mxu0 0.0
    %849 = vmatpush1.msra.mxu0 0.0
    %850 = vmatprep.mubr.f32.mxu0 0.0
    %851 = vmatmul.mubr.f32.gmra.mrb[0].mxu0 %v287
    %v852 = vpop.f32.mrb[0].mxu0
    %v853 = vadd.f32 %v219, %v852
    %v854 = vpop.f32.mrb[0].mxu0
    %v855 = vadd.f32 %v223, %v854
    %856 = vdwg.mxu0
    %857 = vmatprep.subr.mxu0 %v69
    %858 = vmatpush1.msra.mxu0 %v68
    %859 = vmatprep.subr.mxu0 %v94
    %860 = vmatpush1.msra.mxu0 %v93
    %861 = vmatprep.subr.mxu0 %v119
    %862 = vmatpush1.msra.mxu0 %v118
    %863 = vmatprep.subr.mxu0 %v144
    %864 = vmatpush1.msra.mxu0 %v143
    %865 = vmatprep.subr.mxu0 0.0
    %866 = vmatpush1.msra.mxu0 0.0
    %867 = vmatprep.subr.mxu0 0.0
    %868 = vmatpush1.msra.mxu0 0.0
    %869 = vmatprep.subr.mxu0 0.0
    %870 = vmatpush1.msra.mxu0 0.0
    %871 = vmatprep.subr.mxu0 0.0
    %872 = vmatpush1.msra.mxu0 0.0
    %873 = vmatprep.subr.mxu0 0.0
    %874 = vmatpush1.msra.mxu0 0.0
    %875 = vmatprep.subr.mxu0 0.0
    %876 = vmatpush1.msra.mxu0 0.0
    %877 = vmatprep.subr.mxu0 0.0
    %878 = vmatpush1.msra.mxu0 0.0
    %879 = vmatprep.subr.mxu0 0.0
    %880 = vmatpush1.msra.mxu0 0.0
    %881 = vmatprep.subr.mxu0 0.0
    %882 = vmatpush1.msra.mxu0 0.0
    %883 = vmatprep.subr.mxu0 0.0
    %884 = vmatpush1.msra.mxu0 0.0
    %885 = vmatprep.subr.mxu0 0.0
    %886 = vmatpush1.msra.mxu0 0.0
    %887 = vmatprep.subr.mxu0 0.0
    %888 = vmatpush1.msra.mxu0 0.0
    %889 = vmatprep.subr.mxu0 0.0
    %890 = vmatpush1.msra.mxu0 0.0
    %891 = vmatprep.subr.mxu0 0.0
    %892 = vmatpush1.msra.mxu0 0.0
    %893 = vmatprep.subr.mxu0 0.0
    %894 = vmatpush1.msra.mxu0 0.0
    %895 = vmatprep.subr.mxu0 0.0
    %896 = vmatpush1.msra.mxu0 0.0
    %897 = vmatprep.subr.mxu0 0.0
    %898 = vmatpush1.msra.mxu0 0.0
    %899 = vmatprep.subr.mxu0 0.0
    %900 = vmatpush1.msra.mxu0 0.0
    %901 = vmatprep.subr.mxu0 0.0
    %902 = vmatpush1.msra.mxu0 0.0
    %903 = vmatprep.subr.mxu0 0.0
    %904 = vmatpush1.msra.mxu0 0.0
    %905 = vmatprep.subr.mxu0 0.0
    %906 = vmatpush1.msra.mxu0 0.0
    %907 = vmatprep.subr.mxu0 0.0
    %908 = vmatpush1.msra.mxu0 0.0
    %909 = vmatprep.subr.mxu0 0.0
    %910 = vmatpush1.msra.mxu0 0.0
    %911 = vmatprep.subr.mxu0 0.0
    %912 = vmatpush1.msra.mxu0 0.0
    %913 = vmatprep.subr.mxu0 0.0
    %914 = vmatpush1.msra.mxu0 0.0
    %915 = vmatprep.subr.mxu0 0.0
    %916 = vmatpush1.msra.mxu0 0.0
    %917 = vmatprep.subr.mxu0 0.0
    %918 = vmatpush1.msra.mxu0 0.0
    %919 = vmatprep.subr.mxu0 0.0
    %920 = vmatpush1.msra.mxu0 0.0
    %921 = vmatprep.mubr.f32.mxu0 0.0
    %922 = vmatmul.mubr.f32.gmra.mrb[0].mxu0 %v287
    %v923 = vpop.f32.mrb[0].mxu0
    %v924 = vadd.f32 %v227, %v923
    %v925 = vpop.f32.mrb[0].mxu0
    %v926 = vadd.f32 %v231, %v925
    %927 = vdwg.mxu0
    %928 = vmatprep.subr.mxu0 %v71
    %929 = vmatpush1.msra.mxu0 %v70
    %930 = vmatprep.subr.mxu0 %v96
    %931 = vmatpush1.msra.mxu0 %v95
    %932 = vmatprep.subr.mxu0 %v121
    %933 = vmatpush1.msra.mxu0 %v120
    %934 = vmatprep.subr.mxu0 %v146
    %935 = vmatpush1.msra.mxu0 %v145
    %936 = vmatprep.subr.mxu0 0.0
    %937 = vmatpush1.msra.mxu0 0.0
    %938 = vmatprep.subr.mxu0 0.0
    %939 = vmatpush1.msra.mxu0 0.0
    %940 = vmatprep.subr.mxu0 0.0
    %941 = vmatpush1.msra.mxu0 0.0
    %942 = vmatprep.subr.mxu0 0.0
    %943 = vmatpush1.msra.mxu0 0.0
    %944 = vmatprep.subr.mxu0 0.0
    %945 = vmatpush1.msra.mxu0 0.0
    %946 = vmatprep.subr.mxu0 0.0
    %947 = vmatpush1.msra.mxu0 0.0
    %948 = vmatprep.subr.mxu0 0.0
    %949 = vmatpush1.msra.mxu0 0.0
    %950 = vmatprep.subr.mxu0 0.0
    %951 = vmatpush1.msra.mxu0 0.0
    %952 = vmatprep.subr.mxu0 0.0
    %953 = vmatpush1.msra.mxu0 0.0
    %954 = vmatprep.subr.mxu0 0.0
    %955 = vmatpush1.msra.mxu0 0.0
    %956 = vmatprep.subr.mxu0 0.0
    %957 = vmatpush1.msra.mxu0 0.0
    %958 = vmatprep.subr.mxu0 0.0
    %959 = vmatpush1.msra.mxu0 0.0
    %960 = vmatprep.subr.mxu0 0.0
    %961 = vmatpush1.msra.mxu0 0.0
    %962 = vmatprep.subr.mxu0 0.0
    %963 = vmatpush1.msra.mxu0 0.0
    %964 = vmatprep.subr.mxu0 0.0
    %965 = vmatpush1.msra.mxu0 0.0
    %966 = vmatprep.subr.mxu0 0.0
    %967 = vmatpush1.msra.mxu0 0.0
    %968 = vmatprep.subr.mxu0 0.0
    %969 = vmatpush1.msra.mxu0 0.0
    %970 = vmatprep.subr.mxu0 0.0
    %971 = vmatpush1.msra.mxu0 0.0
    %972 = vmatprep.subr.mxu0 0.0
    %973 = vmatpush1.msra.mxu0 0.0
    %974 = vmatprep.subr.mxu0 0.0
    %975 = vmatpush1.msra.mxu0 0.0
    %976 = vmatprep.subr.mxu0 0.0
    %977 = vmatpush1.msra.mxu0 0.0
    %978 = vmatprep.subr.mxu0 0.0
    %979 = vmatpush1.msra.mxu0 0.0
    %980 = vmatprep.subr.mxu0 0.0
    %981 = vmatpush1.msra.mxu0 0.0
    %982 = vmatprep.subr.mxu0 0.0
    %983 = vmatpush1.msra.mxu0 0.0
    %984 = vmatprep.subr.mxu0 0.0
    %985 = vmatpush1.msra.mxu0 0.0
    %986 = vmatprep.subr.mxu0 0.0
    %987 = vmatpush1.msra.mxu0 0.0
    %988 = vmatprep.subr.mxu0 0.0
    %989 = vmatpush1.msra.mxu0 0.0
    %990 = vmatprep.subr.mxu0 0.0
    %991 = vmatpush1.msra.mxu0 0.0
    %992 = vmatprep.mubr.f32.mxu0 0.0
    %993 = vmatmul.mubr.f32.gmra.mrb[0].mxu0 %v287
    %v994 = vpop.f32.mrb[0].mxu0
    %v995 = vadd.f32 %v235, %v994
    %v996 = vpop.f32.mrb[0].mxu0
    %v997 = vadd.f32 %v239, %v996
    %998 = vdwg.mxu0
    %999 = vmatprep.subr.mxu0 %v73
    %1000 = vmatpush1.msra.mxu0 %v72
    %1001 = vmatprep.subr.mxu0 %v98
    %1002 = vmatpush1.msra.mxu0 %v97
    %1003 = vmatprep.subr.mxu0 %v123
    %1004 = vmatpush1.msra.mxu0 %v122
    %1005 = vmatprep.subr.mxu0 %v148
    %1006 = vmatpush1.msra.mxu0 %v147
    %1007 = vmatprep.subr.mxu0 0.0
    %1008 = vmatpush1.msra.mxu0 0.0
    %1009 = vmatprep.subr.mxu0 0.0
    %1010 = vmatpush1.msra.mxu0 0.0
    %1011 = vmatprep.subr.mxu0 0.0
    %1012 = vmatpush1.msra.mxu0 0.0
    %1013 = vmatprep.subr.mxu0 0.0
    %1014 = vmatpush1.msra.mxu0 0.0
    %1015 = vmatprep.subr.mxu0 0.0
    %1016 = vmatpush1.msra.mxu0 0.0
    %1017 = vmatprep.subr.mxu0 0.0
    %1018 = vmatpush1.msra.mxu0 0.0
    %1019 = vmatprep.subr.mxu0 0.0
    %1020 = vmatpush1.msra.mxu0 0.0
    %1021 = vmatprep.subr.mxu0 0.0
    %1022 = vmatpush1.msra.mxu0 0.0
    %1023 = vmatprep.subr.mxu0 0.0
    %1024 = vmatpush1.msra.mxu0 0.0
    %1025 = vmatprep.subr.mxu0 0.0
    %1026 = vmatpush1.msra.mxu0 0.0
    %1027 = vmatprep.subr.mxu0 0.0
    %1028 = vmatpush1.msra.mxu0 0.0
    %1029 = vmatprep.subr.mxu0 0.0
    %1030 = vmatpush1.msra.mxu0 0.0
    %1031 = vmatprep.subr.mxu0 0.0
    %1032 = vmatpush1.msra.mxu0 0.0
    %1033 = vmatprep.subr.mxu0 0.0
    %1034 = vmatpush1.msra.mxu0 0.0
    %1035 = vmatprep.subr.mxu0 0.0
    %1036 = vmatpush1.msra.mxu0 0.0
    %1037 = vmatprep.subr.mxu0 0.0
    %1038 = vmatpush1.msra.mxu0 0.0
    %1039 = vmatprep.subr.mxu0 0.0
    %1040 = vmatpush1.msra.mxu0 0.0
    %1041 = vmatprep.subr.mxu0 0.0
    %1042 = vmatpush1.msra.mxu0 0.0
    %1043 = vmatprep.subr.mxu0 0.0
    %1044 = vmatpush1.msra.mxu0 0.0
    %1045 = vmatprep.subr.mxu0 0.0
    %1046 = vmatpush1.msra.mxu0 0.0
    %1047 = vmatprep.subr.mxu0 0.0
    %1048 = vmatpush1.msra.mxu0 0.0
    %1049 = vmatprep.subr.mxu0 0.0
    %1050 = vmatpush1.msra.mxu0 0.0
    %1051 = vmatprep.subr.mxu0 0.0
    %1052 = vmatpush1.msra.mxu0 0.0
    %1053 = vmatprep.subr.mxu0 0.0
    %1054 = vmatpush1.msra.mxu0 0.0
    %1055 = vmatprep.subr.mxu0 0.0
    %1056 = vmatpush1.msra.mxu0 0.0
    %1057 = vmatprep.subr.mxu0 0.0
    %1058 = vmatpush1.msra.mxu0 0.0
    %1059 = vmatprep.subr.mxu0 0.0
    %1060 = vmatpush1.msra.mxu0 0.0
    %1061 = vmatprep.subr.mxu0 0.0
    %1062 = vmatpush1.msra.mxu0 0.0
    %1063 = vmatprep.mubr.f32.mxu0 0.0
    %1064 = vmatmul.mubr.f32.gmra.mrb[0].mxu0 %v287
    %v1065 = vpop.f32.mrb[0].mxu0
    %v1066 = vadd.f32 %v243, %v1065
    %v1067 = vpop.f32.mrb[0].mxu0
    %v1068 = vadd.f32 %v247, %v1067
    %1069 = vdwg.mxu0
    %1070 = vmatprep.subr.mxu0 %v75
    %1071 = vmatpush1.msra.mxu0 %v74
    %1072 = vmatprep.subr.mxu0 %v100
    %1073 = vmatpush1.msra.mxu0 %v99
    %1074 = vmatprep.subr.mxu0 %v125
    %1075 = vmatpush1.msra.mxu0 %v124
    %1076 = vmatprep.subr.mxu0 %v150
    %1077 = vmatpush1.msra.mxu0 %v149
    %1078 = vmatprep.subr.mxu0 0.0
    %1079 = vmatpush1.msra.mxu0 0.0
    %1080 = vmatprep.subr.mxu0 0.0
    %1081 = vmatpush1.msra.mxu0 0.0
    %1082 = vmatprep.subr.mxu0 0.0
    %1083 = vmatpush1.msra.mxu0 0.0
    %1084 = vmatprep.subr.mxu0 0.0
    %1085 = vmatpush1.msra.mxu0 0.0
    %1086 = vmatprep.subr.mxu0 0.0
    %1087 = vmatpush1.msra.mxu0 0.0
    %1088 = vmatprep.subr.mxu0 0.0
    %1089 = vmatpush1.msra.mxu0 0.0
    %1090 = vmatprep.subr.mxu0 0.0
    %1091 = vmatpush1.msra.mxu0 0.0
    %1092 = vmatprep.subr.mxu0 0.0
    %1093 = vmatpush1.msra.mxu0 0.0
    %1094 = vmatprep.subr.mxu0 0.0
    %1095 = vmatpush1.msra.mxu0 0.0
    %1096 = vmatprep.subr.mxu0 0.0
    %1097 = vmatpush1.msra.mxu0 0.0
    %1098 = vmatprep.subr.mxu0 0.0
    %1099 = vmatpush1.msra.mxu0 0.0
    %1100 = vmatprep.subr.mxu0 0.0
    %1101 = vmatpush1.msra.mxu0 0.0
    %1102 = vmatprep.subr.mxu0 0.0
    %1103 = vmatpush1.msra.mxu0 0.0
    %1104 = vmatprep.subr.mxu0 0.0
    %1105 = vmatpush1.msra.mxu0 0.0
    %1106 = vmatprep.subr.mxu0 0.0
    %1107 = vmatpush1.msra.mxu0 0.0
    %1108 = vmatprep.subr.mxu0 0.0
    %1109 = vmatpush1.msra.mxu0 0.0
    %1110 = vmatprep.subr.mxu0 0.0
    %1111 = vmatpush1.msra.mxu0 0.0
    %1112 = vmatprep.subr.mxu0 0.0
    %1113 = vmatpush1.msra.mxu0 0.0
    %1114 = vmatprep.subr.mxu0 0.0
    %1115 = vmatpush1.msra.mxu0 0.0
    %1116 = vmatprep.subr.mxu0 0.0
    %1117 = vmatpush1.msra.mxu0 0.0
    %1118 = vmatprep.subr.mxu0 0.0
    %1119 = vmatpush1.msra.mxu0 0.0
    %1120 = vmatprep.subr.mxu0 0.0
    %1121 = vmatpush1.msra.mxu0 0.0
    %1122 = vmatprep.subr.mxu0 0.0
    %1123 = vmatpush1.msra.mxu0 0.0
    %1124 = vmatprep.subr.mxu0 0.0
    %1125 = vmatpush1.msra.mxu0 0.0
    %1126 = vmatprep.subr.mxu0 0.0
    %1127 = vmatpush1.msra.mxu0 0.0
    %1128 = vmatprep.subr.mxu0 0.0
    %1129 = vmatpush1.msra.mxu0 0.0
    %1130 = vmatprep.subr.mxu0 0.0
    %1131 = vmatpush1.msra.mxu0 0.0
    %1132 = vmatprep.subr.mxu0 0.0
    %1133 = vmatpush1.msra.mxu0 0.0
    %1134 = vmatprep.mubr.f32.mxu0 0.0
    %1135 = vmatmul.mubr.f32.gmra.mrb[0].mxu0 %v287
    %v1136 = vpop.f32.mrb[0].mxu0
    %v1137 = vadd.f32 %v251, %v1136
    %v1138 = vpop.f32.mrb[0].mxu0
    %v1139 = vadd.f32 %v255, %v1138
    %1140 = vdwg.mxu0
    %1141 = vmatprep.subr.mxu0 0.0
    %1142 = vmatpush1.msra.mxu0 %v76
    %1143 = vmatprep.subr.mxu0 0.0
    %1144 = vmatpush1.msra.mxu0 %v101
    %1145 = vmatprep.subr.mxu0 0.0
    %1146 = vmatpush1.msra.mxu0 %v126
    %1147 = vmatprep.subr.mxu0 0.0
    %1148 = vmatpush1.msra.mxu0 %v151
    %1149 = vmatprep.subr.mxu0 0.0
    %1150 = vmatpush1.msra.mxu0 0.0
    %1151 = vmatprep.subr.mxu0 0.0
    %1152 = vmatpush1.msra.mxu0 0.0
    %1153 = vmatprep.subr.mxu0 0.0
    %1154 = vmatpush1.msra.mxu0 0.0
    %1155 = vmatprep.subr.mxu0 0.0
    %1156 = vmatpush1.msra.mxu0 0.0
    %1157 = vmatprep.subr.mxu0 0.0
    %1158 = vmatpush1.msra.mxu0 0.0
    %1159 = vmatprep.subr.mxu0 0.0
    %1160 = vmatpush1.msra.mxu0 0.0
    %1161 = vmatprep.subr.mxu0 0.0
    %1162 = vmatpush1.msra.mxu0 0.0
    %1163 = vmatprep.subr.mxu0 0.0
    %1164 = vmatpush1.msra.mxu0 0.0
    %1165 = vmatprep.subr.mxu0 0.0
    %1166 = vmatpush1.msra.mxu0 0.0
    %1167 = vmatprep.subr.mxu0 0.0
    %1168 = vmatpush1.msra.mxu0 0.0
    %1169 = vmatprep.subr.mxu0 0.0
    %1170 = vmatpush1.msra.mxu0 0.0
    %1171 = vmatprep.subr.mxu0 0.0
    %1172 = vmatpush1.msra.mxu0 0.0
    %1173 = vmatprep.subr.mxu0 0.0
    %1174 = vmatpush1.msra.mxu0 0.0
    %1175 = vmatprep.subr.mxu0 0.0
    %1176 = vmatpush1.msra.mxu0 0.0
    %1177 = vmatprep.subr.mxu0 0.0
    %1178 = vmatpush1.msra.mxu0 0.0
    %1179 = vmatprep.subr.mxu0 0.0
    %1180 = vmatpush1.msra.mxu0 0.0
    %1181 = vmatprep.subr.mxu0 0.0
    %1182 = vmatpush1.msra.mxu0 0.0
    %1183 = vmatprep.subr.mxu0 0.0
    %1184 = vmatpush1.msra.mxu0 0.0
    %1185 = vmatprep.subr.mxu0 0.0
    %1186 = vmatpush1.msra.mxu0 0.0
    %1187 = vmatprep.subr.mxu0 0.0
    %1188 = vmatpush1.msra.mxu0 0.0
    %1189 = vmatprep.subr.mxu0 0.0
    %1190 = vmatpush1.msra.mxu0 0.0
    %1191 = vmatprep.subr.mxu0 0.0
    %1192 = vmatpush1.msra.mxu0 0.0
    %1193 = vmatprep.subr.mxu0 0.0
    %1194 = vmatpush1.msra.mxu0 0.0
    %1195 = vmatprep.subr.mxu0 0.0
    %1196 = vmatpush1.msra.mxu0 0.0
    %1197 = vmatprep.subr.mxu0 0.0
    %1198 = vmatpush1.msra.mxu0 0.0
    %1199 = vmatprep.subr.mxu0 0.0
    %1200 = vmatpush1.msra.mxu0 0.0
    %1201 = vmatprep.subr.mxu0 0.0
    %1202 = vmatpush1.msra.mxu0 0.0
    %1203 = vmatprep.subr.mxu0 0.0
    %1204 = vmatpush1.msra.mxu0 0.0
    %1205 = vmatprep.mubr.f32.mxu0 0.0
    %1206 = vmatmul.mubr.f32.gmra.mrb[0].mxu0 %v287
    %v1207 = vpop.f32.mrb[0].mxu0
    %v1208 = vadd.f32 %v259, %v1207
    %v1209 = vpop.f32.mrb[0].mxu0
    %1210 = vdwg.mxu0
    %v1211 = vmax.f32 %v356, 0.0
    %v1212 = vmax.f32 %v358, 0.0
    %v1213 = vmax.f32 %v427, 0.0
    %v1214 = vmax.f32 %v429, 0.0
    %v1215 = vmax.f32 %v498, 0.0
    %v1216 = vmax.f32 %v500, 0.0
    %v1217 = vmax.f32 %v569, 0.0
    %v1218 = vmax.f32 %v571, 0.0
    %v1219 = vmax.f32 %v640, 0.0
    %v1220 = vmax.f32 %v642, 0.0
    %v1221 = vmax.f32 %v711, 0.0
    %v1222 = vmax.f32 %v713, 0.0
    %v1223 = vmax.f32 %v782, 0.0
    %v1224 = vmax.f32 %v784, 0.0
    %v1225 = vmax.f32 %v853, 0.0
    %v1226 = vmax.f32 %v855, 0.0
    %v1227 = vmax.f32 %v924, 0.0
    %v1228 = vmax.f32 %v926, 0.0
    %v1229 = vmax.f32 %v995, 0.0
    %v1230 = vmax.f32 %v997, 0.0
    %v1231 = vmax.f32 %v1066, 0.0
    %v1232 = vmax.f32 %v1068, 0.0
    %v1233 = vmax.f32 %v1137, 0.0
    %v1234 = vmax.f32 %v1139, 0.0
    %v1235 = vmax.f32 %v1208, 0.0
    %v1261 = vcombine.low %v1211, %v1212
    %v1262 = vcombine.low %v1213, %v1214
    %v1264 = vunpack.c.l.s4 1983009808
    %v1265 = vunpack.c.0.s8 %v1264
    %v1266 = vlaneseq
    %v1267 = vshrl.u32 %v1266, 7
    %v1268 = vsub.s32 %v1265, %v1267
    %v1269 = vrot.slane %v1261, %v1268
    %v1271 = vunpack.c.l.s4 1983009808
    %v1272 = vunpack.c.0.s8 %v1271
    %v1273 = vlaneseq
    %v1274 = vshrl.u32 %v1273, 7
    %v1275 = vsub.s32 %v1272, %v1274
    %v1276 = vrot.slane %v1262, %v1275
    %v1277 = vcombine.low %v1269, %v1276
    %v1278 = vcombine.low %v1215, %v1216
    %v1279 = vcombine.low %v1217, %v1218
    %v1281 = vunpack.c.l.s4 1983009808
    %v1282 = vunpack.c.0.s8 %v1281
    %v1283 = vlaneseq
    %v1284 = vshrl.u32 %v1283, 7
    %v1285 = vsub.s32 %v1282, %v1284
    %v1286 = vrot.slane %v1278, %v1285
    %v1288 = vunpack.c.l.s4 1983009808
    %v1289 = vunpack.c.0.s8 %v1288
    %v1290 = vlaneseq
    %v1291 = vshrl.u32 %v1290, 7
    %v1292 = vsub.s32 %v1289, %v1291
    %v1293 = vrot.slane %v1279, %v1292
    %v1294 = vcombine.low %v1286, %v1293
    %v1295 = vcombine.low %v1219, %v1220
    %v1296 = vcombine.low %v1221, %v1222
    %v1298 = vunpack.c.l.s4 1983009808
    %v1299 = vunpack.c.0.s8 %v1298
    %v1300 = vlaneseq
    %v1301 = vshrl.u32 %v1300, 7
    %v1302 = vsub.s32 %v1299, %v1301
    %v1303 = vrot.slane %v1295, %v1302
    %v1305 = vunpack.c.l.s4 1983009808
    %v1306 = vunpack.c.0.s8 %v1305
    %v1307 = vlaneseq
    %v1308 = vshrl.u32 %v1307, 7
    %v1309 = vsub.s32 %v1306, %v1308
    %v1310 = vrot.slane %v1296, %v1309
    %v1311 = vcombine.low %v1303, %v1310
    %v1312 = vcombine.low %v1223, %v1224
    %v1313 = vcombine.low %v1225, %v1226
    %v1315 = vunpack.c.l.s4 1983009808
    %v1316 = vunpack.c.0.s8 %v1315
    %v1317 = vlaneseq
    %v1318 = vshrl.u32 %v1317, 7
    %v1319 = vsub.s32 %v1316, %v1318
    %v1320 = vrot.slane %v1312, %v1319
    %v1322 = vunpack.c.l.s4 1983009808
    %v1323 = vunpack.c.0.s8 %v1322
    %v1324 = vlaneseq
    %v1325 = vshrl.u32 %v1324, 7
    %v1326 = vsub.s32 %v1323, %v1325
    %v1327 = vrot.slane %v1313, %v1326
    %v1328 = vcombine.low %v1320, %v1327
    %v1329 = vcombine.low %v1227, %v1228
    %v1330 = vcombine.low %v1229, %v1230
    %v1332 = vunpack.c.l.s4 1983009808
    %v1333 = vunpack.c.0.s8 %v1332
    %v1334 = vlaneseq
    %v1335 = vshrl.u32 %v1334, 7
    %v1336 = vsub.s32 %v1333, %v1335
    %v1337 = vrot.slane %v1329, %v1336
    %v1339 = vunpack.c.l.s4 1983009808
    %v1340 = vunpack.c.0.s8 %v1339
    %v1341 = vlaneseq
    %v1342 = vshrl.u32 %v1341, 7
    %v1343 = vsub.s32 %v1340, %v1342
    %v1344 = vrot.slane %v1330, %v1343
    %v1345 = vcombine.low %v1337, %v1344
    %v1346 = vcombine.low %v1231, %v1232
    %v1347 = vcombine.low %v1233, %v1234
    %v1349 = vunpack.c.l.s4 1983009808
    %v1350 = vunpack.c.0.s8 %v1349
    %v1351 = vlaneseq
    %v1352 = vshrl.u32 %v1351, 7
    %v1353 = vsub.s32 %v1350, %v1352
    %v1354 = vrot.slane %v1346, %v1353
    %v1356 = vunpack.c.l.s4 1983009808
    %v1357 = vunpack.c.0.s8 %v1356
    %v1358 = vlaneseq
    %v1359 = vshrl.u32 %v1358, 7
    %v1360 = vsub.s32 %v1357, %v1359
    %v1361 = vrot.slane %v1347, %v1360
    %v1362 = vcombine.low %v1354, %v1361
    %v1364 = vunpack.c.l.s4 1983009808
    %v1365 = vunpack.c.0.s8 %v1364
    %v1366 = vlaneseq
    %v1367 = vshrl.u32 %v1366, 7
    %v1368 = vsub.s32 %v1365, %v1367
    %v1369 = vrot.slane %v1235, %v1368
    %1377 = vst [vmem:[%s3] sm:$0xff] %v1277
    %1378 = vst [vmem:[%s3 + $0x8] sm:$0xff] %v1294
    %1379 = vst [vmem:[%s3 + $0x10] sm:$0xff] %v1311
    %1380 = vst [vmem:[%s3 + $0x18] sm:$0xff] %v1328
    %1381 = vst [vmem:[%s3 + $0x20] sm:$0xff] %v1345
    %1382 = vst [vmem:[%s3 + $0x28] sm:$0xff] %v1362
    %vm1383 = vcmask 517120
    %1384 = vst.msk [vmem:[%s3 + $0x30] sm:$0x3] %vm1383, %v1369
    // Predicated region
    $region26: #{generator_forward.4} parent=1 // pred_check
      _
    $region27: #{generator_forward.4} parent=1 // pred_check_branch
      %1386 = sbr.rel (0) target = $region29
    $region28: #{generator_forward.4} parent=1 // pred_region
      _
    $region29: #{generator_forward.4} parent=1 // pred_fallthru
      _
    // Predicated region
    $region30: #{generator_forward.4} parent=1 // pred_check
      _
    $region31: #{generator_forward.4} parent=1 // pred_check_branch
      %1388 = sbr.rel (0) target = $region33
    $region32: #{generator_forward.4} parent=1 // pred_region
      _
    $region33: #{generator_forward.4} parent=1 // pred_fallthru
      _
    %1389 = vsyncpa [#allocation3], 1
    %1390 = vsyncpa [#allocation5], 1

// kernel: generator_forward.5
$region0: #{generator_forward.5}
  #allocation0 [shape = 'u32[]', space=smem, size = 0x4, offset = 0x4, fixed_abs, tag = 'smem constant byte address 0x4 - core index']
  #allocation1 [shape = 'u32[144,128]{1,0:T(1,128)}', space=vmem, size = 0x12000, scoped, tag = 'internal scratch']
  %s0 = inlined_call_operand.vmem [shape: f32[32,1024], index: 0, kind: input, shape index: {}]
  %s1 = inlined_call_operand.vmem [shape: f32[1024,512], index: 1, kind: input, shape index: {}]
  %s2 = inlined_call_operand.vmem [shape: f32[32,1], index: 2, kind: input, shape index: {}]
  %s3 = inlined_call_operand.vmem [shape: f32[32,512], index: 3, kind: output, shape index: {}]
  %s4 = sld [smem:[#allocation0]]
  $region22: #{generator_forward.5} parent=0
    _
  %s6 = ssub.s32 1, %s4
  %s7 = scalar_select 0, %s6, %s4
  // Predicated region
  $region2: #{generator_forward.5} parent=0 // pred_check
    _
  $region3: #{generator_forward.5} parent=0 // pred_check_branch
    %9 = sbr.rel (0) target = $region5
  $region4: #{generator_forward.5} parent=0 // pred_region
    _
  $region5: #{generator_forward.5} parent=0 // pred_fallthru
    _
  // Predicated region
  $region6: #{generator_forward.5} parent=0 // pred_check
    _
  $region7: #{generator_forward.5} parent=0 // pred_check_branch
    %11 = sbr.rel (0) target = $region9
  $region8: #{generator_forward.5} parent=0 // pred_region
    _
  $region9: #{generator_forward.5} parent=0 // pred_fallthru
    _
  // Predicated region
  $region10: #{generator_forward.5} parent=0 // pred_check
    _
  $region11: #{generator_forward.5} parent=0 // pred_check_branch
    %13 = sbr.rel (0) target = $region13
  $region12: #{generator_forward.5} parent=0 // pred_region
    _
  $region13: #{generator_forward.5} parent=0 // pred_fallthru
    _
  %v14 = vld [vmem:[%s0] sm:$0xff]
  %v15 = vld [vmem:[%s0 + $0x8] sm:$0xff]
  %v16 = vld [vmem:[%s0 + $0x10] sm:$0xff]
  %v17 = vld [vmem:[%s0 + $0x18] sm:$0xff]
  %v18 = vld [vmem:[%s0 + $0x20] sm:$0xff]
  %v19 = vld [vmem:[%s0 + $0x28] sm:$0xff]
  %v20 = vld [vmem:[%s0 + $0x30] sm:$0xff]
  %v21 = vld [vmem:[%s0 + $0x38] sm:$0xff]
  %v22 = vld [vmem:[%s0 + $0x40] sm:$0xff]
  %v23 = vld [vmem:[%s0 + $0x48] sm:$0xff]
  %v24 = vld [vmem:[%s0 + $0x50] sm:$0xff]
  %v25 = vld [vmem:[%s0 + $0x58] sm:$0xff]
  %v26 = vld [vmem:[%s0 + $0x60] sm:$0xff]
  %v27 = vld [vmem:[%s0 + $0x68] sm:$0xff]
  %v28 = vld [vmem:[%s0 + $0x70] sm:$0xff]
  %v29 = vld [vmem:[%s0 + $0x78] sm:$0xff]
  %v30 = vld [vmem:[%s0 + $0x80] sm:$0xff]
  %v31 = vld [vmem:[%s0 + $0x88] sm:$0xff]
  %v32 = vld [vmem:[%s0 + $0x90] sm:$0xff]
  %v33 = vld [vmem:[%s0 + $0x98] sm:$0xff]
  %v34 = vld [vmem:[%s0 + $0xa0] sm:$0xff]
  %v35 = vld [vmem:[%s0 + $0xa8] sm:$0xff]
  %v36 = vld [vmem:[%s0 + $0xb0] sm:$0xff]
  %v37 = vld [vmem:[%s0 + $0xb8] sm:$0xff]
  %v38 = vld [vmem:[%s0 + $0xc0] sm:$0xff]
  %v39 = vld [vmem:[%s0 + $0xc8] sm:$0xff]
  %v40 = vld [vmem:[%s0 + $0xd0] sm:$0xff]
  %v41 = vld [vmem:[%s0 + $0xd8] sm:$0xff]
  %v42 = vld [vmem:[%s0 + $0xe0] sm:$0xff]
  %v43 = vld [vmem:[%s0 + $0xe8] sm:$0xff]
  %v44 = vld [vmem:[%s0 + $0xf0] sm:$0xff]
  %v45 = vld [vmem:[%s0 + $0xf8] sm:$0xff]
  %v46 = vld [vmem:[%s1] sm:$0xff]
  %v47 = vld [vmem:[%s1 + $0x8] sm:$0xff]
  %v48 = vld [vmem:[%s1 + $0x10] sm:$0xff]
  %v49 = vld [vmem:[%s1 + $0x18] sm:$0xff]
  %v50 = vld [vmem:[%s1 + $0x20] sm:$0xff]
  %v51 = vld [vmem:[%s1 + $0x28] sm:$0xff]
  %v52 = vld [vmem:[%s1 + $0x30] sm:$0xff]
  %v53 = vld [vmem:[%s1 + $0x38] sm:$0xff]
  %v54 = vld [vmem:[%s1 + $0x40] sm:$0xff]
  %v55 = vld [vmem:[%s1 + $0x48] sm:$0xff]
  %v56 = vld [vmem:[%s1 + $0x50] sm:$0xff]
  %v57 = vld [vmem:[%s1 + $0x58] sm:$0xff]
  %v58 = vld [vmem:[%s1 + $0x60] sm:$0xff]
  %v59 = vld [vmem:[%s1 + $0x68] sm:$0xff]
  %v60 = vld [vmem:[%s1 + $0x70] sm:$0xff]
  %v61 = vld [vmem:[%s1 + $0x78] sm:$0xff]
  %v62 = vld [vmem:[%s1 + $0x80] sm:$0xff]
  %v63 = vld [vmem:[%s1 + $0x88] sm:$0xff]
  %v64 = vld [vmem:[%s1 + $0x90] sm:$0xff]
  %v65 = vld [vmem:[%s1 + $0x98] sm:$0xff]
  %v66 = vld [vmem:[%s1 + $0xa0] sm:$0xff]
  %v67 = vld [vmem:[%s1 + $0xa8] sm:$0xff]
  %v68 = vld [vmem:[%s1 + $0xb0] sm:$0xff]
  %v69 = vld [vmem:[%s1 + $0xb8] sm:$0xff]
  %v70 = vld [vmem:[%s1 + $0xc0] sm:$0xff]
  %v71 = vld [vmem:[%s1 + $0xc8] sm:$0xff]
  %v72 = vld [vmem:[%s1 + $0xd0] sm:$0xff]
  %v73 = vld [vmem:[%s1 + $0xd8] sm:$0xff]
  %v74 = vld [vmem:[%s1 + $0xe0] sm:$0xff]
  %v75 = vld [vmem:[%s1 + $0xe8] sm:$0xff]
  %v76 = vld [vmem:[%s1 + $0xf0] sm:$0xff]
  %v77 = vld [vmem:[%s1 + $0xf8] sm:$0xff]
  %v78 = vld [vmem:[%s1 + $0x100] sm:$0xff]
  %v79 = vld [vmem:[%s1 + $0x108] sm:$0xff]
  %v80 = vld [vmem:[%s1 + $0x110] sm:$0xff]
  %v81 = vld [vmem:[%s1 + $0x118] sm:$0xff]
  %v82 = vld [vmem:[%s1 + $0x120] sm:$0xff]
  %v83 = vld [vmem:[%s1 + $0x128] sm:$0xff]
  %v84 = vld [vmem:[%s1 + $0x130] sm:$0xff]
  %v85 = vld [vmem:[%s1 + $0x138] sm:$0xff]
  %v86 = vld [vmem:[%s1 + $0x140] sm:$0xff]
  %v87 = vld [vmem:[%s1 + $0x148] sm:$0xff]
  %v88 = vld [vmem:[%s1 + $0x150] sm:$0xff]
  %v89 = vld [vmem:[%s1 + $0x158] sm:$0xff]
  %v90 = vld [vmem:[%s1 + $0x160] sm:$0xff]
  %v91 = vld [vmem:[%s1 + $0x168] sm:$0xff]
  %v92 = vld [vmem:[%s1 + $0x170] sm:$0xff]
  %v93 = vld [vmem:[%s1 + $0x178] sm:$0xff]
  %v94 = vld [vmem:[%s1 + $0x180] sm:$0xff]
  %v95 = vld [vmem:[%s1 + $0x188] sm:$0xff]
  %v96 = vld [vmem:[%s1 + $0x190] sm:$0xff]
  %v97 = vld [vmem:[%s1 + $0x198] sm:$0xff]
  %v98 = vld [vmem:[%s1 + $0x1a0] sm:$0xff]
  %v99 = vld [vmem:[%s1 + $0x1a8] sm:$0xff]
  %v100 = vld [vmem:[%s1 + $0x1b0] sm:$0xff]
  %v101 = vld [vmem:[%s1 + $0x1b8] sm:$0xff]
  %v102 = vld [vmem:[%s1 + $0x1c0] sm:$0xff]
  %v103 = vld [vmem:[%s1 + $0x1c8] sm:$0xff]
  %v104 = vld [vmem:[%s1 + $0x1d0] sm:$0xff]
  %v105 = vld [vmem:[%s1 + $0x1d8] sm:$0xff]
  %v106 = vld [vmem:[%s1 + $0x1e0] sm:$0xff]
  %v107 = vld [vmem:[%s1 + $0x1e8] sm:$0xff]
  %v108 = vld [vmem:[%s1 + $0x1f0] sm:$0xff]
  %v109 = vld [vmem:[%s1 + $0x1f8] sm:$0xff]
  %v110 = vld [vmem:[%s1 + $0x200] sm:$0xff]
  %v111 = vld [vmem:[%s1 + $0x208] sm:$0xff]
  %v112 = vld [vmem:[%s1 + $0x210] sm:$0xff]
  %v113 = vld [vmem:[%s1 + $0x218] sm:$0xff]
  %v114 = vld [vmem:[%s1 + $0x220] sm:$0xff]
  %v115 = vld [vmem:[%s1 + $0x228] sm:$0xff]
  %v116 = vld [vmem:[%s1 + $0x230] sm:$0xff]
  %v117 = vld [vmem:[%s1 + $0x238] sm:$0xff]
  %v118 = vld [vmem:[%s1 + $0x240] sm:$0xff]
  %v119 = vld [vmem:[%s1 + $0x248] sm:$0xff]
  %v120 = vld [vmem:[%s1 + $0x250] sm:$0xff]
  %v121 = vld [vmem:[%s1 + $0x258] sm:$0xff]
  %v122 = vld [vmem:[%s1 + $0x260] sm:$0xff]
  %v123 = vld [vmem:[%s1 + $0x268] sm:$0xff]
  %v124 = vld [vmem:[%s1 + $0x270] sm:$0xff]
  %v125 = vld [vmem:[%s1 + $0x278] sm:$0xff]
  %v126 = vld [vmem:[%s1 + $0x280] sm:$0xff]
  %v127 = vld [vmem:[%s1 + $0x288] sm:$0xff]
  %v128 = vld [vmem:[%s1 + $0x290] sm:$0xff]
  %v129 = vld [vmem:[%s1 + $0x298] sm:$0xff]
  %v130 = vld [vmem:[%s1 + $0x2a0] sm:$0xff]
  %v131 = vld [vmem:[%s1 + $0x2a8] sm:$0xff]
  %v132 = vld [vmem:[%s1 + $0x2b0] sm:$0xff]
  %v133 = vld [vmem:[%s1 + $0x2b8] sm:$0xff]
  %v134 = vld [vmem:[%s1 + $0x2c0] sm:$0xff]
  %v135 = vld [vmem:[%s1 + $0x2c8] sm:$0xff]
  %v136 = vld [vmem:[%s1 + $0x2d0] sm:$0xff]
  %v137 = vld [vmem:[%s1 + $0x2d8] sm:$0xff]
  %v138 = vld [vmem:[%s1 + $0x2e0] sm:$0xff]
  %v139 = vld [vmem:[%s1 + $0x2e8] sm:$0xff]
  %v140 = vld [vmem:[%s1 + $0x2f0] sm:$0xff]
  %v141 = vld [vmem:[%s1 + $0x2f8] sm:$0xff]
  %v142 = vld [vmem:[%s1 + $0x300] sm:$0xff]
  %v143 = vld [vmem:[%s1 + $0x308] sm:$0xff]
  %v144 = vld [vmem:[%s1 + $0x310] sm:$0xff]
  %v145 = vld [vmem:[%s1 + $0x318] sm:$0xff]
  %v146 = vld [vmem:[%s1 + $0x320] sm:$0xff]
  %v147 = vld [vmem:[%s1 + $0x328] sm:$0xff]
  %v148 = vld [vmem:[%s1 + $0x330] sm:$0xff]
  %v149 = vld [vmem:[%s1 + $0x338] sm:$0xff]
  %v150 = vld [vmem:[%s1 + $0x340] sm:$0xff]
  %v151 = vld [vmem:[%s1 + $0x348] sm:$0xff]
  %v152 = vld [vmem:[%s1 + $0x350] sm:$0xff]
  %v153 = vld [vmem:[%s1 + $0x358] sm:$0xff]
  %v154 = vld [vmem:[%s1 + $0x360] sm:$0xff]
  %v155 = vld [vmem:[%s1 + $0x368] sm:$0xff]
  %v156 = vld [vmem:[%s1 + $0x370] sm:$0xff]
  %v157 = vld [vmem:[%s1 + $0x378] sm:$0xff]
  %v158 = vld [vmem:[%s1 + $0x380] sm:$0xff]
  %v159 = vld [vmem:[%s1 + $0x388] sm:$0xff]
  %v160 = vld [vmem:[%s1 + $0x390] sm:$0xff]
  %v161 = vld [vmem:[%s1 + $0x398] sm:$0xff]
  %v162 = vld [vmem:[%s1 + $0x3a0] sm:$0xff]
  %v163 = vld [vmem:[%s1 + $0x3a8] sm:$0xff]
  %v164 = vld [vmem:[%s1 + $0x3b0] sm:$0xff]
  %v165 = vld [vmem:[%s1 + $0x3b8] sm:$0xff]
  %v166 = vld [vmem:[%s1 + $0x3c0] sm:$0xff]
  %v167 = vld [vmem:[%s1 + $0x3c8] sm:$0xff]
  %v168 = vld [vmem:[%s1 + $0x3d0] sm:$0xff]
  %v169 = vld [vmem:[%s1 + $0x3d8] sm:$0xff]
  %v170 = vld [vmem:[%s1 + $0x3e0] sm:$0xff]
  %v171 = vld [vmem:[%s1 + $0x3e8] sm:$0xff]
  %v172 = vld [vmem:[%s1 + $0x3f0] sm:$0xff]
  %v173 = vld [vmem:[%s1 + $0x3f8] sm:$0xff]
  %v174 = vld [vmem:[%s1 + $0x400] sm:$0xff]
  %v175 = vld [vmem:[%s1 + $0x408] sm:$0xff]
  %v176 = vld [vmem:[%s1 + $0x410] sm:$0xff]
  %v177 = vld [vmem:[%s1 + $0x418] sm:$0xff]
  %v178 = vld [vmem:[%s1 + $0x420] sm:$0xff]
  %v179 = vld [vmem:[%s1 + $0x428] sm:$0xff]
  %v180 = vld [vmem:[%s1 + $0x430] sm:$0xff]
  %v181 = vld [vmem:[%s1 + $0x438] sm:$0xff]
  %v182 = vld [vmem:[%s1 + $0x440] sm:$0xff]
  %v183 = vld [vmem:[%s1 + $0x448] sm:$0xff]
  %v184 = vld [vmem:[%s1 + $0x450] sm:$0xff]
  %v185 = vld [vmem:[%s1 + $0x458] sm:$0xff]
  %v186 = vld [vmem:[%s1 + $0x460] sm:$0xff]
  %v187 = vld [vmem:[%s1 + $0x468] sm:$0xff]
  %v188 = vld [vmem:[%s1 + $0x470] sm:$0xff]
  %v189 = vld [vmem:[%s1 + $0x478] sm:$0xff]
  %v190 = vld [vmem:[%s1 + $0x480] sm:$0xff]
  %v191 = vld [vmem:[%s1 + $0x488] sm:$0xff]
  %v192 = vld [vmem:[%s1 + $0x490] sm:$0xff]
  %v193 = vld [vmem:[%s1 + $0x498] sm:$0xff]
  %v194 = vld [vmem:[%s1 + $0x4a0] sm:$0xff]
  %v195 = vld [vmem:[%s1 + $0x4a8] sm:$0xff]
  %v196 = vld [vmem:[%s1 + $0x4b0] sm:$0xff]
  %v197 = vld [vmem:[%s1 + $0x4b8] sm:$0xff]
  %v198 = vld [vmem:[%s1 + $0x4c0] sm:$0xff]
  %v199 = vld [vmem:[%s1 + $0x4c8] sm:$0xff]
  %v200 = vld [vmem:[%s1 + $0x4d0] sm:$0xff]
  %v201 = vld [vmem:[%s1 + $0x4d8] sm:$0xff]
  %v202 = vld [vmem:[%s1 + $0x4e0] sm:$0xff]
  %v203 = vld [vmem:[%s1 + $0x4e8] sm:$0xff]
  %v204 = vld [vmem:[%s1 + $0x4f0] sm:$0xff]
  %v205 = vld [vmem:[%s1 + $0x4f8] sm:$0xff]
  %v206 = vld [vmem:[%s1 + $0x500] sm:$0xff]
  %v207 = vld [vmem:[%s1 + $0x508] sm:$0xff]
  %v208 = vld [vmem:[%s1 + $0x510] sm:$0xff]
  %v209 = vld [vmem:[%s1 + $0x518] sm:$0xff]
  %v210 = vld [vmem:[%s1 + $0x520] sm:$0xff]
  %v211 = vld [vmem:[%s1 + $0x528] sm:$0xff]
  %v212 = vld [vmem:[%s1 + $0x530] sm:$0xff]
  %v213 = vld [vmem:[%s1 + $0x538] sm:$0xff]
  %v214 = vld [vmem:[%s1 + $0x540] sm:$0xff]
  %v215 = vld [vmem:[%s1 + $0x548] sm:$0xff]
  %v216 = vld [vmem:[%s1 + $0x550] sm:$0xff]
  %v217 = vld [vmem:[%s1 + $0x558] sm:$0xff]
  %v218 = vld [vmem:[%s1 + $0x560] sm:$0xff]
  %v219 = vld [vmem:[%s1 + $0x568] sm:$0xff]
  %v220 = vld [vmem:[%s1 + $0x570] sm:$0xff]
  %v221 = vld [vmem:[%s1 + $0x578] sm:$0xff]
  %v222 = vld [vmem:[%s1 + $0x580] sm:$0xff]
  %v223 = vld [vmem:[%s1 + $0x588] sm:$0xff]
  %v224 = vld [vmem:[%s1 + $0x590] sm:$0xff]
  %v225 = vld [vmem:[%s1 + $0x598] sm:$0xff]
  %v226 = vld [vmem:[%s1 + $0x5a0] sm:$0xff]
  %v227 = vld [vmem:[%s1 + $0x5a8] sm:$0xff]
  %v228 = vld [vmem:[%s1 + $0x5b0] sm:$0xff]
  %v229 = vld [vmem:[%s1 + $0x5b8] sm:$0xff]
  %v230 = vld [vmem:[%s1 + $0x5c0] sm:$0xff]
  %v231 = vld [vmem:[%s1 + $0x5c8] sm:$0xff]
  %v232 = vld [vmem:[%s1 + $0x5d0] sm:$0xff]
  %v233 = vld [vmem:[%s1 + $0x5d8] sm:$0xff]
  %v234 = vld [vmem:[%s1 + $0x5e0] sm:$0xff]
  %v235 = vld [vmem:[%s1 + $0x5e8] sm:$0xff]
  %v236 = vld [vmem:[%s1 + $0x5f0] sm:$0xff]
  %v237 = vld [vmem:[%s1 + $0x5f8] sm:$0xff]
  %v238 = vld [vmem:[%s1 + $0x600] sm:$0xff]
  %v239 = vld [vmem:[%s1 + $0x608] sm:$0xff]
  %v240 = vld [vmem:[%s1 + $0x610] sm:$0xff]
  %v241 = vld [vmem:[%s1 + $0x618] sm:$0xff]
  %v242 = vld [vmem:[%s1 + $0x620] sm:$0xff]
  %v243 = vld [vmem:[%s1 + $0x628] sm:$0xff]
  %v244 = vld [vmem:[%s1 + $0x630] sm:$0xff]
  %v245 = vld [vmem:[%s1 + $0x638] sm:$0xff]
  %v246 = vld [vmem:[%s1 + $0x640] sm:$0xff]
  %v247 = vld [vmem:[%s1 + $0x648] sm:$0xff]
  %v248 = vld [vmem:[%s1 + $0x650] sm:$0xff]
  %v249 = vld [vmem:[%s1 + $0x658] sm:$0xff]
  %v250 = vld [vmem:[%s1 + $0x660] sm:$0xff]
  %v251 = vld [vmem:[%s1 + $0x668] sm:$0xff]
  %v252 = vld [vmem:[%s1 + $0x670] sm:$0xff]
  %v253 = vld [vmem:[%s1 + $0x678] sm:$0xff]
  %v254 = vld [vmem:[%s1 + $0x680] sm:$0xff]
  %v255 = vld [vmem:[%s1 + $0x688] sm:$0xff]
  %v256 = vld [vmem:[%s1 + $0x690] sm:$0xff]
  %v257 = vld [vmem:[%s1 + $0x698] sm:$0xff]
  %v258 = vld [vmem:[%s1 + $0x6a0] sm:$0xff]
  %v259 = vld [vmem:[%s1 + $0x6a8] sm:$0xff]
  %v260 = vld [vmem:[%s1 + $0x6b0] sm:$0xff]
  %v261 = vld [vmem:[%s1 + $0x6b8] sm:$0xff]
  %v262 = vld [vmem:[%s1 + $0x6c0] sm:$0xff]
  %v263 = vld [vmem:[%s1 + $0x6c8] sm:$0xff]
  %v264 = vld [vmem:[%s1 + $0x6d0] sm:$0xff]
  %v265 = vld [vmem:[%s1 + $0x6d8] sm:$0xff]
  %v266 = vld [vmem:[%s1 + $0x6e0] sm:$0xff]
  %v267 = vld [vmem:[%s1 + $0x6e8] sm:$0xff]
  %v268 = vld [vmem:[%s1 + $0x6f0] sm:$0xff]
  %v269 = vld [vmem:[%s1 + $0x6f8] sm:$0xff]
  %v270 = vld [vmem:[%s1 + $0x700] sm:$0xff]
  %v271 = vld [vmem:[%s1 + $0x708] sm:$0xff]
  %v272 = vld [vmem:[%s1 + $0x710] sm:$0xff]
  %v273 = vld [vmem:[%s1 + $0x718] sm:$0xff]
  %v274 = vld [vmem:[%s1 + $0x720] sm:$0xff]
  %v275 = vld [vmem:[%s1 + $0x728] sm:$0xff]
  %v276 = vld [vmem:[%s1 + $0x730] sm:$0xff]
  %v277 = vld [vmem:[%s1 + $0x738] sm:$0xff]
  %v278 = vld [vmem:[%s1 + $0x740] sm:$0xff]
  %v279 = vld [vmem:[%s1 + $0x748] sm:$0xff]
  %v280 = vld [vmem:[%s1 + $0x750] sm:$0xff]
  %v281 = vld [vmem:[%s1 + $0x758] sm:$0xff]
  %v282 = vld [vmem:[%s1 + $0x760] sm:$0xff]
  %v283 = vld [vmem:[%s1 + $0x768] sm:$0xff]
  %v284 = vld [vmem:[%s1 + $0x770] sm:$0xff]
  %v285 = vld [vmem:[%s1 + $0x778] sm:$0xff]
  %v286 = vld [vmem:[%s1 + $0x780] sm:$0xff]
  %v287 = vld [vmem:[%s1 + $0x788] sm:$0xff]
  %v288 = vld [vmem:[%s1 + $0x790] sm:$0xff]
  %v289 = vld [vmem:[%s1 + $0x798] sm:$0xff]
  %v290 = vld [vmem:[%s1 + $0x7a0] sm:$0xff]
  %v291 = vld [vmem:[%s1 + $0x7a8] sm:$0xff]
  %v292 = vld [vmem:[%s1 + $0x7b0] sm:$0xff]
  %v293 = vld [vmem:[%s1 + $0x7b8] sm:$0xff]
  %v294 = vld [vmem:[%s1 + $0x7c0] sm:$0xff]
  %v295 = vld [vmem:[%s1 + $0x7c8] sm:$0xff]
  %v296 = vld [vmem:[%s1 + $0x7d0] sm:$0xff]
  %v297 = vld [vmem:[%s1 + $0x7d8] sm:$0xff]
  %v298 = vld [vmem:[%s1 + $0x7e0] sm:$0xff]
  %v299 = vld [vmem:[%s1 + $0x7e8] sm:$0xff]
  %v300 = vld [vmem:[%s1 + $0x7f0] sm:$0xff]
  %v301 = vld [vmem:[%s1 + $0x7f8] sm:$0xff]
  %v302 = vld [vmem:[%s1 + $0x800] sm:$0xff]
  %v303 = vld [vmem:[%s1 + $0x808] sm:$0xff]
  %v304 = vld [vmem:[%s1 + $0x810] sm:$0xff]
  %v305 = vld [vmem:[%s1 + $0x818] sm:$0xff]
  %v306 = vld [vmem:[%s1 + $0x820] sm:$0xff]
  %v307 = vld [vmem:[%s1 + $0x828] sm:$0xff]
  %v308 = vld [vmem:[%s1 + $0x830] sm:$0xff]
  %v309 = vld [vmem:[%s1 + $0x838] sm:$0xff]
  %v310 = vld [vmem:[%s1 + $0x840] sm:$0xff]
  %v311 = vld [vmem:[%s1 + $0x848] sm:$0xff]
  %v312 = vld [vmem:[%s1 + $0x850] sm:$0xff]
  %v313 = vld [vmem:[%s1 + $0x858] sm:$0xff]
  %v314 = vld [vmem:[%s1 + $0x860] sm:$0xff]
  %v315 = vld [vmem:[%s1 + $0x868] sm:$0xff]
  %v316 = vld [vmem:[%s1 + $0x870] sm:$0xff]
  %v317 = vld [vmem:[%s1 + $0x878] sm:$0xff]
  %v318 = vld [vmem:[%s1 + $0x880] sm:$0xff]
  %v319 = vld [vmem:[%s1 + $0x888] sm:$0xff]
  %v320 = vld [vmem:[%s1 + $0x890] sm:$0xff]
  %v321 = vld [vmem:[%s1 + $0x898] sm:$0xff]
  %v322 = vld [vmem:[%s1 + $0x8a0] sm:$0xff]
  %v323 = vld [vmem:[%s1 + $0x8a8] sm:$0xff]
  %v324 = vld [vmem:[%s1 + $0x8b0] sm:$0xff]
  %v325 = vld [vmem:[%s1 + $0x8b8] sm:$0xff]
  %v326 = vld [vmem:[%s1 + $0x8c0] sm:$0xff]
  %v327 = vld [vmem:[%s1 + $0x8c8] sm:$0xff]
  %v328 = vld [vmem:[%s1 + $0x8d0] sm:$0xff]
  %v329 = vld [vmem:[%s1 + $0x8d8] sm:$0xff]
  %v330 = vld [vmem:[%s1 + $0x8e0] sm:$0xff]
  %v331 = vld [vmem:[%s1 + $0x8e8] sm:$0xff]
  %v332 = vld [vmem:[%s1 + $0x8f0] sm:$0xff]
  %v333 = vld [vmem:[%s1 + $0x8f8] sm:$0xff]
  %v334 = vld [vmem:[%s1 + $0x900] sm:$0xff]
  %v335 = vld [vmem:[%s1 + $0x908] sm:$0xff]
  %v336 = vld [vmem:[%s1 + $0x910] sm:$0xff]
  %v337 = vld [vmem:[%s1 + $0x918] sm:$0xff]
  %v338 = vld [vmem:[%s1 + $0x920] sm:$0xff]
  %v339 = vld [vmem:[%s1 + $0x928] sm:$0xff]
  %v340 = vld [vmem:[%s1 + $0x930] sm:$0xff]
  %v341 = vld [vmem:[%s1 + $0x938] sm:$0xff]
  %v342 = vld [vmem:[%s1 + $0x940] sm:$0xff]
  %v343 = vld [vmem:[%s1 + $0x948] sm:$0xff]
  %v344 = vld [vmem:[%s1 + $0x950] sm:$0xff]
  %v345 = vld [vmem:[%s1 + $0x958] sm:$0xff]
  %v346 = vld [vmem:[%s1 + $0x960] sm:$0xff]
  %v347 = vld [vmem:[%s1 + $0x968] sm:$0xff]
  %v348 = vld [vmem:[%s1 + $0x970] sm:$0xff]
  %v349 = vld [vmem:[%s1 + $0x978] sm:$0xff]
  %v350 = vld [vmem:[%s1 + $0x980] sm:$0xff]
  %v351 = vld [vmem:[%s1 + $0x988] sm:$0xff]
  %v352 = vld [vmem:[%s1 + $0x990] sm:$0xff]
  %v353 = vld [vmem:[%s1 + $0x998] sm:$0xff]
  %v354 = vld [vmem:[%s1 + $0x9a0] sm:$0xff]
  %v355 = vld [vmem:[%s1 + $0x9a8] sm:$0xff]
  %v356 = vld [vmem:[%s1 + $0x9b0] sm:$0xff]
  %v357 = vld [vmem:[%s1 + $0x9b8] sm:$0xff]
  %v358 = vld [vmem:[%s1 + $0x9c0] sm:$0xff]
  %v359 = vld [vmem:[%s1 + $0x9c8] sm:$0xff]
  %v360 = vld [vmem:[%s1 + $0x9d0] sm:$0xff]
  %v361 = vld [vmem:[%s1 + $0x9d8] sm:$0xff]
  %v362 = vld [vmem:[%s1 + $0x9e0] sm:$0xff]
  %v363 = vld [vmem:[%s1 + $0x9e8] sm:$0xff]
  %v364 = vld [vmem:[%s1 + $0x9f0] sm:$0xff]
  %v365 = vld [vmem:[%s1 + $0x9f8] sm:$0xff]
  %v366 = vld [vmem:[%s1 + $0xa00] sm:$0xff]
  %v367 = vld [vmem:[%s1 + $0xa08] sm:$0xff]
  %v368 = vld [vmem:[%s1 + $0xa10] sm:$0xff]
  %v369 = vld [vmem:[%s1 + $0xa18] sm:$0xff]
  %v370 = vld [vmem:[%s1 + $0xa20] sm:$0xff]
  %v371 = vld [vmem:[%s1 + $0xa28] sm:$0xff]
  %v372 = vld [vmem:[%s1 + $0xa30] sm:$0xff]
  %v373 = vld [vmem:[%s1 + $0xa38] sm:$0xff]
  %v374 = vld [vmem:[%s1 + $0xa40] sm:$0xff]
  %v375 = vld [vmem:[%s1 + $0xa48] sm:$0xff]
  %v376 = vld [vmem:[%s1 + $0xa50] sm:$0xff]
  %v377 = vld [vmem:[%s1 + $0xa58] sm:$0xff]
  %v378 = vld [vmem:[%s1 + $0xa60] sm:$0xff]
  %v379 = vld [vmem:[%s1 + $0xa68] sm:$0xff]
  %v380 = vld [vmem:[%s1 + $0xa70] sm:$0xff]
  %v381 = vld [vmem:[%s1 + $0xa78] sm:$0xff]
  %v382 = vld [vmem:[%s1 + $0xa80] sm:$0xff]
  %v383 = vld [vmem:[%s1 + $0xa88] sm:$0xff]
  %v384 = vld [vmem:[%s1 + $0xa90] sm:$0xff]
  %v385 = vld [vmem:[%s1 + $0xa98] sm:$0xff]
  %v386 = vld [vmem:[%s1 + $0xaa0] sm:$0xff]
  %v387 = vld [vmem:[%s1 + $0xaa8] sm:$0xff]
  %v388 = vld [vmem:[%s1 + $0xab0] sm:$0xff]
  %v389 = vld [vmem:[%s1 + $0xab8] sm:$0xff]
  %v390 = vld [vmem:[%s1 + $0xac0] sm:$0xff]
  %v391 = vld [vmem:[%s1 + $0xac8] sm:$0xff]
  %v392 = vld [vmem:[%s1 + $0xad0] sm:$0xff]
  %v393 = vld [vmem:[%s1 + $0xad8] sm:$0xff]
  %v394 = vld [vmem:[%s1 + $0xae0] sm:$0xff]
  %v395 = vld [vmem:[%s1 + $0xae8] sm:$0xff]
  %v396 = vld [vmem:[%s1 + $0xaf0] sm:$0xff]
  %v397 = vld [vmem:[%s1 + $0xaf8] sm:$0xff]
  %v398 = vld [vmem:[%s1 + $0xb00] sm:$0xff]
  %v399 = vld [vmem:[%s1 + $0xb08] sm:$0xff]
  %v400 = vld [vmem:[%s1 + $0xb10] sm:$0xff]
  %v401 = vld [vmem:[%s1 + $0xb18] sm:$0xff]
  %v402 = vld [vmem:[%s1 + $0xb20] sm:$0xff]
  %v403 = vld [vmem:[%s1 + $0xb28] sm:$0xff]
  %v404 = vld [vmem:[%s1 + $0xb30] sm:$0xff]
  %v405 = vld [vmem:[%s1 + $0xb38] sm:$0xff]
  %v406 = vld [vmem:[%s1 + $0xb40] sm:$0xff]
  %v407 = vld [vmem:[%s1 + $0xb48] sm:$0xff]
  %v408 = vld [vmem:[%s1 + $0xb50] sm:$0xff]
  %v409 = vld [vmem:[%s1 + $0xb58] sm:$0xff]
  %v410 = vld [vmem:[%s1 + $0xb60] sm:$0xff]
  %v411 = vld [vmem:[%s1 + $0xb68] sm:$0xff]
  %v412 = vld [vmem:[%s1 + $0xb70] sm:$0xff]
  %v413 = vld [vmem:[%s1 + $0xb78] sm:$0xff]
  %v414 = vld [vmem:[%s1 + $0xb80] sm:$0xff]
  %v415 = vld [vmem:[%s1 + $0xb88] sm:$0xff]
  %v416 = vld [vmem:[%s1 + $0xb90] sm:$0xff]
  %v417 = vld [vmem:[%s1 + $0xb98] sm:$0xff]
  %v418 = vld [vmem:[%s1 + $0xba0] sm:$0xff]
  %v419 = vld [vmem:[%s1 + $0xba8] sm:$0xff]
  %v420 = vld [vmem:[%s1 + $0xbb0] sm:$0xff]
  %v421 = vld [vmem:[%s1 + $0xbb8] sm:$0xff]
  %v422 = vld [vmem:[%s1 + $0xbc0] sm:$0xff]
  %v423 = vld [vmem:[%s1 + $0xbc8] sm:$0xff]
  %v424 = vld [vmem:[%s1 + $0xbd0] sm:$0xff]
  %v425 = vld [vmem:[%s1 + $0xbd8] sm:$0xff]
  %v426 = vld [vmem:[%s1 + $0xbe0] sm:$0xff]
  %v427 = vld [vmem:[%s1 + $0xbe8] sm:$0xff]
  %v428 = vld [vmem:[%s1 + $0xbf0] sm:$0xff]
  %v429 = vld [vmem:[%s1 + $0xbf8] sm:$0xff]
  %v430 = vld [vmem:[%s1 + $0xc00] sm:$0xff]
  %v431 = vld [vmem:[%s1 + $0xc08] sm:$0xff]
  %v432 = vld [vmem:[%s1 + $0xc10] sm:$0xff]
  %v433 = vld [vmem:[%s1 + $0xc18] sm:$0xff]
  %v434 = vld [vmem:[%s1 + $0xc20] sm:$0xff]
  %v435 = vld [vmem:[%s1 + $0xc28] sm:$0xff]
  %v436 = vld [vmem:[%s1 + $0xc30] sm:$0xff]
  %v437 = vld [vmem:[%s1 + $0xc38] sm:$0xff]
  %v438 = vld [vmem:[%s1 + $0xc40] sm:$0xff]
  %v439 = vld [vmem:[%s1 + $0xc48] sm:$0xff]
  %v440 = vld [vmem:[%s1 + $0xc50] sm:$0xff]
  %v441 = vld [vmem:[%s1 + $0xc58] sm:$0xff]
  %v442 = vld [vmem:[%s1 + $0xc60] sm:$0xff]
  %v443 = vld [vmem:[%s1 + $0xc68] sm:$0xff]
  %v444 = vld [vmem:[%s1 + $0xc70] sm:$0xff]
  %v445 = vld [vmem:[%s1 + $0xc78] sm:$0xff]
  %v446 = vld [vmem:[%s1 + $0xc80] sm:$0xff]
  %v447 = vld [vmem:[%s1 + $0xc88] sm:$0xff]
  %v448 = vld [vmem:[%s1 + $0xc90] sm:$0xff]
  %v449 = vld [vmem:[%s1 + $0xc98] sm:$0xff]
  %v450 = vld [vmem:[%s1 + $0xca0] sm:$0xff]
  %v451 = vld [vmem:[%s1 + $0xca8] sm:$0xff]
  %v452 = vld [vmem:[%s1 + $0xcb0] sm:$0xff]
  %v453 = vld [vmem:[%s1 + $0xcb8] sm:$0xff]
  %v454 = vld [vmem:[%s1 + $0xcc0] sm:$0xff]
  %v455 = vld [vmem:[%s1 + $0xcc8] sm:$0xff]
  %v456 = vld [vmem:[%s1 + $0xcd0] sm:$0xff]
  %v457 = vld [vmem:[%s1 + $0xcd8] sm:$0xff]
  %v458 = vld [vmem:[%s1 + $0xce0] sm:$0xff]
  %v459 = vld [vmem:[%s1 + $0xce8] sm:$0xff]
  %v460 = vld [vmem:[%s1 + $0xcf0] sm:$0xff]
  %v461 = vld [vmem:[%s1 + $0xcf8] sm:$0xff]
  %v462 = vld [vmem:[%s1 + $0xd00] sm:$0xff]
  %v463 = vld [vmem:[%s1 + $0xd08] sm:$0xff]
  %v464 = vld [vmem:[%s1 + $0xd10] sm:$0xff]
  %v465 = vld [vmem:[%s1 + $0xd18] sm:$0xff]
  %v466 = vld [vmem:[%s1 + $0xd20] sm:$0xff]
  %v467 = vld [vmem:[%s1 + $0xd28] sm:$0xff]
  %v468 = vld [vmem:[%s1 + $0xd30] sm:$0xff]
  %v469 = vld [vmem:[%s1 + $0xd38] sm:$0xff]
  %v470 = vld [vmem:[%s1 + $0xd40] sm:$0xff]
  %v471 = vld [vmem:[%s1 + $0xd48] sm:$0xff]
  %v472 = vld [vmem:[%s1 + $0xd50] sm:$0xff]
  %v473 = vld [vmem:[%s1 + $0xd58] sm:$0xff]
  %v474 = vld [vmem:[%s1 + $0xd60] sm:$0xff]
  %v475 = vld [vmem:[%s1 + $0xd68] sm:$0xff]
  %v476 = vld [vmem:[%s1 + $0xd70] sm:$0xff]
  %v477 = vld [vmem:[%s1 + $0xd78] sm:$0xff]
  %v478 = vld [vmem:[%s1 + $0xd80] sm:$0xff]
  %v479 = vld [vmem:[%s1 + $0xd88] sm:$0xff]
  %v480 = vld [vmem:[%s1 + $0xd90] sm:$0xff]
  %v481 = vld [vmem:[%s1 + $0xd98] sm:$0xff]
  %v482 = vld [vmem:[%s1 + $0xda0] sm:$0xff]
  %v483 = vld [vmem:[%s1 + $0xda8] sm:$0xff]
  %v484 = vld [vmem:[%s1 + $0xdb0] sm:$0xff]
  %v485 = vld [vmem:[%s1 + $0xdb8] sm:$0xff]
  %v486 = vld [vmem:[%s1 + $0xdc0] sm:$0xff]
  %v487 = vld [vmem:[%s1 + $0xdc8] sm:$0xff]
  %v488 = vld [vmem:[%s1 + $0xdd0] sm:$0xff]
  %v489 = vld [vmem:[%s1 + $0xdd8] sm:$0xff]
  %v490 = vld [vmem:[%s1 + $0xde0] sm:$0xff]
  %v491 = vld [vmem:[%s1 + $0xde8] sm:$0xff]
  %v492 = vld [vmem:[%s1 + $0xdf0] sm:$0xff]
  %v493 = vld [vmem:[%s1 + $0xdf8] sm:$0xff]
  %v494 = vld [vmem:[%s1 + $0xe00] sm:$0xff]
  %v495 = vld [vmem:[%s1 + $0xe08] sm:$0xff]
  %v496 = vld [vmem:[%s1 + $0xe10] sm:$0xff]
  %v497 = vld [vmem:[%s1 + $0xe18] sm:$0xff]
  %v498 = vld [vmem:[%s1 + $0xe20] sm:$0xff]
  %v499 = vld [vmem:[%s1 + $0xe28] sm:$0xff]
  %v500 = vld [vmem:[%s1 + $0xe30] sm:$0xff]
  %v501 = vld [vmem:[%s1 + $0xe38] sm:$0xff]
  %v502 = vld [vmem:[%s1 + $0xe40] sm:$0xff]
  %v503 = vld [vmem:[%s1 + $0xe48] sm:$0xff]
  %v504 = vld [vmem:[%s1 + $0xe50] sm:$0xff]
  %v505 = vld [vmem:[%s1 + $0xe58] sm:$0xff]
  %v506 = vld [vmem:[%s1 + $0xe60] sm:$0xff]
  %v507 = vld [vmem:[%s1 + $0xe68] sm:$0xff]
  %v508 = vld [vmem:[%s1 + $0xe70] sm:$0xff]
  %v509 = vld [vmem:[%s1 + $0xe78] sm:$0xff]
  %v510 = vld [vmem:[%s1 + $0xe80] sm:$0xff]
  %v511 = vld [vmem:[%s1 + $0xe88] sm:$0xff]
  %v512 = vld [vmem:[%s1 + $0xe90] sm:$0xff]
  %v513 = vld [vmem:[%s1 + $0xe98] sm:$0xff]
  %v514 = vld [vmem:[%s1 + $0xea0] sm:$0xff]
  %v515 = vld [vmem:[%s1 + $0xea8] sm:$0xff]
  %v516 = vld [vmem:[%s1 + $0xeb0] sm:$0xff]
  %v517 = vld [vmem:[%s1 + $0xeb8] sm:$0xff]
  %v518 = vld [vmem:[%s1 + $0xec0] sm:$0xff]
  %v519 = vld [vmem:[%s1 + $0xec8] sm:$0xff]
  %v520 = vld [vmem:[%s1 + $0xed0] sm:$0xff]
  %v521 = vld [vmem:[%s1 + $0xed8] sm:$0xff]
  %v522 = vld [vmem:[%s1 + $0xee0] sm:$0xff]
  %v523 = vld [vmem:[%s1 + $0xee8] sm:$0xff]
  %v524 = vld [vmem:[%s1 + $0xef0] sm:$0xff]
  %v525 = vld [vmem:[%s1 + $0xef8] sm:$0xff]
  %v526 = vld [vmem:[%s1 + $0xf00] sm:$0xff]
  %v527 = vld [vmem:[%s1 + $0xf08] sm:$0xff]
  %v528 = vld [vmem:[%s1 + $0xf10] sm:$0xff]
  %v529 = vld [vmem:[%s1 + $0xf18] sm:$0xff]
  %v530 = vld [vmem:[%s1 + $0xf20] sm:$0xff]
  %v531 = vld [vmem:[%s1 + $0xf28] sm:$0xff]
  %v532 = vld [vmem:[%s1 + $0xf30] sm:$0xff]
  %v533 = vld [vmem:[%s1 + $0xf38] sm:$0xff]
  %v534 = vld [vmem:[%s1 + $0xf40] sm:$0xff]
  %v535 = vld [vmem:[%s1 + $0xf48] sm:$0xff]
  %v536 = vld [vmem:[%s1 + $0xf50] sm:$0xff]
  %v537 = vld [vmem:[%s1 + $0xf58] sm:$0xff]
  %v538 = vld [vmem:[%s1 + $0xf60] sm:$0xff]
  %v539 = vld [vmem:[%s1 + $0xf68] sm:$0xff]
  %v540 = vld [vmem:[%s1 + $0xf70] sm:$0xff]
  %v541 = vld [vmem:[%s1 + $0xf78] sm:$0xff]
  %v542 = vld [vmem:[%s1 + $0xf80] sm:$0xff]
  %v543 = vld [vmem:[%s1 + $0xf88] sm:$0xff]
  %v544 = vld [vmem:[%s1 + $0xf90] sm:$0xff]
  %v545 = vld [vmem:[%s1 + $0xf98] sm:$0xff]
  %v546 = vld [vmem:[%s1 + $0xfa0] sm:$0xff]
  %v547 = vld [vmem:[%s1 + $0xfa8] sm:$0xff]
  %v548 = vld [vmem:[%s1 + $0xfb0] sm:$0xff]
  %v549 = vld [vmem:[%s1 + $0xfb8] sm:$0xff]
  %v550 = vld [vmem:[%s1 + $0xfc0] sm:$0xff]
  %v551 = vld [vmem:[%s1 + $0xfc8] sm:$0xff]
  %v552 = vld [vmem:[%s1 + $0xfd0] sm:$0xff]
  %v553 = vld [vmem:[%s1 + $0xfd8] sm:$0xff]
  %v554 = vld [vmem:[%s1 + $0xfe0] sm:$0xff]
  %v555 = vld [vmem:[%s1 + $0xfe8] sm:$0xff]
  %v556 = vld [vmem:[%s1 + $0xff0] sm:$0xff]
  %v557 = vld [vmem:[%s1 + $0xff8] sm:$0xff]
  %v558 = vld [vmem:[%s2] sm:$0xff]
  %v559 = vld [vmem:[%s2 + $0x8] sm:$0xff]
  %v560 = vld [vmem:[%s2 + $0x10] sm:$0xff]
  %v561 = vld [vmem:[%s2 + $0x18] sm:$0xff]
  %563 = vset.pattern.permute.xlu0 0
  %564 = vperm.xlu0 %563, %v558
  %v565 = vpop.permute.xlu0 %564
  %568 = vset.pattern.permute.xlu0 0
  %569 = vperm.xlu0 %568, %v559
  %v570 = vpop.permute.xlu0 %569
  %573 = vset.pattern.permute.xlu0 0
  %574 = vperm.xlu0 %573, %v560
  %v575 = vpop.permute.xlu0 %574
  %578 = vset.pattern.permute.xlu0 0
  %579 = vperm.xlu0 %578, %v561
  %v580 = vpop.permute.xlu0 %579
  %582 = vmatprep.subr.mxu0 %v47
  %583 = vmatpush1.msra.mxu0 %v46
  %584 = vmatprep.subr.mxu0 %v51
  %585 = vmatpush1.msra.mxu0 %v50
  %586 = vmatprep.subr.mxu0 %v55
  %587 = vmatpush1.msra.mxu0 %v54
  %588 = vmatprep.subr.mxu0 %v59
  %589 = vmatpush1.msra.mxu0 %v58
  %590 = vmatprep.subr.mxu0 %v63
  %591 = vmatpush1.msra.mxu0 %v62
  %592 = vmatprep.subr.mxu0 %v67
  %593 = vmatpush1.msra.mxu0 %v66
  %594 = vmatprep.subr.mxu0 %v71
  %595 = vmatpush1.msra.mxu0 %v70
  %596 = vmatprep.subr.mxu0 %v75
  %597 = vmatpush1.msra.mxu0 %v74
  %598 = vmatprep.subr.mxu0 %v79
  %599 = vmatpush1.msra.mxu0 %v78
  %600 = vmatprep.subr.mxu0 %v83
  %601 = vmatpush1.msra.mxu0 %v82
  %602 = vmatprep.subr.mxu0 %v87
  %603 = vmatpush1.msra.mxu0 %v86
  %604 = vmatprep.subr.mxu0 %v91
  %605 = vmatpush1.msra.mxu0 %v90
  %606 = vmatprep.subr.mxu0 %v95
  %607 = vmatpush1.msra.mxu0 %v94
  %608 = vmatprep.subr.mxu0 %v99
  %609 = vmatpush1.msra.mxu0 %v98
  %610 = vmatprep.subr.mxu0 %v103
  %611 = vmatpush1.msra.mxu0 %v102
  %612 = vmatprep.subr.mxu0 %v107
  %613 = vmatpush1.msra.mxu0 %v106
  %614 = vmatprep.subr.mxu0 %v111
  %615 = vmatpush1.msra.mxu0 %v110
  %616 = vmatprep.subr.mxu0 %v115
  %617 = vmatpush1.msra.mxu0 %v114
  %618 = vmatprep.subr.mxu0 %v119
  %619 = vmatpush1.msra.mxu0 %v118
  %620 = vmatprep.subr.mxu0 %v123
  %621 = vmatpush1.msra.mxu0 %v122
  %622 = vmatprep.subr.mxu0 %v127
  %623 = vmatpush1.msra.mxu0 %v126
  %624 = vmatprep.subr.mxu0 %v131
  %625 = vmatpush1.msra.mxu0 %v130
  %626 = vmatprep.subr.mxu0 %v135
  %627 = vmatpush1.msra.mxu0 %v134
  %628 = vmatprep.subr.mxu0 %v139
  %629 = vmatpush1.msra.mxu0 %v138
  %630 = vmatprep.subr.mxu0 %v143
  %631 = vmatpush1.msra.mxu0 %v142
  %632 = vmatprep.subr.mxu0 %v147
  %633 = vmatpush1.msra.mxu0 %v146
  %634 = vmatprep.subr.mxu0 %v151
  %635 = vmatpush1.msra.mxu0 %v150
  %636 = vmatprep.subr.mxu0 %v155
  %637 = vmatpush1.msra.mxu0 %v154
  %638 = vmatprep.subr.mxu0 %v159
  %639 = vmatpush1.msra.mxu0 %v158
  %640 = vmatprep.subr.mxu0 %v163
  %641 = vmatpush1.msra.mxu0 %v162
  %642 = vmatprep.subr.mxu0 %v167
  %643 = vmatpush1.msra.mxu0 %v166
  %644 = vmatprep.subr.mxu0 %v171
  %645 = vmatpush1.msra.mxu0 %v170
  %646 = vmatprep.mubr.f32.mxu0 %v15
  %647 = vmatmul.mubr.f32.gmra.mrb[0].mxu0 %v14
  %v648 = vpop.f32.mrb[0].mxu0
  %v649 = vadd.f32 %v565, %v648
  %v650 = vpop.f32.mrb[0].mxu0
  %v651 = vadd.f32 %v565, %v650
  %652 = vmatprep.mubr.f32.mxu0 %v23
  %653 = vmatmul.mubr.f32.gmra.mrb[0].mxu0 %v22
  %v654 = vpop.f32.mrb[0].mxu0
  %v655 = vadd.f32 %v570, %v654
  %v656 = vpop.f32.mrb[0].mxu0
  %v657 = vadd.f32 %v570, %v656
  %658 = vmatprep.mubr.f32.mxu0 %v31
  %659 = vmatmul.mubr.f32.gmra.mrb[0].mxu0 %v30
  %v660 = vpop.f32.mrb[0].mxu0
  %v661 = vadd.f32 %v575, %v660
  %v662 = vpop.f32.mrb[0].mxu0
  %v663 = vadd.f32 %v575, %v662
  %664 = vmatprep.mubr.f32.mxu0 %v39
  %665 = vmatmul.mubr.f32.gmra.mrb[0].mxu0 %v38
  %v666 = vpop.f32.mrb[0].mxu0
  %v667 = vadd.f32 %v580, %v666
  %v668 = vpop.f32.mrb[0].mxu0
  %v669 = vadd.f32 %v580, %v668
  %670 = vdwg.mxu0
  %671 = vmatprep.subr.mxu0 %v175
  %672 = vmatpush1.msra.mxu0 %v174
  %673 = vmatprep.subr.mxu0 %v179
  %674 = vmatpush1.msra.mxu0 %v178
  %675 = vmatprep.subr.mxu0 %v183
  %676 = vmatpush1.msra.mxu0 %v182
  %677 = vmatprep.subr.mxu0 %v187
  %678 = vmatpush1.msra.mxu0 %v186
  %679 = vmatprep.subr.mxu0 %v191
  %680 = vmatpush1.msra.mxu0 %v190
  %681 = vmatprep.subr.mxu0 %v195
  %682 = vmatpush1.msra.mxu0 %v194
  %683 = vmatprep.subr.mxu0 %v199
  %684 = vmatpush1.msra.mxu0 %v198
  %685 = vmatprep.subr.mxu0 %v203
  %686 = vmatpush1.msra.mxu0 %v202
  %687 = vmatprep.subr.mxu0 %v207
  %688 = vmatpush1.msra.mxu0 %v206
  %689 = vmatprep.subr.mxu0 %v211
  %690 = vmatpush1.msra.mxu0 %v210
  %691 = vmatprep.subr.mxu0 %v215
  %692 = vmatpush1.msra.mxu0 %v214
  %693 = vmatprep.subr.mxu0 %v219
  %694 = vmatpush1.msra.mxu0 %v218
  %695 = vmatprep.subr.mxu0 %v223
  %696 = vmatpush1.msra.mxu0 %v222
  %697 = vmatprep.subr.mxu0 %v227
  %698 = vmatpush1.msra.mxu0 %v226
  %699 = vmatprep.subr.mxu0 %v231
  %700 = vmatpush1.msra.mxu0 %v230
  %701 = vmatprep.subr.mxu0 %v235
  %702 = vmatpush1.msra.mxu0 %v234
  %703 = vmatprep.subr.mxu0 %v239
  %704 = vmatpush1.msra.mxu0 %v238
  %705 = vmatprep.subr.mxu0 %v243
  %706 = vmatpush1.msra.mxu0 %v242
  %707 = vmatprep.subr.mxu0 %v247
  %708 = vmatpush1.msra.mxu0 %v246
  %709 = vmatprep.subr.mxu0 %v251
  %710 = vmatpush1.msra.mxu0 %v250
  %711 = vmatprep.subr.mxu0 %v255
  %712 = vmatpush1.msra.mxu0 %v254
  %713 = vmatprep.subr.mxu0 %v259
  %714 = vmatpush1.msra.mxu0 %v258
  %715 = vmatprep.subr.mxu0 %v263
  %716 = vmatpush1.msra.mxu0 %v262
  %717 = vmatprep.subr.mxu0 %v267
  %718 = vmatpush1.msra.mxu0 %v266
  %719 = vmatprep.subr.mxu0 %v271
  %720 = vmatpush1.msra.mxu0 %v270
  %721 = vmatprep.subr.mxu0 %v275
  %722 = vmatpush1.msra.mxu0 %v274
  %723 = vmatprep.subr.mxu0 %v279
  %724 = vmatpush1.msra.mxu0 %v278
  %725 = vmatprep.subr.mxu0 %v283
  %726 = vmatpush1.msra.mxu0 %v282
  %727 = vmatprep.subr.mxu0 %v287
  %728 = vmatpush1.msra.mxu0 %v286
  %729 = vmatprep.subr.mxu0 %v291
  %730 = vmatpush1.msra.mxu0 %v290
  %731 = vmatprep.subr.mxu0 %v295
  %732 = vmatpush1.msra.mxu0 %v294
  %733 = vmatprep.subr.mxu0 %v299
  %734 = vmatpush1.msra.mxu0 %v298
  %735 = vmatprep.mubr.f32.mxu0 %v17
  %736 = vmatmul.mubr.f32.gmra.mrb[0].mxu0 %v16
  %v737 = vpop.f32.mrb[0].mxu0
  %v738 = vadd.f32 %v649, %v737
  %v739 = vpop.f32.mrb[0].mxu0
  %v740 = vadd.f32 %v651, %v739
  %741 = vmatprep.mubr.f32.mxu0 %v25
  %742 = vmatmul.mubr.f32.gmra.mrb[0].mxu0 %v24
  %v743 = vpop.f32.mrb[0].mxu0
  %v744 = vadd.f32 %v655, %v743
  %v745 = vpop.f32.mrb[0].mxu0
  %v746 = vadd.f32 %v657, %v745
  %747 = vmatprep.mubr.f32.mxu0 %v33
  %748 = vmatmul.mubr.f32.gmra.mrb[0].mxu0 %v32
  %v749 = vpop.f32.mrb[0].mxu0
  %v750 = vadd.f32 %v661, %v749
  %v751 = vpop.f32.mrb[0].mxu0
  %v752 = vadd.f32 %v663, %v751
  %753 = vmatprep.mubr.f32.mxu0 %v41
  %754 = vmatmul.mubr.f32.gmra.mrb[0].mxu0 %v40
  %v755 = vpop.f32.mrb[0].mxu0
  %v756 = vadd.f32 %v667, %v755
  %v757 = vpop.f32.mrb[0].mxu0
  %v758 = vadd.f32 %v669, %v757
  %759 = vdwg.mxu0
  %760 = vmatprep.subr.mxu0 %v303
  %761 = vmatpush1.msra.mxu0 %v302
  %762 = vmatprep.subr.mxu0 %v307
  %763 = vmatpush1.msra.mxu0 %v306
  %764 = vmatprep.subr.mxu0 %v311
  %765 = vmatpush1.msra.mxu0 %v310
  %766 = vmatprep.subr.mxu0 %v315
  %767 = vmatpush1.msra.mxu0 %v314
  %768 = vmatprep.subr.mxu0 %v319
  %769 = vmatpush1.msra.mxu0 %v318
  %770 = vmatprep.subr.mxu0 %v323
  %771 = vmatpush1.msra.mxu0 %v322
  %772 = vmatprep.subr.mxu0 %v327
  %773 = vmatpush1.msra.mxu0 %v326
  %774 = vmatprep.subr.mxu0 %v331
  %775 = vmatpush1.msra.mxu0 %v330
  %776 = vmatprep.subr.mxu0 %v335
  %777 = vmatpush1.msra.mxu0 %v334
  %778 = vmatprep.subr.mxu0 %v339
  %779 = vmatpush1.msra.mxu0 %v338
  %780 = vmatprep.subr.mxu0 %v343
  %781 = vmatpush1.msra.mxu0 %v342
  %782 = vmatprep.subr.mxu0 %v347
  %783 = vmatpush1.msra.mxu0 %v346
  %784 = vmatprep.subr.mxu0 %v351
  %785 = vmatpush1.msra.mxu0 %v350
  %786 = vmatprep.subr.mxu0 %v355
  %787 = vmatpush1.msra.mxu0 %v354
  %788 = vmatprep.subr.mxu0 %v359
  %789 = vmatpush1.msra.mxu0 %v358
  %790 = vmatprep.subr.mxu0 %v363
  %791 = vmatpush1.msra.mxu0 %v362
  %792 = vmatprep.subr.mxu0 %v367
  %793 = vmatpush1.msra.mxu0 %v366
  %794 = vmatprep.subr.mxu0 %v371
  %795 = vmatpush1.msra.mxu0 %v370
  %796 = vmatprep.subr.mxu0 %v375
  %797 = vmatpush1.msra.mxu0 %v374
  %798 = vmatprep.subr.mxu0 %v379
  %799 = vmatpush1.msra.mxu0 %v378
  %800 = vmatprep.subr.mxu0 %v383
  %801 = vmatpush1.msra.mxu0 %v382
  %802 = vmatprep.subr.mxu0 %v387
  %803 = vmatpush1.msra.mxu0 %v386
  %804 = vmatprep.subr.mxu0 %v391
  %805 = vmatpush1.msra.mxu0 %v390
  %806 = vmatprep.subr.mxu0 %v395
  %807 = vmatpush1.msra.mxu0 %v394
  %808 = vmatprep.subr.mxu0 %v399
  %809 = vmatpush1.msra.mxu0 %v398
  %810 = vmatprep.subr.mxu0 %v403
  %811 = vmatpush1.msra.mxu0 %v402
  %812 = vmatprep.subr.mxu0 %v407
  %813 = vmatpush1.msra.mxu0 %v406
  %814 = vmatprep.subr.mxu0 %v411
  %815 = vmatpush1.msra.mxu0 %v410
  %816 = vmatprep.subr.mxu0 %v415
  %817 = vmatpush1.msra.mxu0 %v414
  %818 = vmatprep.subr.mxu0 %v419
  %819 = vmatpush1.msra.mxu0 %v418
  %820 = vmatprep.subr.mxu0 %v423
  %821 = vmatpush1.msra.mxu0 %v422
  %822 = vmatprep.subr.mxu0 %v427
  %823 = vmatpush1.msra.mxu0 %v426
  %824 = vmatprep.mubr.f32.mxu0 %v19
  %825 = vmatmul.mubr.f32.gmra.mrb[0].mxu0 %v18
  %v826 = vpop.f32.mrb[0].mxu0
  %v827 = vadd.f32 %v738, %v826
  %v828 = vpop.f32.mrb[0].mxu0
  %v829 = vadd.f32 %v740, %v828
  %830 = vmatprep.mubr.f32.mxu0 %v27
  %831 = vmatmul.mubr.f32.gmra.mrb[0].mxu0 %v26
  %v832 = vpop.f32.mrb[0].mxu0
  %v833 = vadd.f32 %v744, %v832
  %v834 = vpop.f32.mrb[0].mxu0
  %v835 = vadd.f32 %v746, %v834
  %836 = vmatprep.mubr.f32.mxu0 %v35
  %837 = vmatmul.mubr.f32.gmra.mrb[0].mxu0 %v34
  %v838 = vpop.f32.mrb[0].mxu0
  %v839 = vadd.f32 %v750, %v838
  %v840 = vpop.f32.mrb[0].mxu0
  %v841 = vadd.f32 %v752, %v840
  %842 = vmatprep.mubr.f32.mxu0 %v43
  %843 = vmatmul.mubr.f32.gmra.mrb[0].mxu0 %v42
  %v844 = vpop.f32.mrb[0].mxu0
  %v845 = vadd.f32 %v756, %v844
  %v846 = vpop.f32.mrb[0].mxu0
  %v847 = vadd.f32 %v758, %v846
  %848 = vdwg.mxu0
  %849 = vmatprep.subr.mxu0 %v431
  %850 = vmatpush1.msra.mxu0 %v430
  %851 = vmatprep.subr.mxu0 %v435
  %852 = vmatpush1.msra.mxu0 %v434
  %853 = vmatprep.subr.mxu0 %v439
  %854 = vmatpush1.msra.mxu0 %v438
  %855 = vmatprep.subr.mxu0 %v443
  %856 = vmatpush1.msra.mxu0 %v442
  %857 = vmatprep.subr.mxu0 %v447
  %858 = vmatpush1.msra.mxu0 %v446
  %859 = vmatprep.subr.mxu0 %v451
  %860 = vmatpush1.msra.mxu0 %v450
  %861 = vmatprep.subr.mxu0 %v455
  %862 = vmatpush1.msra.mxu0 %v454
  %863 = vmatprep.subr.mxu0 %v459
  %864 = vmatpush1.msra.mxu0 %v458
  %865 = vmatprep.subr.mxu0 %v463
  %866 = vmatpush1.msra.mxu0 %v462
  %867 = vmatprep.subr.mxu0 %v467
  %868 = vmatpush1.msra.mxu0 %v466
  %869 = vmatprep.subr.mxu0 %v471
  %870 = vmatpush1.msra.mxu0 %v470
  %871 = vmatprep.subr.mxu0 %v475
  %872 = vmatpush1.msra.mxu0 %v474
  %873 = vmatprep.subr.mxu0 %v479
  %874 = vmatpush1.msra.mxu0 %v478
  %875 = vmatprep.subr.mxu0 %v483
  %876 = vmatpush1.msra.mxu0 %v482
  %877 = vmatprep.subr.mxu0 %v487
  %878 = vmatpush1.msra.mxu0 %v486
  %879 = vmatprep.subr.mxu0 %v491
  %880 = vmatpush1.msra.mxu0 %v490
  %881 = vmatprep.subr.mxu0 %v495
  %882 = vmatpush1.msra.mxu0 %v494
  %883 = vmatprep.subr.mxu0 %v499
  %884 = vmatpush1.msra.mxu0 %v498
  %885 = vmatprep.subr.mxu0 %v503
  %886 = vmatpush1.msra.mxu0 %v502
  %887 = vmatprep.subr.mxu0 %v507
  %888 = vmatpush1.msra.mxu0 %v506
  %889 = vmatprep.subr.mxu0 %v511
  %890 = vmatpush1.msra.mxu0 %v510
  %891 = vmatprep.subr.mxu0 %v515
  %892 = vmatpush1.msra.mxu0 %v514
  %893 = vmatprep.subr.mxu0 %v519
  %894 = vmatpush1.msra.mxu0 %v518
  %895 = vmatprep.subr.mxu0 %v523
  %896 = vmatpush1.msra.mxu0 %v522
  %897 = vmatprep.subr.mxu0 %v527
  %898 = vmatpush1.msra.mxu0 %v526
  %899 = vmatprep.subr.mxu0 %v531
  %900 = vmatpush1.msra.mxu0 %v530
  %901 = vmatprep.subr.mxu0 %v535
  %902 = vmatpush1.msra.mxu0 %v534
  %903 = vmatprep.subr.mxu0 %v539
  %904 = vmatpush1.msra.mxu0 %v538
  %905 = vmatprep.subr.mxu0 %v543
  %906 = vmatpush1.msra.mxu0 %v542
  %907 = vmatprep.subr.mxu0 %v547
  %908 = vmatpush1.msra.mxu0 %v546
  %909 = vmatprep.subr.mxu0 %v551
  %910 = vmatpush1.msra.mxu0 %v550
  %911 = vmatprep.subr.mxu0 %v555
  %912 = vmatpush1.msra.mxu0 %v554
  %913 = vmatprep.mubr.f32.mxu0 %v21
  %914 = vmatmul.mubr.f32.gmra.mrb[0].mxu0 %v20
  %v915 = vpop.f32.mrb[0].mxu0
  %v916 = vadd.f32 %v827, %v915
  %v917 = vpop.f32.mrb[0].mxu0
  %v918 = vadd.f32 %v829, %v917
  %919 = vmatprep.mubr.f32.mxu0 %v29
  %920 = vmatmul.mubr.f32.gmra.mrb[0].mxu0 %v28
  %v921 = vpop.f32.mrb[0].mxu0
  %v922 = vadd.f32 %v833, %v921
  %v923 = vpop.f32.mrb[0].mxu0
  %v924 = vadd.f32 %v835, %v923
  %925 = vmatprep.mubr.f32.mxu0 %v37
  %926 = vmatmul.mubr.f32.gmra.mrb[0].mxu0 %v36
  %v927 = vpop.f32.mrb[0].mxu0
  %v928 = vadd.f32 %v839, %v927
  %v929 = vpop.f32.mrb[0].mxu0
  %v930 = vadd.f32 %v841, %v929
  %931 = vmatprep.mubr.f32.mxu0 %v45
  %932 = vmatmul.mubr.f32.gmra.mrb[0].mxu0 %v44
  %v933 = vpop.f32.mrb[0].mxu0
  %v934 = vadd.f32 %v845, %v933
  %v935 = vpop.f32.mrb[0].mxu0
  %v936 = vadd.f32 %v847, %v935
  %937 = vdwg.mxu0
  %938 = vmatprep.subr.mxu0 %v49
  %939 = vmatpush1.msra.mxu0 %v48
  %940 = vmatprep.subr.mxu0 %v53
  %941 = vmatpush1.msra.mxu0 %v52
  %942 = vmatprep.subr.mxu0 %v57
  %943 = vmatpush1.msra.mxu0 %v56
  %944 = vmatprep.subr.mxu0 %v61
  %945 = vmatpush1.msra.mxu0 %v60
  %946 = vmatprep.subr.mxu0 %v65
  %947 = vmatpush1.msra.mxu0 %v64
  %948 = vmatprep.subr.mxu0 %v69
  %949 = vmatpush1.msra.mxu0 %v68
  %950 = vmatprep.subr.mxu0 %v73
  %951 = vmatpush1.msra.mxu0 %v72
  %952 = vmatprep.subr.mxu0 %v77
  %953 = vmatpush1.msra.mxu0 %v76
  %954 = vmatprep.subr.mxu0 %v81
  %955 = vmatpush1.msra.mxu0 %v80
  %956 = vmatprep.subr.mxu0 %v85
  %957 = vmatpush1.msra.mxu0 %v84
  %958 = vmatprep.subr.mxu0 %v89
  %959 = vmatpush1.msra.mxu0 %v88
  %960 = vmatprep.subr.mxu0 %v93
  %961 = vmatpush1.msra.mxu0 %v92
  %962 = vmatprep.subr.mxu0 %v97
  %963 = vmatpush1.msra.mxu0 %v96
  %964 = vmatprep.subr.mxu0 %v101
  %965 = vmatpush1.msra.mxu0 %v100
  %966 = vmatprep.subr.mxu0 %v105
  %967 = vmatpush1.msra.mxu0 %v104
  %968 = vmatprep.subr.mxu0 %v109
  %969 = vmatpush1.msra.mxu0 %v108
  %970 = vmatprep.subr.mxu0 %v113
  %971 = vmatpush1.msra.mxu0 %v112
  %972 = vmatprep.subr.mxu0 %v117
  %973 = vmatpush1.msra.mxu0 %v116
  %974 = vmatprep.subr.mxu0 %v121
  %975 = vmatpush1.msra.mxu0 %v120
  %976 = vmatprep.subr.mxu0 %v125
  %977 = vmatpush1.msra.mxu0 %v124
  %978 = vmatprep.subr.mxu0 %v129
  %979 = vmatpush1.msra.mxu0 %v128
  %980 = vmatprep.subr.mxu0 %v133
  %981 = vmatpush1.msra.mxu0 %v132
  %982 = vmatprep.subr.mxu0 %v137
  %983 = vmatpush1.msra.mxu0 %v136
  %984 = vmatprep.subr.mxu0 %v141
  %985 = vmatpush1.msra.mxu0 %v140
  %986 = vmatprep.subr.mxu0 %v145
  %987 = vmatpush1.msra.mxu0 %v144
  %988 = vmatprep.subr.mxu0 %v149
  %989 = vmatpush1.msra.mxu0 %v148
  %990 = vmatprep.subr.mxu0 %v153
  %991 = vmatpush1.msra.mxu0 %v152
  %992 = vmatprep.subr.mxu0 %v157
  %993 = vmatpush1.msra.mxu0 %v156
  %994 = vmatprep.subr.mxu0 %v161
  %995 = vmatpush1.msra.mxu0 %v160
  %996 = vmatprep.subr.mxu0 %v165
  %997 = vmatpush1.msra.mxu0 %v164
  %998 = vmatprep.subr.mxu0 %v169
  %999 = vmatpush1.msra.mxu0 %v168
  %1000 = vmatprep.subr.mxu0 %v173
  %1001 = vmatpush1.msra.mxu0 %v172
  %1002 = vmatprep.mubr.f32.mxu0 %v15
  %1003 = vmatmul.mubr.f32.gmra.mrb[0].mxu0 %v14
  %v1004 = vpop.f32.mrb[0].mxu0
  %v1005 = vadd.f32 %v565, %v1004
  %v1006 = vpop.f32.mrb[0].mxu0
  %v1007 = vadd.f32 %v565, %v1006
  %1008 = vmatprep.mubr.f32.mxu0 %v23
  %1009 = vmatmul.mubr.f32.gmra.mrb[0].mxu0 %v22
  %v1010 = vpop.f32.mrb[0].mxu0
  %v1011 = vadd.f32 %v570, %v1010
  %v1012 = vpop.f32.mrb[0].mxu0
  %v1013 = vadd.f32 %v570, %v1012
  %1014 = vmatprep.mubr.f32.mxu0 %v31
  %1015 = vmatmul.mubr.f32.gmra.mrb[0].mxu0 %v30
  %v1016 = vpop.f32.mrb[0].mxu0
  %v1017 = vadd.f32 %v575, %v1016
  %v1018 = vpop.f32.mrb[0].mxu0
  %v1019 = vadd.f32 %v575, %v1018
  %1020 = vmatprep.mubr.f32.mxu0 %v39
  %1021 = vmatmul.mubr.f32.gmra.mrb[0].mxu0 %v38
  %v1022 = vpop.f32.mrb[0].mxu0
  %v1023 = vadd.f32 %v580, %v1022
  %v1024 = vpop.f32.mrb[0].mxu0
  %v1025 = vadd.f32 %v580, %v1024
  %1026 = vdwg.mxu0
  %1027 = vmatprep.subr.mxu0 %v177
  %1028 = vmatpush1.msra.mxu0 %v176
  %1029 = vmatprep.subr.mxu0 %v181
  %1030 = vmatpush1.msra.mxu0 %v180
  %1031 = vmatprep.subr.mxu0 %v185
  %1032 = vmatpush1.msra.mxu0 %v184
  %1033 = vmatprep.subr.mxu0 %v189
  %1034 = vmatpush1.msra.mxu0 %v188
  %1035 = vmatprep.subr.mxu0 %v193
  %1036 = vmatpush1.msra.mxu0 %v192
  %1037 = vmatprep.subr.mxu0 %v197
  %1038 = vmatpush1.msra.mxu0 %v196
  %1039 = vmatprep.subr.mxu0 %v201
  %1040 = vmatpush1.msra.mxu0 %v200
  %1041 = vmatprep.subr.mxu0 %v205
  %1042 = vmatpush1.msra.mxu0 %v204
  %1043 = vmatprep.subr.mxu0 %v209
  %1044 = vmatpush1.msra.mxu0 %v208
  %1045 = vmatprep.subr.mxu0 %v213
  %1046 = vmatpush1.msra.mxu0 %v212
  %1047 = vmatprep.subr.mxu0 %v217
  %1048 = vmatpush1.msra.mxu0 %v216
  %1049 = vmatprep.subr.mxu0 %v221
  %1050 = vmatpush1.msra.mxu0 %v220
  %1051 = vmatprep.subr.mxu0 %v225
  %1052 = vmatpush1.msra.mxu0 %v224
  %1053 = vmatprep.subr.mxu0 %v229
  %1054 = vmatpush1.msra.mxu0 %v228
  %1055 = vmatprep.subr.mxu0 %v233
  %1056 = vmatpush1.msra.mxu0 %v232
  %1057 = vmatprep.subr.mxu0 %v237
  %1058 = vmatpush1.msra.mxu0 %v236
  %1059 = vmatprep.subr.mxu0 %v241
  %1060 = vmatpush1.msra.mxu0 %v240
  %1061 = vmatprep.subr.mxu0 %v245
  %1062 = vmatpush1.msra.mxu0 %v244
  %1063 = vmatprep.subr.mxu0 %v249
  %1064 = vmatpush1.msra.mxu0 %v248
  %1065 = vmatprep.subr.mxu0 %v253
  %1066 = vmatpush1.msra.mxu0 %v252
  %1067 = vmatprep.subr.mxu0 %v257
  %1068 = vmatpush1.msra.mxu0 %v256
  %1069 = vmatprep.subr.mxu0 %v261
  %1070 = vmatpush1.msra.mxu0 %v260
  %1071 = vmatprep.subr.mxu0 %v265
  %1072 = vmatpush1.msra.mxu0 %v264
  %1073 = vmatprep.subr.mxu0 %v269
  %1074 = vmatpush1.msra.mxu0 %v268
  %1075 = vmatprep.subr.mxu0 %v273
  %1076 = vmatpush1.msra.mxu0 %v272
  %1077 = vmatprep.subr.mxu0 %v277
  %1078 = vmatpush1.msra.mxu0 %v276
  %1079 = vmatprep.subr.mxu0 %v281
  %1080 = vmatpush1.msra.mxu0 %v280
  %1081 = vmatprep.subr.mxu0 %v285
  %1082 = vmatpush1.msra.mxu0 %v284
  %1083 = vmatprep.subr.mxu0 %v289
  %1084 = vmatpush1.msra.mxu0 %v288
  %1085 = vmatprep.subr.mxu0 %v293
  %1086 = vmatpush1.msra.mxu0 %v292
  %1087 = vmatprep.subr.mxu0 %v297
  %1088 = vmatpush1.msra.mxu0 %v296
  %1089 = vmatprep.subr.mxu0 %v301
  %1090 = vmatpush1.msra.mxu0 %v300
  %1091 = vmatprep.mubr.f32.mxu0 %v17
  %1092 = vmatmul.mubr.f32.gmra.mrb[0].mxu0 %v16
  %v1093 = vpop.f32.mrb[0].mxu0
  %v1094 = vadd.f32 %v1005, %v1093
  %v1095 = vpop.f32.mrb[0].mxu0
  %v1096 = vadd.f32 %v1007, %v1095
  %1097 = vmatprep.mubr.f32.mxu0 %v25
  %1098 = vmatmul.mubr.f32.gmra.mrb[0].mxu0 %v24
  %v1099 = vpop.f32.mrb[0].mxu0
  %v1100 = vadd.f32 %v1011, %v1099
  %v1101 = vpop.f32.mrb[0].mxu0
  %v1102 = vadd.f32 %v1013, %v1101
  %1103 = vmatprep.mubr.f32.mxu0 %v33
  %1104 = vmatmul.mubr.f32.gmra.mrb[0].mxu0 %v32
  %v1105 = vpop.f32.mrb[0].mxu0
  %v1106 = vadd.f32 %v1017, %v1105
  %v1107 = vpop.f32.mrb[0].mxu0
  %v1108 = vadd.f32 %v1019, %v1107
  %1109 = vmatprep.mubr.f32.mxu0 %v41
  %1110 = vmatmul.mubr.f32.gmra.mrb[0].mxu0 %v40
  %v1111 = vpop.f32.mrb[0].mxu0
  %v1112 = vadd.f32 %v1023, %v1111
  %v1113 = vpop.f32.mrb[0].mxu0
  %v1114 = vadd.f32 %v1025, %v1113
  %1115 = vdwg.mxu0
  %1116 = vmatprep.subr.mxu0 %v305
  %1117 = vmatpush1.msra.mxu0 %v304
  %1118 = vmatprep.subr.mxu0 %v309
  %1119 = vmatpush1.msra.mxu0 %v308
  %1120 = vmatprep.subr.mxu0 %v313
  %1121 = vmatpush1.msra.mxu0 %v312
  %1122 = vmatprep.subr.mxu0 %v317
  %1123 = vmatpush1.msra.mxu0 %v316
  %1124 = vmatprep.subr.mxu0 %v321
  %1125 = vmatpush1.msra.mxu0 %v320
  %1126 = vmatprep.subr.mxu0 %v325
  %1127 = vmatpush1.msra.mxu0 %v324
  %1128 = vmatprep.subr.mxu0 %v329
  %1129 = vmatpush1.msra.mxu0 %v328
  %1130 = vmatprep.subr.mxu0 %v333
  %1131 = vmatpush1.msra.mxu0 %v332
  %1132 = vmatprep.subr.mxu0 %v337
  %1133 = vmatpush1.msra.mxu0 %v336
  %1134 = vmatprep.subr.mxu0 %v341
  %1135 = vmatpush1.msra.mxu0 %v340
  %1136 = vmatprep.subr.mxu0 %v345
  %1137 = vmatpush1.msra.mxu0 %v344
  %1138 = vmatprep.subr.mxu0 %v349
  %1139 = vmatpush1.msra.mxu0 %v348
  %1140 = vmatprep.subr.mxu0 %v353
  %1141 = vmatpush1.msra.mxu0 %v352
  %1142 = vmatprep.subr.mxu0 %v357
  %1143 = vmatpush1.msra.mxu0 %v356
  %1144 = vmatprep.subr.mxu0 %v361
  %1145 = vmatpush1.msra.mxu0 %v360
  %1146 = vmatprep.subr.mxu0 %v365
  %1147 = vmatpush1.msra.mxu0 %v364
  %1148 = vmatprep.subr.mxu0 %v369
  %1149 = vmatpush1.msra.mxu0 %v368
  %1150 = vmatprep.subr.mxu0 %v373
  %1151 = vmatpush1.msra.mxu0 %v372
  %1152 = vmatprep.subr.mxu0 %v377
  %1153 = vmatpush1.msra.mxu0 %v376
  %1154 = vmatprep.subr.mxu0 %v381
  %1155 = vmatpush1.msra.mxu0 %v380
  %1156 = vmatprep.subr.mxu0 %v385
  %1157 = vmatpush1.msra.mxu0 %v384
  %1158 = vmatprep.subr.mxu0 %v389
  %1159 = vmatpush1.msra.mxu0 %v388
  %1160 = vmatprep.subr.mxu0 %v393
  %1161 = vmatpush1.msra.mxu0 %v392
  %1162 = vmatprep.subr.mxu0 %v397
  %1163 = vmatpush1.msra.mxu0 %v396
  %1164 = vmatprep.subr.mxu0 %v401
  %1165 = vmatpush1.msra.mxu0 %v400
  %1166 = vmatprep.subr.mxu0 %v405
  %1167 = vmatpush1.msra.mxu0 %v404
  %1168 = vmatprep.subr.mxu0 %v409
  %1169 = vmatpush1.msra.mxu0 %v408
  %1170 = vmatprep.subr.mxu0 %v413
  %1171 = vmatpush1.msra.mxu0 %v412
  %1172 = vmatprep.subr.mxu0 %v417
  %1173 = vmatpush1.msra.mxu0 %v416
  %1174 = vmatprep.subr.mxu0 %v421
  %1175 = vmatpush1.msra.mxu0 %v420
  %1176 = vmatprep.subr.mxu0 %v425
  %1177 = vmatpush1.msra.mxu0 %v424
  %1178 = vmatprep.subr.mxu0 %v429
  %1179 = vmatpush1.msra.mxu0 %v428
  %1180 = vmatprep.mubr.f32.mxu0 %v19
  %1181 = vmatmul.mubr.f32.gmra.mrb[0].mxu0 %v18
  %v1182 = vpop.f32.mrb[0].mxu0
  %v1183 = vadd.f32 %v1094, %v1182
  %v1184 = vpop.f32.mrb[0].mxu0
  %v1185 = vadd.f32 %v1096, %v1184
  %1186 = vmatprep.mubr.f32.mxu0 %v27
  %1187 = vmatmul.mubr.f32.gmra.mrb[0].mxu0 %v26
  %v1188 = vpop.f32.mrb[0].mxu0
  %v1189 = vadd.f32 %v1100, %v1188
  %v1190 = vpop.f32.mrb[0].mxu0
  %v1191 = vadd.f32 %v1102, %v1190
  %1192 = vmatprep.mubr.f32.mxu0 %v35
  %1193 = vmatmul.mubr.f32.gmra.mrb[0].mxu0 %v34
  %v1194 = vpop.f32.mrb[0].mxu0
  %v1195 = vadd.f32 %v1106, %v1194
  %v1196 = vpop.f32.mrb[0].mxu0
  %v1197 = vadd.f32 %v1108, %v1196
  %1198 = vmatprep.mubr.f32.mxu0 %v43
  %1199 = vmatmul.mubr.f32.gmra.mrb[0].mxu0 %v42
  %v1200 = vpop.f32.mrb[0].mxu0
  %v1201 = vadd.f32 %v1112, %v1200
  %v1202 = vpop.f32.mrb[0].mxu0
  %v1203 = vadd.f32 %v1114, %v1202
  %1204 = vdwg.mxu0
  %1205 = vmatprep.subr.mxu0 %v433
  %1206 = vmatpush1.msra.mxu0 %v432
  %1207 = vmatprep.subr.mxu0 %v437
  %1208 = vmatpush1.msra.mxu0 %v436
  %1209 = vmatprep.subr.mxu0 %v441
  %1210 = vmatpush1.msra.mxu0 %v440
  %1211 = vmatprep.subr.mxu0 %v445
  %1212 = vmatpush1.msra.mxu0 %v444
  %1213 = vmatprep.subr.mxu0 %v449
  %1214 = vmatpush1.msra.mxu0 %v448
  %1215 = vmatprep.subr.mxu0 %v453
  %1216 = vmatpush1.msra.mxu0 %v452
  %1217 = vmatprep.subr.mxu0 %v457
  %1218 = vmatpush1.msra.mxu0 %v456
  %1219 = vmatprep.subr.mxu0 %v461
  %1220 = vmatpush1.msra.mxu0 %v460
  %1221 = vmatprep.subr.mxu0 %v465
  %1222 = vmatpush1.msra.mxu0 %v464
  %1223 = vmatprep.subr.mxu0 %v469
  %1224 = vmatpush1.msra.mxu0 %v468
  %1225 = vmatprep.subr.mxu0 %v473
  %1226 = vmatpush1.msra.mxu0 %v472
  %1227 = vmatprep.subr.mxu0 %v477
  %1228 = vmatpush1.msra.mxu0 %v476
  %1229 = vmatprep.subr.mxu0 %v481
  %1230 = vmatpush1.msra.mxu0 %v480
  %1231 = vmatprep.subr.mxu0 %v485
  %1232 = vmatpush1.msra.mxu0 %v484
  %1233 = vmatprep.subr.mxu0 %v489
  %1234 = vmatpush1.msra.mxu0 %v488
  %1235 = vmatprep.subr.mxu0 %v493
  %1236 = vmatpush1.msra.mxu0 %v492
  %1237 = vmatprep.subr.mxu0 %v497
  %1238 = vmatpush1.msra.mxu0 %v496
  %1239 = vmatprep.subr.mxu0 %v501
  %1240 = vmatpush1.msra.mxu0 %v500
  %1241 = vmatprep.subr.mxu0 %v505
  %1242 = vmatpush1.msra.mxu0 %v504
  %1243 = vmatprep.subr.mxu0 %v509
  %1244 = vmatpush1.msra.mxu0 %v508
  %1245 = vmatprep.subr.mxu0 %v513
  %1246 = vmatpush1.msra.mxu0 %v512
  %1247 = vmatprep.subr.mxu0 %v517
  %1248 = vmatpush1.msra.mxu0 %v516
  %1249 = vmatprep.subr.mxu0 %v521
  %1250 = vmatpush1.msra.mxu0 %v520
  %1251 = vmatprep.subr.mxu0 %v525
  %1252 = vmatpush1.msra.mxu0 %v524
  %1253 = vmatprep.subr.mxu0 %v529
  %1254 = vmatpush1.msra.mxu0 %v528
  %1255 = vmatprep.subr.mxu0 %v533
  %1256 = vmatpush1.msra.mxu0 %v532
  %1257 = vmatprep.subr.mxu0 %v537
  %1258 = vmatpush1.msra.mxu0 %v536
  %1259 = vmatprep.subr.mxu0 %v541
  %1260 = vmatpush1.msra.mxu0 %v540
  %1261 = vmatprep.subr.mxu0 %v545
  %1262 = vmatpush1.msra.mxu0 %v544
  %1263 = vmatprep.subr.mxu0 %v549
  %1264 = vmatpush1.msra.mxu0 %v548
  %1265 = vmatprep.subr.mxu0 %v553
  %1266 = vmatpush1.msra.mxu0 %v552
  %1267 = vmatprep.subr.mxu0 %v557
  %1268 = vmatpush1.msra.mxu0 %v556
  %1269 = vmatprep.mubr.f32.mxu0 %v21
  %1270 = vmatmul.mubr.f32.gmra.mrb[0].mxu0 %v20
  %v1271 = vpop.f32.mrb[0].mxu0
  %v1272 = vadd.f32 %v1183, %v1271
  %v1273 = vpop.f32.mrb[0].mxu0
  %v1274 = vadd.f32 %v1185, %v1273
  %1275 = vmatprep.mubr.f32.mxu0 %v29
  %1276 = vmatmul.mubr.f32.gmra.mrb[0].mxu0 %v28
  %v1277 = vpop.f32.mrb[0].mxu0
  %v1278 = vadd.f32 %v1189, %v1277
  %v1279 = vpop.f32.mrb[0].mxu0
  %v1280 = vadd.f32 %v1191, %v1279
  %1281 = vmatprep.mubr.f32.mxu0 %v37
  %1282 = vmatmul.mubr.f32.gmra.mrb[0].mxu0 %v36
  %v1283 = vpop.f32.mrb[0].mxu0
  %v1284 = vadd.f32 %v1195, %v1283
  %v1285 = vpop.f32.mrb[0].mxu0
  %v1286 = vadd.f32 %v1197, %v1285
  %1287 = vmatprep.mubr.f32.mxu0 %v45
  %1288 = vmatmul.mubr.f32.gmra.mrb[0].mxu0 %v44
  %v1289 = vpop.f32.mrb[0].mxu0
  %v1290 = vadd.f32 %v1201, %v1289
  %v1291 = vpop.f32.mrb[0].mxu0
  %v1292 = vadd.f32 %v1203, %v1291
  %1293 = vdwg.mxu0
  %v1294 = vmax.f32 %v916, 0.0
  %v1295 = vmax.f32 %v918, 0.0
  %v1296 = vmax.f32 %v1272, 0.0
  %v1297 = vmax.f32 %v1274, 0.0
  %v1298 = vmax.f32 %v922, 0.0
  %v1299 = vmax.f32 %v924, 0.0
  %v1300 = vmax.f32 %v1278, 0.0
  %v1301 = vmax.f32 %v1280, 0.0
  %v1302 = vmax.f32 %v928, 0.0
  %v1303 = vmax.f32 %v930, 0.0
  %v1304 = vmax.f32 %v1284, 0.0
  %v1305 = vmax.f32 %v1286, 0.0
  %v1306 = vmax.f32 %v934, 0.0
  %v1307 = vmax.f32 %v936, 0.0
  %v1308 = vmax.f32 %v1290, 0.0
  %v1309 = vmax.f32 %v1292, 0.0
  %1310 = vst [vmem:[%s3] sm:$0xff] %v1294
  %1311 = vst [vmem:[%s3 + $0x8] sm:$0xff] %v1295
  %1312 = vst [vmem:[%s3 + $0x10] sm:$0xff] %v1296
  %1313 = vst [vmem:[%s3 + $0x18] sm:$0xff] %v1297
  %1314 = vst [vmem:[%s3 + $0x20] sm:$0xff] %v1298
  %1315 = vst [vmem:[%s3 + $0x28] sm:$0xff] %v1299
  %1316 = vst [vmem:[%s3 + $0x30] sm:$0xff] %v1300
  %1317 = vst [vmem:[%s3 + $0x38] sm:$0xff] %v1301
  %1318 = vst [vmem:[%s3 + $0x40] sm:$0xff] %v1302
  %1319 = vst [vmem:[%s3 + $0x48] sm:$0xff] %v1303
  %1320 = vst [vmem:[%s3 + $0x50] sm:$0xff] %v1304
  %1321 = vst [vmem:[%s3 + $0x58] sm:$0xff] %v1305
  %1322 = vst [vmem:[%s3 + $0x60] sm:$0xff] %v1306
  %1323 = vst [vmem:[%s3 + $0x68] sm:$0xff] %v1307
  %1324 = vst [vmem:[%s3 + $0x70] sm:$0xff] %v1308
  %1325 = vst [vmem:[%s3 + $0x78] sm:$0xff] %v1309
  // Predicated region
  $region14: #{generator_forward.5} parent=0 // pred_check
    _
  $region15: #{generator_forward.5} parent=0 // pred_check_branch
    %1327 = sbr.rel (0) target = $region17
  $region16: #{generator_forward.5} parent=0 // pred_region
    _
  $region17: #{generator_forward.5} parent=0 // pred_fallthru
    _
  // Predicated region
  $region18: #{generator_forward.5} parent=0 // pred_check
    _
  $region19: #{generator_forward.5} parent=0 // pred_check_branch
    %1329 = sbr.rel (0) target = $region21
  $region20: #{generator_forward.5} parent=0 // pred_region
    _
  $region21: #{generator_forward.5} parent=0 // pred_fallthru
    _

// kernel: generator_forward.6
$region0: #{generator_forward.6}
  #allocation0 [shape = 'u32[]', space=smem, size = 0x4, offset = 0x4, fixed_abs, tag = 'smem constant byte address 0x4 - core index']
  #allocation1 [shape = 'u32[144,128]{1,0:T(1,128)}', space=vmem, size = 0x12000, scoped, tag = 'internal scratch']
  %s0 = inlined_call_operand.vmem [shape: f32[16,512], index: 0, kind: input, shape index: {}]
  %s1 = inlined_call_operand.vmem [shape: f32[512,2432], index: 1, kind: input, shape index: {}]
  %s2 = inlined_call_operand.vmem [shape: f32[16,1], index: 2, kind: input, shape index: {}]
  %s3 = inlined_call_operand.vmem [shape: f32[16,2432], index: 3, kind: output, shape index: {}]
  %s4 = sld [smem:[#allocation0]]
  $region22: #{generator_forward.6} parent=0
    _
  %s6 = ssub.s32 1, %s4
  %s7 = scalar_select 0, %s6, %s4
  // Predicated region
  $region2: #{generator_forward.6} parent=0 // pred_check
    _
  $region3: #{generator_forward.6} parent=0 // pred_check_branch
    %9 = sbr.rel (0) target = $region5
  $region4: #{generator_forward.6} parent=0 // pred_region
    _
  $region5: #{generator_forward.6} parent=0 // pred_fallthru
    _
  // Predicated region
  $region6: #{generator_forward.6} parent=0 // pred_check
    _
  $region7: #{generator_forward.6} parent=0 // pred_check_branch
    %11 = sbr.rel (0) target = $region9
  $region8: #{generator_forward.6} parent=0 // pred_region
    _
  $region9: #{generator_forward.6} parent=0 // pred_fallthru
    _
  // Predicated region
  $region10: #{generator_forward.6} parent=0 // pred_check
    _
  $region11: #{generator_forward.6} parent=0 // pred_check_branch
    %13 = sbr.rel (0) target = $region13
  $region12: #{generator_forward.6} parent=0 // pred_region
    _
  $region13: #{generator_forward.6} parent=0 // pred_fallthru
    _
  %v14 = vld [vmem:[%s0] sm:$0xff]
  %v15 = vld [vmem:[%s0 + $0x8] sm:$0xff]
  %v16 = vld [vmem:[%s0 + $0x10] sm:$0xff]
  %v17 = vld [vmem:[%s0 + $0x18] sm:$0xff]
  %v18 = vld [vmem:[%s0 + $0x20] sm:$0xff]
  %v19 = vld [vmem:[%s0 + $0x28] sm:$0xff]
  %v20 = vld [vmem:[%s0 + $0x30] sm:$0xff]
  %v21 = vld [vmem:[%s0 + $0x38] sm:$0xff]
  %v22 = vld [vmem:[%s1] sm:$0xff]
  %v23 = vld [vmem:[%s1 + $0x8] sm:$0xff]
  %v24 = vld [vmem:[%s1 + $0x10] sm:$0xff]
  %v25 = vld [vmem:[%s1 + $0x18] sm:$0xff]
  %v26 = vld [vmem:[%s1 + $0x20] sm:$0xff]
  %v27 = vld [vmem:[%s1 + $0x28] sm:$0xff]
  %v28 = vld [vmem:[%s1 + $0x30] sm:$0xff]
  %v29 = vld [vmem:[%s1 + $0x38] sm:$0xff]
  %v30 = vld [vmem:[%s1 + $0x40] sm:$0xff]
  %v31 = vld [vmem:[%s1 + $0x48] sm:$0xff]
  %v32 = vld [vmem:[%s1 + $0x50] sm:$0xff]
  %v33 = vld [vmem:[%s1 + $0x58] sm:$0xff]
  %v34 = vld [vmem:[%s1 + $0x60] sm:$0xff]
  %v35 = vld [vmem:[%s1 + $0x68] sm:$0xff]
  %v36 = vld [vmem:[%s1 + $0x70] sm:$0xff]
  %v37 = vld [vmem:[%s1 + $0x78] sm:$0xff]
  %v38 = vld [vmem:[%s1 + $0x80] sm:$0xff]
  %v39 = vld [vmem:[%s1 + $0x88] sm:$0xff]
  %v40 = vld [vmem:[%s1 + $0x90] sm:$0xff]
  %v41 = vld [vmem:[%s1 + $0x98] sm:$0xff]
  %v42 = vld [vmem:[%s1 + $0xa0] sm:$0xff]
  %v43 = vld [vmem:[%s1 + $0xa8] sm:$0xff]
  %v44 = vld [vmem:[%s1 + $0xb0] sm:$0xff]
  %v45 = vld [vmem:[%s1 + $0xb8] sm:$0xff]
  %v46 = vld [vmem:[%s1 + $0xc0] sm:$0xff]
  %v47 = vld [vmem:[%s1 + $0xc8] sm:$0xff]
  %v48 = vld [vmem:[%s1 + $0xd0] sm:$0xff]
  %v49 = vld [vmem:[%s1 + $0xd8] sm:$0xff]
  %v50 = vld [vmem:[%s1 + $0xe0] sm:$0xff]
  %v51 = vld [vmem:[%s1 + $0xe8] sm:$0xff]
  %v52 = vld [vmem:[%s1 + $0xf0] sm:$0xff]
  %v53 = vld [vmem:[%s1 + $0xf8] sm:$0xff]
  %v54 = vld [vmem:[%s1 + $0x100] sm:$0xff]
  %v55 = vld [vmem:[%s1 + $0x108] sm:$0xff]
  %v56 = vld [vmem:[%s1 + $0x110] sm:$0xff]
  %v57 = vld [vmem:[%s1 + $0x118] sm:$0xff]
  %v58 = vld [vmem:[%s1 + $0x120] sm:$0xff]
  %v59 = vld [vmem:[%s1 + $0x128] sm:$0xff]
  %v60 = vld [vmem:[%s1 + $0x130] sm:$0xff]
  %v61 = vld [vmem:[%s1 + $0x138] sm:$0xff]
  %v62 = vld [vmem:[%s1 + $0x140] sm:$0xff]
  %v63 = vld [vmem:[%s1 + $0x148] sm:$0xff]
  %v64 = vld [vmem:[%s1 + $0x150] sm:$0xff]
  %v65 = vld [vmem:[%s1 + $0x158] sm:$0xff]
  %v66 = vld [vmem:[%s1 + $0x160] sm:$0xff]
  %v67 = vld [vmem:[%s1 + $0x168] sm:$0xff]
  %v68 = vld [vmem:[%s1 + $0x170] sm:$0xff]
  %v69 = vld [vmem:[%s1 + $0x178] sm:$0xff]
  %v70 = vld [vmem:[%s1 + $0x180] sm:$0xff]
  %v71 = vld [vmem:[%s1 + $0x188] sm:$0xff]
  %v72 = vld [vmem:[%s1 + $0x190] sm:$0xff]
  %v73 = vld [vmem:[%s1 + $0x198] sm:$0xff]
  %v74 = vld [vmem:[%s1 + $0x1a0] sm:$0xff]
  %v75 = vld [vmem:[%s1 + $0x1a8] sm:$0xff]
  %v76 = vld [vmem:[%s1 + $0x1b0] sm:$0xff]
  %v77 = vld [vmem:[%s1 + $0x1b8] sm:$0xff]
  %v78 = vld [vmem:[%s1 + $0x1c0] sm:$0xff]
  %v79 = vld [vmem:[%s1 + $0x1c8] sm:$0xff]
  %v80 = vld [vmem:[%s1 + $0x1d0] sm:$0xff]
  %v81 = vld [vmem:[%s1 + $0x1d8] sm:$0xff]
  %v82 = vld [vmem:[%s1 + $0x1e0] sm:$0xff]
  %v83 = vld [vmem:[%s1 + $0x1e8] sm:$0xff]
  %v84 = vld [vmem:[%s1 + $0x1f0] sm:$0xff]
  %v85 = vld [vmem:[%s1 + $0x1f8] sm:$0xff]
  %v86 = vld [vmem:[%s1 + $0x200] sm:$0xff]
  %v87 = vld [vmem:[%s1 + $0x208] sm:$0xff]
  %v88 = vld [vmem:[%s1 + $0x210] sm:$0xff]
  %v89 = vld [vmem:[%s1 + $0x218] sm:$0xff]
  %v90 = vld [vmem:[%s1 + $0x220] sm:$0xff]
  %v91 = vld [vmem:[%s1 + $0x228] sm:$0xff]
  %v92 = vld [vmem:[%s1 + $0x230] sm:$0xff]
  %v93 = vld [vmem:[%s1 + $0x238] sm:$0xff]
  %v94 = vld [vmem:[%s1 + $0x240] sm:$0xff]
  %v95 = vld [vmem:[%s1 + $0x248] sm:$0xff]
  %v96 = vld [vmem:[%s1 + $0x250] sm:$0xff]
  %v97 = vld [vmem:[%s1 + $0x258] sm:$0xff]
  %v98 = vld [vmem:[%s1 + $0x260] sm:$0xff]
  %v99 = vld [vmem:[%s1 + $0x268] sm:$0xff]
  %v100 = vld [vmem:[%s1 + $0x270] sm:$0xff]
  %v101 = vld [vmem:[%s1 + $0x278] sm:$0xff]
  %v102 = vld [vmem:[%s1 + $0x280] sm:$0xff]
  %v103 = vld [vmem:[%s1 + $0x288] sm:$0xff]
  %v104 = vld [vmem:[%s1 + $0x290] sm:$0xff]
  %v105 = vld [vmem:[%s1 + $0x298] sm:$0xff]
  %v106 = vld [vmem:[%s1 + $0x2a0] sm:$0xff]
  %v107 = vld [vmem:[%s1 + $0x2a8] sm:$0xff]
  %v108 = vld [vmem:[%s1 + $0x2b0] sm:$0xff]
  %v109 = vld [vmem:[%s1 + $0x2b8] sm:$0xff]
  %v110 = vld [vmem:[%s1 + $0x2c0] sm:$0xff]
  %v111 = vld [vmem:[%s1 + $0x2c8] sm:$0xff]
  %v112 = vld [vmem:[%s1 + $0x2d0] sm:$0xff]
  %v113 = vld [vmem:[%s1 + $0x2d8] sm:$0xff]
  %v114 = vld [vmem:[%s1 + $0x2e0] sm:$0xff]
  %v115 = vld [vmem:[%s1 + $0x2e8] sm:$0xff]
  %v116 = vld [vmem:[%s1 + $0x2f0] sm:$0xff]
  %v117 = vld [vmem:[%s1 + $0x2f8] sm:$0xff]
  %v118 = vld [vmem:[%s1 + $0x300] sm:$0xff]
  %v119 = vld [vmem:[%s1 + $0x308] sm:$0xff]
  %v120 = vld [vmem:[%s1 + $0x310] sm:$0xff]
  %v121 = vld [vmem:[%s1 + $0x318] sm:$0xff]
  %v122 = vld [vmem:[%s1 + $0x320] sm:$0xff]
  %v123 = vld [vmem:[%s1 + $0x328] sm:$0xff]
  %v124 = vld [vmem:[%s1 + $0x330] sm:$0xff]
  %v125 = vld [vmem:[%s1 + $0x338] sm:$0xff]
  %v126 = vld [vmem:[%s1 + $0x340] sm:$0xff]
  %v127 = vld [vmem:[%s1 + $0x348] sm:$0xff]
  %v128 = vld [vmem:[%s1 + $0x350] sm:$0xff]
  %v129 = vld [vmem:[%s1 + $0x358] sm:$0xff]
  %v130 = vld [vmem:[%s1 + $0x360] sm:$0xff]
  %v131 = vld [vmem:[%s1 + $0x368] sm:$0xff]
  %v132 = vld [vmem:[%s1 + $0x370] sm:$0xff]
  %v133 = vld [vmem:[%s1 + $0x378] sm:$0xff]
  %v134 = vld [vmem:[%s1 + $0x380] sm:$0xff]
  %v135 = vld [vmem:[%s1 + $0x388] sm:$0xff]
  %v136 = vld [vmem:[%s1 + $0x390] sm:$0xff]
  %v137 = vld [vmem:[%s1 + $0x398] sm:$0xff]
  %v138 = vld [vmem:[%s1 + $0x3a0] sm:$0xff]
  %v139 = vld [vmem:[%s1 + $0x3a8] sm:$0xff]
  %v140 = vld [vmem:[%s1 + $0x3b0] sm:$0xff]
  %v141 = vld [vmem:[%s1 + $0x3b8] sm:$0xff]
  %v142 = vld [vmem:[%s1 + $0x3c0] sm:$0xff]
  %v143 = vld [vmem:[%s1 + $0x3c8] sm:$0xff]
  %v144 = vld [vmem:[%s1 + $0x3d0] sm:$0xff]
  %v145 = vld [vmem:[%s1 + $0x3d8] sm:$0xff]
  %v146 = vld [vmem:[%s1 + $0x3e0] sm:$0xff]
  %v147 = vld [vmem:[%s1 + $0x3e8] sm:$0xff]
  %v148 = vld [vmem:[%s1 + $0x3f0] sm:$0xff]
  %v149 = vld [vmem:[%s1 + $0x3f8] sm:$0xff]
  %v150 = vld [vmem:[%s1 + $0x400] sm:$0xff]
  %v151 = vld [vmem:[%s1 + $0x408] sm:$0xff]
  %v152 = vld [vmem:[%s1 + $0x410] sm:$0xff]
  %v153 = vld [vmem:[%s1 + $0x418] sm:$0xff]
  %v154 = vld [vmem:[%s1 + $0x420] sm:$0xff]
  %v155 = vld [vmem:[%s1 + $0x428] sm:$0xff]
  %v156 = vld [vmem:[%s1 + $0x430] sm:$0xff]
  %v157 = vld [vmem:[%s1 + $0x438] sm:$0xff]
  %v158 = vld [vmem:[%s1 + $0x440] sm:$0xff]
  %v159 = vld [vmem:[%s1 + $0x448] sm:$0xff]
  %v160 = vld [vmem:[%s1 + $0x450] sm:$0xff]
  %v161 = vld [vmem:[%s1 + $0x458] sm:$0xff]
  %v162 = vld [vmem:[%s1 + $0x460] sm:$0xff]
  %v163 = vld [vmem:[%s1 + $0x468] sm:$0xff]
  %v164 = vld [vmem:[%s1 + $0x470] sm:$0xff]
  %v165 = vld [vmem:[%s1 + $0x478] sm:$0xff]
  %v166 = vld [vmem:[%s1 + $0x480] sm:$0xff]
  %v167 = vld [vmem:[%s1 + $0x488] sm:$0xff]
  %v168 = vld [vmem:[%s1 + $0x490] sm:$0xff]
  %v169 = vld [vmem:[%s1 + $0x498] sm:$0xff]
  %v170 = vld [vmem:[%s1 + $0x4a0] sm:$0xff]
  %v171 = vld [vmem:[%s1 + $0x4a8] sm:$0xff]
  %v172 = vld [vmem:[%s1 + $0x4b0] sm:$0xff]
  %v173 = vld [vmem:[%s1 + $0x4b8] sm:$0xff]
  %v174 = vld [vmem:[%s1 + $0x4c0] sm:$0xff]
  %v175 = vld [vmem:[%s1 + $0x4c8] sm:$0xff]
  %v176 = vld [vmem:[%s1 + $0x4d0] sm:$0xff]
  %v177 = vld [vmem:[%s1 + $0x4d8] sm:$0xff]
  %v178 = vld [vmem:[%s1 + $0x4e0] sm:$0xff]
  %v179 = vld [vmem:[%s1 + $0x4e8] sm:$0xff]
  %v180 = vld [vmem:[%s1 + $0x4f0] sm:$0xff]
  %v181 = vld [vmem:[%s1 + $0x4f8] sm:$0xff]
  %v182 = vld [vmem:[%s1 + $0x500] sm:$0xff]
  %v183 = vld [vmem:[%s1 + $0x508] sm:$0xff]
  %v184 = vld [vmem:[%s1 + $0x510] sm:$0xff]
  %v185 = vld [vmem:[%s1 + $0x518] sm:$0xff]
  %v186 = vld [vmem:[%s1 + $0x520] sm:$0xff]
  %v187 = vld [vmem:[%s1 + $0x528] sm:$0xff]
  %v188 = vld [vmem:[%s1 + $0x530] sm:$0xff]
  %v189 = vld [vmem:[%s1 + $0x538] sm:$0xff]
  %v190 = vld [vmem:[%s1 + $0x540] sm:$0xff]
  %v191 = vld [vmem:[%s1 + $0x548] sm:$0xff]
  %v192 = vld [vmem:[%s1 + $0x550] sm:$0xff]
  %v193 = vld [vmem:[%s1 + $0x558] sm:$0xff]
  %v194 = vld [vmem:[%s1 + $0x560] sm:$0xff]
  %v195 = vld [vmem:[%s1 + $0x568] sm:$0xff]
  %v196 = vld [vmem:[%s1 + $0x570] sm:$0xff]
  %v197 = vld [vmem:[%s1 + $0x578] sm:$0xff]
  %v198 = vld [vmem:[%s1 + $0x580] sm:$0xff]
  %v199 = vld [vmem:[%s1 + $0x588] sm:$0xff]
  %v200 = vld [vmem:[%s1 + $0x590] sm:$0xff]
  %v201 = vld [vmem:[%s1 + $0x598] sm:$0xff]
  %v202 = vld [vmem:[%s1 + $0x5a0] sm:$0xff]
  %v203 = vld [vmem:[%s1 + $0x5a8] sm:$0xff]
  %v204 = vld [vmem:[%s1 + $0x5b0] sm:$0xff]
  %v205 = vld [vmem:[%s1 + $0x5b8] sm:$0xff]
  %v206 = vld [vmem:[%s1 + $0x5c0] sm:$0xff]
  %v207 = vld [vmem:[%s1 + $0x5c8] sm:$0xff]
  %v208 = vld [vmem:[%s1 + $0x5d0] sm:$0xff]
  %v209 = vld [vmem:[%s1 + $0x5d8] sm:$0xff]
  %v210 = vld [vmem:[%s1 + $0x5e0] sm:$0xff]
  %v211 = vld [vmem:[%s1 + $0x5e8] sm:$0xff]
  %v212 = vld [vmem:[%s1 + $0x5f0] sm:$0xff]
  %v213 = vld [vmem:[%s1 + $0x5f8] sm:$0xff]
  %v214 = vld [vmem:[%s1 + $0x600] sm:$0xff]
  %v215 = vld [vmem:[%s1 + $0x608] sm:$0xff]
  %v216 = vld [vmem:[%s1 + $0x610] sm:$0xff]
  %v217 = vld [vmem:[%s1 + $0x618] sm:$0xff]
  %v218 = vld [vmem:[%s1 + $0x620] sm:$0xff]
  %v219 = vld [vmem:[%s1 + $0x628] sm:$0xff]
  %v220 = vld [vmem:[%s1 + $0x630] sm:$0xff]
  %v221 = vld [vmem:[%s1 + $0x638] sm:$0xff]
  %v222 = vld [vmem:[%s1 + $0x640] sm:$0xff]
  %v223 = vld [vmem:[%s1 + $0x648] sm:$0xff]
  %v224 = vld [vmem:[%s1 + $0x650] sm:$0xff]
  %v225 = vld [vmem:[%s1 + $0x658] sm:$0xff]
  %v226 = vld [vmem:[%s1 + $0x660] sm:$0xff]
  %v227 = vld [vmem:[%s1 + $0x668] sm:$0xff]
  %v228 = vld [vmem:[%s1 + $0x670] sm:$0xff]
  %v229 = vld [vmem:[%s1 + $0x678] sm:$0xff]
  %v230 = vld [vmem:[%s1 + $0x680] sm:$0xff]
  %v231 = vld [vmem:[%s1 + $0x688] sm:$0xff]
  %v232 = vld [vmem:[%s1 + $0x690] sm:$0xff]
  %v233 = vld [vmem:[%s1 + $0x698] sm:$0xff]
  %v234 = vld [vmem:[%s1 + $0x6a0] sm:$0xff]
  %v235 = vld [vmem:[%s1 + $0x6a8] sm:$0xff]
  %v236 = vld [vmem:[%s1 + $0x6b0] sm:$0xff]
  %v237 = vld [vmem:[%s1 + $0x6b8] sm:$0xff]
  %v238 = vld [vmem:[%s1 + $0x6c0] sm:$0xff]
  %v239 = vld [vmem:[%s1 + $0x6c8] sm:$0xff]
  %v240 = vld [vmem:[%s1 + $0x6d0] sm:$0xff]
  %v241 = vld [vmem:[%s1 + $0x6d8] sm:$0xff]
  %v242 = vld [vmem:[%s1 + $0x6e0] sm:$0xff]
  %v243 = vld [vmem:[%s1 + $0x6e8] sm:$0xff]
  %v244 = vld [vmem:[%s1 + $0x6f0] sm:$0xff]
  %v245 = vld [vmem:[%s1 + $0x6f8] sm:$0xff]
  %v246 = vld [vmem:[%s1 + $0x700] sm:$0xff]
  %v247 = vld [vmem:[%s1 + $0x708] sm:$0xff]
  %v248 = vld [vmem:[%s1 + $0x710] sm:$0xff]
  %v249 = vld [vmem:[%s1 + $0x718] sm:$0xff]
  %v250 = vld [vmem:[%s1 + $0x720] sm:$0xff]
  %v251 = vld [vmem:[%s1 + $0x728] sm:$0xff]
  %v252 = vld [vmem:[%s1 + $0x730] sm:$0xff]
  %v253 = vld [vmem:[%s1 + $0x738] sm:$0xff]
  %v254 = vld [vmem:[%s1 + $0x740] sm:$0xff]
  %v255 = vld [vmem:[%s1 + $0x748] sm:$0xff]
  %v256 = vld [vmem:[%s1 + $0x750] sm:$0xff]
  %v257 = vld [vmem:[%s1 + $0x758] sm:$0xff]
  %v258 = vld [vmem:[%s1 + $0x760] sm:$0xff]
  %v259 = vld [vmem:[%s1 + $0x768] sm:$0xff]
  %v260 = vld [vmem:[%s1 + $0x770] sm:$0xff]
  %v261 = vld [vmem:[%s1 + $0x778] sm:$0xff]
  %v262 = vld [vmem:[%s1 + $0x780] sm:$0xff]
  %v263 = vld [vmem:[%s1 + $0x788] sm:$0xff]
  %v264 = vld [vmem:[%s1 + $0x790] sm:$0xff]
  %v265 = vld [vmem:[%s1 + $0x798] sm:$0xff]
  %v266 = vld [vmem:[%s1 + $0x7a0] sm:$0xff]
  %v267 = vld [vmem:[%s1 + $0x7a8] sm:$0xff]
  %v268 = vld [vmem:[%s1 + $0x7b0] sm:$0xff]
  %v269 = vld [vmem:[%s1 + $0x7b8] sm:$0xff]
  %v270 = vld [vmem:[%s1 + $0x7c0] sm:$0xff]
  %v271 = vld [vmem:[%s1 + $0x7c8] sm:$0xff]
  %v272 = vld [vmem:[%s1 + $0x7d0] sm:$0xff]
  %v273 = vld [vmem:[%s1 + $0x7d8] sm:$0xff]
  %v274 = vld [vmem:[%s1 + $0x7e0] sm:$0xff]
  %v275 = vld [vmem:[%s1 + $0x7e8] sm:$0xff]
  %v276 = vld [vmem:[%s1 + $0x7f0] sm:$0xff]
  %v277 = vld [vmem:[%s1 + $0x7f8] sm:$0xff]
  %v278 = vld [vmem:[%s1 + $0x800] sm:$0xff]
  %v279 = vld [vmem:[%s1 + $0x808] sm:$0xff]
  %v280 = vld [vmem:[%s1 + $0x810] sm:$0xff]
  %v281 = vld [vmem:[%s1 + $0x818] sm:$0xff]
  %v282 = vld [vmem:[%s1 + $0x820] sm:$0xff]
  %v283 = vld [vmem:[%s1 + $0x828] sm:$0xff]
  %v284 = vld [vmem:[%s1 + $0x830] sm:$0xff]
  %v285 = vld [vmem:[%s1 + $0x838] sm:$0xff]
  %v286 = vld [vmem:[%s1 + $0x840] sm:$0xff]
  %v287 = vld [vmem:[%s1 + $0x848] sm:$0xff]
  %v288 = vld [vmem:[%s1 + $0x850] sm:$0xff]
  %v289 = vld [vmem:[%s1 + $0x858] sm:$0xff]
  %v290 = vld [vmem:[%s1 + $0x860] sm:$0xff]
  %v291 = vld [vmem:[%s1 + $0x868] sm:$0xff]
  %v292 = vld [vmem:[%s1 + $0x870] sm:$0xff]
  %v293 = vld [vmem:[%s1 + $0x878] sm:$0xff]
  %v294 = vld [vmem:[%s1 + $0x880] sm:$0xff]
  %v295 = vld [vmem:[%s1 + $0x888] sm:$0xff]
  %v296 = vld [vmem:[%s1 + $0x890] sm:$0xff]
  %v297 = vld [vmem:[%s1 + $0x898] sm:$0xff]
  %v298 = vld [vmem:[%s1 + $0x8a0] sm:$0xff]
  %v299 = vld [vmem:[%s1 + $0x8a8] sm:$0xff]
  %v300 = vld [vmem:[%s1 + $0x8b0] sm:$0xff]
  %v301 = vld [vmem:[%s1 + $0x8b8] sm:$0xff]
  %v302 = vld [vmem:[%s1 + $0x8c0] sm:$0xff]
  %v303 = vld [vmem:[%s1 + $0x8c8] sm:$0xff]
  %v304 = vld [vmem:[%s1 + $0x8d0] sm:$0xff]
  %v305 = vld [vmem:[%s1 + $0x8d8] sm:$0xff]
  %v306 = vld [vmem:[%s1 + $0x8e0] sm:$0xff]
  %v307 = vld [vmem:[%s1 + $0x8e8] sm:$0xff]
  %v308 = vld [vmem:[%s1 + $0x8f0] sm:$0xff]
  %v309 = vld [vmem:[%s1 + $0x8f8] sm:$0xff]
  %v310 = vld [vmem:[%s1 + $0x900] sm:$0xff]
  %v311 = vld [vmem:[%s1 + $0x908] sm:$0xff]
  %v312 = vld [vmem:[%s1 + $0x910] sm:$0xff]
  %v313 = vld [vmem:[%s1 + $0x918] sm:$0xff]
  %v314 = vld [vmem:[%s1 + $0x920] sm:$0xff]
  %v315 = vld [vmem:[%s1 + $0x928] sm:$0xff]
  %v316 = vld [vmem:[%s1 + $0x930] sm:$0xff]
  %v317 = vld [vmem:[%s1 + $0x938] sm:$0xff]
  %v318 = vld [vmem:[%s1 + $0x940] sm:$0xff]
  %v319 = vld [vmem:[%s1 + $0x948] sm:$0xff]
  %v320 = vld [vmem:[%s1 + $0x950] sm:$0xff]
  %v321 = vld [vmem:[%s1 + $0x958] sm:$0xff]
  %v322 = vld [vmem:[%s1 + $0x960] sm:$0xff]
  %v323 = vld [vmem:[%s1 + $0x968] sm:$0xff]
  %v324 = vld [vmem:[%s1 + $0x970] sm:$0xff]
  %v325 = vld [vmem:[%s1 + $0x978] sm:$0xff]
  %v326 = vld [vmem:[%s1 + $0x980] sm:$0xff]
  %v327 = vld [vmem:[%s1 + $0x988] sm:$0xff]
  %v328 = vld [vmem:[%s1 + $0x990] sm:$0xff]
  %v329 = vld [vmem:[%s1 + $0x998] sm:$0xff]
  %v330 = vld [vmem:[%s1 + $0x9a0] sm:$0xff]
  %v331 = vld [vmem:[%s1 + $0x9a8] sm:$0xff]
  %v332 = vld [vmem:[%s1 + $0x9b0] sm:$0xff]
  %v333 = vld [vmem:[%s1 + $0x9b8] sm:$0xff]
  %v334 = vld [vmem:[%s1 + $0x9c0] sm:$0xff]
  %v335 = vld [vmem:[%s1 + $0x9c8] sm:$0xff]
  %v336 = vld [vmem:[%s1 + $0x9d0] sm:$0xff]
  %v337 = vld [vmem:[%s1 + $0x9d8] sm:$0xff]
  %v338 = vld [vmem:[%s1 + $0x9e0] sm:$0xff]
  %v339 = vld [vmem:[%s1 + $0x9e8] sm:$0xff]
  %v340 = vld [vmem:[%s1 + $0x9f0] sm:$0xff]
  %v341 = vld [vmem:[%s1 + $0x9f8] sm:$0xff]
  %v342 = vld [vmem:[%s1 + $0xa00] sm:$0xff]
  %v343 = vld [vmem:[%s1 + $0xa08] sm:$0xff]
  %v344 = vld [vmem:[%s1 + $0xa10] sm:$0xff]
  %v345 = vld [vmem:[%s1 + $0xa18] sm:$0xff]
  %v346 = vld [vmem:[%s1 + $0xa20] sm:$0xff]
  %v347 = vld [vmem:[%s1 + $0xa28] sm:$0xff]
  %v348 = vld [vmem:[%s1 + $0xa30] sm:$0xff]
  %v349 = vld [vmem:[%s1 + $0xa38] sm:$0xff]
  %v350 = vld [vmem:[%s1 + $0xa40] sm:$0xff]
  %v351 = vld [vmem:[%s1 + $0xa48] sm:$0xff]
  %v352 = vld [vmem:[%s1 + $0xa50] sm:$0xff]
  %v353 = vld [vmem:[%s1 + $0xa58] sm:$0xff]
  %v354 = vld [vmem:[%s1 + $0xa60] sm:$0xff]
  %v355 = vld [vmem:[%s1 + $0xa68] sm:$0xff]
  %v356 = vld [vmem:[%s1 + $0xa70] sm:$0xff]
  %v357 = vld [vmem:[%s1 + $0xa78] sm:$0xff]
  %v358 = vld [vmem:[%s1 + $0xa80] sm:$0xff]
  %v359 = vld [vmem:[%s1 + $0xa88] sm:$0xff]
  %v360 = vld [vmem:[%s1 + $0xa90] sm:$0xff]
  %v361 = vld [vmem:[%s1 + $0xa98] sm:$0xff]
  %v362 = vld [vmem:[%s1 + $0xaa0] sm:$0xff]
  %v363 = vld [vmem:[%s1 + $0xaa8] sm:$0xff]
  %v364 = vld [vmem:[%s1 + $0xab0] sm:$0xff]
  %v365 = vld [vmem:[%s1 + $0xab8] sm:$0xff]
  %v366 = vld [vmem:[%s1 + $0xac0] sm:$0xff]
  %v367 = vld [vmem:[%s1 + $0xac8] sm:$0xff]
  %v368 = vld [vmem:[%s1 + $0xad0] sm:$0xff]
  %v369 = vld [vmem:[%s1 + $0xad8] sm:$0xff]
  %v370 = vld [vmem:[%s1 + $0xae0] sm:$0xff]
  %v371 = vld [vmem:[%s1 + $0xae8] sm:$0xff]
  %v372 = vld [vmem:[%s1 + $0xaf0] sm:$0xff]
  %v373 = vld [vmem:[%s1 + $0xaf8] sm:$0xff]
  %v374 = vld [vmem:[%s1 + $0xb00] sm:$0xff]
  %v375 = vld [vmem:[%s1 + $0xb08] sm:$0xff]
  %v376 = vld [vmem:[%s1 + $0xb10] sm:$0xff]
  %v377 = vld [vmem:[%s1 + $0xb18] sm:$0xff]
  %v378 = vld [vmem:[%s1 + $0xb20] sm:$0xff]
  %v379 = vld [vmem:[%s1 + $0xb28] sm:$0xff]
  %v380 = vld [vmem:[%s1 + $0xb30] sm:$0xff]
  %v381 = vld [vmem:[%s1 + $0xb38] sm:$0xff]
  %v382 = vld [vmem:[%s1 + $0xb40] sm:$0xff]
  %v383 = vld [vmem:[%s1 + $0xb48] sm:$0xff]
  %v384 = vld [vmem:[%s1 + $0xb50] sm:$0xff]
  %v385 = vld [vmem:[%s1 + $0xb58] sm:$0xff]
  %v386 = vld [vmem:[%s1 + $0xb60] sm:$0xff]
  %v387 = vld [vmem:[%s1 + $0xb68] sm:$0xff]
  %v388 = vld [vmem:[%s1 + $0xb70] sm:$0xff]
  %v389 = vld [vmem:[%s1 + $0xb78] sm:$0xff]
  %v390 = vld [vmem:[%s1 + $0xb80] sm:$0xff]
  %v391 = vld [vmem:[%s1 + $0xb88] sm:$0xff]
  %v392 = vld [vmem:[%s1 + $0xb90] sm:$0xff]
  %v393 = vld [vmem:[%s1 + $0xb98] sm:$0xff]
  %v394 = vld [vmem:[%s1 + $0xba0] sm:$0xff]
  %v395 = vld [vmem:[%s1 + $0xba8] sm:$0xff]
  %v396 = vld [vmem:[%s1 + $0xbb0] sm:$0xff]
  %v397 = vld [vmem:[%s1 + $0xbb8] sm:$0xff]
  %v398 = vld [vmem:[%s1 + $0xbc0] sm:$0xff]
  %v399 = vld [vmem:[%s1 + $0xbc8] sm:$0xff]
  %v400 = vld [vmem:[%s1 + $0xbd0] sm:$0xff]
  %v401 = vld [vmem:[%s1 + $0xbd8] sm:$0xff]
  %v402 = vld [vmem:[%s1 + $0xbe0] sm:$0xff]
  %v403 = vld [vmem:[%s1 + $0xbe8] sm:$0xff]
  %v404 = vld [vmem:[%s1 + $0xbf0] sm:$0xff]
  %v405 = vld [vmem:[%s1 + $0xbf8] sm:$0xff]
  %v406 = vld [vmem:[%s1 + $0xc00] sm:$0xff]
  %v407 = vld [vmem:[%s1 + $0xc08] sm:$0xff]
  %v408 = vld [vmem:[%s1 + $0xc10] sm:$0xff]
  %v409 = vld [vmem:[%s1 + $0xc18] sm:$0xff]
  %v410 = vld [vmem:[%s1 + $0xc20] sm:$0xff]
  %v411 = vld [vmem:[%s1 + $0xc28] sm:$0xff]
  %v412 = vld [vmem:[%s1 + $0xc30] sm:$0xff]
  %v413 = vld [vmem:[%s1 + $0xc38] sm:$0xff]
  %v414 = vld [vmem:[%s1 + $0xc40] sm:$0xff]
  %v415 = vld [vmem:[%s1 + $0xc48] sm:$0xff]
  %v416 = vld [vmem:[%s1 + $0xc50] sm:$0xff]
  %v417 = vld [vmem:[%s1 + $0xc58] sm:$0xff]
  %v418 = vld [vmem:[%s1 + $0xc60] sm:$0xff]
  %v419 = vld [vmem:[%s1 + $0xc68] sm:$0xff]
  %v420 = vld [vmem:[%s1 + $0xc70] sm:$0xff]
  %v421 = vld [vmem:[%s1 + $0xc78] sm:$0xff]
  %v422 = vld [vmem:[%s1 + $0xc80] sm:$0xff]
  %v423 = vld [vmem:[%s1 + $0xc88] sm:$0xff]
  %v424 = vld [vmem:[%s1 + $0xc90] sm:$0xff]
  %v425 = vld [vmem:[%s1 + $0xc98] sm:$0xff]
  %v426 = vld [vmem:[%s1 + $0xca0] sm:$0xff]
  %v427 = vld [vmem:[%s1 + $0xca8] sm:$0xff]
  %v428 = vld [vmem:[%s1 + $0xcb0] sm:$0xff]
  %v429 = vld [vmem:[%s1 + $0xcb8] sm:$0xff]
  %v430 = vld [vmem:[%s1 + $0xcc0] sm:$0xff]
  %v431 = vld [vmem:[%s1 + $0xcc8] sm:$0xff]
  %v432 = vld [vmem:[%s1 + $0xcd0] sm:$0xff]
  %v433 = vld [vmem:[%s1 + $0xcd8] sm:$0xff]
  %v434 = vld [vmem:[%s1 + $0xce0] sm:$0xff]
  %v435 = vld [vmem:[%s1 + $0xce8] sm:$0xff]
  %v436 = vld [vmem:[%s1 + $0xcf0] sm:$0xff]
  %v437 = vld [vmem:[%s1 + $0xcf8] sm:$0xff]
  %v438 = vld [vmem:[%s1 + $0xd00] sm:$0xff]
  %v439 = vld [vmem:[%s1 + $0xd08] sm:$0xff]
  %v440 = vld [vmem:[%s1 + $0xd10] sm:$0xff]
  %v441 = vld [vmem:[%s1 + $0xd18] sm:$0xff]
  %v442 = vld [vmem:[%s1 + $0xd20] sm:$0xff]
  %v443 = vld [vmem:[%s1 + $0xd28] sm:$0xff]
  %v444 = vld [vmem:[%s1 + $0xd30] sm:$0xff]
  %v445 = vld [vmem:[%s1 + $0xd38] sm:$0xff]
  %v446 = vld [vmem:[%s1 + $0xd40] sm:$0xff]
  %v447 = vld [vmem:[%s1 + $0xd48] sm:$0xff]
  %v448 = vld [vmem:[%s1 + $0xd50] sm:$0xff]
  %v449 = vld [vmem:[%s1 + $0xd58] sm:$0xff]
  %v450 = vld [vmem:[%s1 + $0xd60] sm:$0xff]
  %v451 = vld [vmem:[%s1 + $0xd68] sm:$0xff]
  %v452 = vld [vmem:[%s1 + $0xd70] sm:$0xff]
  %v453 = vld [vmem:[%s1 + $0xd78] sm:$0xff]
  %v454 = vld [vmem:[%s1 + $0xd80] sm:$0xff]
  %v455 = vld [vmem:[%s1 + $0xd88] sm:$0xff]
  %v456 = vld [vmem:[%s1 + $0xd90] sm:$0xff]
  %v457 = vld [vmem:[%s1 + $0xd98] sm:$0xff]
  %v458 = vld [vmem:[%s1 + $0xda0] sm:$0xff]
  %v459 = vld [vmem:[%s1 + $0xda8] sm:$0xff]
  %v460 = vld [vmem:[%s1 + $0xdb0] sm:$0xff]
  %v461 = vld [vmem:[%s1 + $0xdb8] sm:$0xff]
  %v462 = vld [vmem:[%s1 + $0xdc0] sm:$0xff]
  %v463 = vld [vmem:[%s1 + $0xdc8] sm:$0xff]
  %v464 = vld [vmem:[%s1 + $0xdd0] sm:$0xff]
  %v465 = vld [vmem:[%s1 + $0xdd8] sm:$0xff]
  %v466 = vld [vmem:[%s1 + $0xde0] sm:$0xff]
  %v467 = vld [vmem:[%s1 + $0xde8] sm:$0xff]
  %v468 = vld [vmem:[%s1 + $0xdf0] sm:$0xff]
  %v469 = vld [vmem:[%s1 + $0xdf8] sm:$0xff]
  %v470 = vld [vmem:[%s1 + $0xe00] sm:$0xff]
  %v471 = vld [vmem:[%s1 + $0xe08] sm:$0xff]
  %v472 = vld [vmem:[%s1 + $0xe10] sm:$0xff]
  %v473 = vld [vmem:[%s1 + $0xe18] sm:$0xff]
  %v474 = vld [vmem:[%s1 + $0xe20] sm:$0xff]
  %v475 = vld [vmem:[%s1 + $0xe28] sm:$0xff]
  %v476 = vld [vmem:[%s1 + $0xe30] sm:$0xff]
  %v477 = vld [vmem:[%s1 + $0xe38] sm:$0xff]
  %v478 = vld [vmem:[%s1 + $0xe40] sm:$0xff]
  %v479 = vld [vmem:[%s1 + $0xe48] sm:$0xff]
  %v480 = vld [vmem:[%s1 + $0xe50] sm:$0xff]
  %v481 = vld [vmem:[%s1 + $0xe58] sm:$0xff]
  %v482 = vld [vmem:[%s1 + $0xe60] sm:$0xff]
  %v483 = vld [vmem:[%s1 + $0xe68] sm:$0xff]
  %v484 = vld [vmem:[%s1 + $0xe70] sm:$0xff]
  %v485 = vld [vmem:[%s1 + $0xe78] sm:$0xff]
  %v486 = vld [vmem:[%s1 + $0xe80] sm:$0xff]
  %v487 = vld [vmem:[%s1 + $0xe88] sm:$0xff]
  %v488 = vld [vmem:[%s1 + $0xe90] sm:$0xff]
  %v489 = vld [vmem:[%s1 + $0xe98] sm:$0xff]
  %v490 = vld [vmem:[%s1 + $0xea0] sm:$0xff]
  %v491 = vld [vmem:[%s1 + $0xea8] sm:$0xff]
  %v492 = vld [vmem:[%s1 + $0xeb0] sm:$0xff]
  %v493 = vld [vmem:[%s1 + $0xeb8] sm:$0xff]
  %v494 = vld [vmem:[%s1 + $0xec0] sm:$0xff]
  %v495 = vld [vmem:[%s1 + $0xec8] sm:$0xff]
  %v496 = vld [vmem:[%s1 + $0xed0] sm:$0xff]
  %v497 = vld [vmem:[%s1 + $0xed8] sm:$0xff]
  %v498 = vld [vmem:[%s1 + $0xee0] sm:$0xff]
  %v499 = vld [vmem:[%s1 + $0xee8] sm:$0xff]
  %v500 = vld [vmem:[%s1 + $0xef0] sm:$0xff]
  %v501 = vld [vmem:[%s1 + $0xef8] sm:$0xff]
  %v502 = vld [vmem:[%s1 + $0xf00] sm:$0xff]
  %v503 = vld [vmem:[%s1 + $0xf08] sm:$0xff]
  %v504 = vld [vmem:[%s1 + $0xf10] sm:$0xff]
  %v505 = vld [vmem:[%s1 + $0xf18] sm:$0xff]
  %v506 = vld [vmem:[%s1 + $0xf20] sm:$0xff]
  %v507 = vld [vmem:[%s1 + $0xf28] sm:$0xff]
  %v508 = vld [vmem:[%s1 + $0xf30] sm:$0xff]
  %v509 = vld [vmem:[%s1 + $0xf38] sm:$0xff]
  %v510 = vld [vmem:[%s1 + $0xf40] sm:$0xff]
  %v511 = vld [vmem:[%s1 + $0xf48] sm:$0xff]
  %v512 = vld [vmem:[%s1 + $0xf50] sm:$0xff]
  %v513 = vld [vmem:[%s1 + $0xf58] sm:$0xff]
  %v514 = vld [vmem:[%s1 + $0xf60] sm:$0xff]
  %v515 = vld [vmem:[%s1 + $0xf68] sm:$0xff]
  %v516 = vld [vmem:[%s1 + $0xf70] sm:$0xff]
  %v517 = vld [vmem:[%s1 + $0xf78] sm:$0xff]
  %v518 = vld [vmem:[%s1 + $0xf80] sm:$0xff]
  %v519 = vld [vmem:[%s1 + $0xf88] sm:$0xff]
  %v520 = vld [vmem:[%s1 + $0xf90] sm:$0xff]
  %v521 = vld [vmem:[%s1 + $0xf98] sm:$0xff]
  %v522 = vld [vmem:[%s1 + $0xfa0] sm:$0xff]
  %v523 = vld [vmem:[%s1 + $0xfa8] sm:$0xff]
  %v524 = vld [vmem:[%s1 + $0xfb0] sm:$0xff]
  %v525 = vld [vmem:[%s1 + $0xfb8] sm:$0xff]
  %v526 = vld [vmem:[%s1 + $0xfc0] sm:$0xff]
  %v527 = vld [vmem:[%s1 + $0xfc8] sm:$0xff]
  %v528 = vld [vmem:[%s1 + $0xfd0] sm:$0xff]
  %v529 = vld [vmem:[%s1 + $0xfd8] sm:$0xff]
  %v530 = vld [vmem:[%s1 + $0xfe0] sm:$0xff]
  %v531 = vld [vmem:[%s1 + $0xfe8] sm:$0xff]
  %v532 = vld [vmem:[%s1 + $0xff0] sm:$0xff]
  %v533 = vld [vmem:[%s1 + $0xff8] sm:$0xff]
  %v534 = vld [vmem:[%s1 + $0x1000] sm:$0xff]
  %v535 = vld [vmem:[%s1 + $0x1008] sm:$0xff]
  %v536 = vld [vmem:[%s1 + $0x1010] sm:$0xff]
  %v537 = vld [vmem:[%s1 + $0x1018] sm:$0xff]
  %v538 = vld [vmem:[%s1 + $0x1020] sm:$0xff]
  %v539 = vld [vmem:[%s1 + $0x1028] sm:$0xff]
  %v540 = vld [vmem:[%s1 + $0x1030] sm:$0xff]
  %v541 = vld [vmem:[%s1 + $0x1038] sm:$0xff]
  %v542 = vld [vmem:[%s1 + $0x1040] sm:$0xff]
  %v543 = vld [vmem:[%s1 + $0x1048] sm:$0xff]
  %v544 = vld [vmem:[%s1 + $0x1050] sm:$0xff]
  %v545 = vld [vmem:[%s1 + $0x1058] sm:$0xff]
  %v546 = vld [vmem:[%s1 + $0x1060] sm:$0xff]
  %v547 = vld [vmem:[%s1 + $0x1068] sm:$0xff]
  %v548 = vld [vmem:[%s1 + $0x1070] sm:$0xff]
  %v549 = vld [vmem:[%s1 + $0x1078] sm:$0xff]
  %v550 = vld [vmem:[%s1 + $0x1080] sm:$0xff]
  %v551 = vld [vmem:[%s1 + $0x1088] sm:$0xff]
  %v552 = vld [vmem:[%s1 + $0x1090] sm:$0xff]
  %v553 = vld [vmem:[%s1 + $0x1098] sm:$0xff]
  %v554 = vld [vmem:[%s1 + $0x10a0] sm:$0xff]
  %v555 = vld [vmem:[%s1 + $0x10a8] sm:$0xff]
  %v556 = vld [vmem:[%s1 + $0x10b0] sm:$0xff]
  %v557 = vld [vmem:[%s1 + $0x10b8] sm:$0xff]
  %v558 = vld [vmem:[%s1 + $0x10c0] sm:$0xff]
  %v559 = vld [vmem:[%s1 + $0x10c8] sm:$0xff]
  %v560 = vld [vmem:[%s1 + $0x10d0] sm:$0xff]
  %v561 = vld [vmem:[%s1 + $0x10d8] sm:$0xff]
  %v562 = vld [vmem:[%s1 + $0x10e0] sm:$0xff]
  %v563 = vld [vmem:[%s1 + $0x10e8] sm:$0xff]
  %v564 = vld [vmem:[%s1 + $0x10f0] sm:$0xff]
  %v565 = vld [vmem:[%s1 + $0x10f8] sm:$0xff]
  %v566 = vld [vmem:[%s1 + $0x1100] sm:$0xff]
  %v567 = vld [vmem:[%s1 + $0x1108] sm:$0xff]
  %v568 = vld [vmem:[%s1 + $0x1110] sm:$0xff]
  %v569 = vld [vmem:[%s1 + $0x1118] sm:$0xff]
  %v570 = vld [vmem:[%s1 + $0x1120] sm:$0xff]
  %v571 = vld [vmem:[%s1 + $0x1128] sm:$0xff]
  %v572 = vld [vmem:[%s1 + $0x1130] sm:$0xff]
  %v573 = vld [vmem:[%s1 + $0x1138] sm:$0xff]
  %v574 = vld [vmem:[%s1 + $0x1140] sm:$0xff]
  %v575 = vld [vmem:[%s1 + $0x1148] sm:$0xff]
  %v576 = vld [vmem:[%s1 + $0x1150] sm:$0xff]
  %v577 = vld [vmem:[%s1 + $0x1158] sm:$0xff]
  %v578 = vld [vmem:[%s1 + $0x1160] sm:$0xff]
  %v579 = vld [vmem:[%s1 + $0x1168] sm:$0xff]
  %v580 = vld [vmem:[%s1 + $0x1170] sm:$0xff]
  %v581 = vld [vmem:[%s1 + $0x1178] sm:$0xff]
  %v582 = vld [vmem:[%s1 + $0x1180] sm:$0xff]
  %v583 = vld [vmem:[%s1 + $0x1188] sm:$0xff]
  %v584 = vld [vmem:[%s1 + $0x1190] sm:$0xff]
  %v585 = vld [vmem:[%s1 + $0x1198] sm:$0xff]
  %v586 = vld [vmem:[%s1 + $0x11a0] sm:$0xff]
  %v587 = vld [vmem:[%s1 + $0x11a8] sm:$0xff]
  %v588 = vld [vmem:[%s1 + $0x11b0] sm:$0xff]
  %v589 = vld [vmem:[%s1 + $0x11b8] sm:$0xff]
  %v590 = vld [vmem:[%s1 + $0x11c0] sm:$0xff]
  %v591 = vld [vmem:[%s1 + $0x11c8] sm:$0xff]
  %v592 = vld [vmem:[%s1 + $0x11d0] sm:$0xff]
  %v593 = vld [vmem:[%s1 + $0x11d8] sm:$0xff]
  %v594 = vld [vmem:[%s1 + $0x11e0] sm:$0xff]
  %v595 = vld [vmem:[%s1 + $0x11e8] sm:$0xff]
  %v596 = vld [vmem:[%s1 + $0x11f0] sm:$0xff]
  %v597 = vld [vmem:[%s1 + $0x11f8] sm:$0xff]
  %v598 = vld [vmem:[%s1 + $0x1200] sm:$0xff]
  %v599 = vld [vmem:[%s1 + $0x1208] sm:$0xff]
  %v600 = vld [vmem:[%s1 + $0x1210] sm:$0xff]
  %v601 = vld [vmem:[%s1 + $0x1218] sm:$0xff]
  %v602 = vld [vmem:[%s1 + $0x1220] sm:$0xff]
  %v603 = vld [vmem:[%s1 + $0x1228] sm:$0xff]
  %v604 = vld [vmem:[%s1 + $0x1230] sm:$0xff]
  %v605 = vld [vmem:[%s1 + $0x1238] sm:$0xff]
  %v606 = vld [vmem:[%s1 + $0x1240] sm:$0xff]
  %v607 = vld [vmem:[%s1 + $0x1248] sm:$0xff]
  %v608 = vld [vmem:[%s1 + $0x1250] sm:$0xff]
  %v609 = vld [vmem:[%s1 + $0x1258] sm:$0xff]
  %v610 = vld [vmem:[%s1 + $0x1260] sm:$0xff]
  %v611 = vld [vmem:[%s1 + $0x1268] sm:$0xff]
  %v612 = vld [vmem:[%s1 + $0x1270] sm:$0xff]
  %v613 = vld [vmem:[%s1 + $0x1278] sm:$0xff]
  %v614 = vld [vmem:[%s1 + $0x1280] sm:$0xff]
  %v615 = vld [vmem:[%s1 + $0x1288] sm:$0xff]
  %v616 = vld [vmem:[%s1 + $0x1290] sm:$0xff]
  %v617 = vld [vmem:[%s1 + $0x1298] sm:$0xff]
  %v618 = vld [vmem:[%s1 + $0x12a0] sm:$0xff]
  %v619 = vld [vmem:[%s1 + $0x12a8] sm:$0xff]
  %v620 = vld [vmem:[%s1 + $0x12b0] sm:$0xff]
  %v621 = vld [vmem:[%s1 + $0x12b8] sm:$0xff]
  %v622 = vld [vmem:[%s1 + $0x12c0] sm:$0xff]
  %v623 = vld [vmem:[%s1 + $0x12c8] sm:$0xff]
  %v624 = vld [vmem:[%s1 + $0x12d0] sm:$0xff]
  %v625 = vld [vmem:[%s1 + $0x12d8] sm:$0xff]
  %v626 = vld [vmem:[%s1 + $0x12e0] sm:$0xff]
  %v627 = vld [vmem:[%s1 + $0x12e8] sm:$0xff]
  %v628 = vld [vmem:[%s1 + $0x12f0] sm:$0xff]
  %v629 = vld [vmem:[%s1 + $0x12f8] sm:$0xff]
  %v630 = vld [vmem:[%s1 + $0x1300] sm:$0xff]
  %v631 = vld [vmem:[%s1 + $0x1308] sm:$0xff]
  %v632 = vld [vmem:[%s1 + $0x1310] sm:$0xff]
  %v633 = vld [vmem:[%s1 + $0x1318] sm:$0xff]
  %v634 = vld [vmem:[%s1 + $0x1320] sm:$0xff]
  %v635 = vld [vmem:[%s1 + $0x1328] sm:$0xff]
  %v636 = vld [vmem:[%s1 + $0x1330] sm:$0xff]
  %v637 = vld [vmem:[%s1 + $0x1338] sm:$0xff]
  %v638 = vld [vmem:[%s1 + $0x1340] sm:$0xff]
  %v639 = vld [vmem:[%s1 + $0x1348] sm:$0xff]
  %v640 = vld [vmem:[%s1 + $0x1350] sm:$0xff]
  %v641 = vld [vmem:[%s1 + $0x1358] sm:$0xff]
  %v642 = vld [vmem:[%s1 + $0x1360] sm:$0xff]
  %v643 = vld [vmem:[%s1 + $0x1368] sm:$0xff]
  %v644 = vld [vmem:[%s1 + $0x1370] sm:$0xff]
  %v645 = vld [vmem:[%s1 + $0x1378] sm:$0xff]
  %v646 = vld [vmem:[%s1 + $0x1380] sm:$0xff]
  %v647 = vld [vmem:[%s1 + $0x1388] sm:$0xff]
  %v648 = vld [vmem:[%s1 + $0x1390] sm:$0xff]
  %v649 = vld [vmem:[%s1 + $0x1398] sm:$0xff]
  %v650 = vld [vmem:[%s1 + $0x13a0] sm:$0xff]
  %v651 = vld [vmem:[%s1 + $0x13a8] sm:$0xff]
  %v652 = vld [vmem:[%s1 + $0x13b0] sm:$0xff]
  %v653 = vld [vmem:[%s1 + $0x13b8] sm:$0xff]
  %v654 = vld [vmem:[%s1 + $0x13c0] sm:$0xff]
  %v655 = vld [vmem:[%s1 + $0x13c8] sm:$0xff]
  %v656 = vld [vmem:[%s1 + $0x13d0] sm:$0xff]
  %v657 = vld [vmem:[%s1 + $0x13d8] sm:$0xff]
  %v658 = vld [vmem:[%s1 + $0x13e0] sm:$0xff]
  %v659 = vld [vmem:[%s1 + $0x13e8] sm:$0xff]
  %v660 = vld [vmem:[%s1 + $0x13f0] sm:$0xff]
  %v661 = vld [vmem:[%s1 + $0x13f8] sm:$0xff]
  %v662 = vld [vmem:[%s1 + $0x1400] sm:$0xff]
  %v663 = vld [vmem:[%s1 + $0x1408] sm:$0xff]
  %v664 = vld [vmem:[%s1 + $0x1410] sm:$0xff]
  %v665 = vld [vmem:[%s1 + $0x1418] sm:$0xff]
  %v666 = vld [vmem:[%s1 + $0x1420] sm:$0xff]
  %v667 = vld [vmem:[%s1 + $0x1428] sm:$0xff]
  %v668 = vld [vmem:[%s1 + $0x1430] sm:$0xff]
  %v669 = vld [vmem:[%s1 + $0x1438] sm:$0xff]
  %v670 = vld [vmem:[%s1 + $0x1440] sm:$0xff]
  %v671 = vld [vmem:[%s1 + $0x1448] sm:$0xff]
  %v672 = vld [vmem:[%s1 + $0x1450] sm:$0xff]
  %v673 = vld [vmem:[%s1 + $0x1458] sm:$0xff]
  %v674 = vld [vmem:[%s1 + $0x1460] sm:$0xff]
  %v675 = vld [vmem:[%s1 + $0x1468] sm:$0xff]
  %v676 = vld [vmem:[%s1 + $0x1470] sm:$0xff]
  %v677 = vld [vmem:[%s1 + $0x1478] sm:$0xff]
  %v678 = vld [vmem:[%s1 + $0x1480] sm:$0xff]
  %v679 = vld [vmem:[%s1 + $0x1488] sm:$0xff]
  %v680 = vld [vmem:[%s1 + $0x1490] sm:$0xff]
  %v681 = vld [vmem:[%s1 + $0x1498] sm:$0xff]
  %v682 = vld [vmem:[%s1 + $0x14a0] sm:$0xff]
  %v683 = vld [vmem:[%s1 + $0x14a8] sm:$0xff]
  %v684 = vld [vmem:[%s1 + $0x14b0] sm:$0xff]
  %v685 = vld [vmem:[%s1 + $0x14b8] sm:$0xff]
  %v686 = vld [vmem:[%s1 + $0x14c0] sm:$0xff]
  %v687 = vld [vmem:[%s1 + $0x14c8] sm:$0xff]
  %v688 = vld [vmem:[%s1 + $0x14d0] sm:$0xff]
  %v689 = vld [vmem:[%s1 + $0x14d8] sm:$0xff]
  %v690 = vld [vmem:[%s1 + $0x14e0] sm:$0xff]
  %v691 = vld [vmem:[%s1 + $0x14e8] sm:$0xff]
  %v692 = vld [vmem:[%s1 + $0x14f0] sm:$0xff]
  %v693 = vld [vmem:[%s1 + $0x14f8] sm:$0xff]
  %v694 = vld [vmem:[%s1 + $0x1500] sm:$0xff]
  %v695 = vld [vmem:[%s1 + $0x1508] sm:$0xff]
  %v696 = vld [vmem:[%s1 + $0x1510] sm:$0xff]
  %v697 = vld [vmem:[%s1 + $0x1518] sm:$0xff]
  %v698 = vld [vmem:[%s1 + $0x1520] sm:$0xff]
  %v699 = vld [vmem:[%s1 + $0x1528] sm:$0xff]
  %v700 = vld [vmem:[%s1 + $0x1530] sm:$0xff]
  %v701 = vld [vmem:[%s1 + $0x1538] sm:$0xff]
  %v702 = vld [vmem:[%s1 + $0x1540] sm:$0xff]
  %v703 = vld [vmem:[%s1 + $0x1548] sm:$0xff]
  %v704 = vld [vmem:[%s1 + $0x1550] sm:$0xff]
  %v705 = vld [vmem:[%s1 + $0x1558] sm:$0xff]
  %v706 = vld [vmem:[%s1 + $0x1560] sm:$0xff]
  %v707 = vld [vmem:[%s1 + $0x1568] sm:$0xff]
  %v708 = vld [vmem:[%s1 + $0x1570] sm:$0xff]
  %v709 = vld [vmem:[%s1 + $0x1578] sm:$0xff]
  %v710 = vld [vmem:[%s1 + $0x1580] sm:$0xff]
  %v711 = vld [vmem:[%s1 + $0x1588] sm:$0xff]
  %v712 = vld [vmem:[%s1 + $0x1590] sm:$0xff]
  %v713 = vld [vmem:[%s1 + $0x1598] sm:$0xff]
  %v714 = vld [vmem:[%s1 + $0x15a0] sm:$0xff]
  %v715 = vld [vmem:[%s1 + $0x15a8] sm:$0xff]
  %v716 = vld [vmem:[%s1 + $0x15b0] sm:$0xff]
  %v717 = vld [vmem:[%s1 + $0x15b8] sm:$0xff]
  %v718 = vld [vmem:[%s1 + $0x15c0] sm:$0xff]
  %v719 = vld [vmem:[%s1 + $0x15c8] sm:$0xff]
  %v720 = vld [vmem:[%s1 + $0x15d0] sm:$0xff]
  %v721 = vld [vmem:[%s1 + $0x15d8] sm:$0xff]
  %v722 = vld [vmem:[%s1 + $0x15e0] sm:$0xff]
  %v723 = vld [vmem:[%s1 + $0x15e8] sm:$0xff]
  %v724 = vld [vmem:[%s1 + $0x15f0] sm:$0xff]
  %v725 = vld [vmem:[%s1 + $0x15f8] sm:$0xff]
  %v726 = vld [vmem:[%s1 + $0x1600] sm:$0xff]
  %v727 = vld [vmem:[%s1 + $0x1608] sm:$0xff]
  %v728 = vld [vmem:[%s1 + $0x1610] sm:$0xff]
  %v729 = vld [vmem:[%s1 + $0x1618] sm:$0xff]
  %v730 = vld [vmem:[%s1 + $0x1620] sm:$0xff]
  %v731 = vld [vmem:[%s1 + $0x1628] sm:$0xff]
  %v732 = vld [vmem:[%s1 + $0x1630] sm:$0xff]
  %v733 = vld [vmem:[%s1 + $0x1638] sm:$0xff]
  %v734 = vld [vmem:[%s1 + $0x1640] sm:$0xff]
  %v735 = vld [vmem:[%s1 + $0x1648] sm:$0xff]
  %v736 = vld [vmem:[%s1 + $0x1650] sm:$0xff]
  %v737 = vld [vmem:[%s1 + $0x1658] sm:$0xff]
  %v738 = vld [vmem:[%s1 + $0x1660] sm:$0xff]
  %v739 = vld [vmem:[%s1 + $0x1668] sm:$0xff]
  %v740 = vld [vmem:[%s1 + $0x1670] sm:$0xff]
  %v741 = vld [vmem:[%s1 + $0x1678] sm:$0xff]
  %v742 = vld [vmem:[%s1 + $0x1680] sm:$0xff]
  %v743 = vld [vmem:[%s1 + $0x1688] sm:$0xff]
  %v744 = vld [vmem:[%s1 + $0x1690] sm:$0xff]
  %v745 = vld [vmem:[%s1 + $0x1698] sm:$0xff]
  %v746 = vld [vmem:[%s1 + $0x16a0] sm:$0xff]
  %v747 = vld [vmem:[%s1 + $0x16a8] sm:$0xff]
  %v748 = vld [vmem:[%s1 + $0x16b0] sm:$0xff]
  %v749 = vld [vmem:[%s1 + $0x16b8] sm:$0xff]
  %v750 = vld [vmem:[%s1 + $0x16c0] sm:$0xff]
  %v751 = vld [vmem:[%s1 + $0x16c8] sm:$0xff]
  %v752 = vld [vmem:[%s1 + $0x16d0] sm:$0xff]
  %v753 = vld [vmem:[%s1 + $0x16d8] sm:$0xff]
  %v754 = vld [vmem:[%s1 + $0x16e0] sm:$0xff]
  %v755 = vld [vmem:[%s1 + $0x16e8] sm:$0xff]
  %v756 = vld [vmem:[%s1 + $0x16f0] sm:$0xff]
  %v757 = vld [vmem:[%s1 + $0x16f8] sm:$0xff]
  %v758 = vld [vmem:[%s1 + $0x1700] sm:$0xff]
  %v759 = vld [vmem:[%s1 + $0x1708] sm:$0xff]
  %v760 = vld [vmem:[%s1 + $0x1710] sm:$0xff]
  %v761 = vld [vmem:[%s1 + $0x1718] sm:$0xff]
  %v762 = vld [vmem:[%s1 + $0x1720] sm:$0xff]
  %v763 = vld [vmem:[%s1 + $0x1728] sm:$0xff]
  %v764 = vld [vmem:[%s1 + $0x1730] sm:$0xff]
  %v765 = vld [vmem:[%s1 + $0x1738] sm:$0xff]
  %v766 = vld [vmem:[%s1 + $0x1740] sm:$0xff]
  %v767 = vld [vmem:[%s1 + $0x1748] sm:$0xff]
  %v768 = vld [vmem:[%s1 + $0x1750] sm:$0xff]
  %v769 = vld [vmem:[%s1 + $0x1758] sm:$0xff]
  %v770 = vld [vmem:[%s1 + $0x1760] sm:$0xff]
  %v771 = vld [vmem:[%s1 + $0x1768] sm:$0xff]
  %v772 = vld [vmem:[%s1 + $0x1770] sm:$0xff]
  %v773 = vld [vmem:[%s1 + $0x1778] sm:$0xff]
  %v774 = vld [vmem:[%s1 + $0x1780] sm:$0xff]
  %v775 = vld [vmem:[%s1 + $0x1788] sm:$0xff]
  %v776 = vld [vmem:[%s1 + $0x1790] sm:$0xff]
  %v777 = vld [vmem:[%s1 + $0x1798] sm:$0xff]
  %v778 = vld [vmem:[%s1 + $0x17a0] sm:$0xff]
  %v779 = vld [vmem:[%s1 + $0x17a8] sm:$0xff]
  %v780 = vld [vmem:[%s1 + $0x17b0] sm:$0xff]
  %v781 = vld [vmem:[%s1 + $0x17b8] sm:$0xff]
  %v782 = vld [vmem:[%s1 + $0x17c0] sm:$0xff]
  %v783 = vld [vmem:[%s1 + $0x17c8] sm:$0xff]
  %v784 = vld [vmem:[%s1 + $0x17d0] sm:$0xff]
  %v785 = vld [vmem:[%s1 + $0x17d8] sm:$0xff]
  %v786 = vld [vmem:[%s1 + $0x17e0] sm:$0xff]
  %v787 = vld [vmem:[%s1 + $0x17e8] sm:$0xff]
  %v788 = vld [vmem:[%s1 + $0x17f0] sm:$0xff]
  %v789 = vld [vmem:[%s1 + $0x17f8] sm:$0xff]
  %v790 = vld [vmem:[%s1 + $0x1800] sm:$0xff]
  %v791 = vld [vmem:[%s1 + $0x1808] sm:$0xff]
  %v792 = vld [vmem:[%s1 + $0x1810] sm:$0xff]
  %v793 = vld [vmem:[%s1 + $0x1818] sm:$0xff]
  %v794 = vld [vmem:[%s1 + $0x1820] sm:$0xff]
  %v795 = vld [vmem:[%s1 + $0x1828] sm:$0xff]
  %v796 = vld [vmem:[%s1 + $0x1830] sm:$0xff]
  %v797 = vld [vmem:[%s1 + $0x1838] sm:$0xff]
  %v798 = vld [vmem:[%s1 + $0x1840] sm:$0xff]
  %v799 = vld [vmem:[%s1 + $0x1848] sm:$0xff]
  %v800 = vld [vmem:[%s1 + $0x1850] sm:$0xff]
  %v801 = vld [vmem:[%s1 + $0x1858] sm:$0xff]
  %v802 = vld [vmem:[%s1 + $0x1860] sm:$0xff]
  %v803 = vld [vmem:[%s1 + $0x1868] sm:$0xff]
  %v804 = vld [vmem:[%s1 + $0x1870] sm:$0xff]
  %v805 = vld [vmem:[%s1 + $0x1878] sm:$0xff]
  %v806 = vld [vmem:[%s1 + $0x1880] sm:$0xff]
  %v807 = vld [vmem:[%s1 + $0x1888] sm:$0xff]
  %v808 = vld [vmem:[%s1 + $0x1890] sm:$0xff]
  %v809 = vld [vmem:[%s1 + $0x1898] sm:$0xff]
  %v810 = vld [vmem:[%s1 + $0x18a0] sm:$0xff]
  %v811 = vld [vmem:[%s1 + $0x18a8] sm:$0xff]
  %v812 = vld [vmem:[%s1 + $0x18b0] sm:$0xff]
  %v813 = vld [vmem:[%s1 + $0x18b8] sm:$0xff]
  %v814 = vld [vmem:[%s1 + $0x18c0] sm:$0xff]
  %v815 = vld [vmem:[%s1 + $0x18c8] sm:$0xff]
  %v816 = vld [vmem:[%s1 + $0x18d0] sm:$0xff]
  %v817 = vld [vmem:[%s1 + $0x18d8] sm:$0xff]
  %v818 = vld [vmem:[%s1 + $0x18e0] sm:$0xff]
  %v819 = vld [vmem:[%s1 + $0x18e8] sm:$0xff]
  %v820 = vld [vmem:[%s1 + $0x18f0] sm:$0xff]
  %v821 = vld [vmem:[%s1 + $0x18f8] sm:$0xff]
  %v822 = vld [vmem:[%s1 + $0x1900] sm:$0xff]
  %v823 = vld [vmem:[%s1 + $0x1908] sm:$0xff]
  %v824 = vld [vmem:[%s1 + $0x1910] sm:$0xff]
  %v825 = vld [vmem:[%s1 + $0x1918] sm:$0xff]
  %v826 = vld [vmem:[%s1 + $0x1920] sm:$0xff]
  %v827 = vld [vmem:[%s1 + $0x1928] sm:$0xff]
  %v828 = vld [vmem:[%s1 + $0x1930] sm:$0xff]
  %v829 = vld [vmem:[%s1 + $0x1938] sm:$0xff]
  %v830 = vld [vmem:[%s1 + $0x1940] sm:$0xff]
  %v831 = vld [vmem:[%s1 + $0x1948] sm:$0xff]
  %v832 = vld [vmem:[%s1 + $0x1950] sm:$0xff]
  %v833 = vld [vmem:[%s1 + $0x1958] sm:$0xff]
  %v834 = vld [vmem:[%s1 + $0x1960] sm:$0xff]
  %v835 = vld [vmem:[%s1 + $0x1968] sm:$0xff]
  %v836 = vld [vmem:[%s1 + $0x1970] sm:$0xff]
  %v837 = vld [vmem:[%s1 + $0x1978] sm:$0xff]
  %v838 = vld [vmem:[%s1 + $0x1980] sm:$0xff]
  %v839 = vld [vmem:[%s1 + $0x1988] sm:$0xff]
  %v840 = vld [vmem:[%s1 + $0x1990] sm:$0xff]
  %v841 = vld [vmem:[%s1 + $0x1998] sm:$0xff]
  %v842 = vld [vmem:[%s1 + $0x19a0] sm:$0xff]
  %v843 = vld [vmem:[%s1 + $0x19a8] sm:$0xff]
  %v844 = vld [vmem:[%s1 + $0x19b0] sm:$0xff]
  %v845 = vld [vmem:[%s1 + $0x19b8] sm:$0xff]
  %v846 = vld [vmem:[%s1 + $0x19c0] sm:$0xff]
  %v847 = vld [vmem:[%s1 + $0x19c8] sm:$0xff]
  %v848 = vld [vmem:[%s1 + $0x19d0] sm:$0xff]
  %v849 = vld [vmem:[%s1 + $0x19d8] sm:$0xff]
  %v850 = vld [vmem:[%s1 + $0x19e0] sm:$0xff]
  %v851 = vld [vmem:[%s1 + $0x19e8] sm:$0xff]
  %v852 = vld [vmem:[%s1 + $0x19f0] sm:$0xff]
  %v853 = vld [vmem:[%s1 + $0x19f8] sm:$0xff]
  %v854 = vld [vmem:[%s1 + $0x1a00] sm:$0xff]
  %v855 = vld [vmem:[%s1 + $0x1a08] sm:$0xff]
  %v856 = vld [vmem:[%s1 + $0x1a10] sm:$0xff]
  %v857 = vld [vmem:[%s1 + $0x1a18] sm:$0xff]
  %v858 = vld [vmem:[%s1 + $0x1a20] sm:$0xff]
  %v859 = vld [vmem:[%s1 + $0x1a28] sm:$0xff]
  %v860 = vld [vmem:[%s1 + $0x1a30] sm:$0xff]
  %v861 = vld [vmem:[%s1 + $0x1a38] sm:$0xff]
  %v862 = vld [vmem:[%s1 + $0x1a40] sm:$0xff]
  %v863 = vld [vmem:[%s1 + $0x1a48] sm:$0xff]
  %v864 = vld [vmem:[%s1 + $0x1a50] sm:$0xff]
  %v865 = vld [vmem:[%s1 + $0x1a58] sm:$0xff]
  %v866 = vld [vmem:[%s1 + $0x1a60] sm:$0xff]
  %v867 = vld [vmem:[%s1 + $0x1a68] sm:$0xff]
  %v868 = vld [vmem:[%s1 + $0x1a70] sm:$0xff]
  %v869 = vld [vmem:[%s1 + $0x1a78] sm:$0xff]
  %v870 = vld [vmem:[%s1 + $0x1a80] sm:$0xff]
  %v871 = vld [vmem:[%s1 + $0x1a88] sm:$0xff]
  %v872 = vld [vmem:[%s1 + $0x1a90] sm:$0xff]
  %v873 = vld [vmem:[%s1 + $0x1a98] sm:$0xff]
  %v874 = vld [vmem:[%s1 + $0x1aa0] sm:$0xff]
  %v875 = vld [vmem:[%s1 + $0x1aa8] sm:$0xff]
  %v876 = vld [vmem:[%s1 + $0x1ab0] sm:$0xff]
  %v877 = vld [vmem:[%s1 + $0x1ab8] sm:$0xff]
  %v878 = vld [vmem:[%s1 + $0x1ac0] sm:$0xff]
  %v879 = vld [vmem:[%s1 + $0x1ac8] sm:$0xff]
  %v880 = vld [vmem:[%s1 + $0x1ad0] sm:$0xff]
  %v881 = vld [vmem:[%s1 + $0x1ad8] sm:$0xff]
  %v882 = vld [vmem:[%s1 + $0x1ae0] sm:$0xff]
  %v883 = vld [vmem:[%s1 + $0x1ae8] sm:$0xff]
  %v884 = vld [vmem:[%s1 + $0x1af0] sm:$0xff]
  %v885 = vld [vmem:[%s1 + $0x1af8] sm:$0xff]
  %v886 = vld [vmem:[%s1 + $0x1b00] sm:$0xff]
  %v887 = vld [vmem:[%s1 + $0x1b08] sm:$0xff]
  %v888 = vld [vmem:[%s1 + $0x1b10] sm:$0xff]
  %v889 = vld [vmem:[%s1 + $0x1b18] sm:$0xff]
  %v890 = vld [vmem:[%s1 + $0x1b20] sm:$0xff]
  %v891 = vld [vmem:[%s1 + $0x1b28] sm:$0xff]
  %v892 = vld [vmem:[%s1 + $0x1b30] sm:$0xff]
  %v893 = vld [vmem:[%s1 + $0x1b38] sm:$0xff]
  %v894 = vld [vmem:[%s1 + $0x1b40] sm:$0xff]
  %v895 = vld [vmem:[%s1 + $0x1b48] sm:$0xff]
  %v896 = vld [vmem:[%s1 + $0x1b50] sm:$0xff]
  %v897 = vld [vmem:[%s1 + $0x1b58] sm:$0xff]
  %v898 = vld [vmem:[%s1 + $0x1b60] sm:$0xff]
  %v899 = vld [vmem:[%s1 + $0x1b68] sm:$0xff]
  %v900 = vld [vmem:[%s1 + $0x1b70] sm:$0xff]
  %v901 = vld [vmem:[%s1 + $0x1b78] sm:$0xff]
  %v902 = vld [vmem:[%s1 + $0x1b80] sm:$0xff]
  %v903 = vld [vmem:[%s1 + $0x1b88] sm:$0xff]
  %v904 = vld [vmem:[%s1 + $0x1b90] sm:$0xff]
  %v905 = vld [vmem:[%s1 + $0x1b98] sm:$0xff]
  %v906 = vld [vmem:[%s1 + $0x1ba0] sm:$0xff]
  %v907 = vld [vmem:[%s1 + $0x1ba8] sm:$0xff]
  %v908 = vld [vmem:[%s1 + $0x1bb0] sm:$0xff]
  %v909 = vld [vmem:[%s1 + $0x1bb8] sm:$0xff]
  %v910 = vld [vmem:[%s1 + $0x1bc0] sm:$0xff]
  %v911 = vld [vmem:[%s1 + $0x1bc8] sm:$0xff]
  %v912 = vld [vmem:[%s1 + $0x1bd0] sm:$0xff]
  %v913 = vld [vmem:[%s1 + $0x1bd8] sm:$0xff]
  %v914 = vld [vmem:[%s1 + $0x1be0] sm:$0xff]
  %v915 = vld [vmem:[%s1 + $0x1be8] sm:$0xff]
  %v916 = vld [vmem:[%s1 + $0x1bf0] sm:$0xff]
  %v917 = vld [vmem:[%s1 + $0x1bf8] sm:$0xff]
  %v918 = vld [vmem:[%s1 + $0x1c00] sm:$0xff]
  %v919 = vld [vmem:[%s1 + $0x1c08] sm:$0xff]
  %v920 = vld [vmem:[%s1 + $0x1c10] sm:$0xff]
  %v921 = vld [vmem:[%s1 + $0x1c18] sm:$0xff]
  %v922 = vld [vmem:[%s1 + $0x1c20] sm:$0xff]
  %v923 = vld [vmem:[%s1 + $0x1c28] sm:$0xff]
  %v924 = vld [vmem:[%s1 + $0x1c30] sm:$0xff]
  %v925 = vld [vmem:[%s1 + $0x1c38] sm:$0xff]
  %v926 = vld [vmem:[%s1 + $0x1c40] sm:$0xff]
  %v927 = vld [vmem:[%s1 + $0x1c48] sm:$0xff]
  %v928 = vld [vmem:[%s1 + $0x1c50] sm:$0xff]
  %v929 = vld [vmem:[%s1 + $0x1c58] sm:$0xff]
  %v930 = vld [vmem:[%s1 + $0x1c60] sm:$0xff]
  %v931 = vld [vmem:[%s1 + $0x1c68] sm:$0xff]
  %v932 = vld [vmem:[%s1 + $0x1c70] sm:$0xff]
  %v933 = vld [vmem:[%s1 + $0x1c78] sm:$0xff]
  %v934 = vld [vmem:[%s1 + $0x1c80] sm:$0xff]
  %v935 = vld [vmem:[%s1 + $0x1c88] sm:$0xff]
  %v936 = vld [vmem:[%s1 + $0x1c90] sm:$0xff]
  %v937 = vld [vmem:[%s1 + $0x1c98] sm:$0xff]
  %v938 = vld [vmem:[%s1 + $0x1ca0] sm:$0xff]
  %v939 = vld [vmem:[%s1 + $0x1ca8] sm:$0xff]
  %v940 = vld [vmem:[%s1 + $0x1cb0] sm:$0xff]
  %v941 = vld [vmem:[%s1 + $0x1cb8] sm:$0xff]
  %v942 = vld [vmem:[%s1 + $0x1cc0] sm:$0xff]
  %v943 = vld [vmem:[%s1 + $0x1cc8] sm:$0xff]
  %v944 = vld [vmem:[%s1 + $0x1cd0] sm:$0xff]
  %v945 = vld [vmem:[%s1 + $0x1cd8] sm:$0xff]
  %v946 = vld [vmem:[%s1 + $0x1ce0] sm:$0xff]
  %v947 = vld [vmem:[%s1 + $0x1ce8] sm:$0xff]
  %v948 = vld [vmem:[%s1 + $0x1cf0] sm:$0xff]
  %v949 = vld [vmem:[%s1 + $0x1cf8] sm:$0xff]
  %v950 = vld [vmem:[%s1 + $0x1d00] sm:$0xff]
  %v951 = vld [vmem:[%s1 + $0x1d08] sm:$0xff]
  %v952 = vld [vmem:[%s1 + $0x1d10] sm:$0xff]
  %v953 = vld [vmem:[%s1 + $0x1d18] sm:$0xff]
  %v954 = vld [vmem:[%s1 + $0x1d20] sm:$0xff]
  %v955 = vld [vmem:[%s1 + $0x1d28] sm:$0xff]
  %v956 = vld [vmem:[%s1 + $0x1d30] sm:$0xff]
  %v957 = vld [vmem:[%s1 + $0x1d38] sm:$0xff]
  %v958 = vld [vmem:[%s1 + $0x1d40] sm:$0xff]
  %v959 = vld [vmem:[%s1 + $0x1d48] sm:$0xff]
  %v960 = vld [vmem:[%s1 + $0x1d50] sm:$0xff]
  %v961 = vld [vmem:[%s1 + $0x1d58] sm:$0xff]
  %v962 = vld [vmem:[%s1 + $0x1d60] sm:$0xff]
  %v963 = vld [vmem:[%s1 + $0x1d68] sm:$0xff]
  %v964 = vld [vmem:[%s1 + $0x1d70] sm:$0xff]
  %v965 = vld [vmem:[%s1 + $0x1d78] sm:$0xff]
  %v966 = vld [vmem:[%s1 + $0x1d80] sm:$0xff]
  %v967 = vld [vmem:[%s1 + $0x1d88] sm:$0xff]
  %v968 = vld [vmem:[%s1 + $0x1d90] sm:$0xff]
  %v969 = vld [vmem:[%s1 + $0x1d98] sm:$0xff]
  %v970 = vld [vmem:[%s1 + $0x1da0] sm:$0xff]
  %v971 = vld [vmem:[%s1 + $0x1da8] sm:$0xff]
  %v972 = vld [vmem:[%s1 + $0x1db0] sm:$0xff]
  %v973 = vld [vmem:[%s1 + $0x1db8] sm:$0xff]
  %v974 = vld [vmem:[%s1 + $0x1dc0] sm:$0xff]
  %v975 = vld [vmem:[%s1 + $0x1dc8] sm:$0xff]
  %v976 = vld [vmem:[%s1 + $0x1dd0] sm:$0xff]
  %v977 = vld [vmem:[%s1 + $0x1dd8] sm:$0xff]
  %v978 = vld [vmem:[%s1 + $0x1de0] sm:$0xff]
  %v979 = vld [vmem:[%s1 + $0x1de8] sm:$0xff]
  %v980 = vld [vmem:[%s1 + $0x1df0] sm:$0xff]
  %v981 = vld [vmem:[%s1 + $0x1df8] sm:$0xff]
  %v982 = vld [vmem:[%s1 + $0x1e00] sm:$0xff]
  %v983 = vld [vmem:[%s1 + $0x1e08] sm:$0xff]
  %v984 = vld [vmem:[%s1 + $0x1e10] sm:$0xff]
  %v985 = vld [vmem:[%s1 + $0x1e18] sm:$0xff]
  %v986 = vld [vmem:[%s1 + $0x1e20] sm:$0xff]
  %v987 = vld [vmem:[%s1 + $0x1e28] sm:$0xff]
  %v988 = vld [vmem:[%s1 + $0x1e30] sm:$0xff]
  %v989 = vld [vmem:[%s1 + $0x1e38] sm:$0xff]
  %v990 = vld [vmem:[%s1 + $0x1e40] sm:$0xff]
  %v991 = vld [vmem:[%s1 + $0x1e48] sm:$0xff]
  %v992 = vld [vmem:[%s1 + $0x1e50] sm:$0xff]
  %v993 = vld [vmem:[%s1 + $0x1e58] sm:$0xff]
  %v994 = vld [vmem:[%s1 + $0x1e60] sm:$0xff]
  %v995 = vld [vmem:[%s1 + $0x1e68] sm:$0xff]
  %v996 = vld [vmem:[%s1 + $0x1e70] sm:$0xff]
  %v997 = vld [vmem:[%s1 + $0x1e78] sm:$0xff]
  %v998 = vld [vmem:[%s1 + $0x1e80] sm:$0xff]
  %v999 = vld [vmem:[%s1 + $0x1e88] sm:$0xff]
  %v1000 = vld [vmem:[%s1 + $0x1e90] sm:$0xff]
  %v1001 = vld [vmem:[%s1 + $0x1e98] sm:$0xff]
  %v1002 = vld [vmem:[%s1 + $0x1ea0] sm:$0xff]
  %v1003 = vld [vmem:[%s1 + $0x1ea8] sm:$0xff]
  %v1004 = vld [vmem:[%s1 + $0x1eb0] sm:$0xff]
  %v1005 = vld [vmem:[%s1 + $0x1eb8] sm:$0xff]
  %v1006 = vld [vmem:[%s1 + $0x1ec0] sm:$0xff]
  %v1007 = vld [vmem:[%s1 + $0x1ec8] sm:$0xff]
  %v1008 = vld [vmem:[%s1 + $0x1ed0] sm:$0xff]
  %v1009 = vld [vmem:[%s1 + $0x1ed8] sm:$0xff]
  %v1010 = vld [vmem:[%s1 + $0x1ee0] sm:$0xff]
  %v1011 = vld [vmem:[%s1 + $0x1ee8] sm:$0xff]
  %v1012 = vld [vmem:[%s1 + $0x1ef0] sm:$0xff]
  %v1013 = vld [vmem:[%s1 + $0x1ef8] sm:$0xff]
  %v1014 = vld [vmem:[%s1 + $0x1f00] sm:$0xff]
  %v1015 = vld [vmem:[%s1 + $0x1f08] sm:$0xff]
  %v1016 = vld [vmem:[%s1 + $0x1f10] sm:$0xff]
  %v1017 = vld [vmem:[%s1 + $0x1f18] sm:$0xff]
  %v1018 = vld [vmem:[%s1 + $0x1f20] sm:$0xff]
  %v1019 = vld [vmem:[%s1 + $0x1f28] sm:$0xff]
  %v1020 = vld [vmem:[%s1 + $0x1f30] sm:$0xff]
  %v1021 = vld [vmem:[%s1 + $0x1f38] sm:$0xff]
  %v1022 = vld [vmem:[%s1 + $0x1f40] sm:$0xff]
  %v1023 = vld [vmem:[%s1 + $0x1f48] sm:$0xff]
  %v1024 = vld [vmem:[%s1 + $0x1f50] sm:$0xff]
  %v1025 = vld [vmem:[%s1 + $0x1f58] sm:$0xff]
  %v1026 = vld [vmem:[%s1 + $0x1f60] sm:$0xff]
  %v1027 = vld [vmem:[%s1 + $0x1f68] sm:$0xff]
  %v1028 = vld [vmem:[%s1 + $0x1f70] sm:$0xff]
  %v1029 = vld [vmem:[%s1 + $0x1f78] sm:$0xff]
  %v1030 = vld [vmem:[%s1 + $0x1f80] sm:$0xff]
  %v1031 = vld [vmem:[%s1 + $0x1f88] sm:$0xff]
  %v1032 = vld [vmem:[%s1 + $0x1f90] sm:$0xff]
  %v1033 = vld [vmem:[%s1 + $0x1f98] sm:$0xff]
  %v1034 = vld [vmem:[%s1 + $0x1fa0] sm:$0xff]
  %v1035 = vld [vmem:[%s1 + $0x1fa8] sm:$0xff]
  %v1036 = vld [vmem:[%s1 + $0x1fb0] sm:$0xff]
  %v1037 = vld [vmem:[%s1 + $0x1fb8] sm:$0xff]
  %v1038 = vld [vmem:[%s1 + $0x1fc0] sm:$0xff]
  %v1039 = vld [vmem:[%s1 + $0x1fc8] sm:$0xff]
  %v1040 = vld [vmem:[%s1 + $0x1fd0] sm:$0xff]
  %v1041 = vld [vmem:[%s1 + $0x1fd8] sm:$0xff]
  %v1042 = vld [vmem:[%s1 + $0x1fe0] sm:$0xff]
  %v1043 = vld [vmem:[%s1 + $0x1fe8] sm:$0xff]
  %v1044 = vld [vmem:[%s1 + $0x1ff0] sm:$0xff]
  %v1045 = vld [vmem:[%s1 + $0x1ff8] sm:$0xff]
  %v1046 = vld [vmem:[%s1 + $0x2000] sm:$0xff]
  %v1047 = vld [vmem:[%s1 + $0x2008] sm:$0xff]
  %v1048 = vld [vmem:[%s1 + $0x2010] sm:$0xff]
  %v1049 = vld [vmem:[%s1 + $0x2018] sm:$0xff]
  %v1050 = vld [vmem:[%s1 + $0x2020] sm:$0xff]
  %v1051 = vld [vmem:[%s1 + $0x2028] sm:$0xff]
  %v1052 = vld [vmem:[%s1 + $0x2030] sm:$0xff]
  %v1053 = vld [vmem:[%s1 + $0x2038] sm:$0xff]
  %v1054 = vld [vmem:[%s1 + $0x2040] sm:$0xff]
  %v1055 = vld [vmem:[%s1 + $0x2048] sm:$0xff]
  %v1056 = vld [vmem:[%s1 + $0x2050] sm:$0xff]
  %v1057 = vld [vmem:[%s1 + $0x2058] sm:$0xff]
  %v1058 = vld [vmem:[%s1 + $0x2060] sm:$0xff]
  %v1059 = vld [vmem:[%s1 + $0x2068] sm:$0xff]
  %v1060 = vld [vmem:[%s1 + $0x2070] sm:$0xff]
  %v1061 = vld [vmem:[%s1 + $0x2078] sm:$0xff]
  %v1062 = vld [vmem:[%s1 + $0x2080] sm:$0xff]
  %v1063 = vld [vmem:[%s1 + $0x2088] sm:$0xff]
  %v1064 = vld [vmem:[%s1 + $0x2090] sm:$0xff]
  %v1065 = vld [vmem:[%s1 + $0x2098] sm:$0xff]
  %v1066 = vld [vmem:[%s1 + $0x20a0] sm:$0xff]
  %v1067 = vld [vmem:[%s1 + $0x20a8] sm:$0xff]
  %v1068 = vld [vmem:[%s1 + $0x20b0] sm:$0xff]
  %v1069 = vld [vmem:[%s1 + $0x20b8] sm:$0xff]
  %v1070 = vld [vmem:[%s1 + $0x20c0] sm:$0xff]
  %v1071 = vld [vmem:[%s1 + $0x20c8] sm:$0xff]
  %v1072 = vld [vmem:[%s1 + $0x20d0] sm:$0xff]
  %v1073 = vld [vmem:[%s1 + $0x20d8] sm:$0xff]
  %v1074 = vld [vmem:[%s1 + $0x20e0] sm:$0xff]
  %v1075 = vld [vmem:[%s1 + $0x20e8] sm:$0xff]
  %v1076 = vld [vmem:[%s1 + $0x20f0] sm:$0xff]
  %v1077 = vld [vmem:[%s1 + $0x20f8] sm:$0xff]
  %v1078 = vld [vmem:[%s1 + $0x2100] sm:$0xff]
  %v1079 = vld [vmem:[%s1 + $0x2108] sm:$0xff]
  %v1080 = vld [vmem:[%s1 + $0x2110] sm:$0xff]
  %v1081 = vld [vmem:[%s1 + $0x2118] sm:$0xff]
  %v1082 = vld [vmem:[%s1 + $0x2120] sm:$0xff]
  %v1083 = vld [vmem:[%s1 + $0x2128] sm:$0xff]
  %v1084 = vld [vmem:[%s1 + $0x2130] sm:$0xff]
  %v1085 = vld [vmem:[%s1 + $0x2138] sm:$0xff]
  %v1086 = vld [vmem:[%s1 + $0x2140] sm:$0xff]
  %v1087 = vld [vmem:[%s1 + $0x2148] sm:$0xff]
  %v1088 = vld [vmem:[%s1 + $0x2150] sm:$0xff]
  %v1089 = vld [vmem:[%s1 + $0x2158] sm:$0xff]
  %v1090 = vld [vmem:[%s1 + $0x2160] sm:$0xff]
  %v1091 = vld [vmem:[%s1 + $0x2168] sm:$0xff]
  %v1092 = vld [vmem:[%s1 + $0x2170] sm:$0xff]
  %v1093 = vld [vmem:[%s1 + $0x2178] sm:$0xff]
  %v1094 = vld [vmem:[%s1 + $0x2180] sm:$0xff]
  %v1095 = vld [vmem:[%s1 + $0x2188] sm:$0xff]
  %v1096 = vld [vmem:[%s1 + $0x2190] sm:$0xff]
  %v1097 = vld [vmem:[%s1 + $0x2198] sm:$0xff]
  %v1098 = vld [vmem:[%s1 + $0x21a0] sm:$0xff]
  %v1099 = vld [vmem:[%s1 + $0x21a8] sm:$0xff]
  %v1100 = vld [vmem:[%s1 + $0x21b0] sm:$0xff]
  %v1101 = vld [vmem:[%s1 + $0x21b8] sm:$0xff]
  %v1102 = vld [vmem:[%s1 + $0x21c0] sm:$0xff]
  %v1103 = vld [vmem:[%s1 + $0x21c8] sm:$0xff]
  %v1104 = vld [vmem:[%s1 + $0x21d0] sm:$0xff]
  %v1105 = vld [vmem:[%s1 + $0x21d8] sm:$0xff]
  %v1106 = vld [vmem:[%s1 + $0x21e0] sm:$0xff]
  %v1107 = vld [vmem:[%s1 + $0x21e8] sm:$0xff]
  %v1108 = vld [vmem:[%s1 + $0x21f0] sm:$0xff]
  %v1109 = vld [vmem:[%s1 + $0x21f8] sm:$0xff]
  %v1110 = vld [vmem:[%s1 + $0x2200] sm:$0xff]
  %v1111 = vld [vmem:[%s1 + $0x2208] sm:$0xff]
  %v1112 = vld [vmem:[%s1 + $0x2210] sm:$0xff]
  %v1113 = vld [vmem:[%s1 + $0x2218] sm:$0xff]
  %v1114 = vld [vmem:[%s1 + $0x2220] sm:$0xff]
  %v1115 = vld [vmem:[%s1 + $0x2228] sm:$0xff]
  %v1116 = vld [vmem:[%s1 + $0x2230] sm:$0xff]
  %v1117 = vld [vmem:[%s1 + $0x2238] sm:$0xff]
  %v1118 = vld [vmem:[%s1 + $0x2240] sm:$0xff]
  %v1119 = vld [vmem:[%s1 + $0x2248] sm:$0xff]
  %v1120 = vld [vmem:[%s1 + $0x2250] sm:$0xff]
  %v1121 = vld [vmem:[%s1 + $0x2258] sm:$0xff]
  %v1122 = vld [vmem:[%s1 + $0x2260] sm:$0xff]
  %v1123 = vld [vmem:[%s1 + $0x2268] sm:$0xff]
  %v1124 = vld [vmem:[%s1 + $0x2270] sm:$0xff]
  %v1125 = vld [vmem:[%s1 + $0x2278] sm:$0xff]
  %v1126 = vld [vmem:[%s1 + $0x2280] sm:$0xff]
  %v1127 = vld [vmem:[%s1 + $0x2288] sm:$0xff]
  %v1128 = vld [vmem:[%s1 + $0x2290] sm:$0xff]
  %v1129 = vld [vmem:[%s1 + $0x2298] sm:$0xff]
  %v1130 = vld [vmem:[%s1 + $0x22a0] sm:$0xff]
  %v1131 = vld [vmem:[%s1 + $0x22a8] sm:$0xff]
  %v1132 = vld [vmem:[%s1 + $0x22b0] sm:$0xff]
  %v1133 = vld [vmem:[%s1 + $0x22b8] sm:$0xff]
  %v1134 = vld [vmem:[%s1 + $0x22c0] sm:$0xff]
  %v1135 = vld [vmem:[%s1 + $0x22c8] sm:$0xff]
  %v1136 = vld [vmem:[%s1 + $0x22d0] sm:$0xff]
  %v1137 = vld [vmem:[%s1 + $0x22d8] sm:$0xff]
  %v1138 = vld [vmem:[%s1 + $0x22e0] sm:$0xff]
  %v1139 = vld [vmem:[%s1 + $0x22e8] sm:$0xff]
  %v1140 = vld [vmem:[%s1 + $0x22f0] sm:$0xff]
  %v1141 = vld [vmem:[%s1 + $0x22f8] sm:$0xff]
  %v1142 = vld [vmem:[%s1 + $0x2300] sm:$0xff]
  %v1143 = vld [vmem:[%s1 + $0x2308] sm:$0xff]
  %v1144 = vld [vmem:[%s1 + $0x2310] sm:$0xff]
  %v1145 = vld [vmem:[%s1 + $0x2318] sm:$0xff]
  %v1146 = vld [vmem:[%s1 + $0x2320] sm:$0xff]
  %v1147 = vld [vmem:[%s1 + $0x2328] sm:$0xff]
  %v1148 = vld [vmem:[%s1 + $0x2330] sm:$0xff]
  %v1149 = vld [vmem:[%s1 + $0x2338] sm:$0xff]
  %v1150 = vld [vmem:[%s1 + $0x2340] sm:$0xff]
  %v1151 = vld [vmem:[%s1 + $0x2348] sm:$0xff]
  %v1152 = vld [vmem:[%s1 + $0x2350] sm:$0xff]
  %v1153 = vld [vmem:[%s1 + $0x2358] sm:$0xff]
  %v1154 = vld [vmem:[%s1 + $0x2360] sm:$0xff]
  %v1155 = vld [vmem:[%s1 + $0x2368] sm:$0xff]
  %v1156 = vld [vmem:[%s1 + $0x2370] sm:$0xff]
  %v1157 = vld [vmem:[%s1 + $0x2378] sm:$0xff]
  %v1158 = vld [vmem:[%s1 + $0x2380] sm:$0xff]
  %v1159 = vld [vmem:[%s1 + $0x2388] sm:$0xff]
  %v1160 = vld [vmem:[%s1 + $0x2390] sm:$0xff]
  %v1161 = vld [vmem:[%s1 + $0x2398] sm:$0xff]
  %v1162 = vld [vmem:[%s1 + $0x23a0] sm:$0xff]
  %v1163 = vld [vmem:[%s1 + $0x23a8] sm:$0xff]
  %v1164 = vld [vmem:[%s1 + $0x23b0] sm:$0xff]
  %v1165 = vld [vmem:[%s1 + $0x23b8] sm:$0xff]
  %v1166 = vld [vmem:[%s1 + $0x23c0] sm:$0xff]
  %v1167 = vld [vmem:[%s1 + $0x23c8] sm:$0xff]
  %v1168 = vld [vmem:[%s1 + $0x23d0] sm:$0xff]
  %v1169 = vld [vmem:[%s1 + $0x23d8] sm:$0xff]
  %v1170 = vld [vmem:[%s1 + $0x23e0] sm:$0xff]
  %v1171 = vld [vmem:[%s1 + $0x23e8] sm:$0xff]
  %v1172 = vld [vmem:[%s1 + $0x23f0] sm:$0xff]
  %v1173 = vld [vmem:[%s1 + $0x23f8] sm:$0xff]
  %v1174 = vld [vmem:[%s1 + $0x2400] sm:$0xff]
  %v1175 = vld [vmem:[%s1 + $0x2408] sm:$0xff]
  %v1176 = vld [vmem:[%s1 + $0x2410] sm:$0xff]
  %v1177 = vld [vmem:[%s1 + $0x2418] sm:$0xff]
  %v1178 = vld [vmem:[%s1 + $0x2420] sm:$0xff]
  %v1179 = vld [vmem:[%s1 + $0x2428] sm:$0xff]
  %v1180 = vld [vmem:[%s1 + $0x2430] sm:$0xff]
  %v1181 = vld [vmem:[%s1 + $0x2438] sm:$0xff]
  %v1182 = vld [vmem:[%s1 + $0x2440] sm:$0xff]
  %v1183 = vld [vmem:[%s1 + $0x2448] sm:$0xff]
  %v1184 = vld [vmem:[%s1 + $0x2450] sm:$0xff]
  %v1185 = vld [vmem:[%s1 + $0x2458] sm:$0xff]
  %v1186 = vld [vmem:[%s1 + $0x2460] sm:$0xff]
  %v1187 = vld [vmem:[%s1 + $0x2468] sm:$0xff]
  %v1188 = vld [vmem:[%s1 + $0x2470] sm:$0xff]
  %v1189 = vld [vmem:[%s1 + $0x2478] sm:$0xff]
  %v1190 = vld [vmem:[%s1 + $0x2480] sm:$0xff]
  %v1191 = vld [vmem:[%s1 + $0x2488] sm:$0xff]
  %v1192 = vld [vmem:[%s1 + $0x2490] sm:$0xff]
  %v1193 = vld [vmem:[%s1 + $0x2498] sm:$0xff]
  %v1194 = vld [vmem:[%s1 + $0x24a0] sm:$0xff]
  %v1195 = vld [vmem:[%s1 + $0x24a8] sm:$0xff]
  %v1196 = vld [vmem:[%s1 + $0x24b0] sm:$0xff]
  %v1197 = vld [vmem:[%s1 + $0x24b8] sm:$0xff]
  %v1198 = vld [vmem:[%s1 + $0x24c0] sm:$0xff]
  %v1199 = vld [vmem:[%s1 + $0x24c8] sm:$0xff]
  %v1200 = vld [vmem:[%s1 + $0x24d0] sm:$0xff]
  %v1201 = vld [vmem:[%s1 + $0x24d8] sm:$0xff]
  %v1202 = vld [vmem:[%s1 + $0x24e0] sm:$0xff]
  %v1203 = vld [vmem:[%s1 + $0x24e8] sm:$0xff]
  %v1204 = vld [vmem:[%s1 + $0x24f0] sm:$0xff]
  %v1205 = vld [vmem:[%s1 + $0x24f8] sm:$0xff]
  %v1206 = vld [vmem:[%s1 + $0x2500] sm:$0xff]
  %v1207 = vld [vmem:[%s1 + $0x2508] sm:$0xff]
  %v1208 = vld [vmem:[%s1 + $0x2510] sm:$0xff]
  %v1209 = vld [vmem:[%s1 + $0x2518] sm:$0xff]
  %v1210 = vld [vmem:[%s1 + $0x2520] sm:$0xff]
  %v1211 = vld [vmem:[%s1 + $0x2528] sm:$0xff]
  %v1212 = vld [vmem:[%s1 + $0x2530] sm:$0xff]
  %v1213 = vld [vmem:[%s1 + $0x2538] sm:$0xff]
  %v1214 = vld [vmem:[%s1 + $0x2540] sm:$0xff]
  %v1215 = vld [vmem:[%s1 + $0x2548] sm:$0xff]
  %v1216 = vld [vmem:[%s1 + $0x2550] sm:$0xff]
  %v1217 = vld [vmem:[%s1 + $0x2558] sm:$0xff]
  %v1218 = vld [vmem:[%s1 + $0x2560] sm:$0xff]
  %v1219 = vld [vmem:[%s1 + $0x2568] sm:$0xff]
  %v1220 = vld [vmem:[%s1 + $0x2570] sm:$0xff]
  %v1221 = vld [vmem:[%s1 + $0x2578] sm:$0xff]
  %v1222 = vld [vmem:[%s1 + $0x2580] sm:$0xff]
  %v1223 = vld [vmem:[%s1 + $0x2588] sm:$0xff]
  %v1224 = vld [vmem:[%s1 + $0x2590] sm:$0xff]
  %v1225 = vld [vmem:[%s1 + $0x2598] sm:$0xff]
  %v1226 = vld [vmem:[%s1 + $0x25a0] sm:$0xff]
  %v1227 = vld [vmem:[%s1 + $0x25a8] sm:$0xff]
  %v1228 = vld [vmem:[%s1 + $0x25b0] sm:$0xff]
  %v1229 = vld [vmem:[%s1 + $0x25b8] sm:$0xff]
  %v1230 = vld [vmem:[%s1 + $0x25c0] sm:$0xff]
  %v1231 = vld [vmem:[%s1 + $0x25c8] sm:$0xff]
  %v1232 = vld [vmem:[%s1 + $0x25d0] sm:$0xff]
  %v1233 = vld [vmem:[%s1 + $0x25d8] sm:$0xff]
  %v1234 = vld [vmem:[%s1 + $0x25e0] sm:$0xff]
  %v1235 = vld [vmem:[%s1 + $0x25e8] sm:$0xff]
  %v1236 = vld [vmem:[%s1 + $0x25f0] sm:$0xff]
  %v1237 = vld [vmem:[%s1 + $0x25f8] sm:$0xff]
  %v1238 = vld [vmem:[%s2] sm:$0xff]
  %v1239 = vld [vmem:[%s2 + $0x8] sm:$0xff]
  %1241 = vset.pattern.permute.xlu0 0
  %1242 = vperm.xlu0 %1241, %v1238
  %v1243 = vpop.permute.xlu0 %1242
  %1246 = vset.pattern.permute.xlu0 0
  %1247 = vperm.xlu0 %1246, %v1239
  %v1248 = vpop.permute.xlu0 %1247
  %1250 = vmatprep.subr.mxu0 %v23
  %1251 = vmatpush1.msra.mxu0 %v22
  %1252 = vmatprep.subr.mxu0 %v42
  %1253 = vmatpush1.msra.mxu0 %v41
  %1254 = vmatprep.subr.mxu0 %v61
  %1255 = vmatpush1.msra.mxu0 %v60
  %1256 = vmatprep.subr.mxu0 %v80
  %1257 = vmatpush1.msra.mxu0 %v79
  %1258 = vmatprep.subr.mxu0 %v99
  %1259 = vmatpush1.msra.mxu0 %v98
  %1260 = vmatprep.subr.mxu0 %v118
  %1261 = vmatpush1.msra.mxu0 %v117
  %1262 = vmatprep.subr.mxu0 %v137
  %1263 = vmatpush1.msra.mxu0 %v136
  %1264 = vmatprep.subr.mxu0 %v156
  %1265 = vmatpush1.msra.mxu0 %v155
  %1266 = vmatprep.subr.mxu0 %v175
  %1267 = vmatpush1.msra.mxu0 %v174
  %1268 = vmatprep.subr.mxu0 %v194
  %1269 = vmatpush1.msra.mxu0 %v193
  %1270 = vmatprep.subr.mxu0 %v213
  %1271 = vmatpush1.msra.mxu0 %v212
  %1272 = vmatprep.subr.mxu0 %v232
  %1273 = vmatpush1.msra.mxu0 %v231
  %1274 = vmatprep.subr.mxu0 %v251
  %1275 = vmatpush1.msra.mxu0 %v250
  %1276 = vmatprep.subr.mxu0 %v270
  %1277 = vmatpush1.msra.mxu0 %v269
  %1278 = vmatprep.subr.mxu0 %v289
  %1279 = vmatpush1.msra.mxu0 %v288
  %1280 = vmatprep.subr.mxu0 %v308
  %1281 = vmatpush1.msra.mxu0 %v307
  %1282 = vmatprep.subr.mxu0 %v327
  %1283 = vmatpush1.msra.mxu0 %v326
  %1284 = vmatprep.subr.mxu0 %v346
  %1285 = vmatpush1.msra.mxu0 %v345
  %1286 = vmatprep.subr.mxu0 %v365
  %1287 = vmatpush1.msra.mxu0 %v364
  %1288 = vmatprep.subr.mxu0 %v384
  %1289 = vmatpush1.msra.mxu0 %v383
  %1290 = vmatprep.subr.mxu0 %v403
  %1291 = vmatpush1.msra.mxu0 %v402
  %1292 = vmatprep.subr.mxu0 %v422
  %1293 = vmatpush1.msra.mxu0 %v421
  %1294 = vmatprep.subr.mxu0 %v441
  %1295 = vmatpush1.msra.mxu0 %v440
  %1296 = vmatprep.subr.mxu0 %v460
  %1297 = vmatpush1.msra.mxu0 %v459
  %1298 = vmatprep.subr.mxu0 %v479
  %1299 = vmatpush1.msra.mxu0 %v478
  %1300 = vmatprep.subr.mxu0 %v498
  %1301 = vmatpush1.msra.mxu0 %v497
  %1302 = vmatprep.subr.mxu0 %v517
  %1303 = vmatpush1.msra.mxu0 %v516
  %1304 = vmatprep.subr.mxu0 %v536
  %1305 = vmatpush1.msra.mxu0 %v535
  %1306 = vmatprep.subr.mxu0 %v555
  %1307 = vmatpush1.msra.mxu0 %v554
  %1308 = vmatprep.subr.mxu0 %v574
  %1309 = vmatpush1.msra.mxu0 %v573
  %1310 = vmatprep.subr.mxu0 %v593
  %1311 = vmatpush1.msra.mxu0 %v592
  %1312 = vmatprep.subr.mxu0 %v612
  %1313 = vmatpush1.msra.mxu0 %v611
  %1314 = vmatprep.mubr.f32.mxu0 %v15
  %1315 = vmatmul.mubr.f32.gmra.mrb[0].mxu0 %v14
  %v1316 = vpop.f32.mrb[0].mxu0
  %v1317 = vadd.f32 %v1243, %v1316
  %v1318 = vpop.f32.mrb[0].mxu0
  %v1319 = vadd.f32 %v1243, %v1318
  %1320 = vmatprep.mubr.f32.mxu0 %v19
  %1321 = vmatmul.mubr.f32.gmra.mrb[0].mxu0 %v18
  %v1322 = vpop.f32.mrb[0].mxu0
  %v1323 = vadd.f32 %v1248, %v1322
  %v1324 = vpop.f32.mrb[0].mxu0
  %v1325 = vadd.f32 %v1248, %v1324
  %1326 = vdwg.mxu0
  %1327 = vmatprep.subr.mxu0 %v631
  %1328 = vmatpush1.msra.mxu0 %v630
  %1329 = vmatprep.subr.mxu0 %v650
  %1330 = vmatpush1.msra.mxu0 %v649
  %1331 = vmatprep.subr.mxu0 %v669
  %1332 = vmatpush1.msra.mxu0 %v668
  %1333 = vmatprep.subr.mxu0 %v688
  %1334 = vmatpush1.msra.mxu0 %v687
  %1335 = vmatprep.subr.mxu0 %v707
  %1336 = vmatpush1.msra.mxu0 %v706
  %1337 = vmatprep.subr.mxu0 %v726
  %1338 = vmatpush1.msra.mxu0 %v725
  %1339 = vmatprep.subr.mxu0 %v745
  %1340 = vmatpush1.msra.mxu0 %v744
  %1341 = vmatprep.subr.mxu0 %v764
  %1342 = vmatpush1.msra.mxu0 %v763
  %1343 = vmatprep.subr.mxu0 %v783
  %1344 = vmatpush1.msra.mxu0 %v782
  %1345 = vmatprep.subr.mxu0 %v802
  %1346 = vmatpush1.msra.mxu0 %v801
  %1347 = vmatprep.subr.mxu0 %v821
  %1348 = vmatpush1.msra.mxu0 %v820
  %1349 = vmatprep.subr.mxu0 %v840
  %1350 = vmatpush1.msra.mxu0 %v839
  %1351 = vmatprep.subr.mxu0 %v859
  %1352 = vmatpush1.msra.mxu0 %v858
  %1353 = vmatprep.subr.mxu0 %v878
  %1354 = vmatpush1.msra.mxu0 %v877
  %1355 = vmatprep.subr.mxu0 %v897
  %1356 = vmatpush1.msra.mxu0 %v896
  %1357 = vmatprep.subr.mxu0 %v916
  %1358 = vmatpush1.msra.mxu0 %v915
  %1359 = vmatprep.subr.mxu0 %v935
  %1360 = vmatpush1.msra.mxu0 %v934
  %1361 = vmatprep.subr.mxu0 %v954
  %1362 = vmatpush1.msra.mxu0 %v953
  %1363 = vmatprep.subr.mxu0 %v973
  %1364 = vmatpush1.msra.mxu0 %v972
  %1365 = vmatprep.subr.mxu0 %v992
  %1366 = vmatpush1.msra.mxu0 %v991
  %1367 = vmatprep.subr.mxu0 %v1011
  %1368 = vmatpush1.msra.mxu0 %v1010
  %1369 = vmatprep.subr.mxu0 %v1030
  %1370 = vmatpush1.msra.mxu0 %v1029
  %1371 = vmatprep.subr.mxu0 %v1049
  %1372 = vmatpush1.msra.mxu0 %v1048
  %1373 = vmatprep.subr.mxu0 %v1068
  %1374 = vmatpush1.msra.mxu0 %v1067
  %1375 = vmatprep.subr.mxu0 %v1087
  %1376 = vmatpush1.msra.mxu0 %v1086
  %1377 = vmatprep.subr.mxu0 %v1106
  %1378 = vmatpush1.msra.mxu0 %v1105
  %1379 = vmatprep.subr.mxu0 %v1125
  %1380 = vmatpush1.msra.mxu0 %v1124
  %1381 = vmatprep.subr.mxu0 %v1144
  %1382 = vmatpush1.msra.mxu0 %v1143
  %1383 = vmatprep.subr.mxu0 %v1163
  %1384 = vmatpush1.msra.mxu0 %v1162
  %1385 = vmatprep.subr.mxu0 %v1182
  %1386 = vmatpush1.msra.mxu0 %v1181
  %1387 = vmatprep.subr.mxu0 %v1201
  %1388 = vmatpush1.msra.mxu0 %v1200
  %1389 = vmatprep.subr.mxu0 %v1220
  %1390 = vmatpush1.msra.mxu0 %v1219
  %1391 = vmatprep.mubr.f32.mxu0 %v17
  %1392 = vmatmul.mubr.f32.gmra.mrb[0].mxu0 %v16
  %v1393 = vpop.f32.mrb[0].mxu0
  %v1394 = vadd.f32 %v1317, %v1393
  %v1395 = vpop.f32.mrb[0].mxu0
  %v1396 = vadd.f32 %v1319, %v1395
  %1397 = vmatprep.mubr.f32.mxu0 %v21
  %1398 = vmatmul.mubr.f32.gmra.mrb[0].mxu0 %v20
  %v1399 = vpop.f32.mrb[0].mxu0
  %v1400 = vadd.f32 %v1323, %v1399
  %v1401 = vpop.f32.mrb[0].mxu0
  %v1402 = vadd.f32 %v1325, %v1401
  %1403 = vdwg.mxu0
  %1404 = vmatprep.subr.mxu0 %v25
  %1405 = vmatpush1.msra.mxu0 %v24
  %1406 = vmatprep.subr.mxu0 %v44
  %1407 = vmatpush1.msra.mxu0 %v43
  %1408 = vmatprep.subr.mxu0 %v63
  %1409 = vmatpush1.msra.mxu0 %v62
  %1410 = vmatprep.subr.mxu0 %v82
  %1411 = vmatpush1.msra.mxu0 %v81
  %1412 = vmatprep.subr.mxu0 %v101
  %1413 = vmatpush1.msra.mxu0 %v100
  %1414 = vmatprep.subr.mxu0 %v120
  %1415 = vmatpush1.msra.mxu0 %v119
  %1416 = vmatprep.subr.mxu0 %v139
  %1417 = vmatpush1.msra.mxu0 %v138
  %1418 = vmatprep.subr.mxu0 %v158
  %1419 = vmatpush1.msra.mxu0 %v157
  %1420 = vmatprep.subr.mxu0 %v177
  %1421 = vmatpush1.msra.mxu0 %v176
  %1422 = vmatprep.subr.mxu0 %v196
  %1423 = vmatpush1.msra.mxu0 %v195
  %1424 = vmatprep.subr.mxu0 %v215
  %1425 = vmatpush1.msra.mxu0 %v214
  %1426 = vmatprep.subr.mxu0 %v234
  %1427 = vmatpush1.msra.mxu0 %v233
  %1428 = vmatprep.subr.mxu0 %v253
  %1429 = vmatpush1.msra.mxu0 %v252
  %1430 = vmatprep.subr.mxu0 %v272
  %1431 = vmatpush1.msra.mxu0 %v271
  %1432 = vmatprep.subr.mxu0 %v291
  %1433 = vmatpush1.msra.mxu0 %v290
  %1434 = vmatprep.subr.mxu0 %v310
  %1435 = vmatpush1.msra.mxu0 %v309
  %1436 = vmatprep.subr.mxu0 %v329
  %1437 = vmatpush1.msra.mxu0 %v328
  %1438 = vmatprep.subr.mxu0 %v348
  %1439 = vmatpush1.msra.mxu0 %v347
  %1440 = vmatprep.subr.mxu0 %v367
  %1441 = vmatpush1.msra.mxu0 %v366
  %1442 = vmatprep.subr.mxu0 %v386
  %1443 = vmatpush1.msra.mxu0 %v385
  %1444 = vmatprep.subr.mxu0 %v405
  %1445 = vmatpush1.msra.mxu0 %v404
  %1446 = vmatprep.subr.mxu0 %v424
  %1447 = vmatpush1.msra.mxu0 %v423
  %1448 = vmatprep.subr.mxu0 %v443
  %1449 = vmatpush1.msra.mxu0 %v442
  %1450 = vmatprep.subr.mxu0 %v462
  %1451 = vmatpush1.msra.mxu0 %v461
  %1452 = vmatprep.subr.mxu0 %v481
  %1453 = vmatpush1.msra.mxu0 %v480
  %1454 = vmatprep.subr.mxu0 %v500
  %1455 = vmatpush1.msra.mxu0 %v499
  %1456 = vmatprep.subr.mxu0 %v519
  %1457 = vmatpush1.msra.mxu0 %v518
  %1458 = vmatprep.subr.mxu0 %v538
  %1459 = vmatpush1.msra.mxu0 %v537
  %1460 = vmatprep.subr.mxu0 %v557
  %1461 = vmatpush1.msra.mxu0 %v556
  %1462 = vmatprep.subr.mxu0 %v576
  %1463 = vmatpush1.msra.mxu0 %v575
  %1464 = vmatprep.subr.mxu0 %v595
  %1465 = vmatpush1.msra.mxu0 %v594
  %1466 = vmatprep.subr.mxu0 %v614
  %1467 = vmatpush1.msra.mxu0 %v613
  %1468 = vmatprep.mubr.f32.mxu0 %v15
  %1469 = vmatmul.mubr.f32.gmra.mrb[0].mxu0 %v14
  %v1470 = vpop.f32.mrb[0].mxu0
  %v1471 = vadd.f32 %v1243, %v1470
  %v1472 = vpop.f32.mrb[0].mxu0
  %v1473 = vadd.f32 %v1243, %v1472
  %1474 = vmatprep.mubr.f32.mxu0 %v19
  %1475 = vmatmul.mubr.f32.gmra.mrb[0].mxu0 %v18
  %v1476 = vpop.f32.mrb[0].mxu0
  %v1477 = vadd.f32 %v1248, %v1476
  %v1478 = vpop.f32.mrb[0].mxu0
  %v1479 = vadd.f32 %v1248, %v1478
  %1480 = vdwg.mxu0
  %1481 = vmatprep.subr.mxu0 %v633
  %1482 = vmatpush1.msra.mxu0 %v632
  %1483 = vmatprep.subr.mxu0 %v652
  %1484 = vmatpush1.msra.mxu0 %v651
  %1485 = vmatprep.subr.mxu0 %v671
  %1486 = vmatpush1.msra.mxu0 %v670
  %1487 = vmatprep.subr.mxu0 %v690
  %1488 = vmatpush1.msra.mxu0 %v689
  %1489 = vmatprep.subr.mxu0 %v709
  %1490 = vmatpush1.msra.mxu0 %v708
  %1491 = vmatprep.subr.mxu0 %v728
  %1492 = vmatpush1.msra.mxu0 %v727
  %1493 = vmatprep.subr.mxu0 %v747
  %1494 = vmatpush1.msra.mxu0 %v746
  %1495 = vmatprep.subr.mxu0 %v766
  %1496 = vmatpush1.msra.mxu0 %v765
  %1497 = vmatprep.subr.mxu0 %v785
  %1498 = vmatpush1.msra.mxu0 %v784
  %1499 = vmatprep.subr.mxu0 %v804
  %1500 = vmatpush1.msra.mxu0 %v803
  %1501 = vmatprep.subr.mxu0 %v823
  %1502 = vmatpush1.msra.mxu0 %v822
  %1503 = vmatprep.subr.mxu0 %v842
  %1504 = vmatpush1.msra.mxu0 %v841
  %1505 = vmatprep.subr.mxu0 %v861
  %1506 = vmatpush1.msra.mxu0 %v860
  %1507 = vmatprep.subr.mxu0 %v880
  %1508 = vmatpush1.msra.mxu0 %v879
  %1509 = vmatprep.subr.mxu0 %v899
  %1510 = vmatpush1.msra.mxu0 %v898
  %1511 = vmatprep.subr.mxu0 %v918
  %1512 = vmatpush1.msra.mxu0 %v917
  %1513 = vmatprep.subr.mxu0 %v937
  %1514 = vmatpush1.msra.mxu0 %v936
  %1515 = vmatprep.subr.mxu0 %v956
  %1516 = vmatpush1.msra.mxu0 %v955
  %1517 = vmatprep.subr.mxu0 %v975
  %1518 = vmatpush1.msra.mxu0 %v974
  %1519 = vmatprep.subr.mxu0 %v994
  %1520 = vmatpush1.msra.mxu0 %v993
  %1521 = vmatprep.subr.mxu0 %v1013
  %1522 = vmatpush1.msra.mxu0 %v1012
  %1523 = vmatprep.subr.mxu0 %v1032
  %1524 = vmatpush1.msra.mxu0 %v1031
  %1525 = vmatprep.subr.mxu0 %v1051
  %1526 = vmatpush1.msra.mxu0 %v1050
  %1527 = vmatprep.subr.mxu0 %v1070
  %1528 = vmatpush1.msra.mxu0 %v1069
  %1529 = vmatprep.subr.mxu0 %v1089
  %1530 = vmatpush1.msra.mxu0 %v1088
  %1531 = vmatprep.subr.mxu0 %v1108
  %1532 = vmatpush1.msra.mxu0 %v1107
  %1533 = vmatprep.subr.mxu0 %v1127
  %1534 = vmatpush1.msra.mxu0 %v1126
  %1535 = vmatprep.subr.mxu0 %v1146
  %1536 = vmatpush1.msra.mxu0 %v1145
  %1537 = vmatprep.subr.mxu0 %v1165
  %1538 = vmatpush1.msra.mxu0 %v1164
  %1539 = vmatprep.subr.mxu0 %v1184
  %1540 = vmatpush1.msra.mxu0 %v1183
  %1541 = vmatprep.subr.mxu0 %v1203
  %1542 = vmatpush1.msra.mxu0 %v1202
  %1543 = vmatprep.subr.mxu0 %v1222
  %1544 = vmatpush1.msra.mxu0 %v1221
  %1545 = vmatprep.mubr.f32.mxu0 %v17
  %1546 = vmatmul.mubr.f32.gmra.mrb[0].mxu0 %v16
  %v1547 = vpop.f32.mrb[0].mxu0
  %v1548 = vadd.f32 %v1471, %v1547
  %v1549 = vpop.f32.mrb[0].mxu0
  %v1550 = vadd.f32 %v1473, %v1549
  %1551 = vmatprep.mubr.f32.mxu0 %v21
  %1552 = vmatmul.mubr.f32.gmra.mrb[0].mxu0 %v20
  %v1553 = vpop.f32.mrb[0].mxu0
  %v1554 = vadd.f32 %v1477, %v1553
  %v1555 = vpop.f32.mrb[0].mxu0
  %v1556 = vadd.f32 %v1479, %v1555
  %1557 = vdwg.mxu0
  %1558 = vmatprep.subr.mxu0 %v27
  %1559 = vmatpush1.msra.mxu0 %v26
  %1560 = vmatprep.subr.mxu0 %v46
  %1561 = vmatpush1.msra.mxu0 %v45
  %1562 = vmatprep.subr.mxu0 %v65
  %1563 = vmatpush1.msra.mxu0 %v64
  %1564 = vmatprep.subr.mxu0 %v84
  %1565 = vmatpush1.msra.mxu0 %v83
  %1566 = vmatprep.subr.mxu0 %v103
  %1567 = vmatpush1.msra.mxu0 %v102
  %1568 = vmatprep.subr.mxu0 %v122
  %1569 = vmatpush1.msra.mxu0 %v121
  %1570 = vmatprep.subr.mxu0 %v141
  %1571 = vmatpush1.msra.mxu0 %v140
  %1572 = vmatprep.subr.mxu0 %v160
  %1573 = vmatpush1.msra.mxu0 %v159
  %1574 = vmatprep.subr.mxu0 %v179
  %1575 = vmatpush1.msra.mxu0 %v178
  %1576 = vmatprep.subr.mxu0 %v198
  %1577 = vmatpush1.msra.mxu0 %v197
  %1578 = vmatprep.subr.mxu0 %v217
  %1579 = vmatpush1.msra.mxu0 %v216
  %1580 = vmatprep.subr.mxu0 %v236
  %1581 = vmatpush1.msra.mxu0 %v235
  %1582 = vmatprep.subr.mxu0 %v255
  %1583 = vmatpush1.msra.mxu0 %v254
  %1584 = vmatprep.subr.mxu0 %v274
  %1585 = vmatpush1.msra.mxu0 %v273
  %1586 = vmatprep.subr.mxu0 %v293
  %1587 = vmatpush1.msra.mxu0 %v292
  %1588 = vmatprep.subr.mxu0 %v312
  %1589 = vmatpush1.msra.mxu0 %v311
  %1590 = vmatprep.subr.mxu0 %v331
  %1591 = vmatpush1.msra.mxu0 %v330
  %1592 = vmatprep.subr.mxu0 %v350
  %1593 = vmatpush1.msra.mxu0 %v349
  %1594 = vmatprep.subr.mxu0 %v369
  %1595 = vmatpush1.msra.mxu0 %v368
  %1596 = vmatprep.subr.mxu0 %v388
  %1597 = vmatpush1.msra.mxu0 %v387
  %1598 = vmatprep.subr.mxu0 %v407
  %1599 = vmatpush1.msra.mxu0 %v406
  %1600 = vmatprep.subr.mxu0 %v426
  %1601 = vmatpush1.msra.mxu0 %v425
  %1602 = vmatprep.subr.mxu0 %v445
  %1603 = vmatpush1.msra.mxu0 %v444
  %1604 = vmatprep.subr.mxu0 %v464
  %1605 = vmatpush1.msra.mxu0 %v463
  %1606 = vmatprep.subr.mxu0 %v483
  %1607 = vmatpush1.msra.mxu0 %v482
  %1608 = vmatprep.subr.mxu0 %v502
  %1609 = vmatpush1.msra.mxu0 %v501
  %1610 = vmatprep.subr.mxu0 %v521
  %1611 = vmatpush1.msra.mxu0 %v520
  %1612 = vmatprep.subr.mxu0 %v540
  %1613 = vmatpush1.msra.mxu0 %v539
  %1614 = vmatprep.subr.mxu0 %v559
  %1615 = vmatpush1.msra.mxu0 %v558
  %1616 = vmatprep.subr.mxu0 %v578
  %1617 = vmatpush1.msra.mxu0 %v577
  %1618 = vmatprep.subr.mxu0 %v597
  %1619 = vmatpush1.msra.mxu0 %v596
  %1620 = vmatprep.subr.mxu0 %v616
  %1621 = vmatpush1.msra.mxu0 %v615
  %1622 = vmatprep.mubr.f32.mxu0 %v15
  %1623 = vmatmul.mubr.f32.gmra.mrb[0].mxu0 %v14
  %v1624 = vpop.f32.mrb[0].mxu0
  %v1625 = vadd.f32 %v1243, %v1624
  %v1626 = vpop.f32.mrb[0].mxu0
  %v1627 = vadd.f32 %v1243, %v1626
  %1628 = vmatprep.mubr.f32.mxu0 %v19
  %1629 = vmatmul.mubr.f32.gmra.mrb[0].mxu0 %v18
  %v1630 = vpop.f32.mrb[0].mxu0
  %v1631 = vadd.f32 %v1248, %v1630
  %v1632 = vpop.f32.mrb[0].mxu0
  %v1633 = vadd.f32 %v1248, %v1632
  %1634 = vdwg.mxu0
  %1635 = vmatprep.subr.mxu0 %v635
  %1636 = vmatpush1.msra.mxu0 %v634
  %1637 = vmatprep.subr.mxu0 %v654
  %1638 = vmatpush1.msra.mxu0 %v653
  %1639 = vmatprep.subr.mxu0 %v673
  %1640 = vmatpush1.msra.mxu0 %v672
  %1641 = vmatprep.subr.mxu0 %v692
  %1642 = vmatpush1.msra.mxu0 %v691
  %1643 = vmatprep.subr.mxu0 %v711
  %1644 = vmatpush1.msra.mxu0 %v710
  %1645 = vmatprep.subr.mxu0 %v730
  %1646 = vmatpush1.msra.mxu0 %v729
  %1647 = vmatprep.subr.mxu0 %v749
  %1648 = vmatpush1.msra.mxu0 %v748
  %1649 = vmatprep.subr.mxu0 %v768
  %1650 = vmatpush1.msra.mxu0 %v767
  %1651 = vmatprep.subr.mxu0 %v787
  %1652 = vmatpush1.msra.mxu0 %v786
  %1653 = vmatprep.subr.mxu0 %v806
  %1654 = vmatpush1.msra.mxu0 %v805
  %1655 = vmatprep.subr.mxu0 %v825
  %1656 = vmatpush1.msra.mxu0 %v824
  %1657 = vmatprep.subr.mxu0 %v844
  %1658 = vmatpush1.msra.mxu0 %v843
  %1659 = vmatprep.subr.mxu0 %v863
  %1660 = vmatpush1.msra.mxu0 %v862
  %1661 = vmatprep.subr.mxu0 %v882
  %1662 = vmatpush1.msra.mxu0 %v881
  %1663 = vmatprep.subr.mxu0 %v901
  %1664 = vmatpush1.msra.mxu0 %v900
  %1665 = vmatprep.subr.mxu0 %v920
  %1666 = vmatpush1.msra.mxu0 %v919
  %1667 = vmatprep.subr.mxu0 %v939
  %1668 = vmatpush1.msra.mxu0 %v938
  %1669 = vmatprep.subr.mxu0 %v958
  %1670 = vmatpush1.msra.mxu0 %v957
  %1671 = vmatprep.subr.mxu0 %v977
  %1672 = vmatpush1.msra.mxu0 %v976
  %1673 = vmatprep.subr.mxu0 %v996
  %1674 = vmatpush1.msra.mxu0 %v995
  %1675 = vmatprep.subr.mxu0 %v1015
  %1676 = vmatpush1.msra.mxu0 %v1014
  %1677 = vmatprep.subr.mxu0 %v1034
  %1678 = vmatpush1.msra.mxu0 %v1033
  %1679 = vmatprep.subr.mxu0 %v1053
  %1680 = vmatpush1.msra.mxu0 %v1052
  %1681 = vmatprep.subr.mxu0 %v1072
  %1682 = vmatpush1.msra.mxu0 %v1071
  %1683 = vmatprep.subr.mxu0 %v1091
  %1684 = vmatpush1.msra.mxu0 %v1090
  %1685 = vmatprep.subr.mxu0 %v1110
  %1686 = vmatpush1.msra.mxu0 %v1109
  %1687 = vmatprep.subr.mxu0 %v1129
  %1688 = vmatpush1.msra.mxu0 %v1128
  %1689 = vmatprep.subr.mxu0 %v1148
  %1690 = vmatpush1.msra.mxu0 %v1147
  %1691 = vmatprep.subr.mxu0 %v1167
  %1692 = vmatpush1.msra.mxu0 %v1166
  %1693 = vmatprep.subr.mxu0 %v1186
  %1694 = vmatpush1.msra.mxu0 %v1185
  %1695 = vmatprep.subr.mxu0 %v1205
  %1696 = vmatpush1.msra.mxu0 %v1204
  %1697 = vmatprep.subr.mxu0 %v1224
  %1698 = vmatpush1.msra.mxu0 %v1223
  %1699 = vmatprep.mubr.f32.mxu0 %v17
  %1700 = vmatmul.mubr.f32.gmra.mrb[0].mxu0 %v16
  %v1701 = vpop.f32.mrb[0].mxu0
  %v1702 = vadd.f32 %v1625, %v1701
  %v1703 = vpop.f32.mrb[0].mxu0
  %v1704 = vadd.f32 %v1627, %v1703
  %1705 = vmatprep.mubr.f32.mxu0 %v21
  %1706 = vmatmul.mubr.f32.gmra.mrb[0].mxu0 %v20
  %v1707 = vpop.f32.mrb[0].mxu0
  %v1708 = vadd.f32 %v1631, %v1707
  %v1709 = vpop.f32.mrb[0].mxu0
  %v1710 = vadd.f32 %v1633, %v1709
  %1711 = vdwg.mxu0
  %1712 = vmatprep.subr.mxu0 %v29
  %1713 = vmatpush1.msra.mxu0 %v28
  %1714 = vmatprep.subr.mxu0 %v48
  %1715 = vmatpush1.msra.mxu0 %v47
  %1716 = vmatprep.subr.mxu0 %v67
  %1717 = vmatpush1.msra.mxu0 %v66
  %1718 = vmatprep.subr.mxu0 %v86
  %1719 = vmatpush1.msra.mxu0 %v85
  %1720 = vmatprep.subr.mxu0 %v105
  %1721 = vmatpush1.msra.mxu0 %v104
  %1722 = vmatprep.subr.mxu0 %v124
  %1723 = vmatpush1.msra.mxu0 %v123
  %1724 = vmatprep.subr.mxu0 %v143
  %1725 = vmatpush1.msra.mxu0 %v142
  %1726 = vmatprep.subr.mxu0 %v162
  %1727 = vmatpush1.msra.mxu0 %v161
  %1728 = vmatprep.subr.mxu0 %v181
  %1729 = vmatpush1.msra.mxu0 %v180
  %1730 = vmatprep.subr.mxu0 %v200
  %1731 = vmatpush1.msra.mxu0 %v199
  %1732 = vmatprep.subr.mxu0 %v219
  %1733 = vmatpush1.msra.mxu0 %v218
  %1734 = vmatprep.subr.mxu0 %v238
  %1735 = vmatpush1.msra.mxu0 %v237
  %1736 = vmatprep.subr.mxu0 %v257
  %1737 = vmatpush1.msra.mxu0 %v256
  %1738 = vmatprep.subr.mxu0 %v276
  %1739 = vmatpush1.msra.mxu0 %v275
  %1740 = vmatprep.subr.mxu0 %v295
  %1741 = vmatpush1.msra.mxu0 %v294
  %1742 = vmatprep.subr.mxu0 %v314
  %1743 = vmatpush1.msra.mxu0 %v313
  %1744 = vmatprep.subr.mxu0 %v333
  %1745 = vmatpush1.msra.mxu0 %v332
  %1746 = vmatprep.subr.mxu0 %v352
  %1747 = vmatpush1.msra.mxu0 %v351
  %1748 = vmatprep.subr.mxu0 %v371
  %1749 = vmatpush1.msra.mxu0 %v370
  %1750 = vmatprep.subr.mxu0 %v390
  %1751 = vmatpush1.msra.mxu0 %v389
  %1752 = vmatprep.subr.mxu0 %v409
  %1753 = vmatpush1.msra.mxu0 %v408
  %1754 = vmatprep.subr.mxu0 %v428
  %1755 = vmatpush1.msra.mxu0 %v427
  %1756 = vmatprep.subr.mxu0 %v447
  %1757 = vmatpush1.msra.mxu0 %v446
  %1758 = vmatprep.subr.mxu0 %v466
  %1759 = vmatpush1.msra.mxu0 %v465
  %1760 = vmatprep.subr.mxu0 %v485
  %1761 = vmatpush1.msra.mxu0 %v484
  %1762 = vmatprep.subr.mxu0 %v504
  %1763 = vmatpush1.msra.mxu0 %v503
  %1764 = vmatprep.subr.mxu0 %v523
  %1765 = vmatpush1.msra.mxu0 %v522
  %1766 = vmatprep.subr.mxu0 %v542
  %1767 = vmatpush1.msra.mxu0 %v541
  %1768 = vmatprep.subr.mxu0 %v561
  %1769 = vmatpush1.msra.mxu0 %v560
  %1770 = vmatprep.subr.mxu0 %v580
  %1771 = vmatpush1.msra.mxu0 %v579
  %1772 = vmatprep.subr.mxu0 %v599
  %1773 = vmatpush1.msra.mxu0 %v598
  %1774 = vmatprep.subr.mxu0 %v618
  %1775 = vmatpush1.msra.mxu0 %v617
  %1776 = vmatprep.mubr.f32.mxu0 %v15
  %1777 = vmatmul.mubr.f32.gmra.mrb[0].mxu0 %v14
  %v1778 = vpop.f32.mrb[0].mxu0
  %v1779 = vadd.f32 %v1243, %v1778
  %v1780 = vpop.f32.mrb[0].mxu0
  %v1781 = vadd.f32 %v1243, %v1780
  %1782 = vmatprep.mubr.f32.mxu0 %v19
  %1783 = vmatmul.mubr.f32.gmra.mrb[0].mxu0 %v18
  %v1784 = vpop.f32.mrb[0].mxu0
  %v1785 = vadd.f32 %v1248, %v1784
  %v1786 = vpop.f32.mrb[0].mxu0
  %v1787 = vadd.f32 %v1248, %v1786
  %1788 = vdwg.mxu0
  %1789 = vmatprep.subr.mxu0 %v637
  %1790 = vmatpush1.msra.mxu0 %v636
  %1791 = vmatprep.subr.mxu0 %v656
  %1792 = vmatpush1.msra.mxu0 %v655
  %1793 = vmatprep.subr.mxu0 %v675
  %1794 = vmatpush1.msra.mxu0 %v674
  %1795 = vmatprep.subr.mxu0 %v694
  %1796 = vmatpush1.msra.mxu0 %v693
  %1797 = vmatprep.subr.mxu0 %v713
  %1798 = vmatpush1.msra.mxu0 %v712
  %1799 = vmatprep.subr.mxu0 %v732
  %1800 = vmatpush1.msra.mxu0 %v731
  %1801 = vmatprep.subr.mxu0 %v751
  %1802 = vmatpush1.msra.mxu0 %v750
  %1803 = vmatprep.subr.mxu0 %v770
  %1804 = vmatpush1.msra.mxu0 %v769
  %1805 = vmatprep.subr.mxu0 %v789
  %1806 = vmatpush1.msra.mxu0 %v788
  %1807 = vmatprep.subr.mxu0 %v808
  %1808 = vmatpush1.msra.mxu0 %v807
  %1809 = vmatprep.subr.mxu0 %v827
  %1810 = vmatpush1.msra.mxu0 %v826
  %1811 = vmatprep.subr.mxu0 %v846
  %1812 = vmatpush1.msra.mxu0 %v845
  %1813 = vmatprep.subr.mxu0 %v865
  %1814 = vmatpush1.msra.mxu0 %v864
  %1815 = vmatprep.subr.mxu0 %v884
  %1816 = vmatpush1.msra.mxu0 %v883
  %1817 = vmatprep.subr.mxu0 %v903
  %1818 = vmatpush1.msra.mxu0 %v902
  %1819 = vmatprep.subr.mxu0 %v922
  %1820 = vmatpush1.msra.mxu0 %v921
  %1821 = vmatprep.subr.mxu0 %v941
  %1822 = vmatpush1.msra.mxu0 %v940
  %1823 = vmatprep.subr.mxu0 %v960
  %1824 = vmatpush1.msra.mxu0 %v959
  %1825 = vmatprep.subr.mxu0 %v979
  %1826 = vmatpush1.msra.mxu0 %v978
  %1827 = vmatprep.subr.mxu0 %v998
  %1828 = vmatpush1.msra.mxu0 %v997
  %1829 = vmatprep.subr.mxu0 %v1017
  %1830 = vmatpush1.msra.mxu0 %v1016
  %1831 = vmatprep.subr.mxu0 %v1036
  %1832 = vmatpush1.msra.mxu0 %v1035
  %1833 = vmatprep.subr.mxu0 %v1055
  %1834 = vmatpush1.msra.mxu0 %v1054
  %1835 = vmatprep.subr.mxu0 %v1074
  %1836 = vmatpush1.msra.mxu0 %v1073
  %1837 = vmatprep.subr.mxu0 %v1093
  %1838 = vmatpush1.msra.mxu0 %v1092
  %1839 = vmatprep.subr.mxu0 %v1112
  %1840 = vmatpush1.msra.mxu0 %v1111
  %1841 = vmatprep.subr.mxu0 %v1131
  %1842 = vmatpush1.msra.mxu0 %v1130
  %1843 = vmatprep.subr.mxu0 %v1150
  %1844 = vmatpush1.msra.mxu0 %v1149
  %1845 = vmatprep.subr.mxu0 %v1169
  %1846 = vmatpush1.msra.mxu0 %v1168
  %1847 = vmatprep.subr.mxu0 %v1188
  %1848 = vmatpush1.msra.mxu0 %v1187
  %1849 = vmatprep.subr.mxu0 %v1207
  %1850 = vmatpush1.msra.mxu0 %v1206
  %1851 = vmatprep.subr.mxu0 %v1226
  %1852 = vmatpush1.msra.mxu0 %v1225
  %1853 = vmatprep.mubr.f32.mxu0 %v17
  %1854 = vmatmul.mubr.f32.gmra.mrb[0].mxu0 %v16
  %v1855 = vpop.f32.mrb[0].mxu0
  %v1856 = vadd.f32 %v1779, %v1855
  %v1857 = vpop.f32.mrb[0].mxu0
  %v1858 = vadd.f32 %v1781, %v1857
  %1859 = vmatprep.mubr.f32.mxu0 %v21
  %1860 = vmatmul.mubr.f32.gmra.mrb[0].mxu0 %v20
  %v1861 = vpop.f32.mrb[0].mxu0
  %v1862 = vadd.f32 %v1785, %v1861
  %v1863 = vpop.f32.mrb[0].mxu0
  %v1864 = vadd.f32 %v1787, %v1863
  %1865 = vdwg.mxu0
  %1866 = vmatprep.subr.mxu0 %v31
  %1867 = vmatpush1.msra.mxu0 %v30
  %1868 = vmatprep.subr.mxu0 %v50
  %1869 = vmatpush1.msra.mxu0 %v49
  %1870 = vmatprep.subr.mxu0 %v69
  %1871 = vmatpush1.msra.mxu0 %v68
  %1872 = vmatprep.subr.mxu0 %v88
  %1873 = vmatpush1.msra.mxu0 %v87
  %1874 = vmatprep.subr.mxu0 %v107
  %1875 = vmatpush1.msra.mxu0 %v106
  %1876 = vmatprep.subr.mxu0 %v126
  %1877 = vmatpush1.msra.mxu0 %v125
  %1878 = vmatprep.subr.mxu0 %v145
  %1879 = vmatpush1.msra.mxu0 %v144
  %1880 = vmatprep.subr.mxu0 %v164
  %1881 = vmatpush1.msra.mxu0 %v163
  %1882 = vmatprep.subr.mxu0 %v183
  %1883 = vmatpush1.msra.mxu0 %v182
  %1884 = vmatprep.subr.mxu0 %v202
  %1885 = vmatpush1.msra.mxu0 %v201
  %1886 = vmatprep.subr.mxu0 %v221
  %1887 = vmatpush1.msra.mxu0 %v220
  %1888 = vmatprep.subr.mxu0 %v240
  %1889 = vmatpush1.msra.mxu0 %v239
  %1890 = vmatprep.subr.mxu0 %v259
  %1891 = vmatpush1.msra.mxu0 %v258
  %1892 = vmatprep.subr.mxu0 %v278
  %1893 = vmatpush1.msra.mxu0 %v277
  %1894 = vmatprep.subr.mxu0 %v297
  %1895 = vmatpush1.msra.mxu0 %v296
  %1896 = vmatprep.subr.mxu0 %v316
  %1897 = vmatpush1.msra.mxu0 %v315
  %1898 = vmatprep.subr.mxu0 %v335
  %1899 = vmatpush1.msra.mxu0 %v334
  %1900 = vmatprep.subr.mxu0 %v354
  %1901 = vmatpush1.msra.mxu0 %v353
  %1902 = vmatprep.subr.mxu0 %v373
  %1903 = vmatpush1.msra.mxu0 %v372
  %1904 = vmatprep.subr.mxu0 %v392
  %1905 = vmatpush1.msra.mxu0 %v391
  %1906 = vmatprep.subr.mxu0 %v411
  %1907 = vmatpush1.msra.mxu0 %v410
  %1908 = vmatprep.subr.mxu0 %v430
  %1909 = vmatpush1.msra.mxu0 %v429
  %1910 = vmatprep.subr.mxu0 %v449
  %1911 = vmatpush1.msra.mxu0 %v448
  %1912 = vmatprep.subr.mxu0 %v468
  %1913 = vmatpush1.msra.mxu0 %v467
  %1914 = vmatprep.subr.mxu0 %v487
  %1915 = vmatpush1.msra.mxu0 %v486
  %1916 = vmatprep.subr.mxu0 %v506
  %1917 = vmatpush1.msra.mxu0 %v505
  %1918 = vmatprep.subr.mxu0 %v525
  %1919 = vmatpush1.msra.mxu0 %v524
  %1920 = vmatprep.subr.mxu0 %v544
  %1921 = vmatpush1.msra.mxu0 %v543
  %1922 = vmatprep.subr.mxu0 %v563
  %1923 = vmatpush1.msra.mxu0 %v562
  %1924 = vmatprep.subr.mxu0 %v582
  %1925 = vmatpush1.msra.mxu0 %v581
  %1926 = vmatprep.subr.mxu0 %v601
  %1927 = vmatpush1.msra.mxu0 %v600
  %1928 = vmatprep.subr.mxu0 %v620
  %1929 = vmatpush1.msra.mxu0 %v619
  %1930 = vmatprep.mubr.f32.mxu0 %v15
  %1931 = vmatmul.mubr.f32.gmra.mrb[0].mxu0 %v14
  %v1932 = vpop.f32.mrb[0].mxu0
  %v1933 = vadd.f32 %v1243, %v1932
  %v1934 = vpop.f32.mrb[0].mxu0
  %v1935 = vadd.f32 %v1243, %v1934
  %1936 = vmatprep.mubr.f32.mxu0 %v19
  %1937 = vmatmul.mubr.f32.gmra.mrb[0].mxu0 %v18
  %v1938 = vpop.f32.mrb[0].mxu0
  %v1939 = vadd.f32 %v1248, %v1938
  %v1940 = vpop.f32.mrb[0].mxu0
  %v1941 = vadd.f32 %v1248, %v1940
  %1942 = vdwg.mxu0
  %1943 = vmatprep.subr.mxu0 %v639
  %1944 = vmatpush1.msra.mxu0 %v638
  %1945 = vmatprep.subr.mxu0 %v658
  %1946 = vmatpush1.msra.mxu0 %v657
  %1947 = vmatprep.subr.mxu0 %v677
  %1948 = vmatpush1.msra.mxu0 %v676
  %1949 = vmatprep.subr.mxu0 %v696
  %1950 = vmatpush1.msra.mxu0 %v695
  %1951 = vmatprep.subr.mxu0 %v715
  %1952 = vmatpush1.msra.mxu0 %v714
  %1953 = vmatprep.subr.mxu0 %v734
  %1954 = vmatpush1.msra.mxu0 %v733
  %1955 = vmatprep.subr.mxu0 %v753
  %1956 = vmatpush1.msra.mxu0 %v752
  %1957 = vmatprep.subr.mxu0 %v772
  %1958 = vmatpush1.msra.mxu0 %v771
  %1959 = vmatprep.subr.mxu0 %v791
  %1960 = vmatpush1.msra.mxu0 %v790
  %1961 = vmatprep.subr.mxu0 %v810
  %1962 = vmatpush1.msra.mxu0 %v809
  %1963 = vmatprep.subr.mxu0 %v829
  %1964 = vmatpush1.msra.mxu0 %v828
  %1965 = vmatprep.subr.mxu0 %v848
  %1966 = vmatpush1.msra.mxu0 %v847
  %1967 = vmatprep.subr.mxu0 %v867
  %1968 = vmatpush1.msra.mxu0 %v866
  %1969 = vmatprep.subr.mxu0 %v886
  %1970 = vmatpush1.msra.mxu0 %v885
  %1971 = vmatprep.subr.mxu0 %v905
  %1972 = vmatpush1.msra.mxu0 %v904
  %1973 = vmatprep.subr.mxu0 %v924
  %1974 = vmatpush1.msra.mxu0 %v923
  %1975 = vmatprep.subr.mxu0 %v943
  %1976 = vmatpush1.msra.mxu0 %v942
  %1977 = vmatprep.subr.mxu0 %v962
  %1978 = vmatpush1.msra.mxu0 %v961
  %1979 = vmatprep.subr.mxu0 %v981
  %1980 = vmatpush1.msra.mxu0 %v980
  %1981 = vmatprep.subr.mxu0 %v1000
  %1982 = vmatpush1.msra.mxu0 %v999
  %1983 = vmatprep.subr.mxu0 %v1019
  %1984 = vmatpush1.msra.mxu0 %v1018
  %1985 = vmatprep.subr.mxu0 %v1038
  %1986 = vmatpush1.msra.mxu0 %v1037
  %1987 = vmatprep.subr.mxu0 %v1057
  %1988 = vmatpush1.msra.mxu0 %v1056
  %1989 = vmatprep.subr.mxu0 %v1076
  %1990 = vmatpush1.msra.mxu0 %v1075
  %1991 = vmatprep.subr.mxu0 %v1095
  %1992 = vmatpush1.msra.mxu0 %v1094
  %1993 = vmatprep.subr.mxu0 %v1114
  %1994 = vmatpush1.msra.mxu0 %v1113
  %1995 = vmatprep.subr.mxu0 %v1133
  %1996 = vmatpush1.msra.mxu0 %v1132
  %1997 = vmatprep.subr.mxu0 %v1152
  %1998 = vmatpush1.msra.mxu0 %v1151
  %1999 = vmatprep.subr.mxu0 %v1171
  %2000 = vmatpush1.msra.mxu0 %v1170
  %2001 = vmatprep.subr.mxu0 %v1190
  %2002 = vmatpush1.msra.mxu0 %v1189
  %2003 = vmatprep.subr.mxu0 %v1209
  %2004 = vmatpush1.msra.mxu0 %v1208
  %2005 = vmatprep.subr.mxu0 %v1228
  %2006 = vmatpush1.msra.mxu0 %v1227
  %2007 = vmatprep.mubr.f32.mxu0 %v17
  %2008 = vmatmul.mubr.f32.gmra.mrb[0].mxu0 %v16
  %v2009 = vpop.f32.mrb[0].mxu0
  %v2010 = vadd.f32 %v1933, %v2009
  %v2011 = vpop.f32.mrb[0].mxu0
  %v2012 = vadd.f32 %v1935, %v2011
  %2013 = vmatprep.mubr.f32.mxu0 %v21
  %2014 = vmatmul.mubr.f32.gmra.mrb[0].mxu0 %v20
  %v2015 = vpop.f32.mrb[0].mxu0
  %v2016 = vadd.f32 %v1939, %v2015
  %v2017 = vpop.f32.mrb[0].mxu0
  %v2018 = vadd.f32 %v1941, %v2017
  %2019 = vdwg.mxu0
  %2020 = vmatprep.subr.mxu0 %v33
  %2021 = vmatpush1.msra.mxu0 %v32
  %2022 = vmatprep.subr.mxu0 %v52
  %2023 = vmatpush1.msra.mxu0 %v51
  %2024 = vmatprep.subr.mxu0 %v71
  %2025 = vmatpush1.msra.mxu0 %v70
  %2026 = vmatprep.subr.mxu0 %v90
  %2027 = vmatpush1.msra.mxu0 %v89
  %2028 = vmatprep.subr.mxu0 %v109
  %2029 = vmatpush1.msra.mxu0 %v108
  %2030 = vmatprep.subr.mxu0 %v128
  %2031 = vmatpush1.msra.mxu0 %v127
  %2032 = vmatprep.subr.mxu0 %v147
  %2033 = vmatpush1.msra.mxu0 %v146
  %2034 = vmatprep.subr.mxu0 %v166
  %2035 = vmatpush1.msra.mxu0 %v165
  %2036 = vmatprep.subr.mxu0 %v185
  %2037 = vmatpush1.msra.mxu0 %v184
  %2038 = vmatprep.subr.mxu0 %v204
  %2039 = vmatpush1.msra.mxu0 %v203
  %2040 = vmatprep.subr.mxu0 %v223
  %2041 = vmatpush1.msra.mxu0 %v222
  %2042 = vmatprep.subr.mxu0 %v242
  %2043 = vmatpush1.msra.mxu0 %v241
  %2044 = vmatprep.subr.mxu0 %v261
  %2045 = vmatpush1.msra.mxu0 %v260
  %2046 = vmatprep.subr.mxu0 %v280
  %2047 = vmatpush1.msra.mxu0 %v279
  %2048 = vmatprep.subr.mxu0 %v299
  %2049 = vmatpush1.msra.mxu0 %v298
  %2050 = vmatprep.subr.mxu0 %v318
  %2051 = vmatpush1.msra.mxu0 %v317
  %2052 = vmatprep.subr.mxu0 %v337
  %2053 = vmatpush1.msra.mxu0 %v336
  %2054 = vmatprep.subr.mxu0 %v356
  %2055 = vmatpush1.msra.mxu0 %v355
  %2056 = vmatprep.subr.mxu0 %v375
  %2057 = vmatpush1.msra.mxu0 %v374
  %2058 = vmatprep.subr.mxu0 %v394
  %2059 = vmatpush1.msra.mxu0 %v393
  %2060 = vmatprep.subr.mxu0 %v413
  %2061 = vmatpush1.msra.mxu0 %v412
  %2062 = vmatprep.subr.mxu0 %v432
  %2063 = vmatpush1.msra.mxu0 %v431
  %2064 = vmatprep.subr.mxu0 %v451
  %2065 = vmatpush1.msra.mxu0 %v450
  %2066 = vmatprep.subr.mxu0 %v470
  %2067 = vmatpush1.msra.mxu0 %v469
  %2068 = vmatprep.subr.mxu0 %v489
  %2069 = vmatpush1.msra.mxu0 %v488
  %2070 = vmatprep.subr.mxu0 %v508
  %2071 = vmatpush1.msra.mxu0 %v507
  %2072 = vmatprep.subr.mxu0 %v527
  %2073 = vmatpush1.msra.mxu0 %v526
  %2074 = vmatprep.subr.mxu0 %v546
  %2075 = vmatpush1.msra.mxu0 %v545
  %2076 = vmatprep.subr.mxu0 %v565
  %2077 = vmatpush1.msra.mxu0 %v564
  %2078 = vmatprep.subr.mxu0 %v584
  %2079 = vmatpush1.msra.mxu0 %v583
  %2080 = vmatprep.subr.mxu0 %v603
  %2081 = vmatpush1.msra.mxu0 %v602
  %2082 = vmatprep.subr.mxu0 %v622
  %2083 = vmatpush1.msra.mxu0 %v621
  %2084 = vmatprep.mubr.f32.mxu0 %v15
  %2085 = vmatmul.mubr.f32.gmra.mrb[0].mxu0 %v14
  %v2086 = vpop.f32.mrb[0].mxu0
  %v2087 = vadd.f32 %v1243, %v2086
  %v2088 = vpop.f32.mrb[0].mxu0
  %v2089 = vadd.f32 %v1243, %v2088
  %2090 = vmatprep.mubr.f32.mxu0 %v19
  %2091 = vmatmul.mubr.f32.gmra.mrb[0].mxu0 %v18
  %v2092 = vpop.f32.mrb[0].mxu0
  %v2093 = vadd.f32 %v1248, %v2092
  %v2094 = vpop.f32.mrb[0].mxu0
  %v2095 = vadd.f32 %v1248, %v2094
  %2096 = vdwg.mxu0
  %2097 = vmatprep.subr.mxu0 %v641
  %2098 = vmatpush1.msra.mxu0 %v640
  %2099 = vmatprep.subr.mxu0 %v660
  %2100 = vmatpush1.msra.mxu0 %v659
  %2101 = vmatprep.subr.mxu0 %v679
  %2102 = vmatpush1.msra.mxu0 %v678
  %2103 = vmatprep.subr.mxu0 %v698
  %2104 = vmatpush1.msra.mxu0 %v697
  %2105 = vmatprep.subr.mxu0 %v717
  %2106 = vmatpush1.msra.mxu0 %v716
  %2107 = vmatprep.subr.mxu0 %v736
  %2108 = vmatpush1.msra.mxu0 %v735
  %2109 = vmatprep.subr.mxu0 %v755
  %2110 = vmatpush1.msra.mxu0 %v754
  %2111 = vmatprep.subr.mxu0 %v774
  %2112 = vmatpush1.msra.mxu0 %v773
  %2113 = vmatprep.subr.mxu0 %v793
  %2114 = vmatpush1.msra.mxu0 %v792
  %2115 = vmatprep.subr.mxu0 %v812
  %2116 = vmatpush1.msra.mxu0 %v811
  %2117 = vmatprep.subr.mxu0 %v831
  %2118 = vmatpush1.msra.mxu0 %v830
  %2119 = vmatprep.subr.mxu0 %v850
  %2120 = vmatpush1.msra.mxu0 %v849
  %2121 = vmatprep.subr.mxu0 %v869
  %2122 = vmatpush1.msra.mxu0 %v868
  %2123 = vmatprep.subr.mxu0 %v888
  %2124 = vmatpush1.msra.mxu0 %v887
  %2125 = vmatprep.subr.mxu0 %v907
  %2126 = vmatpush1.msra.mxu0 %v906
  %2127 = vmatprep.subr.mxu0 %v926
  %2128 = vmatpush1.msra.mxu0 %v925
  %2129 = vmatprep.subr.mxu0 %v945
  %2130 = vmatpush1.msra.mxu0 %v944
  %2131 = vmatprep.subr.mxu0 %v964
  %2132 = vmatpush1.msra.mxu0 %v963
  %2133 = vmatprep.subr.mxu0 %v983
  %2134 = vmatpush1.msra.mxu0 %v982
  %2135 = vmatprep.subr.mxu0 %v1002
  %2136 = vmatpush1.msra.mxu0 %v1001
  %2137 = vmatprep.subr.mxu0 %v1021
  %2138 = vmatpush1.msra.mxu0 %v1020
  %2139 = vmatprep.subr.mxu0 %v1040
  %2140 = vmatpush1.msra.mxu0 %v1039
  %2141 = vmatprep.subr.mxu0 %v1059
  %2142 = vmatpush1.msra.mxu0 %v1058
  %2143 = vmatprep.subr.mxu0 %v1078
  %2144 = vmatpush1.msra.mxu0 %v1077
  %2145 = vmatprep.subr.mxu0 %v1097
  %2146 = vmatpush1.msra.mxu0 %v1096
  %2147 = vmatprep.subr.mxu0 %v1116
  %2148 = vmatpush1.msra.mxu0 %v1115
  %2149 = vmatprep.subr.mxu0 %v1135
  %2150 = vmatpush1.msra.mxu0 %v1134
  %2151 = vmatprep.subr.mxu0 %v1154
  %2152 = vmatpush1.msra.mxu0 %v1153
  %2153 = vmatprep.subr.mxu0 %v1173
  %2154 = vmatpush1.msra.mxu0 %v1172
  %2155 = vmatprep.subr.mxu0 %v1192
  %2156 = vmatpush1.msra.mxu0 %v1191
  %2157 = vmatprep.subr.mxu0 %v1211
  %2158 = vmatpush1.msra.mxu0 %v1210
  %2159 = vmatprep.subr.mxu0 %v1230
  %2160 = vmatpush1.msra.mxu0 %v1229
  %2161 = vmatprep.mubr.f32.mxu0 %v17
  %2162 = vmatmul.mubr.f32.gmra.mrb[0].mxu0 %v16
  %v2163 = vpop.f32.mrb[0].mxu0
  %v2164 = vadd.f32 %v2087, %v2163
  %v2165 = vpop.f32.mrb[0].mxu0
  %v2166 = vadd.f32 %v2089, %v2165
  %2167 = vmatprep.mubr.f32.mxu0 %v21
  %2168 = vmatmul.mubr.f32.gmra.mrb[0].mxu0 %v20
  %v2169 = vpop.f32.mrb[0].mxu0
  %v2170 = vadd.f32 %v2093, %v2169
  %v2171 = vpop.f32.mrb[0].mxu0
  %v2172 = vadd.f32 %v2095, %v2171
  %2173 = vdwg.mxu0
  %2174 = vmatprep.subr.mxu0 %v35
  %2175 = vmatpush1.msra.mxu0 %v34
  %2176 = vmatprep.subr.mxu0 %v54
  %2177 = vmatpush1.msra.mxu0 %v53
  %2178 = vmatprep.subr.mxu0 %v73
  %2179 = vmatpush1.msra.mxu0 %v72
  %2180 = vmatprep.subr.mxu0 %v92
  %2181 = vmatpush1.msra.mxu0 %v91
  %2182 = vmatprep.subr.mxu0 %v111
  %2183 = vmatpush1.msra.mxu0 %v110
  %2184 = vmatprep.subr.mxu0 %v130
  %2185 = vmatpush1.msra.mxu0 %v129
  %2186 = vmatprep.subr.mxu0 %v149
  %2187 = vmatpush1.msra.mxu0 %v148
  %2188 = vmatprep.subr.mxu0 %v168
  %2189 = vmatpush1.msra.mxu0 %v167
  %2190 = vmatprep.subr.mxu0 %v187
  %2191 = vmatpush1.msra.mxu0 %v186
  %2192 = vmatprep.subr.mxu0 %v206
  %2193 = vmatpush1.msra.mxu0 %v205
  %2194 = vmatprep.subr.mxu0 %v225
  %2195 = vmatpush1.msra.mxu0 %v224
  %2196 = vmatprep.subr.mxu0 %v244
  %2197 = vmatpush1.msra.mxu0 %v243
  %2198 = vmatprep.subr.mxu0 %v263
  %2199 = vmatpush1.msra.mxu0 %v262
  %2200 = vmatprep.subr.mxu0 %v282
  %2201 = vmatpush1.msra.mxu0 %v281
  %2202 = vmatprep.subr.mxu0 %v301
  %2203 = vmatpush1.msra.mxu0 %v300
  %2204 = vmatprep.subr.mxu0 %v320
  %2205 = vmatpush1.msra.mxu0 %v319
  %2206 = vmatprep.subr.mxu0 %v339
  %2207 = vmatpush1.msra.mxu0 %v338
  %2208 = vmatprep.subr.mxu0 %v358
  %2209 = vmatpush1.msra.mxu0 %v357
  %2210 = vmatprep.subr.mxu0 %v377
  %2211 = vmatpush1.msra.mxu0 %v376
  %2212 = vmatprep.subr.mxu0 %v396
  %2213 = vmatpush1.msra.mxu0 %v395
  %2214 = vmatprep.subr.mxu0 %v415
  %2215 = vmatpush1.msra.mxu0 %v414
  %2216 = vmatprep.subr.mxu0 %v434
  %2217 = vmatpush1.msra.mxu0 %v433
  %2218 = vmatprep.subr.mxu0 %v453
  %2219 = vmatpush1.msra.mxu0 %v452
  %2220 = vmatprep.subr.mxu0 %v472
  %2221 = vmatpush1.msra.mxu0 %v471
  %2222 = vmatprep.subr.mxu0 %v491
  %2223 = vmatpush1.msra.mxu0 %v490
  %2224 = vmatprep.subr.mxu0 %v510
  %2225 = vmatpush1.msra.mxu0 %v509
  %2226 = vmatprep.subr.mxu0 %v529
  %2227 = vmatpush1.msra.mxu0 %v528
  %2228 = vmatprep.subr.mxu0 %v548
  %2229 = vmatpush1.msra.mxu0 %v547
  %2230 = vmatprep.subr.mxu0 %v567
  %2231 = vmatpush1.msra.mxu0 %v566
  %2232 = vmatprep.subr.mxu0 %v586
  %2233 = vmatpush1.msra.mxu0 %v585
  %2234 = vmatprep.subr.mxu0 %v605
  %2235 = vmatpush1.msra.mxu0 %v604
  %2236 = vmatprep.subr.mxu0 %v624
  %2237 = vmatpush1.msra.mxu0 %v623
  %2238 = vmatprep.mubr.f32.mxu0 %v15
  %2239 = vmatmul.mubr.f32.gmra.mrb[0].mxu0 %v14
  %v2240 = vpop.f32.mrb[0].mxu0
  %v2241 = vadd.f32 %v1243, %v2240
  %v2242 = vpop.f32.mrb[0].mxu0
  %v2243 = vadd.f32 %v1243, %v2242
  %2244 = vmatprep.mubr.f32.mxu0 %v19
  %2245 = vmatmul.mubr.f32.gmra.mrb[0].mxu0 %v18
  %v2246 = vpop.f32.mrb[0].mxu0
  %v2247 = vadd.f32 %v1248, %v2246
  %v2248 = vpop.f32.mrb[0].mxu0
  %v2249 = vadd.f32 %v1248, %v2248
  %2250 = vdwg.mxu0
  %2251 = vmatprep.subr.mxu0 %v643
  %2252 = vmatpush1.msra.mxu0 %v642
  %2253 = vmatprep.subr.mxu0 %v662
  %2254 = vmatpush1.msra.mxu0 %v661
  %2255 = vmatprep.subr.mxu0 %v681
  %2256 = vmatpush1.msra.mxu0 %v680
  %2257 = vmatprep.subr.mxu0 %v700
  %2258 = vmatpush1.msra.mxu0 %v699
  %2259 = vmatprep.subr.mxu0 %v719
  %2260 = vmatpush1.msra.mxu0 %v718
  %2261 = vmatprep.subr.mxu0 %v738
  %2262 = vmatpush1.msra.mxu0 %v737
  %2263 = vmatprep.subr.mxu0 %v757
  %2264 = vmatpush1.msra.mxu0 %v756
  %2265 = vmatprep.subr.mxu0 %v776
  %2266 = vmatpush1.msra.mxu0 %v775
  %2267 = vmatprep.subr.mxu0 %v795
  %2268 = vmatpush1.msra.mxu0 %v794
  %2269 = vmatprep.subr.mxu0 %v814
  %2270 = vmatpush1.msra.mxu0 %v813
  %2271 = vmatprep.subr.mxu0 %v833
  %2272 = vmatpush1.msra.mxu0 %v832
  %2273 = vmatprep.subr.mxu0 %v852
  %2274 = vmatpush1.msra.mxu0 %v851
  %2275 = vmatprep.subr.mxu0 %v871
  %2276 = vmatpush1.msra.mxu0 %v870
  %2277 = vmatprep.subr.mxu0 %v890
  %2278 = vmatpush1.msra.mxu0 %v889
  %2279 = vmatprep.subr.mxu0 %v909
  %2280 = vmatpush1.msra.mxu0 %v908
  %2281 = vmatprep.subr.mxu0 %v928
  %2282 = vmatpush1.msra.mxu0 %v927
  %2283 = vmatprep.subr.mxu0 %v947
  %2284 = vmatpush1.msra.mxu0 %v946
  %2285 = vmatprep.subr.mxu0 %v966
  %2286 = vmatpush1.msra.mxu0 %v965
  %2287 = vmatprep.subr.mxu0 %v985
  %2288 = vmatpush1.msra.mxu0 %v984
  %2289 = vmatprep.subr.mxu0 %v1004
  %2290 = vmatpush1.msra.mxu0 %v1003
  %2291 = vmatprep.subr.mxu0 %v1023
  %2292 = vmatpush1.msra.mxu0 %v1022
  %2293 = vmatprep.subr.mxu0 %v1042
  %2294 = vmatpush1.msra.mxu0 %v1041
  %2295 = vmatprep.subr.mxu0 %v1061
  %2296 = vmatpush1.msra.mxu0 %v1060
  %2297 = vmatprep.subr.mxu0 %v1080
  %2298 = vmatpush1.msra.mxu0 %v1079
  %2299 = vmatprep.subr.mxu0 %v1099
  %2300 = vmatpush1.msra.mxu0 %v1098
  %2301 = vmatprep.subr.mxu0 %v1118
  %2302 = vmatpush1.msra.mxu0 %v1117
  %2303 = vmatprep.subr.mxu0 %v1137
  %2304 = vmatpush1.msra.mxu0 %v1136
  %2305 = vmatprep.subr.mxu0 %v1156
  %2306 = vmatpush1.msra.mxu0 %v1155
  %2307 = vmatprep.subr.mxu0 %v1175
  %2308 = vmatpush1.msra.mxu0 %v1174
  %2309 = vmatprep.subr.mxu0 %v1194
  %2310 = vmatpush1.msra.mxu0 %v1193
  %2311 = vmatprep.subr.mxu0 %v1213
  %2312 = vmatpush1.msra.mxu0 %v1212
  %2313 = vmatprep.subr.mxu0 %v1232
  %2314 = vmatpush1.msra.mxu0 %v1231
  %2315 = vmatprep.mubr.f32.mxu0 %v17
  %2316 = vmatmul.mubr.f32.gmra.mrb[0].mxu0 %v16
  %v2317 = vpop.f32.mrb[0].mxu0
  %v2318 = vadd.f32 %v2241, %v2317
  %v2319 = vpop.f32.mrb[0].mxu0
  %v2320 = vadd.f32 %v2243, %v2319
  %2321 = vmatprep.mubr.f32.mxu0 %v21
  %2322 = vmatmul.mubr.f32.gmra.mrb[0].mxu0 %v20
  %v2323 = vpop.f32.mrb[0].mxu0
  %v2324 = vadd.f32 %v2247, %v2323
  %v2325 = vpop.f32.mrb[0].mxu0
  %v2326 = vadd.f32 %v2249, %v2325
  %2327 = vdwg.mxu0
  %2328 = vmatprep.subr.mxu0 %v37
  %2329 = vmatpush1.msra.mxu0 %v36
  %2330 = vmatprep.subr.mxu0 %v56
  %2331 = vmatpush1.msra.mxu0 %v55
  %2332 = vmatprep.subr.mxu0 %v75
  %2333 = vmatpush1.msra.mxu0 %v74
  %2334 = vmatprep.subr.mxu0 %v94
  %2335 = vmatpush1.msra.mxu0 %v93
  %2336 = vmatprep.subr.mxu0 %v113
  %2337 = vmatpush1.msra.mxu0 %v112
  %2338 = vmatprep.subr.mxu0 %v132
  %2339 = vmatpush1.msra.mxu0 %v131
  %2340 = vmatprep.subr.mxu0 %v151
  %2341 = vmatpush1.msra.mxu0 %v150
  %2342 = vmatprep.subr.mxu0 %v170
  %2343 = vmatpush1.msra.mxu0 %v169
  %2344 = vmatprep.subr.mxu0 %v189
  %2345 = vmatpush1.msra.mxu0 %v188
  %2346 = vmatprep.subr.mxu0 %v208
  %2347 = vmatpush1.msra.mxu0 %v207
  %2348 = vmatprep.subr.mxu0 %v227
  %2349 = vmatpush1.msra.mxu0 %v226
  %2350 = vmatprep.subr.mxu0 %v246
  %2351 = vmatpush1.msra.mxu0 %v245
  %2352 = vmatprep.subr.mxu0 %v265
  %2353 = vmatpush1.msra.mxu0 %v264
  %2354 = vmatprep.subr.mxu0 %v284
  %2355 = vmatpush1.msra.mxu0 %v283
  %2356 = vmatprep.subr.mxu0 %v303
  %2357 = vmatpush1.msra.mxu0 %v302
  %2358 = vmatprep.subr.mxu0 %v322
  %2359 = vmatpush1.msra.mxu0 %v321
  %2360 = vmatprep.subr.mxu0 %v341
  %2361 = vmatpush1.msra.mxu0 %v340
  %2362 = vmatprep.subr.mxu0 %v360
  %2363 = vmatpush1.msra.mxu0 %v359
  %2364 = vmatprep.subr.mxu0 %v379
  %2365 = vmatpush1.msra.mxu0 %v378
  %2366 = vmatprep.subr.mxu0 %v398
  %2367 = vmatpush1.msra.mxu0 %v397
  %2368 = vmatprep.subr.mxu0 %v417
  %2369 = vmatpush1.msra.mxu0 %v416
  %2370 = vmatprep.subr.mxu0 %v436
  %2371 = vmatpush1.msra.mxu0 %v435
  %2372 = vmatprep.subr.mxu0 %v455
  %2373 = vmatpush1.msra.mxu0 %v454
  %2374 = vmatprep.subr.mxu0 %v474
  %2375 = vmatpush1.msra.mxu0 %v473
  %2376 = vmatprep.subr.mxu0 %v493
  %2377 = vmatpush1.msra.mxu0 %v492
  %2378 = vmatprep.subr.mxu0 %v512
  %2379 = vmatpush1.msra.mxu0 %v511
  %2380 = vmatprep.subr.mxu0 %v531
  %2381 = vmatpush1.msra.mxu0 %v530
  %2382 = vmatprep.subr.mxu0 %v550
  %2383 = vmatpush1.msra.mxu0 %v549
  %2384 = vmatprep.subr.mxu0 %v569
  %2385 = vmatpush1.msra.mxu0 %v568
  %2386 = vmatprep.subr.mxu0 %v588
  %2387 = vmatpush1.msra.mxu0 %v587
  %2388 = vmatprep.subr.mxu0 %v607
  %2389 = vmatpush1.msra.mxu0 %v606
  %2390 = vmatprep.subr.mxu0 %v626
  %2391 = vmatpush1.msra.mxu0 %v625
  %2392 = vmatprep.mubr.f32.mxu0 %v15
  %2393 = vmatmul.mubr.f32.gmra.mrb[0].mxu0 %v14
  %v2394 = vpop.f32.mrb[0].mxu0
  %v2395 = vadd.f32 %v1243, %v2394
  %v2396 = vpop.f32.mrb[0].mxu0
  %v2397 = vadd.f32 %v1243, %v2396
  %2398 = vmatprep.mubr.f32.mxu0 %v19
  %2399 = vmatmul.mubr.f32.gmra.mrb[0].mxu0 %v18
  %v2400 = vpop.f32.mrb[0].mxu0
  %v2401 = vadd.f32 %v1248, %v2400
  %v2402 = vpop.f32.mrb[0].mxu0
  %v2403 = vadd.f32 %v1248, %v2402
  %2404 = vdwg.mxu0
  %2405 = vmatprep.subr.mxu0 %v645
  %2406 = vmatpush1.msra.mxu0 %v644
  %2407 = vmatprep.subr.mxu0 %v664
  %2408 = vmatpush1.msra.mxu0 %v663
  %2409 = vmatprep.subr.mxu0 %v683
  %2410 = vmatpush1.msra.mxu0 %v682
  %2411 = vmatprep.subr.mxu0 %v702
  %2412 = vmatpush1.msra.mxu0 %v701
  %2413 = vmatprep.subr.mxu0 %v721
  %2414 = vmatpush1.msra.mxu0 %v720
  %2415 = vmatprep.subr.mxu0 %v740
  %2416 = vmatpush1.msra.mxu0 %v739
  %2417 = vmatprep.subr.mxu0 %v759
  %2418 = vmatpush1.msra.mxu0 %v758
  %2419 = vmatprep.subr.mxu0 %v778
  %2420 = vmatpush1.msra.mxu0 %v777
  %2421 = vmatprep.subr.mxu0 %v797
  %2422 = vmatpush1.msra.mxu0 %v796
  %2423 = vmatprep.subr.mxu0 %v816
  %2424 = vmatpush1.msra.mxu0 %v815
  %2425 = vmatprep.subr.mxu0 %v835
  %2426 = vmatpush1.msra.mxu0 %v834
  %2427 = vmatprep.subr.mxu0 %v854
  %2428 = vmatpush1.msra.mxu0 %v853
  %2429 = vmatprep.subr.mxu0 %v873
  %2430 = vmatpush1.msra.mxu0 %v872
  %2431 = vmatprep.subr.mxu0 %v892
  %2432 = vmatpush1.msra.mxu0 %v891
  %2433 = vmatprep.subr.mxu0 %v911
  %2434 = vmatpush1.msra.mxu0 %v910
  %2435 = vmatprep.subr.mxu0 %v930
  %2436 = vmatpush1.msra.mxu0 %v929
  %2437 = vmatprep.subr.mxu0 %v949
  %2438 = vmatpush1.msra.mxu0 %v948
  %2439 = vmatprep.subr.mxu0 %v968
  %2440 = vmatpush1.msra.mxu0 %v967
  %2441 = vmatprep.subr.mxu0 %v987
  %2442 = vmatpush1.msra.mxu0 %v986
  %2443 = vmatprep.subr.mxu0 %v1006
  %2444 = vmatpush1.msra.mxu0 %v1005
  %2445 = vmatprep.subr.mxu0 %v1025
  %2446 = vmatpush1.msra.mxu0 %v1024
  %2447 = vmatprep.subr.mxu0 %v1044
  %2448 = vmatpush1.msra.mxu0 %v1043
  %2449 = vmatprep.subr.mxu0 %v1063
  %2450 = vmatpush1.msra.mxu0 %v1062
  %2451 = vmatprep.subr.mxu0 %v1082
  %2452 = vmatpush1.msra.mxu0 %v1081
  %2453 = vmatprep.subr.mxu0 %v1101
  %2454 = vmatpush1.msra.mxu0 %v1100
  %2455 = vmatprep.subr.mxu0 %v1120
  %2456 = vmatpush1.msra.mxu0 %v1119
  %2457 = vmatprep.subr.mxu0 %v1139
  %2458 = vmatpush1.msra.mxu0 %v1138
  %2459 = vmatprep.subr.mxu0 %v1158
  %2460 = vmatpush1.msra.mxu0 %v1157
  %2461 = vmatprep.subr.mxu0 %v1177
  %2462 = vmatpush1.msra.mxu0 %v1176
  %2463 = vmatprep.subr.mxu0 %v1196
  %2464 = vmatpush1.msra.mxu0 %v1195
  %2465 = vmatprep.subr.mxu0 %v1215
  %2466 = vmatpush1.msra.mxu0 %v1214
  %2467 = vmatprep.subr.mxu0 %v1234
  %2468 = vmatpush1.msra.mxu0 %v1233
  %2469 = vmatprep.mubr.f32.mxu0 %v17
  %2470 = vmatmul.mubr.f32.gmra.mrb[0].mxu0 %v16
  %v2471 = vpop.f32.mrb[0].mxu0
  %v2472 = vadd.f32 %v2395, %v2471
  %v2473 = vpop.f32.mrb[0].mxu0
  %v2474 = vadd.f32 %v2397, %v2473
  %2475 = vmatprep.mubr.f32.mxu0 %v21
  %2476 = vmatmul.mubr.f32.gmra.mrb[0].mxu0 %v20
  %v2477 = vpop.f32.mrb[0].mxu0
  %v2478 = vadd.f32 %v2401, %v2477
  %v2479 = vpop.f32.mrb[0].mxu0
  %v2480 = vadd.f32 %v2403, %v2479
  %2481 = vdwg.mxu0
  %2482 = vmatprep.subr.mxu0 %v39
  %2483 = vmatpush1.msra.mxu0 %v38
  %2484 = vmatprep.subr.mxu0 %v58
  %2485 = vmatpush1.msra.mxu0 %v57
  %2486 = vmatprep.subr.mxu0 %v77
  %2487 = vmatpush1.msra.mxu0 %v76
  %2488 = vmatprep.subr.mxu0 %v96
  %2489 = vmatpush1.msra.mxu0 %v95
  %2490 = vmatprep.subr.mxu0 %v115
  %2491 = vmatpush1.msra.mxu0 %v114
  %2492 = vmatprep.subr.mxu0 %v134
  %2493 = vmatpush1.msra.mxu0 %v133
  %2494 = vmatprep.subr.mxu0 %v153
  %2495 = vmatpush1.msra.mxu0 %v152
  %2496 = vmatprep.subr.mxu0 %v172
  %2497 = vmatpush1.msra.mxu0 %v171
  %2498 = vmatprep.subr.mxu0 %v191
  %2499 = vmatpush1.msra.mxu0 %v190
  %2500 = vmatprep.subr.mxu0 %v210
  %2501 = vmatpush1.msra.mxu0 %v209
  %2502 = vmatprep.subr.mxu0 %v229
  %2503 = vmatpush1.msra.mxu0 %v228
  %2504 = vmatprep.subr.mxu0 %v248
  %2505 = vmatpush1.msra.mxu0 %v247
  %2506 = vmatprep.subr.mxu0 %v267
  %2507 = vmatpush1.msra.mxu0 %v266
  %2508 = vmatprep.subr.mxu0 %v286
  %2509 = vmatpush1.msra.mxu0 %v285
  %2510 = vmatprep.subr.mxu0 %v305
  %2511 = vmatpush1.msra.mxu0 %v304
  %2512 = vmatprep.subr.mxu0 %v324
  %2513 = vmatpush1.msra.mxu0 %v323
  %2514 = vmatprep.subr.mxu0 %v343
  %2515 = vmatpush1.msra.mxu0 %v342
  %2516 = vmatprep.subr.mxu0 %v362
  %2517 = vmatpush1.msra.mxu0 %v361
  %2518 = vmatprep.subr.mxu0 %v381
  %2519 = vmatpush1.msra.mxu0 %v380
  %2520 = vmatprep.subr.mxu0 %v400
  %2521 = vmatpush1.msra.mxu0 %v399
  %2522 = vmatprep.subr.mxu0 %v419
  %2523 = vmatpush1.msra.mxu0 %v418
  %2524 = vmatprep.subr.mxu0 %v438
  %2525 = vmatpush1.msra.mxu0 %v437
  %2526 = vmatprep.subr.mxu0 %v457
  %2527 = vmatpush1.msra.mxu0 %v456
  %2528 = vmatprep.subr.mxu0 %v476
  %2529 = vmatpush1.msra.mxu0 %v475
  %2530 = vmatprep.subr.mxu0 %v495
  %2531 = vmatpush1.msra.mxu0 %v494
  %2532 = vmatprep.subr.mxu0 %v514
  %2533 = vmatpush1.msra.mxu0 %v513
  %2534 = vmatprep.subr.mxu0 %v533
  %2535 = vmatpush1.msra.mxu0 %v532
  %2536 = vmatprep.subr.mxu0 %v552
  %2537 = vmatpush1.msra.mxu0 %v551
  %2538 = vmatprep.subr.mxu0 %v571
  %2539 = vmatpush1.msra.mxu0 %v570
  %2540 = vmatprep.subr.mxu0 %v590
  %2541 = vmatpush1.msra.mxu0 %v589
  %2542 = vmatprep.subr.mxu0 %v609
  %2543 = vmatpush1.msra.mxu0 %v608
  %2544 = vmatprep.subr.mxu0 %v628
  %2545 = vmatpush1.msra.mxu0 %v627
  %2546 = vmatprep.mubr.f32.mxu0 %v15
  %2547 = vmatmul.mubr.f32.gmra.mrb[0].mxu0 %v14
  %v2548 = vpop.f32.mrb[0].mxu0
  %v2549 = vadd.f32 %v1243, %v2548
  %v2550 = vpop.f32.mrb[0].mxu0
  %v2551 = vadd.f32 %v1243, %v2550
  %2552 = vmatprep.mubr.f32.mxu0 %v19
  %2553 = vmatmul.mubr.f32.gmra.mrb[0].mxu0 %v18
  %v2554 = vpop.f32.mrb[0].mxu0
  %v2555 = vadd.f32 %v1248, %v2554
  %v2556 = vpop.f32.mrb[0].mxu0
  %v2557 = vadd.f32 %v1248, %v2556
  %2558 = vdwg.mxu0
  %2559 = vmatprep.subr.mxu0 %v647
  %2560 = vmatpush1.msra.mxu0 %v646
  %2561 = vmatprep.subr.mxu0 %v666
  %2562 = vmatpush1.msra.mxu0 %v665
  %2563 = vmatprep.subr.mxu0 %v685
  %2564 = vmatpush1.msra.mxu0 %v684
  %2565 = vmatprep.subr.mxu0 %v704
  %2566 = vmatpush1.msra.mxu0 %v703
  %2567 = vmatprep.subr.mxu0 %v723
  %2568 = vmatpush1.msra.mxu0 %v722
  %2569 = vmatprep.subr.mxu0 %v742
  %2570 = vmatpush1.msra.mxu0 %v741
  %2571 = vmatprep.subr.mxu0 %v761
  %2572 = vmatpush1.msra.mxu0 %v760
  %2573 = vmatprep.subr.mxu0 %v780
  %2574 = vmatpush1.msra.mxu0 %v779
  %2575 = vmatprep.subr.mxu0 %v799
  %2576 = vmatpush1.msra.mxu0 %v798
  %2577 = vmatprep.subr.mxu0 %v818
  %2578 = vmatpush1.msra.mxu0 %v817
  %2579 = vmatprep.subr.mxu0 %v837
  %2580 = vmatpush1.msra.mxu0 %v836
  %2581 = vmatprep.subr.mxu0 %v856
  %2582 = vmatpush1.msra.mxu0 %v855
  %2583 = vmatprep.subr.mxu0 %v875
  %2584 = vmatpush1.msra.mxu0 %v874
  %2585 = vmatprep.subr.mxu0 %v894
  %2586 = vmatpush1.msra.mxu0 %v893
  %2587 = vmatprep.subr.mxu0 %v913
  %2588 = vmatpush1.msra.mxu0 %v912
  %2589 = vmatprep.subr.mxu0 %v932
  %2590 = vmatpush1.msra.mxu0 %v931
  %2591 = vmatprep.subr.mxu0 %v951
  %2592 = vmatpush1.msra.mxu0 %v950
  %2593 = vmatprep.subr.mxu0 %v970
  %2594 = vmatpush1.msra.mxu0 %v969
  %2595 = vmatprep.subr.mxu0 %v989
  %2596 = vmatpush1.msra.mxu0 %v988
  %2597 = vmatprep.subr.mxu0 %v1008
  %2598 = vmatpush1.msra.mxu0 %v1007
  %2599 = vmatprep.subr.mxu0 %v1027
  %2600 = vmatpush1.msra.mxu0 %v1026
  %2601 = vmatprep.subr.mxu0 %v1046
  %2602 = vmatpush1.msra.mxu0 %v1045
  %2603 = vmatprep.subr.mxu0 %v1065
  %2604 = vmatpush1.msra.mxu0 %v1064
  %2605 = vmatprep.subr.mxu0 %v1084
  %2606 = vmatpush1.msra.mxu0 %v1083
  %2607 = vmatprep.subr.mxu0 %v1103
  %2608 = vmatpush1.msra.mxu0 %v1102
  %2609 = vmatprep.subr.mxu0 %v1122
  %2610 = vmatpush1.msra.mxu0 %v1121
  %2611 = vmatprep.subr.mxu0 %v1141
  %2612 = vmatpush1.msra.mxu0 %v1140
  %2613 = vmatprep.subr.mxu0 %v1160
  %2614 = vmatpush1.msra.mxu0 %v1159
  %2615 = vmatprep.subr.mxu0 %v1179
  %2616 = vmatpush1.msra.mxu0 %v1178
  %2617 = vmatprep.subr.mxu0 %v1198
  %2618 = vmatpush1.msra.mxu0 %v1197
  %2619 = vmatprep.subr.mxu0 %v1217
  %2620 = vmatpush1.msra.mxu0 %v1216
  %2621 = vmatprep.subr.mxu0 %v1236
  %2622 = vmatpush1.msra.mxu0 %v1235
  %2623 = vmatprep.mubr.f32.mxu0 %v17
  %2624 = vmatmul.mubr.f32.gmra.mrb[0].mxu0 %v16
  %v2625 = vpop.f32.mrb[0].mxu0
  %v2626 = vadd.f32 %v2549, %v2625
  %v2627 = vpop.f32.mrb[0].mxu0
  %v2628 = vadd.f32 %v2551, %v2627
  %2629 = vmatprep.mubr.f32.mxu0 %v21
  %2630 = vmatmul.mubr.f32.gmra.mrb[0].mxu0 %v20
  %v2631 = vpop.f32.mrb[0].mxu0
  %v2632 = vadd.f32 %v2555, %v2631
  %v2633 = vpop.f32.mrb[0].mxu0
  %v2634 = vadd.f32 %v2557, %v2633
  %2635 = vdwg.mxu0
  %2636 = vmatprep.subr.mxu0 0.0
  %2637 = vmatpush1.msra.mxu0 %v40
  %2638 = vmatprep.subr.mxu0 0.0
  %2639 = vmatpush1.msra.mxu0 %v59
  %2640 = vmatprep.subr.mxu0 0.0
  %2641 = vmatpush1.msra.mxu0 %v78
  %2642 = vmatprep.subr.mxu0 0.0
  %2643 = vmatpush1.msra.mxu0 %v97
  %2644 = vmatprep.subr.mxu0 0.0
  %2645 = vmatpush1.msra.mxu0 %v116
  %2646 = vmatprep.subr.mxu0 0.0
  %2647 = vmatpush1.msra.mxu0 %v135
  %2648 = vmatprep.subr.mxu0 0.0
  %2649 = vmatpush1.msra.mxu0 %v154
  %2650 = vmatprep.subr.mxu0 0.0
  %2651 = vmatpush1.msra.mxu0 %v173
  %2652 = vmatprep.subr.mxu0 0.0
  %2653 = vmatpush1.msra.mxu0 %v192
  %2654 = vmatprep.subr.mxu0 0.0
  %2655 = vmatpush1.msra.mxu0 %v211
  %2656 = vmatprep.subr.mxu0 0.0
  %2657 = vmatpush1.msra.mxu0 %v230
  %2658 = vmatprep.subr.mxu0 0.0
  %2659 = vmatpush1.msra.mxu0 %v249
  %2660 = vmatprep.subr.mxu0 0.0
  %2661 = vmatpush1.msra.mxu0 %v268
  %2662 = vmatprep.subr.mxu0 0.0
  %2663 = vmatpush1.msra.mxu0 %v287
  %2664 = vmatprep.subr.mxu0 0.0
  %2665 = vmatpush1.msra.mxu0 %v306
  %2666 = vmatprep.subr.mxu0 0.0
  %2667 = vmatpush1.msra.mxu0 %v325
  %2668 = vmatprep.subr.mxu0 0.0
  %2669 = vmatpush1.msra.mxu0 %v344
  %2670 = vmatprep.subr.mxu0 0.0
  %2671 = vmatpush1.msra.mxu0 %v363
  %2672 = vmatprep.subr.mxu0 0.0
  %2673 = vmatpush1.msra.mxu0 %v382
  %2674 = vmatprep.subr.mxu0 0.0
  %2675 = vmatpush1.msra.mxu0 %v401
  %2676 = vmatprep.subr.mxu0 0.0
  %2677 = vmatpush1.msra.mxu0 %v420
  %2678 = vmatprep.subr.mxu0 0.0
  %2679 = vmatpush1.msra.mxu0 %v439
  %2680 = vmatprep.subr.mxu0 0.0
  %2681 = vmatpush1.msra.mxu0 %v458
  %2682 = vmatprep.subr.mxu0 0.0
  %2683 = vmatpush1.msra.mxu0 %v477
  %2684 = vmatprep.subr.mxu0 0.0
  %2685 = vmatpush1.msra.mxu0 %v496
  %2686 = vmatprep.subr.mxu0 0.0
  %2687 = vmatpush1.msra.mxu0 %v515
  %2688 = vmatprep.subr.mxu0 0.0
  %2689 = vmatpush1.msra.mxu0 %v534
  %2690 = vmatprep.subr.mxu0 0.0
  %2691 = vmatpush1.msra.mxu0 %v553
  %2692 = vmatprep.subr.mxu0 0.0
  %2693 = vmatpush1.msra.mxu0 %v572
  %2694 = vmatprep.subr.mxu0 0.0
  %2695 = vmatpush1.msra.mxu0 %v591
  %2696 = vmatprep.subr.mxu0 0.0
  %2697 = vmatpush1.msra.mxu0 %v610
  %2698 = vmatprep.subr.mxu0 0.0
  %2699 = vmatpush1.msra.mxu0 %v629
  %2700 = vmatprep.mubr.f32.mxu0 %v15
  %2701 = vmatmul.mubr.f32.gmra.mrb[0].mxu0 %v14
  %v2702 = vpop.f32.mrb[0].mxu0
  %v2703 = vadd.f32 %v1243, %v2702
  %v2704 = vpop.f32.mrb[0].mxu0
  %2705 = vmatprep.mubr.f32.mxu0 %v19
  %2706 = vmatmul.mubr.f32.gmra.mrb[0].mxu0 %v18
  %v2707 = vpop.f32.mrb[0].mxu0
  %v2708 = vadd.f32 %v1248, %v2707
  %v2709 = vpop.f32.mrb[0].mxu0
  %2710 = vdwg.mxu0
  %2711 = vmatprep.subr.mxu0 0.0
  %2712 = vmatpush1.msra.mxu0 %v648
  %2713 = vmatprep.subr.mxu0 0.0
  %2714 = vmatpush1.msra.mxu0 %v667
  %2715 = vmatprep.subr.mxu0 0.0
  %2716 = vmatpush1.msra.mxu0 %v686
  %2717 = vmatprep.subr.mxu0 0.0
  %2718 = vmatpush1.msra.mxu0 %v705
  %2719 = vmatprep.subr.mxu0 0.0
  %2720 = vmatpush1.msra.mxu0 %v724
  %2721 = vmatprep.subr.mxu0 0.0
  %2722 = vmatpush1.msra.mxu0 %v743
  %2723 = vmatprep.subr.mxu0 0.0
  %2724 = vmatpush1.msra.mxu0 %v762
  %2725 = vmatprep.subr.mxu0 0.0
  %2726 = vmatpush1.msra.mxu0 %v781
  %2727 = vmatprep.subr.mxu0 0.0
  %2728 = vmatpush1.msra.mxu0 %v800
  %2729 = vmatprep.subr.mxu0 0.0
  %2730 = vmatpush1.msra.mxu0 %v819
  %2731 = vmatprep.subr.mxu0 0.0
  %2732 = vmatpush1.msra.mxu0 %v838
  %2733 = vmatprep.subr.mxu0 0.0
  %2734 = vmatpush1.msra.mxu0 %v857
  %2735 = vmatprep.subr.mxu0 0.0
  %2736 = vmatpush1.msra.mxu0 %v876
  %2737 = vmatprep.subr.mxu0 0.0
  %2738 = vmatpush1.msra.mxu0 %v895
  %2739 = vmatprep.subr.mxu0 0.0
  %2740 = vmatpush1.msra.mxu0 %v914
  %2741 = vmatprep.subr.mxu0 0.0
  %2742 = vmatpush1.msra.mxu0 %v933
  %2743 = vmatprep.subr.mxu0 0.0
  %2744 = vmatpush1.msra.mxu0 %v952
  %2745 = vmatprep.subr.mxu0 0.0
  %2746 = vmatpush1.msra.mxu0 %v971
  %2747 = vmatprep.subr.mxu0 0.0
  %2748 = vmatpush1.msra.mxu0 %v990
  %2749 = vmatprep.subr.mxu0 0.0
  %2750 = vmatpush1.msra.mxu0 %v1009
  %2751 = vmatprep.subr.mxu0 0.0
  %2752 = vmatpush1.msra.mxu0 %v1028
  %2753 = vmatprep.subr.mxu0 0.0
  %2754 = vmatpush1.msra.mxu0 %v1047
  %2755 = vmatprep.subr.mxu0 0.0
  %2756 = vmatpush1.msra.mxu0 %v1066
  %2757 = vmatprep.subr.mxu0 0.0
  %2758 = vmatpush1.msra.mxu0 %v1085
  %2759 = vmatprep.subr.mxu0 0.0
  %2760 = vmatpush1.msra.mxu0 %v1104
  %2761 = vmatprep.subr.mxu0 0.0
  %2762 = vmatpush1.msra.mxu0 %v1123
  %2763 = vmatprep.subr.mxu0 0.0
  %2764 = vmatpush1.msra.mxu0 %v1142
  %2765 = vmatprep.subr.mxu0 0.0
  %2766 = vmatpush1.msra.mxu0 %v1161
  %2767 = vmatprep.subr.mxu0 0.0
  %2768 = vmatpush1.msra.mxu0 %v1180
  %2769 = vmatprep.subr.mxu0 0.0
  %2770 = vmatpush1.msra.mxu0 %v1199
  %2771 = vmatprep.subr.mxu0 0.0
  %2772 = vmatpush1.msra.mxu0 %v1218
  %2773 = vmatprep.subr.mxu0 0.0
  %2774 = vmatpush1.msra.mxu0 %v1237
  %2775 = vmatprep.mubr.f32.mxu0 %v17
  %2776 = vmatmul.mubr.f32.gmra.mrb[0].mxu0 %v16
  %v2777 = vpop.f32.mrb[0].mxu0
  %v2778 = vadd.f32 %v2703, %v2777
  %v2779 = vpop.f32.mrb[0].mxu0
  %2780 = vmatprep.mubr.f32.mxu0 %v21
  %2781 = vmatmul.mubr.f32.gmra.mrb[0].mxu0 %v20
  %v2782 = vpop.f32.mrb[0].mxu0
  %v2783 = vadd.f32 %v2708, %v2782
  %v2784 = vpop.f32.mrb[0].mxu0
  %2785 = vdwg.mxu0
  %v2786 = vmax.f32 %v1394, 0.0
  %v2787 = vmax.f32 %v1396, 0.0
  %v2788 = vmax.f32 %v1548, 0.0
  %v2789 = vmax.f32 %v1550, 0.0
  %v2790 = vmax.f32 %v1702, 0.0
  %v2791 = vmax.f32 %v1704, 0.0
  %v2792 = vmax.f32 %v1856, 0.0
  %v2793 = vmax.f32 %v1858, 0.0
  %v2794 = vmax.f32 %v2010, 0.0
  %v2795 = vmax.f32 %v2012, 0.0
  %v2796 = vmax.f32 %v2164, 0.0
  %v2797 = vmax.f32 %v2166, 0.0
  %v2798 = vmax.f32 %v2318, 0.0
  %v2799 = vmax.f32 %v2320, 0.0
  %v2800 = vmax.f32 %v2472, 0.0
  %v2801 = vmax.f32 %v2474, 0.0
  %v2802 = vmax.f32 %v2626, 0.0
  %v2803 = vmax.f32 %v2628, 0.0
  %v2804 = vmax.f32 %v2778, 0.0
  %v2805 = vmax.f32 %v1400, 0.0
  %v2806 = vmax.f32 %v1402, 0.0
  %v2807 = vmax.f32 %v1554, 0.0
  %v2808 = vmax.f32 %v1556, 0.0
  %v2809 = vmax.f32 %v1708, 0.0
  %v2810 = vmax.f32 %v1710, 0.0
  %v2811 = vmax.f32 %v1862, 0.0
  %v2812 = vmax.f32 %v1864, 0.0
  %v2813 = vmax.f32 %v2016, 0.0
  %v2814 = vmax.f32 %v2018, 0.0
  %v2815 = vmax.f32 %v2170, 0.0
  %v2816 = vmax.f32 %v2172, 0.0
  %v2817 = vmax.f32 %v2324, 0.0
  %v2818 = vmax.f32 %v2326, 0.0
  %v2819 = vmax.f32 %v2478, 0.0
  %v2820 = vmax.f32 %v2480, 0.0
  %v2821 = vmax.f32 %v2632, 0.0
  %v2822 = vmax.f32 %v2634, 0.0
  %v2823 = vmax.f32 %v2783, 0.0
  %2824 = vst [vmem:[%s3] sm:$0xff] %v2786
  %2825 = vst [vmem:[%s3 + $0x8] sm:$0xff] %v2787
  %2826 = vst [vmem:[%s3 + $0x10] sm:$0xff] %v2788
  %2827 = vst [vmem:[%s3 + $0x18] sm:$0xff] %v2789
  %2828 = vst [vmem:[%s3 + $0x20] sm:$0xff] %v2790
  %2829 = vst [vmem:[%s3 + $0x28] sm:$0xff] %v2791
  %2830 = vst [vmem:[%s3 + $0x30] sm:$0xff] %v2792
  %2831 = vst [vmem:[%s3 + $0x38] sm:$0xff] %v2793
  %2832 = vst [vmem:[%s3 + $0x40] sm:$0xff] %v2794
  %2833 = vst [vmem:[%s3 + $0x48] sm:$0xff] %v2795
  %2834 = vst [vmem:[%s3 + $0x50] sm:$0xff] %v2796
  %2835 = vst [vmem:[%s3 + $0x58] sm:$0xff] %v2797
  %2836 = vst [vmem:[%s3 + $0x60] sm:$0xff] %v2798
  %2837 = vst [vmem:[%s3 + $0x68] sm:$0xff] %v2799
  %2838 = vst [vmem:[%s3 + $0x70] sm:$0xff] %v2800
  %2839 = vst [vmem:[%s3 + $0x78] sm:$0xff] %v2801
  %2840 = vst [vmem:[%s3 + $0x80] sm:$0xff] %v2802
  %2841 = vst [vmem:[%s3 + $0x88] sm:$0xff] %v2803
  %2842 = vst [vmem:[%s3 + $0x90] sm:$0xff] %v2804
  %2843 = vst [vmem:[%s3 + $0x98] sm:$0xff] %v2805
  %2844 = vst [vmem:[%s3 + $0xa0] sm:$0xff] %v2806
  %2845 = vst [vmem:[%s3 + $0xa8] sm:$0xff] %v2807
  %2846 = vst [vmem:[%s3 + $0xb0] sm:$0xff] %v2808
  %2847 = vst [vmem:[%s3 + $0xb8] sm:$0xff] %v2809
  %2848 = vst [vmem:[%s3 + $0xc0] sm:$0xff] %v2810
  %2849 = vst [vmem:[%s3 + $0xc8] sm:$0xff] %v2811
  %2850 = vst [vmem:[%s3 + $0xd0] sm:$0xff] %v2812
  %2851 = vst [vmem:[%s3 + $0xd8] sm:$0xff] %v2813
  %2852 = vst [vmem:[%s3 + $0xe0] sm:$0xff] %v2814
  %2853 = vst [vmem:[%s3 + $0xe8] sm:$0xff] %v2815
  %2854 = vst [vmem:[%s3 + $0xf0] sm:$0xff] %v2816
  %2855 = vst [vmem:[%s3 + $0xf8] sm:$0xff] %v2817
  %2856 = vst [vmem:[%s3 + $0x100] sm:$0xff] %v2818
  %2857 = vst [vmem:[%s3 + $0x108] sm:$0xff] %v2819
  %2858 = vst [vmem:[%s3 + $0x110] sm:$0xff] %v2820
  %2859 = vst [vmem:[%s3 + $0x118] sm:$0xff] %v2821
  %2860 = vst [vmem:[%s3 + $0x120] sm:$0xff] %v2822
  %2861 = vst [vmem:[%s3 + $0x128] sm:$0xff] %v2823
  // Predicated region
  $region14: #{generator_forward.6} parent=0 // pred_check
    _
  $region15: #{generator_forward.6} parent=0 // pred_check_branch
    %2863 = sbr.rel (0) target = $region17
  $region16: #{generator_forward.6} parent=0 // pred_region
    _
  $region17: #{generator_forward.6} parent=0 // pred_fallthru
    _
  // Predicated region
  $region18: #{generator_forward.6} parent=0 // pred_check
    _
  $region19: #{generator_forward.6} parent=0 // pred_check_branch
    %2865 = sbr.rel (0) target = $region21
  $region20: #{generator_forward.6} parent=0 // pred_region
    _
  $region21: #{generator_forward.6} parent=0 // pred_fallthru
    _

// kernel: generator_forward.7
$region0: #{generator_forward.7}
  #allocation0 [shape = 'u32[]', space=smem, size = 0x4, offset = 0x4, fixed_abs, tag = 'smem constant byte address 0x4 - core index']
  #allocation1 [shape = 'u32[144,128]{1,0:T(1,128)}', space=vmem, size = 0x12000, scoped, tag = 'internal scratch']
  #allocation2 [shape = 'f32[1,1]{1,0:T(1,128)S(1)}', space=vmem, size = 0x200, scoped, tag = 'scoped memory for generator_forward.7']
  %s0 = inlined_call_operand.vmem [shape: f32[1,784], index: 0, kind: input, shape index: {}]
  %s1 = inlined_call_operand.vmem [shape: f32[784,1664], index: 1, kind: input, shape index: {}]
  %s2 = inlined_call_operand.<no memory space> [shape: f32[1,1], index: 2, kind: input, shape index: {}]
  %s3 = inlined_call_operand.vmem [shape: f32[1,1664], index: 3, kind: output, shape index: {}]
  %s4 = sld [smem:[#allocation0]]
  $region22: #{generator_forward.7} parent=0
    _
  %s6 = ssub.s32 1, %s4
  %s7 = scalar_select 0, %s6, %s4
  %v8 = vstv %s2
  %9 = vst [vmem:[#allocation2] sm:$0x1] %v8
  // Predicated region
  $region2: #{generator_forward.7} parent=0 // pred_check
    _
  $region3: #{generator_forward.7} parent=0 // pred_check_branch
    %11 = sbr.rel (0) target = $region5
  $region4: #{generator_forward.7} parent=0 // pred_region
    _
  $region5: #{generator_forward.7} parent=0 // pred_fallthru
    _
  // Predicated region
  $region6: #{generator_forward.7} parent=0 // pred_check
    _
  $region7: #{generator_forward.7} parent=0 // pred_check_branch
    %13 = sbr.rel (0) target = $region9
  $region8: #{generator_forward.7} parent=0 // pred_region
    _
  $region9: #{generator_forward.7} parent=0 // pred_fallthru
    _
  // Predicated region
  $region10: #{generator_forward.7} parent=0 // pred_check
    _
  $region11: #{generator_forward.7} parent=0 // pred_check_branch
    %15 = sbr.rel (0) target = $region13
  $region12: #{generator_forward.7} parent=0 // pred_region
    _
  $region13: #{generator_forward.7} parent=0 // pred_fallthru
    _
  %v16 = vld [vmem:[%s0] sm:$0x7f]
  %v17 = vld [vmem:[%s1] sm:$0xff]
  %v18 = vld [vmem:[%s1 + $0x8] sm:$0xff]
  %v19 = vld [vmem:[%s1 + $0x10] sm:$0xff]
  %v20 = vld [vmem:[%s1 + $0x18] sm:$0xff]
  %v21 = vld [vmem:[%s1 + $0x20] sm:$0xff]
  %v22 = vld [vmem:[%s1 + $0x28] sm:$0xff]
  %v23 = vld [vmem:[%s1 + $0x30] sm:$0xff]
  %v24 = vld [vmem:[%s1 + $0x38] sm:$0xff]
  %v25 = vld [vmem:[%s1 + $0x40] sm:$0xff]
  %v26 = vld [vmem:[%s1 + $0x48] sm:$0xff]
  %v27 = vld [vmem:[%s1 + $0x50] sm:$0xff]
  %v28 = vld [vmem:[%s1 + $0x58] sm:$0xff]
  %v29 = vld [vmem:[%s1 + $0x60] sm:$0xff]
  %v30 = vld [vmem:[%s1 + $0x68] sm:$0xff]
  %v31 = vld [vmem:[%s1 + $0x70] sm:$0xff]
  %v32 = vld [vmem:[%s1 + $0x78] sm:$0xff]
  %v33 = vld [vmem:[%s1 + $0x80] sm:$0xff]
  %v34 = vld [vmem:[%s1 + $0x88] sm:$0xff]
  %v35 = vld [vmem:[%s1 + $0x90] sm:$0xff]
  %v36 = vld [vmem:[%s1 + $0x98] sm:$0xff]
  %v37 = vld [vmem:[%s1 + $0xa0] sm:$0xff]
  %v38 = vld [vmem:[%s1 + $0xa8] sm:$0xff]
  %v39 = vld [vmem:[%s1 + $0xb0] sm:$0xff]
  %v40 = vld [vmem:[%s1 + $0xb8] sm:$0xff]
  %v41 = vld [vmem:[%s1 + $0xc0] sm:$0xff]
  %v42 = vld [vmem:[%s1 + $0xc8] sm:$0xff]
  %v43 = vld [vmem:[%s1 + $0xd0] sm:$0xff]
  %v44 = vld [vmem:[%s1 + $0xd8] sm:$0xff]
  %v45 = vld [vmem:[%s1 + $0xe0] sm:$0xff]
  %v46 = vld [vmem:[%s1 + $0xe8] sm:$0xff]
  %v47 = vld [vmem:[%s1 + $0xf0] sm:$0xff]
  %v48 = vld [vmem:[%s1 + $0xf8] sm:$0xff]
  %v49 = vld [vmem:[%s1 + $0x100] sm:$0xff]
  %v50 = vld [vmem:[%s1 + $0x108] sm:$0xff]
  %v51 = vld [vmem:[%s1 + $0x110] sm:$0xff]
  %v52 = vld [vmem:[%s1 + $0x118] sm:$0xff]
  %v53 = vld [vmem:[%s1 + $0x120] sm:$0xff]
  %v54 = vld [vmem:[%s1 + $0x128] sm:$0xff]
  %v55 = vld [vmem:[%s1 + $0x130] sm:$0xff]
  %v56 = vld [vmem:[%s1 + $0x138] sm:$0xff]
  %v57 = vld [vmem:[%s1 + $0x140] sm:$0xff]
  %v58 = vld [vmem:[%s1 + $0x148] sm:$0xff]
  %v59 = vld [vmem:[%s1 + $0x150] sm:$0xff]
  %v60 = vld [vmem:[%s1 + $0x158] sm:$0xff]
  %v61 = vld [vmem:[%s1 + $0x160] sm:$0xff]
  %v62 = vld [vmem:[%s1 + $0x168] sm:$0xff]
  %v63 = vld [vmem:[%s1 + $0x170] sm:$0xff]
  %v64 = vld [vmem:[%s1 + $0x178] sm:$0xff]
  %v65 = vld [vmem:[%s1 + $0x180] sm:$0xff]
  %v66 = vld [vmem:[%s1 + $0x188] sm:$0xff]
  %v67 = vld [vmem:[%s1 + $0x190] sm:$0xff]
  %v68 = vld [vmem:[%s1 + $0x198] sm:$0xff]
  %v69 = vld [vmem:[%s1 + $0x1a0] sm:$0xff]
  %v70 = vld [vmem:[%s1 + $0x1a8] sm:$0xff]
  %v71 = vld [vmem:[%s1 + $0x1b0] sm:$0xff]
  %v72 = vld [vmem:[%s1 + $0x1b8] sm:$0xff]
  %v73 = vld [vmem:[%s1 + $0x1c0] sm:$0xff]
  %v74 = vld [vmem:[%s1 + $0x1c8] sm:$0xff]
  %v75 = vld [vmem:[%s1 + $0x1d0] sm:$0xff]
  %v76 = vld [vmem:[%s1 + $0x1d8] sm:$0xff]
  %v77 = vld [vmem:[%s1 + $0x1e0] sm:$0xff]
  %v78 = vld [vmem:[%s1 + $0x1e8] sm:$0xff]
  %v79 = vld [vmem:[%s1 + $0x1f0] sm:$0xff]
  %v80 = vld [vmem:[%s1 + $0x1f8] sm:$0xff]
  %v81 = vld [vmem:[%s1 + $0x200] sm:$0xff]
  %v82 = vld [vmem:[%s1 + $0x208] sm:$0xff]
  %v83 = vld [vmem:[%s1 + $0x210] sm:$0xff]
  %v84 = vld [vmem:[%s1 + $0x218] sm:$0xff]
  %v85 = vld [vmem:[%s1 + $0x220] sm:$0xff]
  %v86 = vld [vmem:[%s1 + $0x228] sm:$0xff]
  %v87 = vld [vmem:[%s1 + $0x230] sm:$0xff]
  %v88 = vld [vmem:[%s1 + $0x238] sm:$0xff]
  %v89 = vld [vmem:[%s1 + $0x240] sm:$0xff]
  %v90 = vld [vmem:[%s1 + $0x248] sm:$0xff]
  %v91 = vld [vmem:[%s1 + $0x250] sm:$0xff]
  %v92 = vld [vmem:[%s1 + $0x258] sm:$0xff]
  %v93 = vld [vmem:[%s1 + $0x260] sm:$0xff]
  %v94 = vld [vmem:[%s1 + $0x268] sm:$0xff]
  %v95 = vld [vmem:[%s1 + $0x270] sm:$0xff]
  %v96 = vld [vmem:[%s1 + $0x278] sm:$0xff]
  %v97 = vld [vmem:[%s1 + $0x280] sm:$0xff]
  %v98 = vld [vmem:[%s1 + $0x288] sm:$0xff]
  %v99 = vld [vmem:[%s1 + $0x290] sm:$0xff]
  %v100 = vld [vmem:[%s1 + $0x298] sm:$0xff]
  %v101 = vld [vmem:[%s1 + $0x2a0] sm:$0xff]
  %v102 = vld [vmem:[%s1 + $0x2a8] sm:$0xff]
  %v103 = vld [vmem:[%s1 + $0x2b0] sm:$0xff]
  %v104 = vld [vmem:[%s1 + $0x2b8] sm:$0xff]
  %v105 = vld [vmem:[%s1 + $0x2c0] sm:$0xff]
  %v106 = vld [vmem:[%s1 + $0x2c8] sm:$0xff]
  %v107 = vld [vmem:[%s1 + $0x2d0] sm:$0xff]
  %v108 = vld [vmem:[%s1 + $0x2d8] sm:$0xff]
  %v109 = vld [vmem:[%s1 + $0x2e0] sm:$0xff]
  %v110 = vld [vmem:[%s1 + $0x2e8] sm:$0xff]
  %v111 = vld [vmem:[%s1 + $0x2f0] sm:$0xff]
  %v112 = vld [vmem:[%s1 + $0x2f8] sm:$0xff]
  %v113 = vld [vmem:[%s1 + $0x300] sm:$0xff]
  %v114 = vld [vmem:[%s1 + $0x308] sm:$0xff]
  %v115 = vld [vmem:[%s1 + $0x310] sm:$0xff]
  %v116 = vld [vmem:[%s1 + $0x318] sm:$0xff]
  %v117 = vld [vmem:[%s1 + $0x320] sm:$0xff]
  %v118 = vld [vmem:[%s1 + $0x328] sm:$0xff]
  %v119 = vld [vmem:[%s1 + $0x330] sm:$0xff]
  %v120 = vld [vmem:[%s1 + $0x338] sm:$0xff]
  %v121 = vld [vmem:[%s1 + $0x340] sm:$0xff]
  %v122 = vld [vmem:[%s1 + $0x348] sm:$0xff]
  %v123 = vld [vmem:[%s1 + $0x350] sm:$0xff]
  %v124 = vld [vmem:[%s1 + $0x358] sm:$0xff]
  %v125 = vld [vmem:[%s1 + $0x360] sm:$0xff]
  %v126 = vld [vmem:[%s1 + $0x368] sm:$0xff]
  %v127 = vld [vmem:[%s1 + $0x370] sm:$0xff]
  %v128 = vld [vmem:[%s1 + $0x378] sm:$0xff]
  %v129 = vld [vmem:[%s1 + $0x380] sm:$0xff]
  %v130 = vld [vmem:[%s1 + $0x388] sm:$0xff]
  %v131 = vld [vmem:[%s1 + $0x390] sm:$0xff]
  %v132 = vld [vmem:[%s1 + $0x398] sm:$0xff]
  %v133 = vld [vmem:[%s1 + $0x3a0] sm:$0xff]
  %v134 = vld [vmem:[%s1 + $0x3a8] sm:$0xff]
  %v135 = vld [vmem:[%s1 + $0x3b0] sm:$0xff]
  %v136 = vld [vmem:[%s1 + $0x3b8] sm:$0xff]
  %v137 = vld [vmem:[%s1 + $0x3c0] sm:$0xff]
  %v138 = vld [vmem:[%s1 + $0x3c8] sm:$0xff]
  %v139 = vld [vmem:[%s1 + $0x3d0] sm:$0xff]
  %v140 = vld [vmem:[%s1 + $0x3d8] sm:$0xff]
  %v141 = vld [vmem:[%s1 + $0x3e0] sm:$0xff]
  %v142 = vld [vmem:[%s1 + $0x3e8] sm:$0xff]
  %v143 = vld [vmem:[%s1 + $0x3f0] sm:$0xff]
  %v144 = vld [vmem:[%s1 + $0x3f8] sm:$0xff]
  %v145 = vld [vmem:[%s1 + $0x400] sm:$0xff]
  %v146 = vld [vmem:[%s1 + $0x408] sm:$0xff]
  %v147 = vld [vmem:[%s1 + $0x410] sm:$0xff]
  %v148 = vld [vmem:[%s1 + $0x418] sm:$0xff]
  %v149 = vld [vmem:[%s1 + $0x420] sm:$0xff]
  %v150 = vld [vmem:[%s1 + $0x428] sm:$0xff]
  %v151 = vld [vmem:[%s1 + $0x430] sm:$0xff]
  %v152 = vld [vmem:[%s1 + $0x438] sm:$0xff]
  %v153 = vld [vmem:[%s1 + $0x440] sm:$0xff]
  %v154 = vld [vmem:[%s1 + $0x448] sm:$0xff]
  %v155 = vld [vmem:[%s1 + $0x450] sm:$0xff]
  %v156 = vld [vmem:[%s1 + $0x458] sm:$0xff]
  %v157 = vld [vmem:[%s1 + $0x460] sm:$0xff]
  %v158 = vld [vmem:[%s1 + $0x468] sm:$0xff]
  %v159 = vld [vmem:[%s1 + $0x470] sm:$0xff]
  %v160 = vld [vmem:[%s1 + $0x478] sm:$0xff]
  %v161 = vld [vmem:[%s1 + $0x480] sm:$0xff]
  %v162 = vld [vmem:[%s1 + $0x488] sm:$0xff]
  %v163 = vld [vmem:[%s1 + $0x490] sm:$0xff]
  %v164 = vld [vmem:[%s1 + $0x498] sm:$0xff]
  %v165 = vld [vmem:[%s1 + $0x4a0] sm:$0xff]
  %v166 = vld [vmem:[%s1 + $0x4a8] sm:$0xff]
  %v167 = vld [vmem:[%s1 + $0x4b0] sm:$0xff]
  %v168 = vld [vmem:[%s1 + $0x4b8] sm:$0xff]
  %v169 = vld [vmem:[%s1 + $0x4c0] sm:$0xff]
  %v170 = vld [vmem:[%s1 + $0x4c8] sm:$0xff]
  %v171 = vld [vmem:[%s1 + $0x4d0] sm:$0xff]
  %v172 = vld [vmem:[%s1 + $0x4d8] sm:$0xff]
  %v173 = vld [vmem:[%s1 + $0x4e0] sm:$0xff]
  %v174 = vld [vmem:[%s1 + $0x4e8] sm:$0xff]
  %v175 = vld [vmem:[%s1 + $0x4f0] sm:$0xff]
  %v176 = vld [vmem:[%s1 + $0x4f8] sm:$0xff]
  %v177 = vld [vmem:[%s1 + $0x500] sm:$0xff]
  %v178 = vld [vmem:[%s1 + $0x508] sm:$0xff]
  %v179 = vld [vmem:[%s1 + $0x510] sm:$0xff]
  %v180 = vld [vmem:[%s1 + $0x518] sm:$0xff]
  %v181 = vld [vmem:[%s1 + $0x520] sm:$0xff]
  %v182 = vld [vmem:[%s1 + $0x528] sm:$0xff]
  %v183 = vld [vmem:[%s1 + $0x530] sm:$0xff]
  %v184 = vld [vmem:[%s1 + $0x538] sm:$0xff]
  %v185 = vld [vmem:[%s1 + $0x540] sm:$0xff]
  %v186 = vld [vmem:[%s1 + $0x548] sm:$0xff]
  %v187 = vld [vmem:[%s1 + $0x550] sm:$0xff]
  %v188 = vld [vmem:[%s1 + $0x558] sm:$0xff]
  %v189 = vld [vmem:[%s1 + $0x560] sm:$0xff]
  %v190 = vld [vmem:[%s1 + $0x568] sm:$0xff]
  %v191 = vld [vmem:[%s1 + $0x570] sm:$0xff]
  %v192 = vld [vmem:[%s1 + $0x578] sm:$0xff]
  %v193 = vld [vmem:[%s1 + $0x580] sm:$0xff]
  %v194 = vld [vmem:[%s1 + $0x588] sm:$0xff]
  %v195 = vld [vmem:[%s1 + $0x590] sm:$0xff]
  %v196 = vld [vmem:[%s1 + $0x598] sm:$0xff]
  %v197 = vld [vmem:[%s1 + $0x5a0] sm:$0xff]
  %v198 = vld [vmem:[%s1 + $0x5a8] sm:$0xff]
  %v199 = vld [vmem:[%s1 + $0x5b0] sm:$0xff]
  %v200 = vld [vmem:[%s1 + $0x5b8] sm:$0xff]
  %v201 = vld [vmem:[%s1 + $0x5c0] sm:$0xff]
  %v202 = vld [vmem:[%s1 + $0x5c8] sm:$0xff]
  %v203 = vld [vmem:[%s1 + $0x5d0] sm:$0xff]
  %v204 = vld [vmem:[%s1 + $0x5d8] sm:$0xff]
  %v205 = vld [vmem:[%s1 + $0x5e0] sm:$0xff]
  %v206 = vld [vmem:[%s1 + $0x5e8] sm:$0xff]
  %v207 = vld [vmem:[%s1 + $0x5f0] sm:$0xff]
  %v208 = vld [vmem:[%s1 + $0x5f8] sm:$0xff]
  %v209 = vld [vmem:[%s1 + $0x600] sm:$0xff]
  %v210 = vld [vmem:[%s1 + $0x608] sm:$0xff]
  %v211 = vld [vmem:[%s1 + $0x610] sm:$0xff]
  %v212 = vld [vmem:[%s1 + $0x618] sm:$0xff]
  %v213 = vld [vmem:[%s1 + $0x620] sm:$0xff]
  %v214 = vld [vmem:[%s1 + $0x628] sm:$0xff]
  %v215 = vld [vmem:[%s1 + $0x630] sm:$0xff]
  %v216 = vld [vmem:[%s1 + $0x638] sm:$0xff]
  %v217 = vld [vmem:[%s1 + $0x640] sm:$0xff]
  %v218 = vld [vmem:[%s1 + $0x648] sm:$0xff]
  %v219 = vld [vmem:[%s1 + $0x650] sm:$0xff]
  %v220 = vld [vmem:[%s1 + $0x658] sm:$0xff]
  %v221 = vld [vmem:[%s1 + $0x660] sm:$0xff]
  %v222 = vld [vmem:[%s1 + $0x668] sm:$0xff]
  %v223 = vld [vmem:[%s1 + $0x670] sm:$0xff]
  %v224 = vld [vmem:[%s1 + $0x678] sm:$0xff]
  %v225 = vld [vmem:[%s1 + $0x680] sm:$0xff]
  %v226 = vld [vmem:[%s1 + $0x688] sm:$0xff]
  %v227 = vld [vmem:[%s1 + $0x690] sm:$0xff]
  %v228 = vld [vmem:[%s1 + $0x698] sm:$0xff]
  %v229 = vld [vmem:[%s1 + $0x6a0] sm:$0xff]
  %v230 = vld [vmem:[%s1 + $0x6a8] sm:$0xff]
  %v231 = vld [vmem:[%s1 + $0x6b0] sm:$0xff]
  %v232 = vld [vmem:[%s1 + $0x6b8] sm:$0xff]
  %v233 = vld [vmem:[%s1 + $0x6c0] sm:$0xff]
  %v234 = vld [vmem:[%s1 + $0x6c8] sm:$0xff]
  %v235 = vld [vmem:[%s1 + $0x6d0] sm:$0xff]
  %v236 = vld [vmem:[%s1 + $0x6d8] sm:$0xff]
  %v237 = vld [vmem:[%s1 + $0x6e0] sm:$0xff]
  %v238 = vld [vmem:[%s1 + $0x6e8] sm:$0xff]
  %v239 = vld [vmem:[%s1 + $0x6f0] sm:$0xff]
  %v240 = vld [vmem:[%s1 + $0x6f8] sm:$0xff]
  %v241 = vld [vmem:[%s1 + $0x700] sm:$0xff]
  %v242 = vld [vmem:[%s1 + $0x708] sm:$0xff]
  %v243 = vld [vmem:[%s1 + $0x710] sm:$0xff]
  %v244 = vld [vmem:[%s1 + $0x718] sm:$0xff]
  %v245 = vld [vmem:[%s1 + $0x720] sm:$0xff]
  %v246 = vld [vmem:[%s1 + $0x728] sm:$0xff]
  %v247 = vld [vmem:[%s1 + $0x730] sm:$0xff]
  %v248 = vld [vmem:[%s1 + $0x738] sm:$0xff]
  %v249 = vld [vmem:[%s1 + $0x740] sm:$0xff]
  %v250 = vld [vmem:[%s1 + $0x748] sm:$0xff]
  %v251 = vld [vmem:[%s1 + $0x750] sm:$0xff]
  %v252 = vld [vmem:[%s1 + $0x758] sm:$0xff]
  %v253 = vld [vmem:[%s1 + $0x760] sm:$0xff]
  %v254 = vld [vmem:[%s1 + $0x768] sm:$0xff]
  %v255 = vld [vmem:[%s1 + $0x770] sm:$0xff]
  %v256 = vld [vmem:[%s1 + $0x778] sm:$0xff]
  %v257 = vld [vmem:[%s1 + $0x780] sm:$0xff]
  %v258 = vld [vmem:[%s1 + $0x788] sm:$0xff]
  %v259 = vld [vmem:[%s1 + $0x790] sm:$0xff]
  %v260 = vld [vmem:[%s1 + $0x798] sm:$0xff]
  %v261 = vld [vmem:[%s1 + $0x7a0] sm:$0xff]
  %v262 = vld [vmem:[%s1 + $0x7a8] sm:$0xff]
  %v263 = vld [vmem:[%s1 + $0x7b0] sm:$0xff]
  %v264 = vld [vmem:[%s1 + $0x7b8] sm:$0xff]
  %v265 = vld [vmem:[%s1 + $0x7c0] sm:$0xff]
  %v266 = vld [vmem:[%s1 + $0x7c8] sm:$0xff]
  %v267 = vld [vmem:[%s1 + $0x7d0] sm:$0xff]
  %v268 = vld [vmem:[%s1 + $0x7d8] sm:$0xff]
  %v269 = vld [vmem:[%s1 + $0x7e0] sm:$0xff]
  %v270 = vld [vmem:[%s1 + $0x7e8] sm:$0xff]
  %v271 = vld [vmem:[%s1 + $0x7f0] sm:$0xff]
  %v272 = vld [vmem:[%s1 + $0x7f8] sm:$0xff]
  %v273 = vld [vmem:[%s1 + $0x800] sm:$0xff]
  %v274 = vld [vmem:[%s1 + $0x808] sm:$0xff]
  %v275 = vld [vmem:[%s1 + $0x810] sm:$0xff]
  %v276 = vld [vmem:[%s1 + $0x818] sm:$0xff]
  %v277 = vld [vmem:[%s1 + $0x820] sm:$0xff]
  %v278 = vld [vmem:[%s1 + $0x828] sm:$0xff]
  %v279 = vld [vmem:[%s1 + $0x830] sm:$0xff]
  %v280 = vld [vmem:[%s1 + $0x838] sm:$0xff]
  %v281 = vld [vmem:[%s1 + $0x840] sm:$0xff]
  %v282 = vld [vmem:[%s1 + $0x848] sm:$0xff]
  %v283 = vld [vmem:[%s1 + $0x850] sm:$0xff]
  %v284 = vld [vmem:[%s1 + $0x858] sm:$0xff]
  %v285 = vld [vmem:[%s1 + $0x860] sm:$0xff]
  %v286 = vld [vmem:[%s1 + $0x868] sm:$0xff]
  %v287 = vld [vmem:[%s1 + $0x870] sm:$0xff]
  %v288 = vld [vmem:[%s1 + $0x878] sm:$0xff]
  %v289 = vld [vmem:[%s1 + $0x880] sm:$0xff]
  %v290 = vld [vmem:[%s1 + $0x888] sm:$0xff]
  %v291 = vld [vmem:[%s1 + $0x890] sm:$0xff]
  %v292 = vld [vmem:[%s1 + $0x898] sm:$0xff]
  %v293 = vld [vmem:[%s1 + $0x8a0] sm:$0xff]
  %v294 = vld [vmem:[%s1 + $0x8a8] sm:$0xff]
  %v295 = vld [vmem:[%s1 + $0x8b0] sm:$0xff]
  %v296 = vld [vmem:[%s1 + $0x8b8] sm:$0xff]
  %v297 = vld [vmem:[%s1 + $0x8c0] sm:$0xff]
  %v298 = vld [vmem:[%s1 + $0x8c8] sm:$0xff]
  %v299 = vld [vmem:[%s1 + $0x8d0] sm:$0xff]
  %v300 = vld [vmem:[%s1 + $0x8d8] sm:$0xff]
  %v301 = vld [vmem:[%s1 + $0x8e0] sm:$0xff]
  %v302 = vld [vmem:[%s1 + $0x8e8] sm:$0xff]
  %v303 = vld [vmem:[%s1 + $0x8f0] sm:$0xff]
  %v304 = vld [vmem:[%s1 + $0x8f8] sm:$0xff]
  %v305 = vld [vmem:[%s1 + $0x900] sm:$0xff]
  %v306 = vld [vmem:[%s1 + $0x908] sm:$0xff]
  %v307 = vld [vmem:[%s1 + $0x910] sm:$0xff]
  %v308 = vld [vmem:[%s1 + $0x918] sm:$0xff]
  %v309 = vld [vmem:[%s1 + $0x920] sm:$0xff]
  %v310 = vld [vmem:[%s1 + $0x928] sm:$0xff]
  %v311 = vld [vmem:[%s1 + $0x930] sm:$0xff]
  %v312 = vld [vmem:[%s1 + $0x938] sm:$0xff]
  %v313 = vld [vmem:[%s1 + $0x940] sm:$0xff]
  %v314 = vld [vmem:[%s1 + $0x948] sm:$0xff]
  %v315 = vld [vmem:[%s1 + $0x950] sm:$0xff]
  %v316 = vld [vmem:[%s1 + $0x958] sm:$0xff]
  %v317 = vld [vmem:[%s1 + $0x960] sm:$0xff]
  %v318 = vld [vmem:[%s1 + $0x968] sm:$0xff]
  %v319 = vld [vmem:[%s1 + $0x970] sm:$0xff]
  %v320 = vld [vmem:[%s1 + $0x978] sm:$0xff]
  %v321 = vld [vmem:[%s1 + $0x980] sm:$0xff]
  %v322 = vld [vmem:[%s1 + $0x988] sm:$0xff]
  %v323 = vld [vmem:[%s1 + $0x990] sm:$0xff]
  %v324 = vld [vmem:[%s1 + $0x998] sm:$0xff]
  %v325 = vld [vmem:[%s1 + $0x9a0] sm:$0xff]
  %v326 = vld [vmem:[%s1 + $0x9a8] sm:$0xff]
  %v327 = vld [vmem:[%s1 + $0x9b0] sm:$0xff]
  %v328 = vld [vmem:[%s1 + $0x9b8] sm:$0xff]
  %v329 = vld [vmem:[%s1 + $0x9c0] sm:$0xff]
  %v330 = vld [vmem:[%s1 + $0x9c8] sm:$0xff]
  %v331 = vld [vmem:[%s1 + $0x9d0] sm:$0xff]
  %v332 = vld [vmem:[%s1 + $0x9d8] sm:$0xff]
  %v333 = vld [vmem:[%s1 + $0x9e0] sm:$0xff]
  %v334 = vld [vmem:[%s1 + $0x9e8] sm:$0xff]
  %v335 = vld [vmem:[%s1 + $0x9f0] sm:$0xff]
  %v336 = vld [vmem:[%s1 + $0x9f8] sm:$0xff]
  %v337 = vld [vmem:[%s1 + $0xa00] sm:$0xff]
  %v338 = vld [vmem:[%s1 + $0xa08] sm:$0xff]
  %v339 = vld [vmem:[%s1 + $0xa10] sm:$0xff]
  %v340 = vld [vmem:[%s1 + $0xa18] sm:$0xff]
  %v341 = vld [vmem:[%s1 + $0xa20] sm:$0xff]
  %v342 = vld [vmem:[%s1 + $0xa28] sm:$0xff]
  %v343 = vld [vmem:[%s1 + $0xa30] sm:$0xff]
  %v344 = vld [vmem:[%s1 + $0xa38] sm:$0xff]
  %v345 = vld [vmem:[%s1 + $0xa40] sm:$0xff]
  %v346 = vld [vmem:[%s1 + $0xa48] sm:$0xff]
  %v347 = vld [vmem:[%s1 + $0xa50] sm:$0xff]
  %v348 = vld [vmem:[%s1 + $0xa58] sm:$0xff]
  %v349 = vld [vmem:[%s1 + $0xa60] sm:$0xff]
  %v350 = vld [vmem:[%s1 + $0xa68] sm:$0xff]
  %v351 = vld [vmem:[%s1 + $0xa70] sm:$0xff]
  %v352 = vld [vmem:[%s1 + $0xa78] sm:$0xff]
  %v353 = vld [vmem:[%s1 + $0xa80] sm:$0xff]
  %v354 = vld [vmem:[%s1 + $0xa88] sm:$0xff]
  %v355 = vld [vmem:[%s1 + $0xa90] sm:$0xff]
  %v356 = vld [vmem:[%s1 + $0xa98] sm:$0xff]
  %v357 = vld [vmem:[%s1 + $0xaa0] sm:$0xff]
  %v358 = vld [vmem:[%s1 + $0xaa8] sm:$0xff]
  %v359 = vld [vmem:[%s1 + $0xab0] sm:$0xff]
  %v360 = vld [vmem:[%s1 + $0xab8] sm:$0xff]
  %v361 = vld [vmem:[%s1 + $0xac0] sm:$0xff]
  %v362 = vld [vmem:[%s1 + $0xac8] sm:$0xff]
  %v363 = vld [vmem:[%s1 + $0xad0] sm:$0xff]
  %v364 = vld [vmem:[%s1 + $0xad8] sm:$0xff]
  %v365 = vld [vmem:[%s1 + $0xae0] sm:$0xff]
  %v366 = vld [vmem:[%s1 + $0xae8] sm:$0xff]
  %v367 = vld [vmem:[%s1 + $0xaf0] sm:$0xff]
  %v368 = vld [vmem:[%s1 + $0xaf8] sm:$0xff]
  %v369 = vld [vmem:[%s1 + $0xb00] sm:$0xff]
  %v370 = vld [vmem:[%s1 + $0xb08] sm:$0xff]
  %v371 = vld [vmem:[%s1 + $0xb10] sm:$0xff]
  %v372 = vld [vmem:[%s1 + $0xb18] sm:$0xff]
  %v373 = vld [vmem:[%s1 + $0xb20] sm:$0xff]
  %v374 = vld [vmem:[%s1 + $0xb28] sm:$0xff]
  %v375 = vld [vmem:[%s1 + $0xb30] sm:$0xff]
  %v376 = vld [vmem:[%s1 + $0xb38] sm:$0xff]
  %v377 = vld [vmem:[%s1 + $0xb40] sm:$0xff]
  %v378 = vld [vmem:[%s1 + $0xb48] sm:$0xff]
  %v379 = vld [vmem:[%s1 + $0xb50] sm:$0xff]
  %v380 = vld [vmem:[%s1 + $0xb58] sm:$0xff]
  %v381 = vld [vmem:[%s1 + $0xb60] sm:$0xff]
  %v382 = vld [vmem:[%s1 + $0xb68] sm:$0xff]
  %v383 = vld [vmem:[%s1 + $0xb70] sm:$0xff]
  %v384 = vld [vmem:[%s1 + $0xb78] sm:$0xff]
  %v385 = vld [vmem:[%s1 + $0xb80] sm:$0xff]
  %v386 = vld [vmem:[%s1 + $0xb88] sm:$0xff]
  %v387 = vld [vmem:[%s1 + $0xb90] sm:$0xff]
  %v388 = vld [vmem:[%s1 + $0xb98] sm:$0xff]
  %v389 = vld [vmem:[%s1 + $0xba0] sm:$0xff]
  %v390 = vld [vmem:[%s1 + $0xba8] sm:$0xff]
  %v391 = vld [vmem:[%s1 + $0xbb0] sm:$0xff]
  %v392 = vld [vmem:[%s1 + $0xbb8] sm:$0xff]
  %v393 = vld [vmem:[%s1 + $0xbc0] sm:$0xff]
  %v394 = vld [vmem:[%s1 + $0xbc8] sm:$0xff]
  %v395 = vld [vmem:[%s1 + $0xbd0] sm:$0xff]
  %v396 = vld [vmem:[%s1 + $0xbd8] sm:$0xff]
  %v397 = vld [vmem:[%s1 + $0xbe0] sm:$0xff]
  %v398 = vld [vmem:[%s1 + $0xbe8] sm:$0xff]
  %v399 = vld [vmem:[%s1 + $0xbf0] sm:$0xff]
  %v400 = vld [vmem:[%s1 + $0xbf8] sm:$0xff]
  %v401 = vld [vmem:[%s1 + $0xc00] sm:$0xff]
  %v402 = vld [vmem:[%s1 + $0xc08] sm:$0xff]
  %v403 = vld [vmem:[%s1 + $0xc10] sm:$0xff]
  %v404 = vld [vmem:[%s1 + $0xc18] sm:$0xff]
  %v405 = vld [vmem:[%s1 + $0xc20] sm:$0xff]
  %v406 = vld [vmem:[%s1 + $0xc28] sm:$0xff]
  %v407 = vld [vmem:[%s1 + $0xc30] sm:$0xff]
  %v408 = vld [vmem:[%s1 + $0xc38] sm:$0xff]
  %v409 = vld [vmem:[%s1 + $0xc40] sm:$0xff]
  %v410 = vld [vmem:[%s1 + $0xc48] sm:$0xff]
  %v411 = vld [vmem:[%s1 + $0xc50] sm:$0xff]
  %v412 = vld [vmem:[%s1 + $0xc58] sm:$0xff]
  %v413 = vld [vmem:[%s1 + $0xc60] sm:$0xff]
  %v414 = vld [vmem:[%s1 + $0xc68] sm:$0xff]
  %v415 = vld [vmem:[%s1 + $0xc70] sm:$0xff]
  %v416 = vld [vmem:[%s1 + $0xc78] sm:$0xff]
  %v417 = vld [vmem:[%s1 + $0xc80] sm:$0xff]
  %v418 = vld [vmem:[%s1 + $0xc88] sm:$0xff]
  %v419 = vld [vmem:[%s1 + $0xc90] sm:$0xff]
  %v420 = vld [vmem:[%s1 + $0xc98] sm:$0xff]
  %v421 = vld [vmem:[%s1 + $0xca0] sm:$0xff]
  %v422 = vld [vmem:[%s1 + $0xca8] sm:$0xff]
  %v423 = vld [vmem:[%s1 + $0xcb0] sm:$0xff]
  %v424 = vld [vmem:[%s1 + $0xcb8] sm:$0xff]
  %v425 = vld [vmem:[%s1 + $0xcc0] sm:$0xff]
  %v426 = vld [vmem:[%s1 + $0xcc8] sm:$0xff]
  %v427 = vld [vmem:[%s1 + $0xcd0] sm:$0xff]
  %v428 = vld [vmem:[%s1 + $0xcd8] sm:$0xff]
  %v429 = vld [vmem:[%s1 + $0xce0] sm:$0xff]
  %v430 = vld [vmem:[%s1 + $0xce8] sm:$0xff]
  %v431 = vld [vmem:[%s1 + $0xcf0] sm:$0xff]
  %v432 = vld [vmem:[%s1 + $0xcf8] sm:$0xff]
  %v433 = vld [vmem:[%s1 + $0xd00] sm:$0xff]
  %v434 = vld [vmem:[%s1 + $0xd08] sm:$0xff]
  %v435 = vld [vmem:[%s1 + $0xd10] sm:$0xff]
  %v436 = vld [vmem:[%s1 + $0xd18] sm:$0xff]
  %v437 = vld [vmem:[%s1 + $0xd20] sm:$0xff]
  %v438 = vld [vmem:[%s1 + $0xd28] sm:$0xff]
  %v439 = vld [vmem:[%s1 + $0xd30] sm:$0xff]
  %v440 = vld [vmem:[%s1 + $0xd38] sm:$0xff]
  %v441 = vld [vmem:[%s1 + $0xd40] sm:$0xff]
  %v442 = vld [vmem:[%s1 + $0xd48] sm:$0xff]
  %v443 = vld [vmem:[%s1 + $0xd50] sm:$0xff]
  %v444 = vld [vmem:[%s1 + $0xd58] sm:$0xff]
  %v445 = vld [vmem:[%s1 + $0xd60] sm:$0xff]
  %v446 = vld [vmem:[%s1 + $0xd68] sm:$0xff]
  %v447 = vld [vmem:[%s1 + $0xd70] sm:$0xff]
  %v448 = vld [vmem:[%s1 + $0xd78] sm:$0xff]
  %v449 = vld [vmem:[%s1 + $0xd80] sm:$0xff]
  %v450 = vld [vmem:[%s1 + $0xd88] sm:$0xff]
  %v451 = vld [vmem:[%s1 + $0xd90] sm:$0xff]
  %v452 = vld [vmem:[%s1 + $0xd98] sm:$0xff]
  %v453 = vld [vmem:[%s1 + $0xda0] sm:$0xff]
  %v454 = vld [vmem:[%s1 + $0xda8] sm:$0xff]
  %v455 = vld [vmem:[%s1 + $0xdb0] sm:$0xff]
  %v456 = vld [vmem:[%s1 + $0xdb8] sm:$0xff]
  %v457 = vld [vmem:[%s1 + $0xdc0] sm:$0xff]
  %v458 = vld [vmem:[%s1 + $0xdc8] sm:$0xff]
  %v459 = vld [vmem:[%s1 + $0xdd0] sm:$0xff]
  %v460 = vld [vmem:[%s1 + $0xdd8] sm:$0xff]
  %v461 = vld [vmem:[%s1 + $0xde0] sm:$0xff]
  %v462 = vld [vmem:[%s1 + $0xde8] sm:$0xff]
  %v463 = vld [vmem:[%s1 + $0xdf0] sm:$0xff]
  %v464 = vld [vmem:[%s1 + $0xdf8] sm:$0xff]
  %v465 = vld [vmem:[%s1 + $0xe00] sm:$0xff]
  %v466 = vld [vmem:[%s1 + $0xe08] sm:$0xff]
  %v467 = vld [vmem:[%s1 + $0xe10] sm:$0xff]
  %v468 = vld [vmem:[%s1 + $0xe18] sm:$0xff]
  %v469 = vld [vmem:[%s1 + $0xe20] sm:$0xff]
  %v470 = vld [vmem:[%s1 + $0xe28] sm:$0xff]
  %v471 = vld [vmem:[%s1 + $0xe30] sm:$0xff]
  %v472 = vld [vmem:[%s1 + $0xe38] sm:$0xff]
  %v473 = vld [vmem:[%s1 + $0xe40] sm:$0xff]
  %v474 = vld [vmem:[%s1 + $0xe48] sm:$0xff]
  %v475 = vld [vmem:[%s1 + $0xe50] sm:$0xff]
  %v476 = vld [vmem:[%s1 + $0xe58] sm:$0xff]
  %v477 = vld [vmem:[%s1 + $0xe60] sm:$0xff]
  %v478 = vld [vmem:[%s1 + $0xe68] sm:$0xff]
  %v479 = vld [vmem:[%s1 + $0xe70] sm:$0xff]
  %v480 = vld [vmem:[%s1 + $0xe78] sm:$0xff]
  %v481 = vld [vmem:[%s1 + $0xe80] sm:$0xff]
  %v482 = vld [vmem:[%s1 + $0xe88] sm:$0xff]
  %v483 = vld [vmem:[%s1 + $0xe90] sm:$0xff]
  %v484 = vld [vmem:[%s1 + $0xe98] sm:$0xff]
  %v485 = vld [vmem:[%s1 + $0xea0] sm:$0xff]
  %v486 = vld [vmem:[%s1 + $0xea8] sm:$0xff]
  %v487 = vld [vmem:[%s1 + $0xeb0] sm:$0xff]
  %v488 = vld [vmem:[%s1 + $0xeb8] sm:$0xff]
  %v489 = vld [vmem:[%s1 + $0xec0] sm:$0xff]
  %v490 = vld [vmem:[%s1 + $0xec8] sm:$0xff]
  %v491 = vld [vmem:[%s1 + $0xed0] sm:$0xff]
  %v492 = vld [vmem:[%s1 + $0xed8] sm:$0xff]
  %v493 = vld [vmem:[%s1 + $0xee0] sm:$0xff]
  %v494 = vld [vmem:[%s1 + $0xee8] sm:$0xff]
  %v495 = vld [vmem:[%s1 + $0xef0] sm:$0xff]
  %v496 = vld [vmem:[%s1 + $0xef8] sm:$0xff]
  %v497 = vld [vmem:[%s1 + $0xf00] sm:$0xff]
  %v498 = vld [vmem:[%s1 + $0xf08] sm:$0xff]
  %v499 = vld [vmem:[%s1 + $0xf10] sm:$0xff]
  %v500 = vld [vmem:[%s1 + $0xf18] sm:$0xff]
  %v501 = vld [vmem:[%s1 + $0xf20] sm:$0xff]
  %v502 = vld [vmem:[%s1 + $0xf28] sm:$0xff]
  %v503 = vld [vmem:[%s1 + $0xf30] sm:$0xff]
  %v504 = vld [vmem:[%s1 + $0xf38] sm:$0xff]
  %v505 = vld [vmem:[%s1 + $0xf40] sm:$0xff]
  %v506 = vld [vmem:[%s1 + $0xf48] sm:$0xff]
  %v507 = vld [vmem:[%s1 + $0xf50] sm:$0xff]
  %v508 = vld [vmem:[%s1 + $0xf58] sm:$0xff]
  %v509 = vld [vmem:[%s1 + $0xf60] sm:$0xff]
  %v510 = vld [vmem:[%s1 + $0xf68] sm:$0xff]
  %v511 = vld [vmem:[%s1 + $0xf70] sm:$0xff]
  %v512 = vld [vmem:[%s1 + $0xf78] sm:$0xff]
  %v513 = vld [vmem:[%s1 + $0xf80] sm:$0xff]
  %v514 = vld [vmem:[%s1 + $0xf88] sm:$0xff]
  %v515 = vld [vmem:[%s1 + $0xf90] sm:$0xff]
  %v516 = vld [vmem:[%s1 + $0xf98] sm:$0xff]
  %v517 = vld [vmem:[%s1 + $0xfa0] sm:$0xff]
  %v518 = vld [vmem:[%s1 + $0xfa8] sm:$0xff]
  %v519 = vld [vmem:[%s1 + $0xfb0] sm:$0xff]
  %v520 = vld [vmem:[%s1 + $0xfb8] sm:$0xff]
  %v521 = vld [vmem:[%s1 + $0xfc0] sm:$0xff]
  %v522 = vld [vmem:[%s1 + $0xfc8] sm:$0xff]
  %v523 = vld [vmem:[%s1 + $0xfd0] sm:$0xff]
  %v524 = vld [vmem:[%s1 + $0xfd8] sm:$0xff]
  %v525 = vld [vmem:[%s1 + $0xfe0] sm:$0xff]
  %v526 = vld [vmem:[%s1 + $0xfe8] sm:$0xff]
  %v527 = vld [vmem:[%s1 + $0xff0] sm:$0xff]
  %v528 = vld [vmem:[%s1 + $0xff8] sm:$0xff]
  %v529 = vld [vmem:[%s1 + $0x1000] sm:$0xff]
  %v530 = vld [vmem:[%s1 + $0x1008] sm:$0xff]
  %v531 = vld [vmem:[%s1 + $0x1010] sm:$0xff]
  %v532 = vld [vmem:[%s1 + $0x1018] sm:$0xff]
  %v533 = vld [vmem:[%s1 + $0x1020] sm:$0xff]
  %v534 = vld [vmem:[%s1 + $0x1028] sm:$0xff]
  %v535 = vld [vmem:[%s1 + $0x1030] sm:$0xff]
  %v536 = vld [vmem:[%s1 + $0x1038] sm:$0xff]
  %v537 = vld [vmem:[%s1 + $0x1040] sm:$0xff]
  %v538 = vld [vmem:[%s1 + $0x1048] sm:$0xff]
  %v539 = vld [vmem:[%s1 + $0x1050] sm:$0xff]
  %v540 = vld [vmem:[%s1 + $0x1058] sm:$0xff]
  %v541 = vld [vmem:[%s1 + $0x1060] sm:$0xff]
  %v542 = vld [vmem:[%s1 + $0x1068] sm:$0xff]
  %v543 = vld [vmem:[%s1 + $0x1070] sm:$0xff]
  %v544 = vld [vmem:[%s1 + $0x1078] sm:$0xff]
  %v545 = vld [vmem:[%s1 + $0x1080] sm:$0xff]
  %v546 = vld [vmem:[%s1 + $0x1088] sm:$0xff]
  %v547 = vld [vmem:[%s1 + $0x1090] sm:$0xff]
  %v548 = vld [vmem:[%s1 + $0x1098] sm:$0xff]
  %v549 = vld [vmem:[%s1 + $0x10a0] sm:$0xff]
  %v550 = vld [vmem:[%s1 + $0x10a8] sm:$0xff]
  %v551 = vld [vmem:[%s1 + $0x10b0] sm:$0xff]
  %v552 = vld [vmem:[%s1 + $0x10b8] sm:$0xff]
  %v553 = vld [vmem:[%s1 + $0x10c0] sm:$0xff]
  %v554 = vld [vmem:[%s1 + $0x10c8] sm:$0xff]
  %v555 = vld [vmem:[%s1 + $0x10d0] sm:$0xff]
  %v556 = vld [vmem:[%s1 + $0x10d8] sm:$0xff]
  %v557 = vld [vmem:[%s1 + $0x10e0] sm:$0xff]
  %v558 = vld [vmem:[%s1 + $0x10e8] sm:$0xff]
  %v559 = vld [vmem:[%s1 + $0x10f0] sm:$0xff]
  %v560 = vld [vmem:[%s1 + $0x10f8] sm:$0xff]
  %v561 = vld [vmem:[%s1 + $0x1100] sm:$0xff]
  %v562 = vld [vmem:[%s1 + $0x1108] sm:$0xff]
  %v563 = vld [vmem:[%s1 + $0x1110] sm:$0xff]
  %v564 = vld [vmem:[%s1 + $0x1118] sm:$0xff]
  %v565 = vld [vmem:[%s1 + $0x1120] sm:$0xff]
  %v566 = vld [vmem:[%s1 + $0x1128] sm:$0xff]
  %v567 = vld [vmem:[%s1 + $0x1130] sm:$0xff]
  %v568 = vld [vmem:[%s1 + $0x1138] sm:$0xff]
  %v569 = vld [vmem:[%s1 + $0x1140] sm:$0xff]
  %v570 = vld [vmem:[%s1 + $0x1148] sm:$0xff]
  %v571 = vld [vmem:[%s1 + $0x1150] sm:$0xff]
  %v572 = vld [vmem:[%s1 + $0x1158] sm:$0xff]
  %v573 = vld [vmem:[%s1 + $0x1160] sm:$0xff]
  %v574 = vld [vmem:[%s1 + $0x1168] sm:$0xff]
  %v575 = vld [vmem:[%s1 + $0x1170] sm:$0xff]
  %v576 = vld [vmem:[%s1 + $0x1178] sm:$0xff]
  %v577 = vld [vmem:[%s1 + $0x1180] sm:$0xff]
  %v578 = vld [vmem:[%s1 + $0x1188] sm:$0xff]
  %v579 = vld [vmem:[%s1 + $0x1190] sm:$0xff]
  %v580 = vld [vmem:[%s1 + $0x1198] sm:$0xff]
  %v581 = vld [vmem:[%s1 + $0x11a0] sm:$0xff]
  %v582 = vld [vmem:[%s1 + $0x11a8] sm:$0xff]
  %v583 = vld [vmem:[%s1 + $0x11b0] sm:$0xff]
  %v584 = vld [vmem:[%s1 + $0x11b8] sm:$0xff]
  %v585 = vld [vmem:[%s1 + $0x11c0] sm:$0xff]
  %v586 = vld [vmem:[%s1 + $0x11c8] sm:$0xff]
  %v587 = vld [vmem:[%s1 + $0x11d0] sm:$0xff]
  %v588 = vld [vmem:[%s1 + $0x11d8] sm:$0xff]
  %v589 = vld [vmem:[%s1 + $0x11e0] sm:$0xff]
  %v590 = vld [vmem:[%s1 + $0x11e8] sm:$0xff]
  %v591 = vld [vmem:[%s1 + $0x11f0] sm:$0xff]
  %v592 = vld [vmem:[%s1 + $0x11f8] sm:$0xff]
  %v593 = vld [vmem:[%s1 + $0x1200] sm:$0xff]
  %v594 = vld [vmem:[%s1 + $0x1208] sm:$0xff]
  %v595 = vld [vmem:[%s1 + $0x1210] sm:$0xff]
  %v596 = vld [vmem:[%s1 + $0x1218] sm:$0xff]
  %v597 = vld [vmem:[%s1 + $0x1220] sm:$0xff]
  %v598 = vld [vmem:[%s1 + $0x1228] sm:$0xff]
  %v599 = vld [vmem:[%s1 + $0x1230] sm:$0xff]
  %v600 = vld [vmem:[%s1 + $0x1238] sm:$0xff]
  %v601 = vld [vmem:[%s1 + $0x1240] sm:$0xff]
  %v602 = vld [vmem:[%s1 + $0x1248] sm:$0xff]
  %v603 = vld [vmem:[%s1 + $0x1250] sm:$0xff]
  %v604 = vld [vmem:[%s1 + $0x1258] sm:$0xff]
  %v605 = vld [vmem:[%s1 + $0x1260] sm:$0xff]
  %v606 = vld [vmem:[%s1 + $0x1268] sm:$0xff]
  %v607 = vld [vmem:[%s1 + $0x1270] sm:$0xff]
  %v608 = vld [vmem:[%s1 + $0x1278] sm:$0xff]
  %v609 = vld [vmem:[%s1 + $0x1280] sm:$0xff]
  %v610 = vld [vmem:[%s1 + $0x1288] sm:$0xff]
  %v611 = vld [vmem:[%s1 + $0x1290] sm:$0xff]
  %v612 = vld [vmem:[%s1 + $0x1298] sm:$0xff]
  %v613 = vld [vmem:[%s1 + $0x12a0] sm:$0xff]
  %v614 = vld [vmem:[%s1 + $0x12a8] sm:$0xff]
  %v615 = vld [vmem:[%s1 + $0x12b0] sm:$0xff]
  %v616 = vld [vmem:[%s1 + $0x12b8] sm:$0xff]
  %v617 = vld [vmem:[%s1 + $0x12c0] sm:$0xff]
  %v618 = vld [vmem:[%s1 + $0x12c8] sm:$0xff]
  %v619 = vld [vmem:[%s1 + $0x12d0] sm:$0xff]
  %v620 = vld [vmem:[%s1 + $0x12d8] sm:$0xff]
  %v621 = vld [vmem:[%s1 + $0x12e0] sm:$0xff]
  %v622 = vld [vmem:[%s1 + $0x12e8] sm:$0xff]
  %v623 = vld [vmem:[%s1 + $0x12f0] sm:$0xff]
  %v624 = vld [vmem:[%s1 + $0x12f8] sm:$0xff]
  %v625 = vld [vmem:[%s1 + $0x1300] sm:$0xff]
  %v626 = vld [vmem:[%s1 + $0x1308] sm:$0xff]
  %v627 = vld [vmem:[%s1 + $0x1310] sm:$0xff]
  %v628 = vld [vmem:[%s1 + $0x1318] sm:$0xff]
  %v629 = vld [vmem:[%s1 + $0x1320] sm:$0xff]
  %v630 = vld [vmem:[%s1 + $0x1328] sm:$0xff]
  %v631 = vld [vmem:[%s1 + $0x1330] sm:$0xff]
  %v632 = vld [vmem:[%s1 + $0x1338] sm:$0xff]
  %v633 = vld [vmem:[%s1 + $0x1340] sm:$0xff]
  %v634 = vld [vmem:[%s1 + $0x1348] sm:$0xff]
  %v635 = vld [vmem:[%s1 + $0x1350] sm:$0xff]
  %v636 = vld [vmem:[%s1 + $0x1358] sm:$0xff]
  %v637 = vld [vmem:[%s1 + $0x1360] sm:$0xff]
  %v638 = vld [vmem:[%s1 + $0x1368] sm:$0xff]
  %v639 = vld [vmem:[%s1 + $0x1370] sm:$0xff]
  %v640 = vld [vmem:[%s1 + $0x1378] sm:$0xff]
  %v641 = vld [vmem:[%s1 + $0x1380] sm:$0xff]
  %v642 = vld [vmem:[%s1 + $0x1388] sm:$0xff]
  %v643 = vld [vmem:[%s1 + $0x1390] sm:$0xff]
  %v644 = vld [vmem:[%s1 + $0x1398] sm:$0xff]
  %v645 = vld [vmem:[%s1 + $0x13a0] sm:$0xff]
  %v646 = vld [vmem:[%s1 + $0x13a8] sm:$0xff]
  %v647 = vld [vmem:[%s1 + $0x13b0] sm:$0xff]
  %v648 = vld [vmem:[%s1 + $0x13b8] sm:$0xff]
  %v649 = vld [vmem:[%s1 + $0x13c0] sm:$0xff]
  %v650 = vld [vmem:[%s1 + $0x13c8] sm:$0xff]
  %v651 = vld [vmem:[%s1 + $0x13d0] sm:$0xff]
  %v652 = vld [vmem:[%s1 + $0x13d8] sm:$0xff]
  %v653 = vld [vmem:[%s1 + $0x13e0] sm:$0xff]
  %v654 = vld [vmem:[%s1 + $0x13e8] sm:$0xff]
  %v655 = vld [vmem:[%s1 + $0x13f0] sm:$0xff]
  %v656 = vld [vmem:[%s1 + $0x13f8] sm:$0xff]
  %v657 = vld [vmem:[%s1 + $0x1400] sm:$0xff]
  %v658 = vld [vmem:[%s1 + $0x1408] sm:$0xff]
  %v659 = vld [vmem:[%s1 + $0x1410] sm:$0xff]
  %v660 = vld [vmem:[%s1 + $0x1418] sm:$0xff]
  %v661 = vld [vmem:[%s1 + $0x1420] sm:$0xff]
  %v662 = vld [vmem:[%s1 + $0x1428] sm:$0xff]
  %v663 = vld [vmem:[%s1 + $0x1430] sm:$0xff]
  %v664 = vld [vmem:[%s1 + $0x1438] sm:$0xff]
  %v665 = vld [vmem:[%s1 + $0x1440] sm:$0xff]
  %v666 = vld [vmem:[%s1 + $0x1448] sm:$0xff]
  %v667 = vld [vmem:[%s1 + $0x1450] sm:$0xff]
  %v668 = vld [vmem:[%s1 + $0x1458] sm:$0xff]
  %v669 = vld [vmem:[%s1 + $0x1460] sm:$0xff]
  %v670 = vld [vmem:[%s1 + $0x1468] sm:$0xff]
  %v671 = vld [vmem:[%s1 + $0x1470] sm:$0xff]
  %v672 = vld [vmem:[%s1 + $0x1478] sm:$0xff]
  %v673 = vld [vmem:[%s1 + $0x1480] sm:$0xff]
  %v674 = vld [vmem:[%s1 + $0x1488] sm:$0xff]
  %v675 = vld [vmem:[%s1 + $0x1490] sm:$0xff]
  %v676 = vld [vmem:[%s1 + $0x1498] sm:$0xff]
  %v677 = vld [vmem:[%s1 + $0x14a0] sm:$0xff]
  %v678 = vld [vmem:[%s1 + $0x14a8] sm:$0xff]
  %v679 = vld [vmem:[%s1 + $0x14b0] sm:$0xff]
  %v680 = vld [vmem:[%s1 + $0x14b8] sm:$0xff]
  %v681 = vld [vmem:[%s1 + $0x14c0] sm:$0xff]
  %v682 = vld [vmem:[%s1 + $0x14c8] sm:$0xff]
  %v683 = vld [vmem:[%s1 + $0x14d0] sm:$0xff]
  %v684 = vld [vmem:[%s1 + $0x14d8] sm:$0xff]
  %v685 = vld [vmem:[%s1 + $0x14e0] sm:$0xff]
  %v686 = vld [vmem:[%s1 + $0x14e8] sm:$0xff]
  %v687 = vld [vmem:[%s1 + $0x14f0] sm:$0xff]
  %v688 = vld [vmem:[%s1 + $0x14f8] sm:$0xff]
  %v689 = vld [vmem:[%s1 + $0x1500] sm:$0xff]
  %v690 = vld [vmem:[%s1 + $0x1508] sm:$0xff]
  %v691 = vld [vmem:[%s1 + $0x1510] sm:$0xff]
  %v692 = vld [vmem:[%s1 + $0x1518] sm:$0xff]
  %v693 = vld [vmem:[%s1 + $0x1520] sm:$0xff]
  %v694 = vld [vmem:[%s1 + $0x1528] sm:$0xff]
  %v695 = vld [vmem:[%s1 + $0x1530] sm:$0xff]
  %v696 = vld [vmem:[%s1 + $0x1538] sm:$0xff]
  %v697 = vld [vmem:[%s1 + $0x1540] sm:$0xff]
  %v698 = vld [vmem:[%s1 + $0x1548] sm:$0xff]
  %v699 = vld [vmem:[%s1 + $0x1550] sm:$0xff]
  %v700 = vld [vmem:[%s1 + $0x1558] sm:$0xff]
  %v701 = vld [vmem:[%s1 + $0x1560] sm:$0xff]
  %v702 = vld [vmem:[%s1 + $0x1568] sm:$0xff]
  %v703 = vld [vmem:[%s1 + $0x1570] sm:$0xff]
  %v704 = vld [vmem:[%s1 + $0x1578] sm:$0xff]
  %v705 = vld [vmem:[%s1 + $0x1580] sm:$0xff]
  %v706 = vld [vmem:[%s1 + $0x1588] sm:$0xff]
  %v707 = vld [vmem:[%s1 + $0x1590] sm:$0xff]
  %v708 = vld [vmem:[%s1 + $0x1598] sm:$0xff]
  %v709 = vld [vmem:[%s1 + $0x15a0] sm:$0xff]
  %v710 = vld [vmem:[%s1 + $0x15a8] sm:$0xff]
  %v711 = vld [vmem:[%s1 + $0x15b0] sm:$0xff]
  %v712 = vld [vmem:[%s1 + $0x15b8] sm:$0xff]
  %v713 = vld [vmem:[%s1 + $0x15c0] sm:$0xff]
  %v714 = vld [vmem:[%s1 + $0x15c8] sm:$0xff]
  %v715 = vld [vmem:[%s1 + $0x15d0] sm:$0xff]
  %v716 = vld [vmem:[%s1 + $0x15d8] sm:$0xff]
  %v717 = vld [vmem:[%s1 + $0x15e0] sm:$0xff]
  %v718 = vld [vmem:[%s1 + $0x15e8] sm:$0xff]
  %v719 = vld [vmem:[%s1 + $0x15f0] sm:$0xff]
  %v720 = vld [vmem:[%s1 + $0x15f8] sm:$0xff]
  %v721 = vld [vmem:[%s1 + $0x1600] sm:$0xff]
  %v722 = vld [vmem:[%s1 + $0x1608] sm:$0xff]
  %v723 = vld [vmem:[%s1 + $0x1610] sm:$0xff]
  %v724 = vld [vmem:[%s1 + $0x1618] sm:$0xff]
  %v725 = vld [vmem:[%s1 + $0x1620] sm:$0xff]
  %v726 = vld [vmem:[%s1 + $0x1628] sm:$0xff]
  %v727 = vld [vmem:[%s1 + $0x1630] sm:$0xff]
  %v728 = vld [vmem:[%s1 + $0x1638] sm:$0xff]
  %v729 = vld [vmem:[%s1 + $0x1640] sm:$0xff]
  %v730 = vld [vmem:[%s1 + $0x1648] sm:$0xff]
  %v731 = vld [vmem:[%s1 + $0x1650] sm:$0xff]
  %v732 = vld [vmem:[%s1 + $0x1658] sm:$0xff]
  %v733 = vld [vmem:[%s1 + $0x1660] sm:$0xff]
  %v734 = vld [vmem:[%s1 + $0x1668] sm:$0xff]
  %v735 = vld [vmem:[%s1 + $0x1670] sm:$0xff]
  %v736 = vld [vmem:[%s1 + $0x1678] sm:$0xff]
  %v737 = vld [vmem:[%s1 + $0x1680] sm:$0xff]
  %v738 = vld [vmem:[%s1 + $0x1688] sm:$0xff]
  %v739 = vld [vmem:[%s1 + $0x1690] sm:$0xff]
  %v740 = vld [vmem:[%s1 + $0x1698] sm:$0xff]
  %v741 = vld [vmem:[%s1 + $0x16a0] sm:$0xff]
  %v742 = vld [vmem:[%s1 + $0x16a8] sm:$0xff]
  %v743 = vld [vmem:[%s1 + $0x16b0] sm:$0xff]
  %v744 = vld [vmem:[%s1 + $0x16b8] sm:$0xff]
  %v745 = vld [vmem:[%s1 + $0x16c0] sm:$0xff]
  %v746 = vld [vmem:[%s1 + $0x16c8] sm:$0xff]
  %v747 = vld [vmem:[%s1 + $0x16d0] sm:$0xff]
  %v748 = vld [vmem:[%s1 + $0x16d8] sm:$0xff]
  %v749 = vld [vmem:[%s1 + $0x16e0] sm:$0xff]
  %v750 = vld [vmem:[%s1 + $0x16e8] sm:$0xff]
  %v751 = vld [vmem:[%s1 + $0x16f0] sm:$0xff]
  %v752 = vld [vmem:[%s1 + $0x16f8] sm:$0xff]
  %v753 = vld [vmem:[%s1 + $0x1700] sm:$0xff]
  %v754 = vld [vmem:[%s1 + $0x1708] sm:$0xff]
  %v755 = vld [vmem:[%s1 + $0x1710] sm:$0xff]
  %v756 = vld [vmem:[%s1 + $0x1718] sm:$0xff]
  %v757 = vld [vmem:[%s1 + $0x1720] sm:$0xff]
  %v758 = vld [vmem:[%s1 + $0x1728] sm:$0xff]
  %v759 = vld [vmem:[%s1 + $0x1730] sm:$0xff]
  %v760 = vld [vmem:[%s1 + $0x1738] sm:$0xff]
  %v761 = vld [vmem:[%s1 + $0x1740] sm:$0xff]
  %v762 = vld [vmem:[%s1 + $0x1748] sm:$0xff]
  %v763 = vld [vmem:[%s1 + $0x1750] sm:$0xff]
  %v764 = vld [vmem:[%s1 + $0x1758] sm:$0xff]
  %v765 = vld [vmem:[%s1 + $0x1760] sm:$0xff]
  %v766 = vld [vmem:[%s1 + $0x1768] sm:$0xff]
  %v767 = vld [vmem:[%s1 + $0x1770] sm:$0xff]
  %v768 = vld [vmem:[%s1 + $0x1778] sm:$0xff]
  %v769 = vld [vmem:[%s1 + $0x1780] sm:$0xff]
  %v770 = vld [vmem:[%s1 + $0x1788] sm:$0xff]
  %v771 = vld [vmem:[%s1 + $0x1790] sm:$0xff]
  %v772 = vld [vmem:[%s1 + $0x1798] sm:$0xff]
  %v773 = vld [vmem:[%s1 + $0x17a0] sm:$0xff]
  %v774 = vld [vmem:[%s1 + $0x17a8] sm:$0xff]
  %v775 = vld [vmem:[%s1 + $0x17b0] sm:$0xff]
  %v776 = vld [vmem:[%s1 + $0x17b8] sm:$0xff]
  %v777 = vld [vmem:[%s1 + $0x17c0] sm:$0xff]
  %v778 = vld [vmem:[%s1 + $0x17c8] sm:$0xff]
  %v779 = vld [vmem:[%s1 + $0x17d0] sm:$0xff]
  %v780 = vld [vmem:[%s1 + $0x17d8] sm:$0xff]
  %v781 = vld [vmem:[%s1 + $0x17e0] sm:$0xff]
  %v782 = vld [vmem:[%s1 + $0x17e8] sm:$0xff]
  %v783 = vld [vmem:[%s1 + $0x17f0] sm:$0xff]
  %v784 = vld [vmem:[%s1 + $0x17f8] sm:$0xff]
  %v785 = vld [vmem:[%s1 + $0x1800] sm:$0xff]
  %v786 = vld [vmem:[%s1 + $0x1808] sm:$0xff]
  %v787 = vld [vmem:[%s1 + $0x1810] sm:$0xff]
  %v788 = vld [vmem:[%s1 + $0x1818] sm:$0xff]
  %v789 = vld [vmem:[%s1 + $0x1820] sm:$0xff]
  %v790 = vld [vmem:[%s1 + $0x1828] sm:$0xff]
  %v791 = vld [vmem:[%s1 + $0x1830] sm:$0xff]
  %v792 = vld [vmem:[%s1 + $0x1838] sm:$0xff]
  %v793 = vld [vmem:[%s1 + $0x1840] sm:$0xff]
  %v794 = vld [vmem:[%s1 + $0x1848] sm:$0xff]
  %v795 = vld [vmem:[%s1 + $0x1850] sm:$0xff]
  %v796 = vld [vmem:[%s1 + $0x1858] sm:$0xff]
  %v797 = vld [vmem:[%s1 + $0x1860] sm:$0xff]
  %v798 = vld [vmem:[%s1 + $0x1868] sm:$0xff]
  %v799 = vld [vmem:[%s1 + $0x1870] sm:$0xff]
  %v800 = vld [vmem:[%s1 + $0x1878] sm:$0xff]
  %v801 = vld [vmem:[%s1 + $0x1880] sm:$0xff]
  %v802 = vld [vmem:[%s1 + $0x1888] sm:$0xff]
  %v803 = vld [vmem:[%s1 + $0x1890] sm:$0xff]
  %v804 = vld [vmem:[%s1 + $0x1898] sm:$0xff]
  %v805 = vld [vmem:[%s1 + $0x18a0] sm:$0xff]
  %v806 = vld [vmem:[%s1 + $0x18a8] sm:$0xff]
  %v807 = vld [vmem:[%s1 + $0x18b0] sm:$0xff]
  %v808 = vld [vmem:[%s1 + $0x18b8] sm:$0xff]
  %v809 = vld [vmem:[%s1 + $0x18c0] sm:$0xff]
  %v810 = vld [vmem:[%s1 + $0x18c8] sm:$0xff]
  %v811 = vld [vmem:[%s1 + $0x18d0] sm:$0xff]
  %v812 = vld [vmem:[%s1 + $0x18d8] sm:$0xff]
  %v813 = vld [vmem:[%s1 + $0x18e0] sm:$0xff]
  %v814 = vld [vmem:[%s1 + $0x18e8] sm:$0xff]
  %v815 = vld [vmem:[%s1 + $0x18f0] sm:$0xff]
  %v816 = vld [vmem:[%s1 + $0x18f8] sm:$0xff]
  %v817 = vld [vmem:[%s1 + $0x1900] sm:$0xff]
  %v818 = vld [vmem:[%s1 + $0x1908] sm:$0xff]
  %v819 = vld [vmem:[%s1 + $0x1910] sm:$0xff]
  %v820 = vld [vmem:[%s1 + $0x1918] sm:$0xff]
  %v821 = vld [vmem:[%s1 + $0x1920] sm:$0xff]
  %v822 = vld [vmem:[%s1 + $0x1928] sm:$0xff]
  %v823 = vld [vmem:[%s1 + $0x1930] sm:$0xff]
  %v824 = vld [vmem:[%s1 + $0x1938] sm:$0xff]
  %v825 = vld [vmem:[%s1 + $0x1940] sm:$0xff]
  %v826 = vld [vmem:[%s1 + $0x1948] sm:$0xff]
  %v827 = vld [vmem:[%s1 + $0x1950] sm:$0xff]
  %v828 = vld [vmem:[%s1 + $0x1958] sm:$0xff]
  %v829 = vld [vmem:[%s1 + $0x1960] sm:$0xff]
  %v830 = vld [vmem:[%s1 + $0x1968] sm:$0xff]
  %v831 = vld [vmem:[%s1 + $0x1970] sm:$0xff]
  %v832 = vld [vmem:[%s1 + $0x1978] sm:$0xff]
  %v833 = vld [vmem:[%s1 + $0x1980] sm:$0xff]
  %v834 = vld [vmem:[%s1 + $0x1988] sm:$0xff]
  %v835 = vld [vmem:[%s1 + $0x1990] sm:$0xff]
  %v836 = vld [vmem:[%s1 + $0x1998] sm:$0xff]
  %v837 = vld [vmem:[%s1 + $0x19a0] sm:$0xff]
  %v838 = vld [vmem:[%s1 + $0x19a8] sm:$0xff]
  %v839 = vld [vmem:[%s1 + $0x19b0] sm:$0xff]
  %v840 = vld [vmem:[%s1 + $0x19b8] sm:$0xff]
  %v841 = vld [vmem:[%s1 + $0x19c0] sm:$0xff]
  %v842 = vld [vmem:[%s1 + $0x19c8] sm:$0xff]
  %v843 = vld [vmem:[%s1 + $0x19d0] sm:$0xff]
  %v844 = vld [vmem:[%s1 + $0x19d8] sm:$0xff]
  %v845 = vld [vmem:[%s1 + $0x19e0] sm:$0xff]
  %v846 = vld [vmem:[%s1 + $0x19e8] sm:$0xff]
  %v847 = vld [vmem:[%s1 + $0x19f0] sm:$0xff]
  %v848 = vld [vmem:[%s1 + $0x19f8] sm:$0xff]
  %v849 = vld [vmem:[%s1 + $0x1a00] sm:$0xff]
  %v850 = vld [vmem:[%s1 + $0x1a08] sm:$0xff]
  %v851 = vld [vmem:[%s1 + $0x1a10] sm:$0xff]
  %v852 = vld [vmem:[%s1 + $0x1a18] sm:$0xff]
  %v853 = vld [vmem:[%s1 + $0x1a20] sm:$0xff]
  %v854 = vld [vmem:[%s1 + $0x1a28] sm:$0xff]
  %v855 = vld [vmem:[%s1 + $0x1a30] sm:$0xff]
  %v856 = vld [vmem:[%s1 + $0x1a38] sm:$0xff]
  %v857 = vld [vmem:[%s1 + $0x1a40] sm:$0xff]
  %v858 = vld [vmem:[%s1 + $0x1a48] sm:$0xff]
  %v859 = vld [vmem:[%s1 + $0x1a50] sm:$0xff]
  %v860 = vld [vmem:[%s1 + $0x1a58] sm:$0xff]
  %v861 = vld [vmem:[%s1 + $0x1a60] sm:$0xff]
  %v862 = vld [vmem:[%s1 + $0x1a68] sm:$0xff]
  %v863 = vld [vmem:[%s1 + $0x1a70] sm:$0xff]
  %v864 = vld [vmem:[%s1 + $0x1a78] sm:$0xff]
  %v865 = vld [vmem:[%s1 + $0x1a80] sm:$0xff]
  %v866 = vld [vmem:[%s1 + $0x1a88] sm:$0xff]
  %v867 = vld [vmem:[%s1 + $0x1a90] sm:$0xff]
  %v868 = vld [vmem:[%s1 + $0x1a98] sm:$0xff]
  %v869 = vld [vmem:[%s1 + $0x1aa0] sm:$0xff]
  %v870 = vld [vmem:[%s1 + $0x1aa8] sm:$0xff]
  %v871 = vld [vmem:[%s1 + $0x1ab0] sm:$0xff]
  %v872 = vld [vmem:[%s1 + $0x1ab8] sm:$0xff]
  %v873 = vld [vmem:[%s1 + $0x1ac0] sm:$0xff]
  %v874 = vld [vmem:[%s1 + $0x1ac8] sm:$0xff]
  %v875 = vld [vmem:[%s1 + $0x1ad0] sm:$0xff]
  %v876 = vld [vmem:[%s1 + $0x1ad8] sm:$0xff]
  %v877 = vld [vmem:[%s1 + $0x1ae0] sm:$0xff]
  %v878 = vld [vmem:[%s1 + $0x1ae8] sm:$0xff]
  %v879 = vld [vmem:[%s1 + $0x1af0] sm:$0xff]
  %v880 = vld [vmem:[%s1 + $0x1af8] sm:$0xff]
  %v881 = vld [vmem:[%s1 + $0x1b00] sm:$0xff]
  %v882 = vld [vmem:[%s1 + $0x1b08] sm:$0xff]
  %v883 = vld [vmem:[%s1 + $0x1b10] sm:$0xff]
  %v884 = vld [vmem:[%s1 + $0x1b18] sm:$0xff]
  %v885 = vld [vmem:[%s1 + $0x1b20] sm:$0xff]
  %v886 = vld [vmem:[%s1 + $0x1b28] sm:$0xff]
  %v887 = vld [vmem:[%s1 + $0x1b30] sm:$0xff]
  %v888 = vld [vmem:[%s1 + $0x1b38] sm:$0xff]
  %v889 = vld [vmem:[%s1 + $0x1b40] sm:$0xff]
  %v890 = vld [vmem:[%s1 + $0x1b48] sm:$0xff]
  %v891 = vld [vmem:[%s1 + $0x1b50] sm:$0xff]
  %v892 = vld [vmem:[%s1 + $0x1b58] sm:$0xff]
  %v893 = vld [vmem:[%s1 + $0x1b60] sm:$0xff]
  %v894 = vld [vmem:[%s1 + $0x1b68] sm:$0xff]
  %v895 = vld [vmem:[%s1 + $0x1b70] sm:$0xff]
  %v896 = vld [vmem:[%s1 + $0x1b78] sm:$0xff]
  %v897 = vld [vmem:[%s1 + $0x1b80] sm:$0xff]
  %v898 = vld [vmem:[%s1 + $0x1b88] sm:$0xff]
  %v899 = vld [vmem:[%s1 + $0x1b90] sm:$0xff]
  %v900 = vld [vmem:[%s1 + $0x1b98] sm:$0xff]
  %v901 = vld [vmem:[%s1 + $0x1ba0] sm:$0xff]
  %v902 = vld [vmem:[%s1 + $0x1ba8] sm:$0xff]
  %v903 = vld [vmem:[%s1 + $0x1bb0] sm:$0xff]
  %v904 = vld [vmem:[%s1 + $0x1bb8] sm:$0xff]
  %v905 = vld [vmem:[%s1 + $0x1bc0] sm:$0xff]
  %v906 = vld [vmem:[%s1 + $0x1bc8] sm:$0xff]
  %v907 = vld [vmem:[%s1 + $0x1bd0] sm:$0xff]
  %v908 = vld [vmem:[%s1 + $0x1bd8] sm:$0xff]
  %v909 = vld [vmem:[%s1 + $0x1be0] sm:$0xff]
  %v910 = vld [vmem:[%s1 + $0x1be8] sm:$0xff]
  %v911 = vld [vmem:[%s1 + $0x1bf0] sm:$0xff]
  %v912 = vld [vmem:[%s1 + $0x1bf8] sm:$0xff]
  %v913 = vld [vmem:[%s1 + $0x1c00] sm:$0xff]
  %v914 = vld [vmem:[%s1 + $0x1c08] sm:$0xff]
  %v915 = vld [vmem:[%s1 + $0x1c10] sm:$0xff]
  %v916 = vld [vmem:[%s1 + $0x1c18] sm:$0xff]
  %v917 = vld [vmem:[%s1 + $0x1c20] sm:$0xff]
  %v918 = vld [vmem:[%s1 + $0x1c28] sm:$0xff]
  %v919 = vld [vmem:[%s1 + $0x1c30] sm:$0xff]
  %v920 = vld [vmem:[%s1 + $0x1c38] sm:$0xff]
  %v921 = vld [vmem:[%s1 + $0x1c40] sm:$0xff]
  %v922 = vld [vmem:[%s1 + $0x1c48] sm:$0xff]
  %v923 = vld [vmem:[%s1 + $0x1c50] sm:$0xff]
  %v924 = vld [vmem:[%s1 + $0x1c58] sm:$0xff]
  %v925 = vld [vmem:[%s1 + $0x1c60] sm:$0xff]
  %v926 = vld [vmem:[%s1 + $0x1c68] sm:$0xff]
  %v927 = vld [vmem:[%s1 + $0x1c70] sm:$0xff]
  %v928 = vld [vmem:[%s1 + $0x1c78] sm:$0xff]
  %v929 = vld [vmem:[%s1 + $0x1c80] sm:$0xff]
  %v930 = vld [vmem:[%s1 + $0x1c88] sm:$0xff]
  %v931 = vld [vmem:[%s1 + $0x1c90] sm:$0xff]
  %v932 = vld [vmem:[%s1 + $0x1c98] sm:$0xff]
  %v933 = vld [vmem:[%s1 + $0x1ca0] sm:$0xff]
  %v934 = vld [vmem:[%s1 + $0x1ca8] sm:$0xff]
  %v935 = vld [vmem:[%s1 + $0x1cb0] sm:$0xff]
  %v936 = vld [vmem:[%s1 + $0x1cb8] sm:$0xff]
  %v937 = vld [vmem:[%s1 + $0x1cc0] sm:$0xff]
  %v938 = vld [vmem:[%s1 + $0x1cc8] sm:$0xff]
  %v939 = vld [vmem:[%s1 + $0x1cd0] sm:$0xff]
  %v940 = vld [vmem:[%s1 + $0x1cd8] sm:$0xff]
  %v941 = vld [vmem:[%s1 + $0x1ce0] sm:$0xff]
  %v942 = vld [vmem:[%s1 + $0x1ce8] sm:$0xff]
  %v943 = vld [vmem:[%s1 + $0x1cf0] sm:$0xff]
  %v944 = vld [vmem:[%s1 + $0x1cf8] sm:$0xff]
  %v945 = vld [vmem:[%s1 + $0x1d00] sm:$0xff]
  %v946 = vld [vmem:[%s1 + $0x1d08] sm:$0xff]
  %v947 = vld [vmem:[%s1 + $0x1d10] sm:$0xff]
  %v948 = vld [vmem:[%s1 + $0x1d18] sm:$0xff]
  %v949 = vld [vmem:[%s1 + $0x1d20] sm:$0xff]
  %v950 = vld [vmem:[%s1 + $0x1d28] sm:$0xff]
  %v951 = vld [vmem:[%s1 + $0x1d30] sm:$0xff]
  %v952 = vld [vmem:[%s1 + $0x1d38] sm:$0xff]
  %v953 = vld [vmem:[%s1 + $0x1d40] sm:$0xff]
  %v954 = vld [vmem:[%s1 + $0x1d48] sm:$0xff]
  %v955 = vld [vmem:[%s1 + $0x1d50] sm:$0xff]
  %v956 = vld [vmem:[%s1 + $0x1d58] sm:$0xff]
  %v957 = vld [vmem:[%s1 + $0x1d60] sm:$0xff]
  %v958 = vld [vmem:[%s1 + $0x1d68] sm:$0xff]
  %v959 = vld [vmem:[%s1 + $0x1d70] sm:$0xff]
  %v960 = vld [vmem:[%s1 + $0x1d78] sm:$0xff]
  %v961 = vld [vmem:[%s1 + $0x1d80] sm:$0xff]
  %v962 = vld [vmem:[%s1 + $0x1d88] sm:$0xff]
  %v963 = vld [vmem:[%s1 + $0x1d90] sm:$0xff]
  %v964 = vld [vmem:[%s1 + $0x1d98] sm:$0xff]
  %v965 = vld [vmem:[%s1 + $0x1da0] sm:$0xff]
  %v966 = vld [vmem:[%s1 + $0x1da8] sm:$0xff]
  %v967 = vld [vmem:[%s1 + $0x1db0] sm:$0xff]
  %v968 = vld [vmem:[%s1 + $0x1db8] sm:$0xff]
  %v969 = vld [vmem:[%s1 + $0x1dc0] sm:$0xff]
  %v970 = vld [vmem:[%s1 + $0x1dc8] sm:$0xff]
  %v971 = vld [vmem:[%s1 + $0x1dd0] sm:$0xff]
  %v972 = vld [vmem:[%s1 + $0x1dd8] sm:$0xff]
  %v973 = vld [vmem:[%s1 + $0x1de0] sm:$0xff]
  %v974 = vld [vmem:[%s1 + $0x1de8] sm:$0xff]
  %v975 = vld [vmem:[%s1 + $0x1df0] sm:$0xff]
  %v976 = vld [vmem:[%s1 + $0x1df8] sm:$0xff]
  %v977 = vld [vmem:[%s1 + $0x1e00] sm:$0xff]
  %v978 = vld [vmem:[%s1 + $0x1e08] sm:$0xff]
  %v979 = vld [vmem:[%s1 + $0x1e10] sm:$0xff]
  %v980 = vld [vmem:[%s1 + $0x1e18] sm:$0xff]
  %v981 = vld [vmem:[%s1 + $0x1e20] sm:$0xff]
  %v982 = vld [vmem:[%s1 + $0x1e28] sm:$0xff]
  %v983 = vld [vmem:[%s1 + $0x1e30] sm:$0xff]
  %v984 = vld [vmem:[%s1 + $0x1e38] sm:$0xff]
  %v985 = vld [vmem:[%s1 + $0x1e40] sm:$0xff]
  %v986 = vld [vmem:[%s1 + $0x1e48] sm:$0xff]
  %v987 = vld [vmem:[%s1 + $0x1e50] sm:$0xff]
  %v988 = vld [vmem:[%s1 + $0x1e58] sm:$0xff]
  %v989 = vld [vmem:[%s1 + $0x1e60] sm:$0xff]
  %v990 = vld [vmem:[%s1 + $0x1e68] sm:$0xff]
  %v991 = vld [vmem:[%s1 + $0x1e70] sm:$0xff]
  %v992 = vld [vmem:[%s1 + $0x1e78] sm:$0xff]
  %v993 = vld [vmem:[%s1 + $0x1e80] sm:$0xff]
  %v994 = vld [vmem:[%s1 + $0x1e88] sm:$0xff]
  %v995 = vld [vmem:[%s1 + $0x1e90] sm:$0xff]
  %v996 = vld [vmem:[%s1 + $0x1e98] sm:$0xff]
  %v997 = vld [vmem:[%s1 + $0x1ea0] sm:$0xff]
  %v998 = vld [vmem:[%s1 + $0x1ea8] sm:$0xff]
  %v999 = vld [vmem:[%s1 + $0x1eb0] sm:$0xff]
  %v1000 = vld [vmem:[%s1 + $0x1eb8] sm:$0xff]
  %v1001 = vld [vmem:[%s1 + $0x1ec0] sm:$0xff]
  %v1002 = vld [vmem:[%s1 + $0x1ec8] sm:$0xff]
  %v1003 = vld [vmem:[%s1 + $0x1ed0] sm:$0xff]
  %v1004 = vld [vmem:[%s1 + $0x1ed8] sm:$0xff]
  %v1005 = vld [vmem:[%s1 + $0x1ee0] sm:$0xff]
  %v1006 = vld [vmem:[%s1 + $0x1ee8] sm:$0xff]
  %v1007 = vld [vmem:[%s1 + $0x1ef0] sm:$0xff]
  %v1008 = vld [vmem:[%s1 + $0x1ef8] sm:$0xff]
  %v1009 = vld [vmem:[%s1 + $0x1f00] sm:$0xff]
  %v1010 = vld [vmem:[%s1 + $0x1f08] sm:$0xff]
  %v1011 = vld [vmem:[%s1 + $0x1f10] sm:$0xff]
  %v1012 = vld [vmem:[%s1 + $0x1f18] sm:$0xff]
  %v1013 = vld [vmem:[%s1 + $0x1f20] sm:$0xff]
  %v1014 = vld [vmem:[%s1 + $0x1f28] sm:$0xff]
  %v1015 = vld [vmem:[%s1 + $0x1f30] sm:$0xff]
  %v1016 = vld [vmem:[%s1 + $0x1f38] sm:$0xff]
  %v1017 = vld [vmem:[%s1 + $0x1f40] sm:$0xff]
  %v1018 = vld [vmem:[%s1 + $0x1f48] sm:$0xff]
  %v1019 = vld [vmem:[%s1 + $0x1f50] sm:$0xff]
  %v1020 = vld [vmem:[%s1 + $0x1f58] sm:$0xff]
  %v1021 = vld [vmem:[%s1 + $0x1f60] sm:$0xff]
  %v1022 = vld [vmem:[%s1 + $0x1f68] sm:$0xff]
  %v1023 = vld [vmem:[%s1 + $0x1f70] sm:$0xff]
  %v1024 = vld [vmem:[%s1 + $0x1f78] sm:$0xff]
  %v1025 = vld [vmem:[%s1 + $0x1f80] sm:$0xff]
  %v1026 = vld [vmem:[%s1 + $0x1f88] sm:$0xff]
  %v1027 = vld [vmem:[%s1 + $0x1f90] sm:$0xff]
  %v1028 = vld [vmem:[%s1 + $0x1f98] sm:$0xff]
  %v1029 = vld [vmem:[%s1 + $0x1fa0] sm:$0xff]
  %v1030 = vld [vmem:[%s1 + $0x1fa8] sm:$0xff]
  %v1031 = vld [vmem:[%s1 + $0x1fb0] sm:$0xff]
  %v1032 = vld [vmem:[%s1 + $0x1fb8] sm:$0xff]
  %v1033 = vld [vmem:[%s1 + $0x1fc0] sm:$0xff]
  %v1034 = vld [vmem:[%s1 + $0x1fc8] sm:$0xff]
  %v1035 = vld [vmem:[%s1 + $0x1fd0] sm:$0xff]
  %v1036 = vld [vmem:[%s1 + $0x1fd8] sm:$0xff]
  %v1037 = vld [vmem:[%s1 + $0x1fe0] sm:$0xff]
  %v1038 = vld [vmem:[%s1 + $0x1fe8] sm:$0xff]
  %v1039 = vld [vmem:[%s1 + $0x1ff0] sm:$0xff]
  %v1040 = vld [vmem:[%s1 + $0x1ff8] sm:$0xff]
  %v1041 = vld [vmem:[%s1 + $0x2000] sm:$0xff]
  %v1042 = vld [vmem:[%s1 + $0x2008] sm:$0xff]
  %v1043 = vld [vmem:[%s1 + $0x2010] sm:$0xff]
  %v1044 = vld [vmem:[%s1 + $0x2018] sm:$0xff]
  %v1045 = vld [vmem:[%s1 + $0x2020] sm:$0xff]
  %v1046 = vld [vmem:[%s1 + $0x2028] sm:$0xff]
  %v1047 = vld [vmem:[%s1 + $0x2030] sm:$0xff]
  %v1048 = vld [vmem:[%s1 + $0x2038] sm:$0xff]
  %v1049 = vld [vmem:[%s1 + $0x2040] sm:$0xff]
  %v1050 = vld [vmem:[%s1 + $0x2048] sm:$0xff]
  %v1051 = vld [vmem:[%s1 + $0x2050] sm:$0xff]
  %v1052 = vld [vmem:[%s1 + $0x2058] sm:$0xff]
  %v1053 = vld [vmem:[%s1 + $0x2060] sm:$0xff]
  %v1054 = vld [vmem:[%s1 + $0x2068] sm:$0xff]
  %v1055 = vld [vmem:[%s1 + $0x2070] sm:$0xff]
  %v1056 = vld [vmem:[%s1 + $0x2078] sm:$0xff]
  %v1057 = vld [vmem:[%s1 + $0x2080] sm:$0xff]
  %v1058 = vld [vmem:[%s1 + $0x2088] sm:$0xff]
  %v1059 = vld [vmem:[%s1 + $0x2090] sm:$0xff]
  %v1060 = vld [vmem:[%s1 + $0x2098] sm:$0xff]
  %v1061 = vld [vmem:[%s1 + $0x20a0] sm:$0xff]
  %v1062 = vld [vmem:[%s1 + $0x20a8] sm:$0xff]
  %v1063 = vld [vmem:[%s1 + $0x20b0] sm:$0xff]
  %v1064 = vld [vmem:[%s1 + $0x20b8] sm:$0xff]
  %v1065 = vld [vmem:[%s1 + $0x20c0] sm:$0xff]
  %v1066 = vld [vmem:[%s1 + $0x20c8] sm:$0xff]
  %v1067 = vld [vmem:[%s1 + $0x20d0] sm:$0xff]
  %v1068 = vld [vmem:[%s1 + $0x20d8] sm:$0xff]
  %v1069 = vld [vmem:[%s1 + $0x20e0] sm:$0xff]
  %v1070 = vld [vmem:[%s1 + $0x20e8] sm:$0xff]
  %v1071 = vld [vmem:[%s1 + $0x20f0] sm:$0xff]
  %v1072 = vld [vmem:[%s1 + $0x20f8] sm:$0xff]
  %v1073 = vld [vmem:[%s1 + $0x2100] sm:$0xff]
  %v1074 = vld [vmem:[%s1 + $0x2108] sm:$0xff]
  %v1075 = vld [vmem:[%s1 + $0x2110] sm:$0xff]
  %v1076 = vld [vmem:[%s1 + $0x2118] sm:$0xff]
  %v1077 = vld [vmem:[%s1 + $0x2120] sm:$0xff]
  %v1078 = vld [vmem:[%s1 + $0x2128] sm:$0xff]
  %v1079 = vld [vmem:[%s1 + $0x2130] sm:$0xff]
  %v1080 = vld [vmem:[%s1 + $0x2138] sm:$0xff]
  %v1081 = vld [vmem:[%s1 + $0x2140] sm:$0xff]
  %v1082 = vld [vmem:[%s1 + $0x2148] sm:$0xff]
  %v1083 = vld [vmem:[%s1 + $0x2150] sm:$0xff]
  %v1084 = vld [vmem:[%s1 + $0x2158] sm:$0xff]
  %v1085 = vld [vmem:[%s1 + $0x2160] sm:$0xff]
  %v1086 = vld [vmem:[%s1 + $0x2168] sm:$0xff]
  %v1087 = vld [vmem:[%s1 + $0x2170] sm:$0xff]
  %v1088 = vld [vmem:[%s1 + $0x2178] sm:$0xff]
  %v1089 = vld [vmem:[%s1 + $0x2180] sm:$0xff]
  %v1090 = vld [vmem:[%s1 + $0x2188] sm:$0xff]
  %v1091 = vld [vmem:[%s1 + $0x2190] sm:$0xff]
  %v1092 = vld [vmem:[%s1 + $0x2198] sm:$0xff]
  %v1093 = vld [vmem:[%s1 + $0x21a0] sm:$0xff]
  %v1094 = vld [vmem:[%s1 + $0x21a8] sm:$0xff]
  %v1095 = vld [vmem:[%s1 + $0x21b0] sm:$0xff]
  %v1096 = vld [vmem:[%s1 + $0x21b8] sm:$0xff]
  %v1097 = vld [vmem:[%s1 + $0x21c0] sm:$0xff]
  %v1098 = vld [vmem:[%s1 + $0x21c8] sm:$0xff]
  %v1099 = vld [vmem:[%s1 + $0x21d0] sm:$0xff]
  %v1100 = vld [vmem:[%s1 + $0x21d8] sm:$0xff]
  %v1101 = vld [vmem:[%s1 + $0x21e0] sm:$0xff]
  %v1102 = vld [vmem:[%s1 + $0x21e8] sm:$0xff]
  %v1103 = vld [vmem:[%s1 + $0x21f0] sm:$0xff]
  %v1104 = vld [vmem:[%s1 + $0x21f8] sm:$0xff]
  %v1105 = vld [vmem:[%s1 + $0x2200] sm:$0xff]
  %v1106 = vld [vmem:[%s1 + $0x2208] sm:$0xff]
  %v1107 = vld [vmem:[%s1 + $0x2210] sm:$0xff]
  %v1108 = vld [vmem:[%s1 + $0x2218] sm:$0xff]
  %v1109 = vld [vmem:[%s1 + $0x2220] sm:$0xff]
  %v1110 = vld [vmem:[%s1 + $0x2228] sm:$0xff]
  %v1111 = vld [vmem:[%s1 + $0x2230] sm:$0xff]
  %v1112 = vld [vmem:[%s1 + $0x2238] sm:$0xff]
  %v1113 = vld [vmem:[%s1 + $0x2240] sm:$0xff]
  %v1114 = vld [vmem:[%s1 + $0x2248] sm:$0xff]
  %v1115 = vld [vmem:[%s1 + $0x2250] sm:$0xff]
  %v1116 = vld [vmem:[%s1 + $0x2258] sm:$0xff]
  %v1117 = vld [vmem:[%s1 + $0x2260] sm:$0xff]
  %v1118 = vld [vmem:[%s1 + $0x2268] sm:$0xff]
  %v1119 = vld [vmem:[%s1 + $0x2270] sm:$0xff]
  %v1120 = vld [vmem:[%s1 + $0x2278] sm:$0xff]
  %v1121 = vld [vmem:[%s1 + $0x2280] sm:$0xff]
  %v1122 = vld [vmem:[%s1 + $0x2288] sm:$0xff]
  %v1123 = vld [vmem:[%s1 + $0x2290] sm:$0xff]
  %v1124 = vld [vmem:[%s1 + $0x2298] sm:$0xff]
  %v1125 = vld [vmem:[%s1 + $0x22a0] sm:$0xff]
  %v1126 = vld [vmem:[%s1 + $0x22a8] sm:$0xff]
  %v1127 = vld [vmem:[%s1 + $0x22b0] sm:$0xff]
  %v1128 = vld [vmem:[%s1 + $0x22b8] sm:$0xff]
  %v1129 = vld [vmem:[%s1 + $0x22c0] sm:$0xff]
  %v1130 = vld [vmem:[%s1 + $0x22c8] sm:$0xff]
  %v1131 = vld [vmem:[%s1 + $0x22d0] sm:$0xff]
  %v1132 = vld [vmem:[%s1 + $0x22d8] sm:$0xff]
  %v1133 = vld [vmem:[%s1 + $0x22e0] sm:$0xff]
  %v1134 = vld [vmem:[%s1 + $0x22e8] sm:$0xff]
  %v1135 = vld [vmem:[%s1 + $0x22f0] sm:$0xff]
  %v1136 = vld [vmem:[%s1 + $0x22f8] sm:$0xff]
  %v1137 = vld [vmem:[%s1 + $0x2300] sm:$0xff]
  %v1138 = vld [vmem:[%s1 + $0x2308] sm:$0xff]
  %v1139 = vld [vmem:[%s1 + $0x2310] sm:$0xff]
  %v1140 = vld [vmem:[%s1 + $0x2318] sm:$0xff]
  %v1141 = vld [vmem:[%s1 + $0x2320] sm:$0xff]
  %v1142 = vld [vmem:[%s1 + $0x2328] sm:$0xff]
  %v1143 = vld [vmem:[%s1 + $0x2330] sm:$0xff]
  %v1144 = vld [vmem:[%s1 + $0x2338] sm:$0xff]
  %v1145 = vld [vmem:[%s1 + $0x2340] sm:$0xff]
  %v1146 = vld [vmem:[%s1 + $0x2348] sm:$0xff]
  %v1147 = vld [vmem:[%s1 + $0x2350] sm:$0xff]
  %v1148 = vld [vmem:[%s1 + $0x2358] sm:$0xff]
  %v1149 = vld [vmem:[%s1 + $0x2360] sm:$0xff]
  %v1150 = vld [vmem:[%s1 + $0x2368] sm:$0xff]
  %v1151 = vld [vmem:[%s1 + $0x2370] sm:$0xff]
  %v1152 = vld [vmem:[%s1 + $0x2378] sm:$0xff]
  %v1153 = vld [vmem:[%s1 + $0x2380] sm:$0xff]
  %v1154 = vld [vmem:[%s1 + $0x2388] sm:$0xff]
  %v1155 = vld [vmem:[%s1 + $0x2390] sm:$0xff]
  %v1156 = vld [vmem:[%s1 + $0x2398] sm:$0xff]
  %v1157 = vld [vmem:[%s1 + $0x23a0] sm:$0xff]
  %v1158 = vld [vmem:[%s1 + $0x23a8] sm:$0xff]
  %v1159 = vld [vmem:[%s1 + $0x23b0] sm:$0xff]
  %v1160 = vld [vmem:[%s1 + $0x23b8] sm:$0xff]
  %v1161 = vld [vmem:[%s1 + $0x23c0] sm:$0xff]
  %v1162 = vld [vmem:[%s1 + $0x23c8] sm:$0xff]
  %v1163 = vld [vmem:[%s1 + $0x23d0] sm:$0xff]
  %v1164 = vld [vmem:[%s1 + $0x23d8] sm:$0xff]
  %v1165 = vld [vmem:[%s1 + $0x23e0] sm:$0xff]
  %v1166 = vld [vmem:[%s1 + $0x23e8] sm:$0xff]
  %v1167 = vld [vmem:[%s1 + $0x23f0] sm:$0xff]
  %v1168 = vld [vmem:[%s1 + $0x23f8] sm:$0xff]
  %v1169 = vld [vmem:[%s1 + $0x2400] sm:$0xff]
  %v1170 = vld [vmem:[%s1 + $0x2408] sm:$0xff]
  %v1171 = vld [vmem:[%s1 + $0x2410] sm:$0xff]
  %v1172 = vld [vmem:[%s1 + $0x2418] sm:$0xff]
  %v1173 = vld [vmem:[%s1 + $0x2420] sm:$0xff]
  %v1174 = vld [vmem:[%s1 + $0x2428] sm:$0xff]
  %v1175 = vld [vmem:[%s1 + $0x2430] sm:$0xff]
  %v1176 = vld [vmem:[%s1 + $0x2438] sm:$0xff]
  %v1177 = vld [vmem:[%s1 + $0x2440] sm:$0xff]
  %v1178 = vld [vmem:[%s1 + $0x2448] sm:$0xff]
  %v1179 = vld [vmem:[%s1 + $0x2450] sm:$0xff]
  %v1180 = vld [vmem:[%s1 + $0x2458] sm:$0xff]
  %v1181 = vld [vmem:[%s1 + $0x2460] sm:$0xff]
  %v1182 = vld [vmem:[%s1 + $0x2468] sm:$0xff]
  %v1183 = vld [vmem:[%s1 + $0x2470] sm:$0xff]
  %v1184 = vld [vmem:[%s1 + $0x2478] sm:$0xff]
  %v1185 = vld [vmem:[%s1 + $0x2480] sm:$0xff]
  %v1186 = vld [vmem:[%s1 + $0x2488] sm:$0xff]
  %v1187 = vld [vmem:[%s1 + $0x2490] sm:$0xff]
  %v1188 = vld [vmem:[%s1 + $0x2498] sm:$0xff]
  %v1189 = vld [vmem:[%s1 + $0x24a0] sm:$0xff]
  %v1190 = vld [vmem:[%s1 + $0x24a8] sm:$0xff]
  %v1191 = vld [vmem:[%s1 + $0x24b0] sm:$0xff]
  %v1192 = vld [vmem:[%s1 + $0x24b8] sm:$0xff]
  %v1193 = vld [vmem:[%s1 + $0x24c0] sm:$0xff]
  %v1194 = vld [vmem:[%s1 + $0x24c8] sm:$0xff]
  %v1195 = vld [vmem:[%s1 + $0x24d0] sm:$0xff]
  %v1196 = vld [vmem:[%s1 + $0x24d8] sm:$0xff]
  %v1197 = vld [vmem:[%s1 + $0x24e0] sm:$0xff]
  %v1198 = vld [vmem:[%s1 + $0x24e8] sm:$0xff]
  %v1199 = vld [vmem:[%s1 + $0x24f0] sm:$0xff]
  %v1200 = vld [vmem:[%s1 + $0x24f8] sm:$0xff]
  %v1201 = vld [vmem:[%s1 + $0x2500] sm:$0xff]
  %v1202 = vld [vmem:[%s1 + $0x2508] sm:$0xff]
  %v1203 = vld [vmem:[%s1 + $0x2510] sm:$0xff]
  %v1204 = vld [vmem:[%s1 + $0x2518] sm:$0xff]
  %v1205 = vld [vmem:[%s1 + $0x2520] sm:$0xff]
  %v1206 = vld [vmem:[%s1 + $0x2528] sm:$0xff]
  %v1207 = vld [vmem:[%s1 + $0x2530] sm:$0xff]
  %v1208 = vld [vmem:[%s1 + $0x2538] sm:$0xff]
  %v1209 = vld [vmem:[%s1 + $0x2540] sm:$0xff]
  %v1210 = vld [vmem:[%s1 + $0x2548] sm:$0xff]
  %v1211 = vld [vmem:[%s1 + $0x2550] sm:$0xff]
  %v1212 = vld [vmem:[%s1 + $0x2558] sm:$0xff]
  %v1213 = vld [vmem:[%s1 + $0x2560] sm:$0xff]
  %v1214 = vld [vmem:[%s1 + $0x2568] sm:$0xff]
  %v1215 = vld [vmem:[%s1 + $0x2570] sm:$0xff]
  %v1216 = vld [vmem:[%s1 + $0x2578] sm:$0xff]
  %v1217 = vld [vmem:[%s1 + $0x2580] sm:$0xff]
  %v1218 = vld [vmem:[%s1 + $0x2588] sm:$0xff]
  %v1219 = vld [vmem:[%s1 + $0x2590] sm:$0xff]
  %v1220 = vld [vmem:[%s1 + $0x2598] sm:$0xff]
  %v1221 = vld [vmem:[%s1 + $0x25a0] sm:$0xff]
  %v1222 = vld [vmem:[%s1 + $0x25a8] sm:$0xff]
  %v1223 = vld [vmem:[%s1 + $0x25b0] sm:$0xff]
  %v1224 = vld [vmem:[%s1 + $0x25b8] sm:$0xff]
  %v1225 = vld [vmem:[%s1 + $0x25c0] sm:$0xff]
  %v1226 = vld [vmem:[%s1 + $0x25c8] sm:$0xff]
  %v1227 = vld [vmem:[%s1 + $0x25d0] sm:$0xff]
  %v1228 = vld [vmem:[%s1 + $0x25d8] sm:$0xff]
  %v1229 = vld [vmem:[%s1 + $0x25e0] sm:$0xff]
  %v1230 = vld [vmem:[%s1 + $0x25e8] sm:$0xff]
  %v1231 = vld [vmem:[%s1 + $0x25f0] sm:$0xff]
  %v1232 = vld [vmem:[%s1 + $0x25f8] sm:$0xff]
  %v1233 = vld [vmem:[%s1 + $0x2600] sm:$0xff]
  %v1234 = vld [vmem:[%s1 + $0x2608] sm:$0xff]
  %v1235 = vld [vmem:[%s1 + $0x2610] sm:$0xff]
  %v1236 = vld [vmem:[%s1 + $0x2618] sm:$0xff]
  %v1237 = vld [vmem:[%s1 + $0x2620] sm:$0xff]
  %v1238 = vld [vmem:[%s1 + $0x2628] sm:$0xff]
  %v1239 = vld [vmem:[%s1 + $0x2630] sm:$0xff]
  %v1240 = vld [vmem:[%s1 + $0x2638] sm:$0xff]
  %v1241 = vld [vmem:[%s1 + $0x2640] sm:$0xff]
  %v1242 = vld [vmem:[%s1 + $0x2648] sm:$0xff]
  %v1243 = vld [vmem:[%s1 + $0x2650] sm:$0xff]
  %v1244 = vld [vmem:[%s1 + $0x2658] sm:$0xff]
  %v1245 = vld [vmem:[%s1 + $0x2660] sm:$0xff]
  %v1246 = vld [vmem:[%s1 + $0x2668] sm:$0xff]
  %v1247 = vld [vmem:[%s1 + $0x2670] sm:$0xff]
  %v1248 = vld [vmem:[%s1 + $0x2678] sm:$0xff]
  %v1249 = vld [vmem:[%s1 + $0x2680] sm:$0xff]
  %v1250 = vld [vmem:[%s1 + $0x2688] sm:$0xff]
  %v1251 = vld [vmem:[%s1 + $0x2690] sm:$0xff]
  %v1252 = vld [vmem:[%s1 + $0x2698] sm:$0xff]
  %v1253 = vld [vmem:[%s1 + $0x26a0] sm:$0xff]
  %v1254 = vld [vmem:[%s1 + $0x26a8] sm:$0xff]
  %v1255 = vld [vmem:[%s1 + $0x26b0] sm:$0xff]
  %v1256 = vld [vmem:[%s1 + $0x26b8] sm:$0xff]
  %v1257 = vld [vmem:[%s1 + $0x26c0] sm:$0xff]
  %v1258 = vld [vmem:[%s1 + $0x26c8] sm:$0xff]
  %v1259 = vld [vmem:[%s1 + $0x26d0] sm:$0xff]
  %v1260 = vld [vmem:[%s1 + $0x26d8] sm:$0xff]
  %v1261 = vld [vmem:[%s1 + $0x26e0] sm:$0xff]
  %v1262 = vld [vmem:[%s1 + $0x26e8] sm:$0xff]
  %v1263 = vld [vmem:[%s1 + $0x26f0] sm:$0xff]
  %v1264 = vld [vmem:[%s1 + $0x26f8] sm:$0xff]
  %v1265 = vld [vmem:[%s1 + $0x2700] sm:$0xff]
  %v1266 = vld [vmem:[%s1 + $0x2708] sm:$0xff]
  %v1267 = vld [vmem:[%s1 + $0x2710] sm:$0xff]
  %v1268 = vld [vmem:[%s1 + $0x2718] sm:$0xff]
  %v1269 = vld [vmem:[%s1 + $0x2720] sm:$0xff]
  %v1270 = vld [vmem:[%s1 + $0x2728] sm:$0xff]
  %v1271 = vld [vmem:[%s1 + $0x2730] sm:$0xff]
  %v1272 = vld [vmem:[%s1 + $0x2738] sm:$0xff]
  %v1273 = vld [vmem:[%s1 + $0x2740] sm:$0xff]
  %v1274 = vld [vmem:[%s1 + $0x2748] sm:$0xff]
  %v1275 = vld [vmem:[%s1 + $0x2750] sm:$0xff]
  %v1276 = vld [vmem:[%s1 + $0x2758] sm:$0xff]
  %v1277 = vld [vmem:[%s1 + $0x2760] sm:$0xff]
  %v1278 = vld [vmem:[%s1 + $0x2768] sm:$0xff]
  %v1279 = vld [vmem:[%s1 + $0x2770] sm:$0xff]
  %v1280 = vld [vmem:[%s1 + $0x2778] sm:$0xff]
  %v1281 = vld [vmem:[%s1 + $0x2780] sm:$0xff]
  %v1282 = vld [vmem:[%s1 + $0x2788] sm:$0xff]
  %v1283 = vld [vmem:[%s1 + $0x2790] sm:$0xff]
  %v1284 = vld [vmem:[%s1 + $0x2798] sm:$0xff]
  %v1285 = vld [vmem:[%s1 + $0x27a0] sm:$0xff]
  %v1286 = vld [vmem:[%s1 + $0x27a8] sm:$0xff]
  %v1287 = vld [vmem:[%s1 + $0x27b0] sm:$0xff]
  %v1288 = vld [vmem:[%s1 + $0x27b8] sm:$0xff]
  %v1289 = vld [vmem:[%s1 + $0x27c0] sm:$0xff]
  %v1290 = vld [vmem:[%s1 + $0x27c8] sm:$0xff]
  %v1291 = vld [vmem:[#allocation2] sm:$0x1]
  %1293 = vset.pattern.permute.xlu0 0
  %1294 = vperm.xlu0 %1293, %v1291
  %v1295 = vpop.permute.xlu0 %1294
  %v1297 = vlaneseq
  %v1298 = vshrl.u32 %v1297, 7
  %v1299 = vsub.s32 0, %v1298
  %v1300 = vrot.slane %v1295, %v1299
  %v1302 = vlaneseq
  %v1303 = vshrl.u32 %v1302, 7
  %v1304 = vsub.s32 0, %v1303
  %v1305 = vrot.slane %v16, %v1304
  %v1306 = vlaneseq
  %v1307 = vshrl.u32 %v1306, 7
  %v1308 = vsub.s32 1, %v1307
  %v1309 = vrot.slane %v16, %v1308
  %v1310 = vlaneseq
  %v1311 = vshrl.u32 %v1310, 7
  %v1312 = vsub.s32 2, %v1311
  %v1313 = vrot.slane %v16, %v1312
  %v1314 = vlaneseq
  %v1315 = vshrl.u32 %v1314, 7
  %v1316 = vsub.s32 3, %v1315
  %v1317 = vrot.slane %v16, %v1316
  %v1318 = vlaneseq
  %v1319 = vshrl.u32 %v1318, 7
  %v1320 = vsub.s32 4, %v1319
  %v1321 = vrot.slane %v16, %v1320
  %v1322 = vlaneseq
  %v1323 = vshrl.u32 %v1322, 7
  %v1324 = vsub.s32 5, %v1323
  %v1325 = vrot.slane %v16, %v1324
  %v1326 = vlaneseq
  %v1327 = vshrl.u32 %v1326, 7
  %v1328 = vsub.s32 6, %v1327
  %v1329 = vrot.slane %v16, %v1328
  %vm1336 = vcmask 130048
  %v1337 = vsel %vm1336, %v1329, 0
  %1339 = vmatprep.subr.mxu0 %v18
  %1340 = vmatpush1.msra.mxu0 %v17
  %1341 = vmatprep.subr.mxu0 %v31
  %1342 = vmatpush1.msra.mxu0 %v30
  %1343 = vmatprep.subr.mxu0 %v44
  %1344 = vmatpush1.msra.mxu0 %v43
  %1345 = vmatprep.subr.mxu0 %v57
  %1346 = vmatpush1.msra.mxu0 %v56
  %1347 = vmatprep.subr.mxu0 %v70
  %1348 = vmatpush1.msra.mxu0 %v69
  %1349 = vmatprep.subr.mxu0 %v83
  %1350 = vmatpush1.msra.mxu0 %v82
  %1351 = vmatprep.subr.mxu0 %v96
  %1352 = vmatpush1.msra.mxu0 %v95
  %1353 = vmatprep.subr.mxu0 %v109
  %1354 = vmatpush1.msra.mxu0 %v108
  %1355 = vmatprep.subr.mxu0 %v122
  %1356 = vmatpush1.msra.mxu0 %v121
  %1357 = vmatprep.subr.mxu0 %v135
  %1358 = vmatpush1.msra.mxu0 %v134
  %1359 = vmatprep.subr.mxu0 %v148
  %1360 = vmatpush1.msra.mxu0 %v147
  %1361 = vmatprep.subr.mxu0 %v161
  %1362 = vmatpush1.msra.mxu0 %v160
  %1363 = vmatprep.subr.mxu0 %v174
  %1364 = vmatpush1.msra.mxu0 %v173
  %1365 = vmatprep.subr.mxu0 %v187
  %1366 = vmatpush1.msra.mxu0 %v186
  %1367 = vmatprep.subr.mxu0 %v200
  %1368 = vmatpush1.msra.mxu0 %v199
  %1369 = vmatprep.subr.mxu0 %v213
  %1370 = vmatpush1.msra.mxu0 %v212
  %1371 = vmatprep.subr.mxu0 %v226
  %1372 = vmatpush1.msra.mxu0 %v225
  %1373 = vmatprep.subr.mxu0 %v239
  %1374 = vmatpush1.msra.mxu0 %v238
  %1375 = vmatprep.subr.mxu0 %v252
  %1376 = vmatpush1.msra.mxu0 %v251
  %1377 = vmatprep.subr.mxu0 %v265
  %1378 = vmatpush1.msra.mxu0 %v264
  %1379 = vmatprep.subr.mxu0 %v278
  %1380 = vmatpush1.msra.mxu0 %v277
  %1381 = vmatprep.subr.mxu0 %v291
  %1382 = vmatpush1.msra.mxu0 %v290
  %1383 = vmatprep.subr.mxu0 %v304
  %1384 = vmatpush1.msra.mxu0 %v303
  %1385 = vmatprep.subr.mxu0 %v317
  %1386 = vmatpush1.msra.mxu0 %v316
  %1387 = vmatprep.subr.mxu0 %v330
  %1388 = vmatpush1.msra.mxu0 %v329
  %1389 = vmatprep.subr.mxu0 %v343
  %1390 = vmatpush1.msra.mxu0 %v342
  %1391 = vmatprep.subr.mxu0 %v356
  %1392 = vmatpush1.msra.mxu0 %v355
  %1393 = vmatprep.subr.mxu0 %v369
  %1394 = vmatpush1.msra.mxu0 %v368
  %1395 = vmatprep.subr.mxu0 %v382
  %1396 = vmatpush1.msra.mxu0 %v381
  %1397 = vmatprep.subr.mxu0 %v395
  %1398 = vmatpush1.msra.mxu0 %v394
  %1399 = vmatprep.subr.mxu0 %v408
  %1400 = vmatpush1.msra.mxu0 %v407
  %1401 = vmatprep.subr.mxu0 %v421
  %1402 = vmatpush1.msra.mxu0 %v420
  %1403 = vmatprep.mubr.f32.mxu0 %v1309
  %1404 = vmatmul.mubr.f32.gmra.mrb[0].mxu0 %v1305
  %v1405 = vpop.f32.mrb[0].mxu0
  %v1406 = vadd.f32 %v1300, %v1405
  %v1407 = vpop.f32.mrb[0].mxu0
  %v1408 = vadd.f32 %v1300, %v1407
  %1409 = vdwg.mxu0
  %1410 = vmatprep.subr.mxu0 %v434
  %1411 = vmatpush1.msra.mxu0 %v433
  %1412 = vmatprep.subr.mxu0 %v447
  %1413 = vmatpush1.msra.mxu0 %v446
  %1414 = vmatprep.subr.mxu0 %v460
  %1415 = vmatpush1.msra.mxu0 %v459
  %1416 = vmatprep.subr.mxu0 %v473
  %1417 = vmatpush1.msra.mxu0 %v472
  %1418 = vmatprep.subr.mxu0 %v486
  %1419 = vmatpush1.msra.mxu0 %v485
  %1420 = vmatprep.subr.mxu0 %v499
  %1421 = vmatpush1.msra.mxu0 %v498
  %1422 = vmatprep.subr.mxu0 %v512
  %1423 = vmatpush1.msra.mxu0 %v511
  %1424 = vmatprep.subr.mxu0 %v525
  %1425 = vmatpush1.msra.mxu0 %v524
  %1426 = vmatprep.subr.mxu0 %v538
  %1427 = vmatpush1.msra.mxu0 %v537
  %1428 = vmatprep.subr.mxu0 %v551
  %1429 = vmatpush1.msra.mxu0 %v550
  %1430 = vmatprep.subr.mxu0 %v564
  %1431 = vmatpush1.msra.mxu0 %v563
  %1432 = vmatprep.subr.mxu0 %v577
  %1433 = vmatpush1.msra.mxu0 %v576
  %1434 = vmatprep.subr.mxu0 %v590
  %1435 = vmatpush1.msra.mxu0 %v589
  %1436 = vmatprep.subr.mxu0 %v603
  %1437 = vmatpush1.msra.mxu0 %v602
  %1438 = vmatprep.subr.mxu0 %v616
  %1439 = vmatpush1.msra.mxu0 %v615
  %1440 = vmatprep.subr.mxu0 %v629
  %1441 = vmatpush1.msra.mxu0 %v628
  %1442 = vmatprep.subr.mxu0 %v642
  %1443 = vmatpush1.msra.mxu0 %v641
  %1444 = vmatprep.subr.mxu0 %v655
  %1445 = vmatpush1.msra.mxu0 %v654
  %1446 = vmatprep.subr.mxu0 %v668
  %1447 = vmatpush1.msra.mxu0 %v667
  %1448 = vmatprep.subr.mxu0 %v681
  %1449 = vmatpush1.msra.mxu0 %v680
  %1450 = vmatprep.subr.mxu0 %v694
  %1451 = vmatpush1.msra.mxu0 %v693
  %1452 = vmatprep.subr.mxu0 %v707
  %1453 = vmatpush1.msra.mxu0 %v706
  %1454 = vmatprep.subr.mxu0 %v720
  %1455 = vmatpush1.msra.mxu0 %v719
  %1456 = vmatprep.subr.mxu0 %v733
  %1457 = vmatpush1.msra.mxu0 %v732
  %1458 = vmatprep.subr.mxu0 %v746
  %1459 = vmatpush1.msra.mxu0 %v745
  %1460 = vmatprep.subr.mxu0 %v759
  %1461 = vmatpush1.msra.mxu0 %v758
  %1462 = vmatprep.subr.mxu0 %v772
  %1463 = vmatpush1.msra.mxu0 %v771
  %1464 = vmatprep.subr.mxu0 %v785
  %1465 = vmatpush1.msra.mxu0 %v784
  %1466 = vmatprep.subr.mxu0 %v798
  %1467 = vmatpush1.msra.mxu0 %v797
  %1468 = vmatprep.subr.mxu0 %v811
  %1469 = vmatpush1.msra.mxu0 %v810
  %1470 = vmatprep.subr.mxu0 %v824
  %1471 = vmatpush1.msra.mxu0 %v823
  %1472 = vmatprep.subr.mxu0 %v837
  %1473 = vmatpush1.msra.mxu0 %v836
  %1474 = vmatprep.mubr.f32.mxu0 %v1317
  %1475 = vmatmul.mubr.f32.gmra.mrb[0].mxu0 %v1313
  %v1476 = vpop.f32.mrb[0].mxu0
  %v1477 = vadd.f32 %v1406, %v1476
  %v1478 = vpop.f32.mrb[0].mxu0
  %v1479 = vadd.f32 %v1408, %v1478
  %1480 = vdwg.mxu0
  %1481 = vmatprep.subr.mxu0 %v850
  %1482 = vmatpush1.msra.mxu0 %v849
  %1483 = vmatprep.subr.mxu0 %v863
  %1484 = vmatpush1.msra.mxu0 %v862
  %1485 = vmatprep.subr.mxu0 %v876
  %1486 = vmatpush1.msra.mxu0 %v875
  %1487 = vmatprep.subr.mxu0 %v889
  %1488 = vmatpush1.msra.mxu0 %v888
  %1489 = vmatprep.subr.mxu0 %v902
  %1490 = vmatpush1.msra.mxu0 %v901
  %1491 = vmatprep.subr.mxu0 %v915
  %1492 = vmatpush1.msra.mxu0 %v914
  %1493 = vmatprep.subr.mxu0 %v928
  %1494 = vmatpush1.msra.mxu0 %v927
  %1495 = vmatprep.subr.mxu0 %v941
  %1496 = vmatpush1.msra.mxu0 %v940
  %1497 = vmatprep.subr.mxu0 %v954
  %1498 = vmatpush1.msra.mxu0 %v953
  %1499 = vmatprep.subr.mxu0 %v967
  %1500 = vmatpush1.msra.mxu0 %v966
  %1501 = vmatprep.subr.mxu0 %v980
  %1502 = vmatpush1.msra.mxu0 %v979
  %1503 = vmatprep.subr.mxu0 %v993
  %1504 = vmatpush1.msra.mxu0 %v992
  %1505 = vmatprep.subr.mxu0 %v1006
  %1506 = vmatpush1.msra.mxu0 %v1005
  %1507 = vmatprep.subr.mxu0 %v1019
  %1508 = vmatpush1.msra.mxu0 %v1018
  %1509 = vmatprep.subr.mxu0 %v1032
  %1510 = vmatpush1.msra.mxu0 %v1031
  %1511 = vmatprep.subr.mxu0 %v1045
  %1512 = vmatpush1.msra.mxu0 %v1044
  %1513 = vmatprep.subr.mxu0 %v1058
  %1514 = vmatpush1.msra.mxu0 %v1057
  %1515 = vmatprep.subr.mxu0 %v1071
  %1516 = vmatpush1.msra.mxu0 %v1070
  %1517 = vmatprep.subr.mxu0 %v1084
  %1518 = vmatpush1.msra.mxu0 %v1083
  %1519 = vmatprep.subr.mxu0 %v1097
  %1520 = vmatpush1.msra.mxu0 %v1096
  %1521 = vmatprep.subr.mxu0 %v1110
  %1522 = vmatpush1.msra.mxu0 %v1109
  %1523 = vmatprep.subr.mxu0 %v1123
  %1524 = vmatpush1.msra.mxu0 %v1122
  %1525 = vmatprep.subr.mxu0 %v1136
  %1526 = vmatpush1.msra.mxu0 %v1135
  %1527 = vmatprep.subr.mxu0 %v1149
  %1528 = vmatpush1.msra.mxu0 %v1148
  %1529 = vmatprep.subr.mxu0 %v1162
  %1530 = vmatpush1.msra.mxu0 %v1161
  %1531 = vmatprep.subr.mxu0 %v1175
  %1532 = vmatpush1.msra.mxu0 %v1174
  %1533 = vmatprep.subr.mxu0 %v1188
  %1534 = vmatpush1.msra.mxu0 %v1187
  %1535 = vmatprep.subr.mxu0 %v1201
  %1536 = vmatpush1.msra.mxu0 %v1200
  %1537 = vmatprep.subr.mxu0 %v1214
  %1538 = vmatpush1.msra.mxu0 %v1213
  %1539 = vmatprep.subr.mxu0 %v1227
  %1540 = vmatpush1.msra.mxu0 %v1226
  %1541 = vmatprep.subr.mxu0 %v1240
  %1542 = vmatpush1.msra.mxu0 %v1239
  %1543 = vmatprep.subr.mxu0 %v1253
  %1544 = vmatpush1.msra.mxu0 %v1252
  %1545 = vmatprep.mubr.f32.mxu0 %v1325
  %1546 = vmatmul.mubr.f32.gmra.mrb[0].mxu0 %v1321
  %v1547 = vpop.f32.mrb[0].mxu0
  %v1548 = vadd.f32 %v1477, %v1547
  %v1549 = vpop.f32.mrb[0].mxu0
  %v1550 = vadd.f32 %v1479, %v1549
  %1551 = vdwg.mxu0
  %1552 = vmatprep.subr.mxu0 %v1266
  %1553 = vmatpush1.msra.mxu0 %v1265
  %1554 = vmatprep.subr.mxu0 %v1279
  %1555 = vmatpush1.msra.mxu0 %v1278
  %1556 = vmatprep.subr.mxu0 0.0
  %1557 = vmatpush1.msra.mxu0 0.0
  %1558 = vmatprep.subr.mxu0 0.0
  %1559 = vmatpush1.msra.mxu0 0.0
  %1560 = vmatprep.subr.mxu0 0.0
  %1561 = vmatpush1.msra.mxu0 0.0
  %1562 = vmatprep.subr.mxu0 0.0
  %1563 = vmatpush1.msra.mxu0 0.0
  %1564 = vmatprep.subr.mxu0 0.0
  %1565 = vmatpush1.msra.mxu0 0.0
  %1566 = vmatprep.subr.mxu0 0.0
  %1567 = vmatpush1.msra.mxu0 0.0
  %1568 = vmatprep.subr.mxu0 0.0
  %1569 = vmatpush1.msra.mxu0 0.0
  %1570 = vmatprep.subr.mxu0 0.0
  %1571 = vmatpush1.msra.mxu0 0.0
  %1572 = vmatprep.subr.mxu0 0.0
  %1573 = vmatpush1.msra.mxu0 0.0
  %1574 = vmatprep.subr.mxu0 0.0
  %1575 = vmatpush1.msra.mxu0 0.0
  %1576 = vmatprep.subr.mxu0 0.0
  %1577 = vmatpush1.msra.mxu0 0.0
  %1578 = vmatprep.subr.mxu0 0.0
  %1579 = vmatpush1.msra.mxu0 0.0
  %1580 = vmatprep.subr.mxu0 0.0
  %1581 = vmatpush1.msra.mxu0 0.0
  %1582 = vmatprep.subr.mxu0 0.0
  %1583 = vmatpush1.msra.mxu0 0.0
  %1584 = vmatprep.subr.mxu0 0.0
  %1585 = vmatpush1.msra.mxu0 0.0
  %1586 = vmatprep.subr.mxu0 0.0
  %1587 = vmatpush1.msra.mxu0 0.0
  %1588 = vmatprep.subr.mxu0 0.0
  %1589 = vmatpush1.msra.mxu0 0.0
  %1590 = vmatprep.subr.mxu0 0.0
  %1591 = vmatpush1.msra.mxu0 0.0
  %1592 = vmatprep.subr.mxu0 0.0
  %1593 = vmatpush1.msra.mxu0 0.0
  %1594 = vmatprep.subr.mxu0 0.0
  %1595 = vmatpush1.msra.mxu0 0.0
  %1596 = vmatprep.subr.mxu0 0.0
  %1597 = vmatpush1.msra.mxu0 0.0
  %1598 = vmatprep.subr.mxu0 0.0
  %1599 = vmatpush1.msra.mxu0 0.0
  %1600 = vmatprep.subr.mxu0 0.0
  %1601 = vmatpush1.msra.mxu0 0.0
  %1602 = vmatprep.subr.mxu0 0.0
  %1603 = vmatpush1.msra.mxu0 0.0
  %1604 = vmatprep.subr.mxu0 0.0
  %1605 = vmatpush1.msra.mxu0 0.0
  %1606 = vmatprep.subr.mxu0 0.0
  %1607 = vmatpush1.msra.mxu0 0.0
  %1608 = vmatprep.subr.mxu0 0.0
  %1609 = vmatpush1.msra.mxu0 0.0
  %1610 = vmatprep.subr.mxu0 0.0
  %1611 = vmatpush1.msra.mxu0 0.0
  %1612 = vmatprep.subr.mxu0 0.0
  %1613 = vmatpush1.msra.mxu0 0.0
  %1614 = vmatprep.subr.mxu0 0.0
  %1615 = vmatpush1.msra.mxu0 0.0
  %1616 = vmatprep.mubr.f32.mxu0 0.0
  %1617 = vmatmul.mubr.f32.gmra.mrb[0].mxu0 %v1337
  %v1618 = vpop.f32.mrb[0].mxu0
  %v1619 = vadd.f32 %v1548, %v1618
  %v1620 = vpop.f32.mrb[0].mxu0
  %v1621 = vadd.f32 %v1550, %v1620
  %1622 = vdwg.mxu0
  %1623 = vmatprep.subr.mxu0 %v20
  %1624 = vmatpush1.msra.mxu0 %v19
  %1625 = vmatprep.subr.mxu0 %v33
  %1626 = vmatpush1.msra.mxu0 %v32
  %1627 = vmatprep.subr.mxu0 %v46
  %1628 = vmatpush1.msra.mxu0 %v45
  %1629 = vmatprep.subr.mxu0 %v59
  %1630 = vmatpush1.msra.mxu0 %v58
  %1631 = vmatprep.subr.mxu0 %v72
  %1632 = vmatpush1.msra.mxu0 %v71
  %1633 = vmatprep.subr.mxu0 %v85
  %1634 = vmatpush1.msra.mxu0 %v84
  %1635 = vmatprep.subr.mxu0 %v98
  %1636 = vmatpush1.msra.mxu0 %v97
  %1637 = vmatprep.subr.mxu0 %v111
  %1638 = vmatpush1.msra.mxu0 %v110
  %1639 = vmatprep.subr.mxu0 %v124
  %1640 = vmatpush1.msra.mxu0 %v123
  %1641 = vmatprep.subr.mxu0 %v137
  %1642 = vmatpush1.msra.mxu0 %v136
  %1643 = vmatprep.subr.mxu0 %v150
  %1644 = vmatpush1.msra.mxu0 %v149
  %1645 = vmatprep.subr.mxu0 %v163
  %1646 = vmatpush1.msra.mxu0 %v162
  %1647 = vmatprep.subr.mxu0 %v176
  %1648 = vmatpush1.msra.mxu0 %v175
  %1649 = vmatprep.subr.mxu0 %v189
  %1650 = vmatpush1.msra.mxu0 %v188
  %1651 = vmatprep.subr.mxu0 %v202
  %1652 = vmatpush1.msra.mxu0 %v201
  %1653 = vmatprep.subr.mxu0 %v215
  %1654 = vmatpush1.msra.mxu0 %v214
  %1655 = vmatprep.subr.mxu0 %v228
  %1656 = vmatpush1.msra.mxu0 %v227
  %1657 = vmatprep.subr.mxu0 %v241
  %1658 = vmatpush1.msra.mxu0 %v240
  %1659 = vmatprep.subr.mxu0 %v254
  %1660 = vmatpush1.msra.mxu0 %v253
  %1661 = vmatprep.subr.mxu0 %v267
  %1662 = vmatpush1.msra.mxu0 %v266
  %1663 = vmatprep.subr.mxu0 %v280
  %1664 = vmatpush1.msra.mxu0 %v279
  %1665 = vmatprep.subr.mxu0 %v293
  %1666 = vmatpush1.msra.mxu0 %v292
  %1667 = vmatprep.subr.mxu0 %v306
  %1668 = vmatpush1.msra.mxu0 %v305
  %1669 = vmatprep.subr.mxu0 %v319
  %1670 = vmatpush1.msra.mxu0 %v318
  %1671 = vmatprep.subr.mxu0 %v332
  %1672 = vmatpush1.msra.mxu0 %v331
  %1673 = vmatprep.subr.mxu0 %v345
  %1674 = vmatpush1.msra.mxu0 %v344
  %1675 = vmatprep.subr.mxu0 %v358
  %1676 = vmatpush1.msra.mxu0 %v357
  %1677 = vmatprep.subr.mxu0 %v371
  %1678 = vmatpush1.msra.mxu0 %v370
  %1679 = vmatprep.subr.mxu0 %v384
  %1680 = vmatpush1.msra.mxu0 %v383
  %1681 = vmatprep.subr.mxu0 %v397
  %1682 = vmatpush1.msra.mxu0 %v396
  %1683 = vmatprep.subr.mxu0 %v410
  %1684 = vmatpush1.msra.mxu0 %v409
  %1685 = vmatprep.subr.mxu0 %v423
  %1686 = vmatpush1.msra.mxu0 %v422
  %1687 = vmatprep.mubr.f32.mxu0 %v1309
  %1688 = vmatmul.mubr.f32.gmra.mrb[0].mxu0 %v1305
  %v1689 = vpop.f32.mrb[0].mxu0
  %v1690 = vadd.f32 %v1300, %v1689
  %v1691 = vpop.f32.mrb[0].mxu0
  %v1692 = vadd.f32 %v1300, %v1691
  %1693 = vdwg.mxu0
  %1694 = vmatprep.subr.mxu0 %v436
  %1695 = vmatpush1.msra.mxu0 %v435
  %1696 = vmatprep.subr.mxu0 %v449
  %1697 = vmatpush1.msra.mxu0 %v448
  %1698 = vmatprep.subr.mxu0 %v462
  %1699 = vmatpush1.msra.mxu0 %v461
  %1700 = vmatprep.subr.mxu0 %v475
  %1701 = vmatpush1.msra.mxu0 %v474
  %1702 = vmatprep.subr.mxu0 %v488
  %1703 = vmatpush1.msra.mxu0 %v487
  %1704 = vmatprep.subr.mxu0 %v501
  %1705 = vmatpush1.msra.mxu0 %v500
  %1706 = vmatprep.subr.mxu0 %v514
  %1707 = vmatpush1.msra.mxu0 %v513
  %1708 = vmatprep.subr.mxu0 %v527
  %1709 = vmatpush1.msra.mxu0 %v526
  %1710 = vmatprep.subr.mxu0 %v540
  %1711 = vmatpush1.msra.mxu0 %v539
  %1712 = vmatprep.subr.mxu0 %v553
  %1713 = vmatpush1.msra.mxu0 %v552
  %1714 = vmatprep.subr.mxu0 %v566
  %1715 = vmatpush1.msra.mxu0 %v565
  %1716 = vmatprep.subr.mxu0 %v579
  %1717 = vmatpush1.msra.mxu0 %v578
  %1718 = vmatprep.subr.mxu0 %v592
  %1719 = vmatpush1.msra.mxu0 %v591
  %1720 = vmatprep.subr.mxu0 %v605
  %1721 = vmatpush1.msra.mxu0 %v604
  %1722 = vmatprep.subr.mxu0 %v618
  %1723 = vmatpush1.msra.mxu0 %v617
  %1724 = vmatprep.subr.mxu0 %v631
  %1725 = vmatpush1.msra.mxu0 %v630
  %1726 = vmatprep.subr.mxu0 %v644
  %1727 = vmatpush1.msra.mxu0 %v643
  %1728 = vmatprep.subr.mxu0 %v657
  %1729 = vmatpush1.msra.mxu0 %v656
  %1730 = vmatprep.subr.mxu0 %v670
  %1731 = vmatpush1.msra.mxu0 %v669
  %1732 = vmatprep.subr.mxu0 %v683
  %1733 = vmatpush1.msra.mxu0 %v682
  %1734 = vmatprep.subr.mxu0 %v696
  %1735 = vmatpush1.msra.mxu0 %v695
  %1736 = vmatprep.subr.mxu0 %v709
  %1737 = vmatpush1.msra.mxu0 %v708
  %1738 = vmatprep.subr.mxu0 %v722
  %1739 = vmatpush1.msra.mxu0 %v721
  %1740 = vmatprep.subr.mxu0 %v735
  %1741 = vmatpush1.msra.mxu0 %v734
  %1742 = vmatprep.subr.mxu0 %v748
  %1743 = vmatpush1.msra.mxu0 %v747
  %1744 = vmatprep.subr.mxu0 %v761
  %1745 = vmatpush1.msra.mxu0 %v760
  %1746 = vmatprep.subr.mxu0 %v774
  %1747 = vmatpush1.msra.mxu0 %v773
  %1748 = vmatprep.subr.mxu0 %v787
  %1749 = vmatpush1.msra.mxu0 %v786
  %1750 = vmatprep.subr.mxu0 %v800
  %1751 = vmatpush1.msra.mxu0 %v799
  %1752 = vmatprep.subr.mxu0 %v813
  %1753 = vmatpush1.msra.mxu0 %v812
  %1754 = vmatprep.subr.mxu0 %v826
  %1755 = vmatpush1.msra.mxu0 %v825
  %1756 = vmatprep.subr.mxu0 %v839
  %1757 = vmatpush1.msra.mxu0 %v838
  %1758 = vmatprep.mubr.f32.mxu0 %v1317
  %1759 = vmatmul.mubr.f32.gmra.mrb[0].mxu0 %v1313
  %v1760 = vpop.f32.mrb[0].mxu0
  %v1761 = vadd.f32 %v1690, %v1760
  %v1762 = vpop.f32.mrb[0].mxu0
  %v1763 = vadd.f32 %v1692, %v1762
  %1764 = vdwg.mxu0
  %1765 = vmatprep.subr.mxu0 %v852
  %1766 = vmatpush1.msra.mxu0 %v851
  %1767 = vmatprep.subr.mxu0 %v865
  %1768 = vmatpush1.msra.mxu0 %v864
  %1769 = vmatprep.subr.mxu0 %v878
  %1770 = vmatpush1.msra.mxu0 %v877
  %1771 = vmatprep.subr.mxu0 %v891
  %1772 = vmatpush1.msra.mxu0 %v890
  %1773 = vmatprep.subr.mxu0 %v904
  %1774 = vmatpush1.msra.mxu0 %v903
  %1775 = vmatprep.subr.mxu0 %v917
  %1776 = vmatpush1.msra.mxu0 %v916
  %1777 = vmatprep.subr.mxu0 %v930
  %1778 = vmatpush1.msra.mxu0 %v929
  %1779 = vmatprep.subr.mxu0 %v943
  %1780 = vmatpush1.msra.mxu0 %v942
  %1781 = vmatprep.subr.mxu0 %v956
  %1782 = vmatpush1.msra.mxu0 %v955
  %1783 = vmatprep.subr.mxu0 %v969
  %1784 = vmatpush1.msra.mxu0 %v968
  %1785 = vmatprep.subr.mxu0 %v982
  %1786 = vmatpush1.msra.mxu0 %v981
  %1787 = vmatprep.subr.mxu0 %v995
  %1788 = vmatpush1.msra.mxu0 %v994
  %1789 = vmatprep.subr.mxu0 %v1008
  %1790 = vmatpush1.msra.mxu0 %v1007
  %1791 = vmatprep.subr.mxu0 %v1021
  %1792 = vmatpush1.msra.mxu0 %v1020
  %1793 = vmatprep.subr.mxu0 %v1034
  %1794 = vmatpush1.msra.mxu0 %v1033
  %1795 = vmatprep.subr.mxu0 %v1047
  %1796 = vmatpush1.msra.mxu0 %v1046
  %1797 = vmatprep.subr.mxu0 %v1060
  %1798 = vmatpush1.msra.mxu0 %v1059
  %1799 = vmatprep.subr.mxu0 %v1073
  %1800 = vmatpush1.msra.mxu0 %v1072
  %1801 = vmatprep.subr.mxu0 %v1086
  %1802 = vmatpush1.msra.mxu0 %v1085
  %1803 = vmatprep.subr.mxu0 %v1099
  %1804 = vmatpush1.msra.mxu0 %v1098
  %1805 = vmatprep.subr.mxu0 %v1112
  %1806 = vmatpush1.msra.mxu0 %v1111
  %1807 = vmatprep.subr.mxu0 %v1125
  %1808 = vmatpush1.msra.mxu0 %v1124
  %1809 = vmatprep.subr.mxu0 %v1138
  %1810 = vmatpush1.msra.mxu0 %v1137
  %1811 = vmatprep.subr.mxu0 %v1151
  %1812 = vmatpush1.msra.mxu0 %v1150
  %1813 = vmatprep.subr.mxu0 %v1164
  %1814 = vmatpush1.msra.mxu0 %v1163
  %1815 = vmatprep.subr.mxu0 %v1177
  %1816 = vmatpush1.msra.mxu0 %v1176
  %1817 = vmatprep.subr.mxu0 %v1190
  %1818 = vmatpush1.msra.mxu0 %v1189
  %1819 = vmatprep.subr.mxu0 %v1203
  %1820 = vmatpush1.msra.mxu0 %v1202
  %1821 = vmatprep.subr.mxu0 %v1216
  %1822 = vmatpush1.msra.mxu0 %v1215
  %1823 = vmatprep.subr.mxu0 %v1229
  %1824 = vmatpush1.msra.mxu0 %v1228
  %1825 = vmatprep.subr.mxu0 %v1242
  %1826 = vmatpush1.msra.mxu0 %v1241
  %1827 = vmatprep.subr.mxu0 %v1255
  %1828 = vmatpush1.msra.mxu0 %v1254
  %1829 = vmatprep.mubr.f32.mxu0 %v1325
  %1830 = vmatmul.mubr.f32.gmra.mrb[0].mxu0 %v1321
  %v1831 = vpop.f32.mrb[0].mxu0
  %v1832 = vadd.f32 %v1761, %v1831
  %v1833 = vpop.f32.mrb[0].mxu0
  %v1834 = vadd.f32 %v1763, %v1833
  %1835 = vdwg.mxu0
  %1836 = vmatprep.subr.mxu0 %v1268
  %1837 = vmatpush1.msra.mxu0 %v1267
  %1838 = vmatprep.subr.mxu0 %v1281
  %1839 = vmatpush1.msra.mxu0 %v1280
  %1840 = vmatprep.subr.mxu0 0.0
  %1841 = vmatpush1.msra.mxu0 0.0
  %1842 = vmatprep.subr.mxu0 0.0
  %1843 = vmatpush1.msra.mxu0 0.0
  %1844 = vmatprep.subr.mxu0 0.0
  %1845 = vmatpush1.msra.mxu0 0.0
  %1846 = vmatprep.subr.mxu0 0.0
  %1847 = vmatpush1.msra.mxu0 0.0
  %1848 = vmatprep.subr.mxu0 0.0
  %1849 = vmatpush1.msra.mxu0 0.0
  %1850 = vmatprep.subr.mxu0 0.0
  %1851 = vmatpush1.msra.mxu0 0.0
  %1852 = vmatprep.subr.mxu0 0.0
  %1853 = vmatpush1.msra.mxu0 0.0
  %1854 = vmatprep.subr.mxu0 0.0
  %1855 = vmatpush1.msra.mxu0 0.0
  %1856 = vmatprep.subr.mxu0 0.0
  %1857 = vmatpush1.msra.mxu0 0.0
  %1858 = vmatprep.subr.mxu0 0.0
  %1859 = vmatpush1.msra.mxu0 0.0
  %1860 = vmatprep.subr.mxu0 0.0
  %1861 = vmatpush1.msra.mxu0 0.0
  %1862 = vmatprep.subr.mxu0 0.0
  %1863 = vmatpush1.msra.mxu0 0.0
  %1864 = vmatprep.subr.mxu0 0.0
  %1865 = vmatpush1.msra.mxu0 0.0
  %1866 = vmatprep.subr.mxu0 0.0
  %1867 = vmatpush1.msra.mxu0 0.0
  %1868 = vmatprep.subr.mxu0 0.0
  %1869 = vmatpush1.msra.mxu0 0.0
  %1870 = vmatprep.subr.mxu0 0.0
  %1871 = vmatpush1.msra.mxu0 0.0
  %1872 = vmatprep.subr.mxu0 0.0
  %1873 = vmatpush1.msra.mxu0 0.0
  %1874 = vmatprep.subr.mxu0 0.0
  %1875 = vmatpush1.msra.mxu0 0.0
  %1876 = vmatprep.subr.mxu0 0.0
  %1877 = vmatpush1.msra.mxu0 0.0
  %1878 = vmatprep.subr.mxu0 0.0
  %1879 = vmatpush1.msra.mxu0 0.0
  %1880 = vmatprep.subr.mxu0 0.0
  %1881 = vmatpush1.msra.mxu0 0.0
  %1882 = vmatprep.subr.mxu0 0.0
  %1883 = vmatpush1.msra.mxu0 0.0
  %1884 = vmatprep.subr.mxu0 0.0
  %1885 = vmatpush1.msra.mxu0 0.0
  %1886 = vmatprep.subr.mxu0 0.0
  %1887 = vmatpush1.msra.mxu0 0.0
  %1888 = vmatprep.subr.mxu0 0.0
  %1889 = vmatpush1.msra.mxu0 0.0
  %1890 = vmatprep.subr.mxu0 0.0
  %1891 = vmatpush1.msra.mxu0 0.0
  %1892 = vmatprep.subr.mxu0 0.0
  %1893 = vmatpush1.msra.mxu0 0.0
  %1894 = vmatprep.subr.mxu0 0.0
  %1895 = vmatpush1.msra.mxu0 0.0
  %1896 = vmatprep.subr.mxu0 0.0
  %1897 = vmatpush1.msra.mxu0 0.0
  %1898 = vmatprep.subr.mxu0 0.0
  %1899 = vmatpush1.msra.mxu0 0.0
  %1900 = vmatprep.mubr.f32.mxu0 0.0
  %1901 = vmatmul.mubr.f32.gmra.mrb[0].mxu0 %v1337
  %v1902 = vpop.f32.mrb[0].mxu0
  %v1903 = vadd.f32 %v1832, %v1902
  %v1904 = vpop.f32.mrb[0].mxu0
  %v1905 = vadd.f32 %v1834, %v1904
  %1906 = vdwg.mxu0
  %1907 = vmatprep.subr.mxu0 %v22
  %1908 = vmatpush1.msra.mxu0 %v21
  %1909 = vmatprep.subr.mxu0 %v35
  %1910 = vmatpush1.msra.mxu0 %v34
  %1911 = vmatprep.subr.mxu0 %v48
  %1912 = vmatpush1.msra.mxu0 %v47
  %1913 = vmatprep.subr.mxu0 %v61
  %1914 = vmatpush1.msra.mxu0 %v60
  %1915 = vmatprep.subr.mxu0 %v74
  %1916 = vmatpush1.msra.mxu0 %v73
  %1917 = vmatprep.subr.mxu0 %v87
  %1918 = vmatpush1.msra.mxu0 %v86
  %1919 = vmatprep.subr.mxu0 %v100
  %1920 = vmatpush1.msra.mxu0 %v99
  %1921 = vmatprep.subr.mxu0 %v113
  %1922 = vmatpush1.msra.mxu0 %v112
  %1923 = vmatprep.subr.mxu0 %v126
  %1924 = vmatpush1.msra.mxu0 %v125
  %1925 = vmatprep.subr.mxu0 %v139
  %1926 = vmatpush1.msra.mxu0 %v138
  %1927 = vmatprep.subr.mxu0 %v152
  %1928 = vmatpush1.msra.mxu0 %v151
  %1929 = vmatprep.subr.mxu0 %v165
  %1930 = vmatpush1.msra.mxu0 %v164
  %1931 = vmatprep.subr.mxu0 %v178
  %1932 = vmatpush1.msra.mxu0 %v177
  %1933 = vmatprep.subr.mxu0 %v191
  %1934 = vmatpush1.msra.mxu0 %v190
  %1935 = vmatprep.subr.mxu0 %v204
  %1936 = vmatpush1.msra.mxu0 %v203
  %1937 = vmatprep.subr.mxu0 %v217
  %1938 = vmatpush1.msra.mxu0 %v216
  %1939 = vmatprep.subr.mxu0 %v230
  %1940 = vmatpush1.msra.mxu0 %v229
  %1941 = vmatprep.subr.mxu0 %v243
  %1942 = vmatpush1.msra.mxu0 %v242
  %1943 = vmatprep.subr.mxu0 %v256
  %1944 = vmatpush1.msra.mxu0 %v255
  %1945 = vmatprep.subr.mxu0 %v269
  %1946 = vmatpush1.msra.mxu0 %v268
  %1947 = vmatprep.subr.mxu0 %v282
  %1948 = vmatpush1.msra.mxu0 %v281
  %1949 = vmatprep.subr.mxu0 %v295
  %1950 = vmatpush1.msra.mxu0 %v294
  %1951 = vmatprep.subr.mxu0 %v308
  %1952 = vmatpush1.msra.mxu0 %v307
  %1953 = vmatprep.subr.mxu0 %v321
  %1954 = vmatpush1.msra.mxu0 %v320
  %1955 = vmatprep.subr.mxu0 %v334
  %1956 = vmatpush1.msra.mxu0 %v333
  %1957 = vmatprep.subr.mxu0 %v347
  %1958 = vmatpush1.msra.mxu0 %v346
  %1959 = vmatprep.subr.mxu0 %v360
  %1960 = vmatpush1.msra.mxu0 %v359
  %1961 = vmatprep.subr.mxu0 %v373
  %1962 = vmatpush1.msra.mxu0 %v372
  %1963 = vmatprep.subr.mxu0 %v386
  %1964 = vmatpush1.msra.mxu0 %v385
  %1965 = vmatprep.subr.mxu0 %v399
  %1966 = vmatpush1.msra.mxu0 %v398
  %1967 = vmatprep.subr.mxu0 %v412
  %1968 = vmatpush1.msra.mxu0 %v411
  %1969 = vmatprep.subr.mxu0 %v425
  %1970 = vmatpush1.msra.mxu0 %v424
  %1971 = vmatprep.mubr.f32.mxu0 %v1309
  %1972 = vmatmul.mubr.f32.gmra.mrb[0].mxu0 %v1305
  %v1973 = vpop.f32.mrb[0].mxu0
  %v1974 = vadd.f32 %v1300, %v1973
  %v1975 = vpop.f32.mrb[0].mxu0
  %v1976 = vadd.f32 %v1300, %v1975
  %1977 = vdwg.mxu0
  %1978 = vmatprep.subr.mxu0 %v438
  %1979 = vmatpush1.msra.mxu0 %v437
  %1980 = vmatprep.subr.mxu0 %v451
  %1981 = vmatpush1.msra.mxu0 %v450
  %1982 = vmatprep.subr.mxu0 %v464
  %1983 = vmatpush1.msra.mxu0 %v463
  %1984 = vmatprep.subr.mxu0 %v477
  %1985 = vmatpush1.msra.mxu0 %v476
  %1986 = vmatprep.subr.mxu0 %v490
  %1987 = vmatpush1.msra.mxu0 %v489
  %1988 = vmatprep.subr.mxu0 %v503
  %1989 = vmatpush1.msra.mxu0 %v502
  %1990 = vmatprep.subr.mxu0 %v516
  %1991 = vmatpush1.msra.mxu0 %v515
  %1992 = vmatprep.subr.mxu0 %v529
  %1993 = vmatpush1.msra.mxu0 %v528
  %1994 = vmatprep.subr.mxu0 %v542
  %1995 = vmatpush1.msra.mxu0 %v541
  %1996 = vmatprep.subr.mxu0 %v555
  %1997 = vmatpush1.msra.mxu0 %v554
  %1998 = vmatprep.subr.mxu0 %v568
  %1999 = vmatpush1.msra.mxu0 %v567
  %2000 = vmatprep.subr.mxu0 %v581
  %2001 = vmatpush1.msra.mxu0 %v580
  %2002 = vmatprep.subr.mxu0 %v594
  %2003 = vmatpush1.msra.mxu0 %v593
  %2004 = vmatprep.subr.mxu0 %v607
  %2005 = vmatpush1.msra.mxu0 %v606
  %2006 = vmatprep.subr.mxu0 %v620
  %2007 = vmatpush1.msra.mxu0 %v619
  %2008 = vmatprep.subr.mxu0 %v633
  %2009 = vmatpush1.msra.mxu0 %v632
  %2010 = vmatprep.subr.mxu0 %v646
  %2011 = vmatpush1.msra.mxu0 %v645
  %2012 = vmatprep.subr.mxu0 %v659
  %2013 = vmatpush1.msra.mxu0 %v658
  %2014 = vmatprep.subr.mxu0 %v672
  %2015 = vmatpush1.msra.mxu0 %v671
  %2016 = vmatprep.subr.mxu0 %v685
  %2017 = vmatpush1.msra.mxu0 %v684
  %2018 = vmatprep.subr.mxu0 %v698
  %2019 = vmatpush1.msra.mxu0 %v697
  %2020 = vmatprep.subr.mxu0 %v711
  %2021 = vmatpush1.msra.mxu0 %v710
  %2022 = vmatprep.subr.mxu0 %v724
  %2023 = vmatpush1.msra.mxu0 %v723
  %2024 = vmatprep.subr.mxu0 %v737
  %2025 = vmatpush1.msra.mxu0 %v736
  %2026 = vmatprep.subr.mxu0 %v750
  %2027 = vmatpush1.msra.mxu0 %v749
  %2028 = vmatprep.subr.mxu0 %v763
  %2029 = vmatpush1.msra.mxu0 %v762
  %2030 = vmatprep.subr.mxu0 %v776
  %2031 = vmatpush1.msra.mxu0 %v775
  %2032 = vmatprep.subr.mxu0 %v789
  %2033 = vmatpush1.msra.mxu0 %v788
  %2034 = vmatprep.subr.mxu0 %v802
  %2035 = vmatpush1.msra.mxu0 %v801
  %2036 = vmatprep.subr.mxu0 %v815
  %2037 = vmatpush1.msra.mxu0 %v814
  %2038 = vmatprep.subr.mxu0 %v828
  %2039 = vmatpush1.msra.mxu0 %v827
  %2040 = vmatprep.subr.mxu0 %v841
  %2041 = vmatpush1.msra.mxu0 %v840
  %2042 = vmatprep.mubr.f32.mxu0 %v1317
  %2043 = vmatmul.mubr.f32.gmra.mrb[0].mxu0 %v1313
  %v2044 = vpop.f32.mrb[0].mxu0
  %v2045 = vadd.f32 %v1974, %v2044
  %v2046 = vpop.f32.mrb[0].mxu0
  %v2047 = vadd.f32 %v1976, %v2046
  %2048 = vdwg.mxu0
  %2049 = vmatprep.subr.mxu0 %v854
  %2050 = vmatpush1.msra.mxu0 %v853
  %2051 = vmatprep.subr.mxu0 %v867
  %2052 = vmatpush1.msra.mxu0 %v866
  %2053 = vmatprep.subr.mxu0 %v880
  %2054 = vmatpush1.msra.mxu0 %v879
  %2055 = vmatprep.subr.mxu0 %v893
  %2056 = vmatpush1.msra.mxu0 %v892
  %2057 = vmatprep.subr.mxu0 %v906
  %2058 = vmatpush1.msra.mxu0 %v905
  %2059 = vmatprep.subr.mxu0 %v919
  %2060 = vmatpush1.msra.mxu0 %v918
  %2061 = vmatprep.subr.mxu0 %v932
  %2062 = vmatpush1.msra.mxu0 %v931
  %2063 = vmatprep.subr.mxu0 %v945
  %2064 = vmatpush1.msra.mxu0 %v944
  %2065 = vmatprep.subr.mxu0 %v958
  %2066 = vmatpush1.msra.mxu0 %v957
  %2067 = vmatprep.subr.mxu0 %v971
  %2068 = vmatpush1.msra.mxu0 %v970
  %2069 = vmatprep.subr.mxu0 %v984
  %2070 = vmatpush1.msra.mxu0 %v983
  %2071 = vmatprep.subr.mxu0 %v997
  %2072 = vmatpush1.msra.mxu0 %v996
  %2073 = vmatprep.subr.mxu0 %v1010
  %2074 = vmatpush1.msra.mxu0 %v1009
  %2075 = vmatprep.subr.mxu0 %v1023
  %2076 = vmatpush1.msra.mxu0 %v1022
  %2077 = vmatprep.subr.mxu0 %v1036
  %2078 = vmatpush1.msra.mxu0 %v1035
  %2079 = vmatprep.subr.mxu0 %v1049
  %2080 = vmatpush1.msra.mxu0 %v1048
  %2081 = vmatprep.subr.mxu0 %v1062
  %2082 = vmatpush1.msra.mxu0 %v1061
  %2083 = vmatprep.subr.mxu0 %v1075
  %2084 = vmatpush1.msra.mxu0 %v1074
  %2085 = vmatprep.subr.mxu0 %v1088
  %2086 = vmatpush1.msra.mxu0 %v1087
  %2087 = vmatprep.subr.mxu0 %v1101
  %2088 = vmatpush1.msra.mxu0 %v1100
  %2089 = vmatprep.subr.mxu0 %v1114
  %2090 = vmatpush1.msra.mxu0 %v1113
  %2091 = vmatprep.subr.mxu0 %v1127
  %2092 = vmatpush1.msra.mxu0 %v1126
  %2093 = vmatprep.subr.mxu0 %v1140
  %2094 = vmatpush1.msra.mxu0 %v1139
  %2095 = vmatprep.subr.mxu0 %v1153
  %2096 = vmatpush1.msra.mxu0 %v1152
  %2097 = vmatprep.subr.mxu0 %v1166
  %2098 = vmatpush1.msra.mxu0 %v1165
  %2099 = vmatprep.subr.mxu0 %v1179
  %2100 = vmatpush1.msra.mxu0 %v1178
  %2101 = vmatprep.subr.mxu0 %v1192
  %2102 = vmatpush1.msra.mxu0 %v1191
  %2103 = vmatprep.subr.mxu0 %v1205
  %2104 = vmatpush1.msra.mxu0 %v1204
  %2105 = vmatprep.subr.mxu0 %v1218
  %2106 = vmatpush1.msra.mxu0 %v1217
  %2107 = vmatprep.subr.mxu0 %v1231
  %2108 = vmatpush1.msra.mxu0 %v1230
  %2109 = vmatprep.subr.mxu0 %v1244
  %2110 = vmatpush1.msra.mxu0 %v1243
  %2111 = vmatprep.subr.mxu0 %v1257
  %2112 = vmatpush1.msra.mxu0 %v1256
  %2113 = vmatprep.mubr.f32.mxu0 %v1325
  %2114 = vmatmul.mubr.f32.gmra.mrb[0].mxu0 %v1321
  %v2115 = vpop.f32.mrb[0].mxu0
  %v2116 = vadd.f32 %v2045, %v2115
  %v2117 = vpop.f32.mrb[0].mxu0
  %v2118 = vadd.f32 %v2047, %v2117
  %2119 = vdwg.mxu0
  %2120 = vmatprep.subr.mxu0 %v1270
  %2121 = vmatpush1.msra.mxu0 %v1269
  %2122 = vmatprep.subr.mxu0 %v1283
  %2123 = vmatpush1.msra.mxu0 %v1282
  %2124 = vmatprep.subr.mxu0 0.0
  %2125 = vmatpush1.msra.mxu0 0.0
  %2126 = vmatprep.subr.mxu0 0.0
  %2127 = vmatpush1.msra.mxu0 0.0
  %2128 = vmatprep.subr.mxu0 0.0
  %2129 = vmatpush1.msra.mxu0 0.0
  %2130 = vmatprep.subr.mxu0 0.0
  %2131 = vmatpush1.msra.mxu0 0.0
  %2132 = vmatprep.subr.mxu0 0.0
  %2133 = vmatpush1.msra.mxu0 0.0
  %2134 = vmatprep.subr.mxu0 0.0
  %2135 = vmatpush1.msra.mxu0 0.0
  %2136 = vmatprep.subr.mxu0 0.0
  %2137 = vmatpush1.msra.mxu0 0.0
  %2138 = vmatprep.subr.mxu0 0.0
  %2139 = vmatpush1.msra.mxu0 0.0
  %2140 = vmatprep.subr.mxu0 0.0
  %2141 = vmatpush1.msra.mxu0 0.0
  %2142 = vmatprep.subr.mxu0 0.0
  %2143 = vmatpush1.msra.mxu0 0.0
  %2144 = vmatprep.subr.mxu0 0.0
  %2145 = vmatpush1.msra.mxu0 0.0
  %2146 = vmatprep.subr.mxu0 0.0
  %2147 = vmatpush1.msra.mxu0 0.0
  %2148 = vmatprep.subr.mxu0 0.0
  %2149 = vmatpush1.msra.mxu0 0.0
  %2150 = vmatprep.subr.mxu0 0.0
  %2151 = vmatpush1.msra.mxu0 0.0
  %2152 = vmatprep.subr.mxu0 0.0
  %2153 = vmatpush1.msra.mxu0 0.0
  %2154 = vmatprep.subr.mxu0 0.0
  %2155 = vmatpush1.msra.mxu0 0.0
  %2156 = vmatprep.subr.mxu0 0.0
  %2157 = vmatpush1.msra.mxu0 0.0
  %2158 = vmatprep.subr.mxu0 0.0
  %2159 = vmatpush1.msra.mxu0 0.0
  %2160 = vmatprep.subr.mxu0 0.0
  %2161 = vmatpush1.msra.mxu0 0.0
  %2162 = vmatprep.subr.mxu0 0.0
  %2163 = vmatpush1.msra.mxu0 0.0
  %2164 = vmatprep.subr.mxu0 0.0
  %2165 = vmatpush1.msra.mxu0 0.0
  %2166 = vmatprep.subr.mxu0 0.0
  %2167 = vmatpush1.msra.mxu0 0.0
  %2168 = vmatprep.subr.mxu0 0.0
  %2169 = vmatpush1.msra.mxu0 0.0
  %2170 = vmatprep.subr.mxu0 0.0
  %2171 = vmatpush1.msra.mxu0 0.0
  %2172 = vmatprep.subr.mxu0 0.0
  %2173 = vmatpush1.msra.mxu0 0.0
  %2174 = vmatprep.subr.mxu0 0.0
  %2175 = vmatpush1.msra.mxu0 0.0
  %2176 = vmatprep.subr.mxu0 0.0
  %2177 = vmatpush1.msra.mxu0 0.0
  %2178 = vmatprep.subr.mxu0 0.0
  %2179 = vmatpush1.msra.mxu0 0.0
  %2180 = vmatprep.subr.mxu0 0.0
  %2181 = vmatpush1.msra.mxu0 0.0
  %2182 = vmatprep.subr.mxu0 0.0
  %2183 = vmatpush1.msra.mxu0 0.0
  %2184 = vmatprep.mubr.f32.mxu0 0.0
  %2185 = vmatmul.mubr.f32.gmra.mrb[0].mxu0 %v1337
  %v2186 = vpop.f32.mrb[0].mxu0
  %v2187 = vadd.f32 %v2116, %v2186
  %v2188 = vpop.f32.mrb[0].mxu0
  %v2189 = vadd.f32 %v2118, %v2188
  %2190 = vdwg.mxu0
  %2191 = vmatprep.subr.mxu0 %v24
  %2192 = vmatpush1.msra.mxu0 %v23
  %2193 = vmatprep.subr.mxu0 %v37
  %2194 = vmatpush1.msra.mxu0 %v36
  %2195 = vmatprep.subr.mxu0 %v50
  %2196 = vmatpush1.msra.mxu0 %v49
  %2197 = vmatprep.subr.mxu0 %v63
  %2198 = vmatpush1.msra.mxu0 %v62
  %2199 = vmatprep.subr.mxu0 %v76
  %2200 = vmatpush1.msra.mxu0 %v75
  %2201 = vmatprep.subr.mxu0 %v89
  %2202 = vmatpush1.msra.mxu0 %v88
  %2203 = vmatprep.subr.mxu0 %v102
  %2204 = vmatpush1.msra.mxu0 %v101
  %2205 = vmatprep.subr.mxu0 %v115
  %2206 = vmatpush1.msra.mxu0 %v114
  %2207 = vmatprep.subr.mxu0 %v128
  %2208 = vmatpush1.msra.mxu0 %v127
  %2209 = vmatprep.subr.mxu0 %v141
  %2210 = vmatpush1.msra.mxu0 %v140
  %2211 = vmatprep.subr.mxu0 %v154
  %2212 = vmatpush1.msra.mxu0 %v153
  %2213 = vmatprep.subr.mxu0 %v167
  %2214 = vmatpush1.msra.mxu0 %v166
  %2215 = vmatprep.subr.mxu0 %v180
  %2216 = vmatpush1.msra.mxu0 %v179
  %2217 = vmatprep.subr.mxu0 %v193
  %2218 = vmatpush1.msra.mxu0 %v192
  %2219 = vmatprep.subr.mxu0 %v206
  %2220 = vmatpush1.msra.mxu0 %v205
  %2221 = vmatprep.subr.mxu0 %v219
  %2222 = vmatpush1.msra.mxu0 %v218
  %2223 = vmatprep.subr.mxu0 %v232
  %2224 = vmatpush1.msra.mxu0 %v231
  %2225 = vmatprep.subr.mxu0 %v245
  %2226 = vmatpush1.msra.mxu0 %v244
  %2227 = vmatprep.subr.mxu0 %v258
  %2228 = vmatpush1.msra.mxu0 %v257
  %2229 = vmatprep.subr.mxu0 %v271
  %2230 = vmatpush1.msra.mxu0 %v270
  %2231 = vmatprep.subr.mxu0 %v284
  %2232 = vmatpush1.msra.mxu0 %v283
  %2233 = vmatprep.subr.mxu0 %v297
  %2234 = vmatpush1.msra.mxu0 %v296
  %2235 = vmatprep.subr.mxu0 %v310
  %2236 = vmatpush1.msra.mxu0 %v309
  %2237 = vmatprep.subr.mxu0 %v323
  %2238 = vmatpush1.msra.mxu0 %v322
  %2239 = vmatprep.subr.mxu0 %v336
  %2240 = vmatpush1.msra.mxu0 %v335
  %2241 = vmatprep.subr.mxu0 %v349
  %2242 = vmatpush1.msra.mxu0 %v348
  %2243 = vmatprep.subr.mxu0 %v362
  %2244 = vmatpush1.msra.mxu0 %v361
  %2245 = vmatprep.subr.mxu0 %v375
  %2246 = vmatpush1.msra.mxu0 %v374
  %2247 = vmatprep.subr.mxu0 %v388
  %2248 = vmatpush1.msra.mxu0 %v387
  %2249 = vmatprep.subr.mxu0 %v401
  %2250 = vmatpush1.msra.mxu0 %v400
  %2251 = vmatprep.subr.mxu0 %v414
  %2252 = vmatpush1.msra.mxu0 %v413
  %2253 = vmatprep.subr.mxu0 %v427
  %2254 = vmatpush1.msra.mxu0 %v426
  %2255 = vmatprep.mubr.f32.mxu0 %v1309
  %2256 = vmatmul.mubr.f32.gmra.mrb[0].mxu0 %v1305
  %v2257 = vpop.f32.mrb[0].mxu0
  %v2258 = vadd.f32 %v1300, %v2257
  %v2259 = vpop.f32.mrb[0].mxu0
  %v2260 = vadd.f32 %v1300, %v2259
  %2261 = vdwg.mxu0
  %2262 = vmatprep.subr.mxu0 %v440
  %2263 = vmatpush1.msra.mxu0 %v439
  %2264 = vmatprep.subr.mxu0 %v453
  %2265 = vmatpush1.msra.mxu0 %v452
  %2266 = vmatprep.subr.mxu0 %v466
  %2267 = vmatpush1.msra.mxu0 %v465
  %2268 = vmatprep.subr.mxu0 %v479
  %2269 = vmatpush1.msra.mxu0 %v478
  %2270 = vmatprep.subr.mxu0 %v492
  %2271 = vmatpush1.msra.mxu0 %v491
  %2272 = vmatprep.subr.mxu0 %v505
  %2273 = vmatpush1.msra.mxu0 %v504
  %2274 = vmatprep.subr.mxu0 %v518
  %2275 = vmatpush1.msra.mxu0 %v517
  %2276 = vmatprep.subr.mxu0 %v531
  %2277 = vmatpush1.msra.mxu0 %v530
  %2278 = vmatprep.subr.mxu0 %v544
  %2279 = vmatpush1.msra.mxu0 %v543
  %2280 = vmatprep.subr.mxu0 %v557
  %2281 = vmatpush1.msra.mxu0 %v556
  %2282 = vmatprep.subr.mxu0 %v570
  %2283 = vmatpush1.msra.mxu0 %v569
  %2284 = vmatprep.subr.mxu0 %v583
  %2285 = vmatpush1.msra.mxu0 %v582
  %2286 = vmatprep.subr.mxu0 %v596
  %2287 = vmatpush1.msra.mxu0 %v595
  %2288 = vmatprep.subr.mxu0 %v609
  %2289 = vmatpush1.msra.mxu0 %v608
  %2290 = vmatprep.subr.mxu0 %v622
  %2291 = vmatpush1.msra.mxu0 %v621
  %2292 = vmatprep.subr.mxu0 %v635
  %2293 = vmatpush1.msra.mxu0 %v634
  %2294 = vmatprep.subr.mxu0 %v648
  %2295 = vmatpush1.msra.mxu0 %v647
  %2296 = vmatprep.subr.mxu0 %v661
  %2297 = vmatpush1.msra.mxu0 %v660
  %2298 = vmatprep.subr.mxu0 %v674
  %2299 = vmatpush1.msra.mxu0 %v673
  %2300 = vmatprep.subr.mxu0 %v687
  %2301 = vmatpush1.msra.mxu0 %v686
  %2302 = vmatprep.subr.mxu0 %v700
  %2303 = vmatpush1.msra.mxu0 %v699
  %2304 = vmatprep.subr.mxu0 %v713
  %2305 = vmatpush1.msra.mxu0 %v712
  %2306 = vmatprep.subr.mxu0 %v726
  %2307 = vmatpush1.msra.mxu0 %v725
  %2308 = vmatprep.subr.mxu0 %v739
  %2309 = vmatpush1.msra.mxu0 %v738
  %2310 = vmatprep.subr.mxu0 %v752
  %2311 = vmatpush1.msra.mxu0 %v751
  %2312 = vmatprep.subr.mxu0 %v765
  %2313 = vmatpush1.msra.mxu0 %v764
  %2314 = vmatprep.subr.mxu0 %v778
  %2315 = vmatpush1.msra.mxu0 %v777
  %2316 = vmatprep.subr.mxu0 %v791
  %2317 = vmatpush1.msra.mxu0 %v790
  %2318 = vmatprep.subr.mxu0 %v804
  %2319 = vmatpush1.msra.mxu0 %v803
  %2320 = vmatprep.subr.mxu0 %v817
  %2321 = vmatpush1.msra.mxu0 %v816
  %2322 = vmatprep.subr.mxu0 %v830
  %2323 = vmatpush1.msra.mxu0 %v829
  %2324 = vmatprep.subr.mxu0 %v843
  %2325 = vmatpush1.msra.mxu0 %v842
  %2326 = vmatprep.mubr.f32.mxu0 %v1317
  %2327 = vmatmul.mubr.f32.gmra.mrb[0].mxu0 %v1313
  %v2328 = vpop.f32.mrb[0].mxu0
  %v2329 = vadd.f32 %v2258, %v2328
  %v2330 = vpop.f32.mrb[0].mxu0
  %v2331 = vadd.f32 %v2260, %v2330
  %2332 = vdwg.mxu0
  %2333 = vmatprep.subr.mxu0 %v856
  %2334 = vmatpush1.msra.mxu0 %v855
  %2335 = vmatprep.subr.mxu0 %v869
  %2336 = vmatpush1.msra.mxu0 %v868
  %2337 = vmatprep.subr.mxu0 %v882
  %2338 = vmatpush1.msra.mxu0 %v881
  %2339 = vmatprep.subr.mxu0 %v895
  %2340 = vmatpush1.msra.mxu0 %v894
  %2341 = vmatprep.subr.mxu0 %v908
  %2342 = vmatpush1.msra.mxu0 %v907
  %2343 = vmatprep.subr.mxu0 %v921
  %2344 = vmatpush1.msra.mxu0 %v920
  %2345 = vmatprep.subr.mxu0 %v934
  %2346 = vmatpush1.msra.mxu0 %v933
  %2347 = vmatprep.subr.mxu0 %v947
  %2348 = vmatpush1.msra.mxu0 %v946
  %2349 = vmatprep.subr.mxu0 %v960
  %2350 = vmatpush1.msra.mxu0 %v959
  %2351 = vmatprep.subr.mxu0 %v973
  %2352 = vmatpush1.msra.mxu0 %v972
  %2353 = vmatprep.subr.mxu0 %v986
  %2354 = vmatpush1.msra.mxu0 %v985
  %2355 = vmatprep.subr.mxu0 %v999
  %2356 = vmatpush1.msra.mxu0 %v998
  %2357 = vmatprep.subr.mxu0 %v1012
  %2358 = vmatpush1.msra.mxu0 %v1011
  %2359 = vmatprep.subr.mxu0 %v1025
  %2360 = vmatpush1.msra.mxu0 %v1024
  %2361 = vmatprep.subr.mxu0 %v1038
  %2362 = vmatpush1.msra.mxu0 %v1037
  %2363 = vmatprep.subr.mxu0 %v1051
  %2364 = vmatpush1.msra.mxu0 %v1050
  %2365 = vmatprep.subr.mxu0 %v1064
  %2366 = vmatpush1.msra.mxu0 %v1063
  %2367 = vmatprep.subr.mxu0 %v1077
  %2368 = vmatpush1.msra.mxu0 %v1076
  %2369 = vmatprep.subr.mxu0 %v1090
  %2370 = vmatpush1.msra.mxu0 %v1089
  %2371 = vmatprep.subr.mxu0 %v1103
  %2372 = vmatpush1.msra.mxu0 %v1102
  %2373 = vmatprep.subr.mxu0 %v1116
  %2374 = vmatpush1.msra.mxu0 %v1115
  %2375 = vmatprep.subr.mxu0 %v1129
  %2376 = vmatpush1.msra.mxu0 %v1128
  %2377 = vmatprep.subr.mxu0 %v1142
  %2378 = vmatpush1.msra.mxu0 %v1141
  %2379 = vmatprep.subr.mxu0 %v1155
  %2380 = vmatpush1.msra.mxu0 %v1154
  %2381 = vmatprep.subr.mxu0 %v1168
  %2382 = vmatpush1.msra.mxu0 %v1167
  %2383 = vmatprep.subr.mxu0 %v1181
  %2384 = vmatpush1.msra.mxu0 %v1180
  %2385 = vmatprep.subr.mxu0 %v1194
  %2386 = vmatpush1.msra.mxu0 %v1193
  %2387 = vmatprep.subr.mxu0 %v1207
  %2388 = vmatpush1.msra.mxu0 %v1206
  %2389 = vmatprep.subr.mxu0 %v1220
  %2390 = vmatpush1.msra.mxu0 %v1219
  %2391 = vmatprep.subr.mxu0 %v1233
  %2392 = vmatpush1.msra.mxu0 %v1232
  %2393 = vmatprep.subr.mxu0 %v1246
  %2394 = vmatpush1.msra.mxu0 %v1245
  %2395 = vmatprep.subr.mxu0 %v1259
  %2396 = vmatpush1.msra.mxu0 %v1258
  %2397 = vmatprep.mubr.f32.mxu0 %v1325
  %2398 = vmatmul.mubr.f32.gmra.mrb[0].mxu0 %v1321
  %v2399 = vpop.f32.mrb[0].mxu0
  %v2400 = vadd.f32 %v2329, %v2399
  %v2401 = vpop.f32.mrb[0].mxu0
  %v2402 = vadd.f32 %v2331, %v2401
  %2403 = vdwg.mxu0
  %2404 = vmatprep.subr.mxu0 %v1272
  %2405 = vmatpush1.msra.mxu0 %v1271
  %2406 = vmatprep.subr.mxu0 %v1285
  %2407 = vmatpush1.msra.mxu0 %v1284
  %2408 = vmatprep.subr.mxu0 0.0
  %2409 = vmatpush1.msra.mxu0 0.0
  %2410 = vmatprep.subr.mxu0 0.0
  %2411 = vmatpush1.msra.mxu0 0.0
  %2412 = vmatprep.subr.mxu0 0.0
  %2413 = vmatpush1.msra.mxu0 0.0
  %2414 = vmatprep.subr.mxu0 0.0
  %2415 = vmatpush1.msra.mxu0 0.0
  %2416 = vmatprep.subr.mxu0 0.0
  %2417 = vmatpush1.msra.mxu0 0.0
  %2418 = vmatprep.subr.mxu0 0.0
  %2419 = vmatpush1.msra.mxu0 0.0
  %2420 = vmatprep.subr.mxu0 0.0
  %2421 = vmatpush1.msra.mxu0 0.0
  %2422 = vmatprep.subr.mxu0 0.0
  %2423 = vmatpush1.msra.mxu0 0.0
  %2424 = vmatprep.subr.mxu0 0.0
  %2425 = vmatpush1.msra.mxu0 0.0
  %2426 = vmatprep.subr.mxu0 0.0
  %2427 = vmatpush1.msra.mxu0 0.0
  %2428 = vmatprep.subr.mxu0 0.0
  %2429 = vmatpush1.msra.mxu0 0.0
  %2430 = vmatprep.subr.mxu0 0.0
  %2431 = vmatpush1.msra.mxu0 0.0
  %2432 = vmatprep.subr.mxu0 0.0
  %2433 = vmatpush1.msra.mxu0 0.0
  %2434 = vmatprep.subr.mxu0 0.0
  %2435 = vmatpush1.msra.mxu0 0.0
  %2436 = vmatprep.subr.mxu0 0.0
  %2437 = vmatpush1.msra.mxu0 0.0
  %2438 = vmatprep.subr.mxu0 0.0
  %2439 = vmatpush1.msra.mxu0 0.0
  %2440 = vmatprep.subr.mxu0 0.0
  %2441 = vmatpush1.msra.mxu0 0.0
  %2442 = vmatprep.subr.mxu0 0.0
  %2443 = vmatpush1.msra.mxu0 0.0
  %2444 = vmatprep.subr.mxu0 0.0
  %2445 = vmatpush1.msra.mxu0 0.0
  %2446 = vmatprep.subr.mxu0 0.0
  %2447 = vmatpush1.msra.mxu0 0.0
  %2448 = vmatprep.subr.mxu0 0.0
  %2449 = vmatpush1.msra.mxu0 0.0
  %2450 = vmatprep.subr.mxu0 0.0
  %2451 = vmatpush1.msra.mxu0 0.0
  %2452 = vmatprep.subr.mxu0 0.0
  %2453 = vmatpush1.msra.mxu0 0.0
  %2454 = vmatprep.subr.mxu0 0.0
  %2455 = vmatpush1.msra.mxu0 0.0
  %2456 = vmatprep.subr.mxu0 0.0
  %2457 = vmatpush1.msra.mxu0 0.0
  %2458 = vmatprep.subr.mxu0 0.0
  %2459 = vmatpush1.msra.mxu0 0.0
  %2460 = vmatprep.subr.mxu0 0.0
  %2461 = vmatpush1.msra.mxu0 0.0
  %2462 = vmatprep.subr.mxu0 0.0
  %2463 = vmatpush1.msra.mxu0 0.0
  %2464 = vmatprep.subr.mxu0 0.0
  %2465 = vmatpush1.msra.mxu0 0.0
  %2466 = vmatprep.subr.mxu0 0.0
  %2467 = vmatpush1.msra.mxu0 0.0
  %2468 = vmatprep.mubr.f32.mxu0 0.0
  %2469 = vmatmul.mubr.f32.gmra.mrb[0].mxu0 %v1337
  %v2470 = vpop.f32.mrb[0].mxu0
  %v2471 = vadd.f32 %v2400, %v2470
  %v2472 = vpop.f32.mrb[0].mxu0
  %v2473 = vadd.f32 %v2402, %v2472
  %2474 = vdwg.mxu0
  %2475 = vmatprep.subr.mxu0 %v26
  %2476 = vmatpush1.msra.mxu0 %v25
  %2477 = vmatprep.subr.mxu0 %v39
  %2478 = vmatpush1.msra.mxu0 %v38
  %2479 = vmatprep.subr.mxu0 %v52
  %2480 = vmatpush1.msra.mxu0 %v51
  %2481 = vmatprep.subr.mxu0 %v65
  %2482 = vmatpush1.msra.mxu0 %v64
  %2483 = vmatprep.subr.mxu0 %v78
  %2484 = vmatpush1.msra.mxu0 %v77
  %2485 = vmatprep.subr.mxu0 %v91
  %2486 = vmatpush1.msra.mxu0 %v90
  %2487 = vmatprep.subr.mxu0 %v104
  %2488 = vmatpush1.msra.mxu0 %v103
  %2489 = vmatprep.subr.mxu0 %v117
  %2490 = vmatpush1.msra.mxu0 %v116
  %2491 = vmatprep.subr.mxu0 %v130
  %2492 = vmatpush1.msra.mxu0 %v129
  %2493 = vmatprep.subr.mxu0 %v143
  %2494 = vmatpush1.msra.mxu0 %v142
  %2495 = vmatprep.subr.mxu0 %v156
  %2496 = vmatpush1.msra.mxu0 %v155
  %2497 = vmatprep.subr.mxu0 %v169
  %2498 = vmatpush1.msra.mxu0 %v168
  %2499 = vmatprep.subr.mxu0 %v182
  %2500 = vmatpush1.msra.mxu0 %v181
  %2501 = vmatprep.subr.mxu0 %v195
  %2502 = vmatpush1.msra.mxu0 %v194
  %2503 = vmatprep.subr.mxu0 %v208
  %2504 = vmatpush1.msra.mxu0 %v207
  %2505 = vmatprep.subr.mxu0 %v221
  %2506 = vmatpush1.msra.mxu0 %v220
  %2507 = vmatprep.subr.mxu0 %v234
  %2508 = vmatpush1.msra.mxu0 %v233
  %2509 = vmatprep.subr.mxu0 %v247
  %2510 = vmatpush1.msra.mxu0 %v246
  %2511 = vmatprep.subr.mxu0 %v260
  %2512 = vmatpush1.msra.mxu0 %v259
  %2513 = vmatprep.subr.mxu0 %v273
  %2514 = vmatpush1.msra.mxu0 %v272
  %2515 = vmatprep.subr.mxu0 %v286
  %2516 = vmatpush1.msra.mxu0 %v285
  %2517 = vmatprep.subr.mxu0 %v299
  %2518 = vmatpush1.msra.mxu0 %v298
  %2519 = vmatprep.subr.mxu0 %v312
  %2520 = vmatpush1.msra.mxu0 %v311
  %2521 = vmatprep.subr.mxu0 %v325
  %2522 = vmatpush1.msra.mxu0 %v324
  %2523 = vmatprep.subr.mxu0 %v338
  %2524 = vmatpush1.msra.mxu0 %v337
  %2525 = vmatprep.subr.mxu0 %v351
  %2526 = vmatpush1.msra.mxu0 %v350
  %2527 = vmatprep.subr.mxu0 %v364
  %2528 = vmatpush1.msra.mxu0 %v363
  %2529 = vmatprep.subr.mxu0 %v377
  %2530 = vmatpush1.msra.mxu0 %v376
  %2531 = vmatprep.subr.mxu0 %v390
  %2532 = vmatpush1.msra.mxu0 %v389
  %2533 = vmatprep.subr.mxu0 %v403
  %2534 = vmatpush1.msra.mxu0 %v402
  %2535 = vmatprep.subr.mxu0 %v416
  %2536 = vmatpush1.msra.mxu0 %v415
  %2537 = vmatprep.subr.mxu0 %v429
  %2538 = vmatpush1.msra.mxu0 %v428
  %2539 = vmatprep.mubr.f32.mxu0 %v1309
  %2540 = vmatmul.mubr.f32.gmra.mrb[0].mxu0 %v1305
  %v2541 = vpop.f32.mrb[0].mxu0
  %v2542 = vadd.f32 %v1300, %v2541
  %v2543 = vpop.f32.mrb[0].mxu0
  %v2544 = vadd.f32 %v1300, %v2543
  %2545 = vdwg.mxu0
  %2546 = vmatprep.subr.mxu0 %v442
  %2547 = vmatpush1.msra.mxu0 %v441
  %2548 = vmatprep.subr.mxu0 %v455
  %2549 = vmatpush1.msra.mxu0 %v454
  %2550 = vmatprep.subr.mxu0 %v468
  %2551 = vmatpush1.msra.mxu0 %v467
  %2552 = vmatprep.subr.mxu0 %v481
  %2553 = vmatpush1.msra.mxu0 %v480
  %2554 = vmatprep.subr.mxu0 %v494
  %2555 = vmatpush1.msra.mxu0 %v493
  %2556 = vmatprep.subr.mxu0 %v507
  %2557 = vmatpush1.msra.mxu0 %v506
  %2558 = vmatprep.subr.mxu0 %v520
  %2559 = vmatpush1.msra.mxu0 %v519
  %2560 = vmatprep.subr.mxu0 %v533
  %2561 = vmatpush1.msra.mxu0 %v532
  %2562 = vmatprep.subr.mxu0 %v546
  %2563 = vmatpush1.msra.mxu0 %v545
  %2564 = vmatprep.subr.mxu0 %v559
  %2565 = vmatpush1.msra.mxu0 %v558
  %2566 = vmatprep.subr.mxu0 %v572
  %2567 = vmatpush1.msra.mxu0 %v571
  %2568 = vmatprep.subr.mxu0 %v585
  %2569 = vmatpush1.msra.mxu0 %v584
  %2570 = vmatprep.subr.mxu0 %v598
  %2571 = vmatpush1.msra.mxu0 %v597
  %2572 = vmatprep.subr.mxu0 %v611
  %2573 = vmatpush1.msra.mxu0 %v610
  %2574 = vmatprep.subr.mxu0 %v624
  %2575 = vmatpush1.msra.mxu0 %v623
  %2576 = vmatprep.subr.mxu0 %v637
  %2577 = vmatpush1.msra.mxu0 %v636
  %2578 = vmatprep.subr.mxu0 %v650
  %2579 = vmatpush1.msra.mxu0 %v649
  %2580 = vmatprep.subr.mxu0 %v663
  %2581 = vmatpush1.msra.mxu0 %v662
  %2582 = vmatprep.subr.mxu0 %v676
  %2583 = vmatpush1.msra.mxu0 %v675
  %2584 = vmatprep.subr.mxu0 %v689
  %2585 = vmatpush1.msra.mxu0 %v688
  %2586 = vmatprep.subr.mxu0 %v702
  %2587 = vmatpush1.msra.mxu0 %v701
  %2588 = vmatprep.subr.mxu0 %v715
  %2589 = vmatpush1.msra.mxu0 %v714
  %2590 = vmatprep.subr.mxu0 %v728
  %2591 = vmatpush1.msra.mxu0 %v727
  %2592 = vmatprep.subr.mxu0 %v741
  %2593 = vmatpush1.msra.mxu0 %v740
  %2594 = vmatprep.subr.mxu0 %v754
  %2595 = vmatpush1.msra.mxu0 %v753
  %2596 = vmatprep.subr.mxu0 %v767
  %2597 = vmatpush1.msra.mxu0 %v766
  %2598 = vmatprep.subr.mxu0 %v780
  %2599 = vmatpush1.msra.mxu0 %v779
  %2600 = vmatprep.subr.mxu0 %v793
  %2601 = vmatpush1.msra.mxu0 %v792
  %2602 = vmatprep.subr.mxu0 %v806
  %2603 = vmatpush1.msra.mxu0 %v805
  %2604 = vmatprep.subr.mxu0 %v819
  %2605 = vmatpush1.msra.mxu0 %v818
  %2606 = vmatprep.subr.mxu0 %v832
  %2607 = vmatpush1.msra.mxu0 %v831
  %2608 = vmatprep.subr.mxu0 %v845
  %2609 = vmatpush1.msra.mxu0 %v844
  %2610 = vmatprep.mubr.f32.mxu0 %v1317
  %2611 = vmatmul.mubr.f32.gmra.mrb[0].mxu0 %v1313
  %v2612 = vpop.f32.mrb[0].mxu0
  %v2613 = vadd.f32 %v2542, %v2612
  %v2614 = vpop.f32.mrb[0].mxu0
  %v2615 = vadd.f32 %v2544, %v2614
  %2616 = vdwg.mxu0
  %2617 = vmatprep.subr.mxu0 %v858
  %2618 = vmatpush1.msra.mxu0 %v857
  %2619 = vmatprep.subr.mxu0 %v871
  %2620 = vmatpush1.msra.mxu0 %v870
  %2621 = vmatprep.subr.mxu0 %v884
  %2622 = vmatpush1.msra.mxu0 %v883
  %2623 = vmatprep.subr.mxu0 %v897
  %2624 = vmatpush1.msra.mxu0 %v896
  %2625 = vmatprep.subr.mxu0 %v910
  %2626 = vmatpush1.msra.mxu0 %v909
  %2627 = vmatprep.subr.mxu0 %v923
  %2628 = vmatpush1.msra.mxu0 %v922
  %2629 = vmatprep.subr.mxu0 %v936
  %2630 = vmatpush1.msra.mxu0 %v935
  %2631 = vmatprep.subr.mxu0 %v949
  %2632 = vmatpush1.msra.mxu0 %v948
  %2633 = vmatprep.subr.mxu0 %v962
  %2634 = vmatpush1.msra.mxu0 %v961
  %2635 = vmatprep.subr.mxu0 %v975
  %2636 = vmatpush1.msra.mxu0 %v974
  %2637 = vmatprep.subr.mxu0 %v988
  %2638 = vmatpush1.msra.mxu0 %v987
  %2639 = vmatprep.subr.mxu0 %v1001
  %2640 = vmatpush1.msra.mxu0 %v1000
  %2641 = vmatprep.subr.mxu0 %v1014
  %2642 = vmatpush1.msra.mxu0 %v1013
  %2643 = vmatprep.subr.mxu0 %v1027
  %2644 = vmatpush1.msra.mxu0 %v1026
  %2645 = vmatprep.subr.mxu0 %v1040
  %2646 = vmatpush1.msra.mxu0 %v1039
  %2647 = vmatprep.subr.mxu0 %v1053
  %2648 = vmatpush1.msra.mxu0 %v1052
  %2649 = vmatprep.subr.mxu0 %v1066
  %2650 = vmatpush1.msra.mxu0 %v1065
  %2651 = vmatprep.subr.mxu0 %v1079
  %2652 = vmatpush1.msra.mxu0 %v1078
  %2653 = vmatprep.subr.mxu0 %v1092
  %2654 = vmatpush1.msra.mxu0 %v1091
  %2655 = vmatprep.subr.mxu0 %v1105
  %2656 = vmatpush1.msra.mxu0 %v1104
  %2657 = vmatprep.subr.mxu0 %v1118
  %2658 = vmatpush1.msra.mxu0 %v1117
  %2659 = vmatprep.subr.mxu0 %v1131
  %2660 = vmatpush1.msra.mxu0 %v1130
  %2661 = vmatprep.subr.mxu0 %v1144
  %2662 = vmatpush1.msra.mxu0 %v1143
  %2663 = vmatprep.subr.mxu0 %v1157
  %2664 = vmatpush1.msra.mxu0 %v1156
  %2665 = vmatprep.subr.mxu0 %v1170
  %2666 = vmatpush1.msra.mxu0 %v1169
  %2667 = vmatprep.subr.mxu0 %v1183
  %2668 = vmatpush1.msra.mxu0 %v1182
  %2669 = vmatprep.subr.mxu0 %v1196
  %2670 = vmatpush1.msra.mxu0 %v1195
  %2671 = vmatprep.subr.mxu0 %v1209
  %2672 = vmatpush1.msra.mxu0 %v1208
  %2673 = vmatprep.subr.mxu0 %v1222
  %2674 = vmatpush1.msra.mxu0 %v1221
  %2675 = vmatprep.subr.mxu0 %v1235
  %2676 = vmatpush1.msra.mxu0 %v1234
  %2677 = vmatprep.subr.mxu0 %v1248
  %2678 = vmatpush1.msra.mxu0 %v1247
  %2679 = vmatprep.subr.mxu0 %v1261
  %2680 = vmatpush1.msra.mxu0 %v1260
  %2681 = vmatprep.mubr.f32.mxu0 %v1325
  %2682 = vmatmul.mubr.f32.gmra.mrb[0].mxu0 %v1321
  %v2683 = vpop.f32.mrb[0].mxu0
  %v2684 = vadd.f32 %v2613, %v2683
  %v2685 = vpop.f32.mrb[0].mxu0
  %v2686 = vadd.f32 %v2615, %v2685
  %2687 = vdwg.mxu0
  %2688 = vmatprep.subr.mxu0 %v1274
  %2689 = vmatpush1.msra.mxu0 %v1273
  %2690 = vmatprep.subr.mxu0 %v1287
  %2691 = vmatpush1.msra.mxu0 %v1286
  %2692 = vmatprep.subr.mxu0 0.0
  %2693 = vmatpush1.msra.mxu0 0.0
  %2694 = vmatprep.subr.mxu0 0.0
  %2695 = vmatpush1.msra.mxu0 0.0
  %2696 = vmatprep.subr.mxu0 0.0
  %2697 = vmatpush1.msra.mxu0 0.0
  %2698 = vmatprep.subr.mxu0 0.0
  %2699 = vmatpush1.msra.mxu0 0.0
  %2700 = vmatprep.subr.mxu0 0.0
  %2701 = vmatpush1.msra.mxu0 0.0
  %2702 = vmatprep.subr.mxu0 0.0
  %2703 = vmatpush1.msra.mxu0 0.0
  %2704 = vmatprep.subr.mxu0 0.0
  %2705 = vmatpush1.msra.mxu0 0.0
  %2706 = vmatprep.subr.mxu0 0.0
  %2707 = vmatpush1.msra.mxu0 0.0
  %2708 = vmatprep.subr.mxu0 0.0
  %2709 = vmatpush1.msra.mxu0 0.0
  %2710 = vmatprep.subr.mxu0 0.0
  %2711 = vmatpush1.msra.mxu0 0.0
  %2712 = vmatprep.subr.mxu0 0.0
  %2713 = vmatpush1.msra.mxu0 0.0
  %2714 = vmatprep.subr.mxu0 0.0
  %2715 = vmatpush1.msra.mxu0 0.0
  %2716 = vmatprep.subr.mxu0 0.0
  %2717 = vmatpush1.msra.mxu0 0.0
  %2718 = vmatprep.subr.mxu0 0.0
  %2719 = vmatpush1.msra.mxu0 0.0
  %2720 = vmatprep.subr.mxu0 0.0
  %2721 = vmatpush1.msra.mxu0 0.0
  %2722 = vmatprep.subr.mxu0 0.0
  %2723 = vmatpush1.msra.mxu0 0.0
  %2724 = vmatprep.subr.mxu0 0.0
  %2725 = vmatpush1.msra.mxu0 0.0
  %2726 = vmatprep.subr.mxu0 0.0
  %2727 = vmatpush1.msra.mxu0 0.0
  %2728 = vmatprep.subr.mxu0 0.0
  %2729 = vmatpush1.msra.mxu0 0.0
  %2730 = vmatprep.subr.mxu0 0.0
  %2731 = vmatpush1.msra.mxu0 0.0
  %2732 = vmatprep.subr.mxu0 0.0
  %2733 = vmatpush1.msra.mxu0 0.0
  %2734 = vmatprep.subr.mxu0 0.0
  %2735 = vmatpush1.msra.mxu0 0.0
  %2736 = vmatprep.subr.mxu0 0.0
  %2737 = vmatpush1.msra.mxu0 0.0
  %2738 = vmatprep.subr.mxu0 0.0
  %2739 = vmatpush1.msra.mxu0 0.0
  %2740 = vmatprep.subr.mxu0 0.0
  %2741 = vmatpush1.msra.mxu0 0.0
  %2742 = vmatprep.subr.mxu0 0.0
  %2743 = vmatpush1.msra.mxu0 0.0
  %2744 = vmatprep.subr.mxu0 0.0
  %2745 = vmatpush1.msra.mxu0 0.0
  %2746 = vmatprep.subr.mxu0 0.0
  %2747 = vmatpush1.msra.mxu0 0.0
  %2748 = vmatprep.subr.mxu0 0.0
  %2749 = vmatpush1.msra.mxu0 0.0
  %2750 = vmatprep.subr.mxu0 0.0
  %2751 = vmatpush1.msra.mxu0 0.0
  %2752 = vmatprep.mubr.f32.mxu0 0.0
  %2753 = vmatmul.mubr.f32.gmra.mrb[0].mxu0 %v1337
  %v2754 = vpop.f32.mrb[0].mxu0
  %v2755 = vadd.f32 %v2684, %v2754
  %v2756 = vpop.f32.mrb[0].mxu0
  %v2757 = vadd.f32 %v2686, %v2756
  %2758 = vdwg.mxu0
  %2759 = vmatprep.subr.mxu0 %v28
  %2760 = vmatpush1.msra.mxu0 %v27
  %2761 = vmatprep.subr.mxu0 %v41
  %2762 = vmatpush1.msra.mxu0 %v40
  %2763 = vmatprep.subr.mxu0 %v54
  %2764 = vmatpush1.msra.mxu0 %v53
  %2765 = vmatprep.subr.mxu0 %v67
  %2766 = vmatpush1.msra.mxu0 %v66
  %2767 = vmatprep.subr.mxu0 %v80
  %2768 = vmatpush1.msra.mxu0 %v79
  %2769 = vmatprep.subr.mxu0 %v93
  %2770 = vmatpush1.msra.mxu0 %v92
  %2771 = vmatprep.subr.mxu0 %v106
  %2772 = vmatpush1.msra.mxu0 %v105
  %2773 = vmatprep.subr.mxu0 %v119
  %2774 = vmatpush1.msra.mxu0 %v118
  %2775 = vmatprep.subr.mxu0 %v132
  %2776 = vmatpush1.msra.mxu0 %v131
  %2777 = vmatprep.subr.mxu0 %v145
  %2778 = vmatpush1.msra.mxu0 %v144
  %2779 = vmatprep.subr.mxu0 %v158
  %2780 = vmatpush1.msra.mxu0 %v157
  %2781 = vmatprep.subr.mxu0 %v171
  %2782 = vmatpush1.msra.mxu0 %v170
  %2783 = vmatprep.subr.mxu0 %v184
  %2784 = vmatpush1.msra.mxu0 %v183
  %2785 = vmatprep.subr.mxu0 %v197
  %2786 = vmatpush1.msra.mxu0 %v196
  %2787 = vmatprep.subr.mxu0 %v210
  %2788 = vmatpush1.msra.mxu0 %v209
  %2789 = vmatprep.subr.mxu0 %v223
  %2790 = vmatpush1.msra.mxu0 %v222
  %2791 = vmatprep.subr.mxu0 %v236
  %2792 = vmatpush1.msra.mxu0 %v235
  %2793 = vmatprep.subr.mxu0 %v249
  %2794 = vmatpush1.msra.mxu0 %v248
  %2795 = vmatprep.subr.mxu0 %v262
  %2796 = vmatpush1.msra.mxu0 %v261
  %2797 = vmatprep.subr.mxu0 %v275
  %2798 = vmatpush1.msra.mxu0 %v274
  %2799 = vmatprep.subr.mxu0 %v288
  %2800 = vmatpush1.msra.mxu0 %v287
  %2801 = vmatprep.subr.mxu0 %v301
  %2802 = vmatpush1.msra.mxu0 %v300
  %2803 = vmatprep.subr.mxu0 %v314
  %2804 = vmatpush1.msra.mxu0 %v313
  %2805 = vmatprep.subr.mxu0 %v327
  %2806 = vmatpush1.msra.mxu0 %v326
  %2807 = vmatprep.subr.mxu0 %v340
  %2808 = vmatpush1.msra.mxu0 %v339
  %2809 = vmatprep.subr.mxu0 %v353
  %2810 = vmatpush1.msra.mxu0 %v352
  %2811 = vmatprep.subr.mxu0 %v366
  %2812 = vmatpush1.msra.mxu0 %v365
  %2813 = vmatprep.subr.mxu0 %v379
  %2814 = vmatpush1.msra.mxu0 %v378
  %2815 = vmatprep.subr.mxu0 %v392
  %2816 = vmatpush1.msra.mxu0 %v391
  %2817 = vmatprep.subr.mxu0 %v405
  %2818 = vmatpush1.msra.mxu0 %v404
  %2819 = vmatprep.subr.mxu0 %v418
  %2820 = vmatpush1.msra.mxu0 %v417
  %2821 = vmatprep.subr.mxu0 %v431
  %2822 = vmatpush1.msra.mxu0 %v430
  %2823 = vmatprep.mubr.f32.mxu0 %v1309
  %2824 = vmatmul.mubr.f32.gmra.mrb[0].mxu0 %v1305
  %v2825 = vpop.f32.mrb[0].mxu0
  %v2826 = vadd.f32 %v1300, %v2825
  %v2827 = vpop.f32.mrb[0].mxu0
  %v2828 = vadd.f32 %v1300, %v2827
  %2829 = vdwg.mxu0
  %2830 = vmatprep.subr.mxu0 %v444
  %2831 = vmatpush1.msra.mxu0 %v443
  %2832 = vmatprep.subr.mxu0 %v457
  %2833 = vmatpush1.msra.mxu0 %v456
  %2834 = vmatprep.subr.mxu0 %v470
  %2835 = vmatpush1.msra.mxu0 %v469
  %2836 = vmatprep.subr.mxu0 %v483
  %2837 = vmatpush1.msra.mxu0 %v482
  %2838 = vmatprep.subr.mxu0 %v496
  %2839 = vmatpush1.msra.mxu0 %v495
  %2840 = vmatprep.subr.mxu0 %v509
  %2841 = vmatpush1.msra.mxu0 %v508
  %2842 = vmatprep.subr.mxu0 %v522
  %2843 = vmatpush1.msra.mxu0 %v521
  %2844 = vmatprep.subr.mxu0 %v535
  %2845 = vmatpush1.msra.mxu0 %v534
  %2846 = vmatprep.subr.mxu0 %v548
  %2847 = vmatpush1.msra.mxu0 %v547
  %2848 = vmatprep.subr.mxu0 %v561
  %2849 = vmatpush1.msra.mxu0 %v560
  %2850 = vmatprep.subr.mxu0 %v574
  %2851 = vmatpush1.msra.mxu0 %v573
  %2852 = vmatprep.subr.mxu0 %v587
  %2853 = vmatpush1.msra.mxu0 %v586
  %2854 = vmatprep.subr.mxu0 %v600
  %2855 = vmatpush1.msra.mxu0 %v599
  %2856 = vmatprep.subr.mxu0 %v613
  %2857 = vmatpush1.msra.mxu0 %v612
  %2858 = vmatprep.subr.mxu0 %v626
  %2859 = vmatpush1.msra.mxu0 %v625
  %2860 = vmatprep.subr.mxu0 %v639
  %2861 = vmatpush1.msra.mxu0 %v638
  %2862 = vmatprep.subr.mxu0 %v652
  %2863 = vmatpush1.msra.mxu0 %v651
  %2864 = vmatprep.subr.mxu0 %v665
  %2865 = vmatpush1.msra.mxu0 %v664
  %2866 = vmatprep.subr.mxu0 %v678
  %2867 = vmatpush1.msra.mxu0 %v677
  %2868 = vmatprep.subr.mxu0 %v691
  %2869 = vmatpush1.msra.mxu0 %v690
  %2870 = vmatprep.subr.mxu0 %v704
  %2871 = vmatpush1.msra.mxu0 %v703
  %2872 = vmatprep.subr.mxu0 %v717
  %2873 = vmatpush1.msra.mxu0 %v716
  %2874 = vmatprep.subr.mxu0 %v730
  %2875 = vmatpush1.msra.mxu0 %v729
  %2876 = vmatprep.subr.mxu0 %v743
  %2877 = vmatpush1.msra.mxu0 %v742
  %2878 = vmatprep.subr.mxu0 %v756
  %2879 = vmatpush1.msra.mxu0 %v755
  %2880 = vmatprep.subr.mxu0 %v769
  %2881 = vmatpush1.msra.mxu0 %v768
  %2882 = vmatprep.subr.mxu0 %v782
  %2883 = vmatpush1.msra.mxu0 %v781
  %2884 = vmatprep.subr.mxu0 %v795
  %2885 = vmatpush1.msra.mxu0 %v794
  %2886 = vmatprep.subr.mxu0 %v808
  %2887 = vmatpush1.msra.mxu0 %v807
  %2888 = vmatprep.subr.mxu0 %v821
  %2889 = vmatpush1.msra.mxu0 %v820
  %2890 = vmatprep.subr.mxu0 %v834
  %2891 = vmatpush1.msra.mxu0 %v833
  %2892 = vmatprep.subr.mxu0 %v847
  %2893 = vmatpush1.msra.mxu0 %v846
  %2894 = vmatprep.mubr.f32.mxu0 %v1317
  %2895 = vmatmul.mubr.f32.gmra.mrb[0].mxu0 %v1313
  %v2896 = vpop.f32.mrb[0].mxu0
  %v2897 = vadd.f32 %v2826, %v2896
  %v2898 = vpop.f32.mrb[0].mxu0
  %v2899 = vadd.f32 %v2828, %v2898
  %2900 = vdwg.mxu0
  %2901 = vmatprep.subr.mxu0 %v860
  %2902 = vmatpush1.msra.mxu0 %v859
  %2903 = vmatprep.subr.mxu0 %v873
  %2904 = vmatpush1.msra.mxu0 %v872
  %2905 = vmatprep.subr.mxu0 %v886
  %2906 = vmatpush1.msra.mxu0 %v885
  %2907 = vmatprep.subr.mxu0 %v899
  %2908 = vmatpush1.msra.mxu0 %v898
  %2909 = vmatprep.subr.mxu0 %v912
  %2910 = vmatpush1.msra.mxu0 %v911
  %2911 = vmatprep.subr.mxu0 %v925
  %2912 = vmatpush1.msra.mxu0 %v924
  %2913 = vmatprep.subr.mxu0 %v938
  %2914 = vmatpush1.msra.mxu0 %v937
  %2915 = vmatprep.subr.mxu0 %v951
  %2916 = vmatpush1.msra.mxu0 %v950
  %2917 = vmatprep.subr.mxu0 %v964
  %2918 = vmatpush1.msra.mxu0 %v963
  %2919 = vmatprep.subr.mxu0 %v977
  %2920 = vmatpush1.msra.mxu0 %v976
  %2921 = vmatprep.subr.mxu0 %v990
  %2922 = vmatpush1.msra.mxu0 %v989
  %2923 = vmatprep.subr.mxu0 %v1003
  %2924 = vmatpush1.msra.mxu0 %v1002
  %2925 = vmatprep.subr.mxu0 %v1016
  %2926 = vmatpush1.msra.mxu0 %v1015
  %2927 = vmatprep.subr.mxu0 %v1029
  %2928 = vmatpush1.msra.mxu0 %v1028
  %2929 = vmatprep.subr.mxu0 %v1042
  %2930 = vmatpush1.msra.mxu0 %v1041
  %2931 = vmatprep.subr.mxu0 %v1055
  %2932 = vmatpush1.msra.mxu0 %v1054
  %2933 = vmatprep.subr.mxu0 %v1068
  %2934 = vmatpush1.msra.mxu0 %v1067
  %2935 = vmatprep.subr.mxu0 %v1081
  %2936 = vmatpush1.msra.mxu0 %v1080
  %2937 = vmatprep.subr.mxu0 %v1094
  %2938 = vmatpush1.msra.mxu0 %v1093
  %2939 = vmatprep.subr.mxu0 %v1107
  %2940 = vmatpush1.msra.mxu0 %v1106
  %2941 = vmatprep.subr.mxu0 %v1120
  %2942 = vmatpush1.msra.mxu0 %v1119
  %2943 = vmatprep.subr.mxu0 %v1133
  %2944 = vmatpush1.msra.mxu0 %v1132
  %2945 = vmatprep.subr.mxu0 %v1146
  %2946 = vmatpush1.msra.mxu0 %v1145
  %2947 = vmatprep.subr.mxu0 %v1159
  %2948 = vmatpush1.msra.mxu0 %v1158
  %2949 = vmatprep.subr.mxu0 %v1172
  %2950 = vmatpush1.msra.mxu0 %v1171
  %2951 = vmatprep.subr.mxu0 %v1185
  %2952 = vmatpush1.msra.mxu0 %v1184
  %2953 = vmatprep.subr.mxu0 %v1198
  %2954 = vmatpush1.msra.mxu0 %v1197
  %2955 = vmatprep.subr.mxu0 %v1211
  %2956 = vmatpush1.msra.mxu0 %v1210
  %2957 = vmatprep.subr.mxu0 %v1224
  %2958 = vmatpush1.msra.mxu0 %v1223
  %2959 = vmatprep.subr.mxu0 %v1237
  %2960 = vmatpush1.msra.mxu0 %v1236
  %2961 = vmatprep.subr.mxu0 %v1250
  %2962 = vmatpush1.msra.mxu0 %v1249
  %2963 = vmatprep.subr.mxu0 %v1263
  %2964 = vmatpush1.msra.mxu0 %v1262
  %2965 = vmatprep.mubr.f32.mxu0 %v1325
  %2966 = vmatmul.mubr.f32.gmra.mrb[0].mxu0 %v1321
  %v2967 = vpop.f32.mrb[0].mxu0
  %v2968 = vadd.f32 %v2897, %v2967
  %v2969 = vpop.f32.mrb[0].mxu0
  %v2970 = vadd.f32 %v2899, %v2969
  %2971 = vdwg.mxu0
  %2972 = vmatprep.subr.mxu0 %v1276
  %2973 = vmatpush1.msra.mxu0 %v1275
  %2974 = vmatprep.subr.mxu0 %v1289
  %2975 = vmatpush1.msra.mxu0 %v1288
  %2976 = vmatprep.subr.mxu0 0.0
  %2977 = vmatpush1.msra.mxu0 0.0
  %2978 = vmatprep.subr.mxu0 0.0
  %2979 = vmatpush1.msra.mxu0 0.0
  %2980 = vmatprep.subr.mxu0 0.0
  %2981 = vmatpush1.msra.mxu0 0.0
  %2982 = vmatprep.subr.mxu0 0.0
  %2983 = vmatpush1.msra.mxu0 0.0
  %2984 = vmatprep.subr.mxu0 0.0
  %2985 = vmatpush1.msra.mxu0 0.0
  %2986 = vmatprep.subr.mxu0 0.0
  %2987 = vmatpush1.msra.mxu0 0.0
  %2988 = vmatprep.subr.mxu0 0.0
  %2989 = vmatpush1.msra.mxu0 0.0
  %2990 = vmatprep.subr.mxu0 0.0
  %2991 = vmatpush1.msra.mxu0 0.0
  %2992 = vmatprep.subr.mxu0 0.0
  %2993 = vmatpush1.msra.mxu0 0.0
  %2994 = vmatprep.subr.mxu0 0.0
  %2995 = vmatpush1.msra.mxu0 0.0
  %2996 = vmatprep.subr.mxu0 0.0
  %2997 = vmatpush1.msra.mxu0 0.0
  %2998 = vmatprep.subr.mxu0 0.0
  %2999 = vmatpush1.msra.mxu0 0.0
  %3000 = vmatprep.subr.mxu0 0.0
  %3001 = vmatpush1.msra.mxu0 0.0
  %3002 = vmatprep.subr.mxu0 0.0
  %3003 = vmatpush1.msra.mxu0 0.0
  %3004 = vmatprep.subr.mxu0 0.0
  %3005 = vmatpush1.msra.mxu0 0.0
  %3006 = vmatprep.subr.mxu0 0.0
  %3007 = vmatpush1.msra.mxu0 0.0
  %3008 = vmatprep.subr.mxu0 0.0
  %3009 = vmatpush1.msra.mxu0 0.0
  %3010 = vmatprep.subr.mxu0 0.0
  %3011 = vmatpush1.msra.mxu0 0.0
  %3012 = vmatprep.subr.mxu0 0.0
  %3013 = vmatpush1.msra.mxu0 0.0
  %3014 = vmatprep.subr.mxu0 0.0
  %3015 = vmatpush1.msra.mxu0 0.0
  %3016 = vmatprep.subr.mxu0 0.0
  %3017 = vmatpush1.msra.mxu0 0.0
  %3018 = vmatprep.subr.mxu0 0.0
  %3019 = vmatpush1.msra.mxu0 0.0
  %3020 = vmatprep.subr.mxu0 0.0
  %3021 = vmatpush1.msra.mxu0 0.0
  %3022 = vmatprep.subr.mxu0 0.0
  %3023 = vmatpush1.msra.mxu0 0.0
  %3024 = vmatprep.subr.mxu0 0.0
  %3025 = vmatpush1.msra.mxu0 0.0
  %3026 = vmatprep.subr.mxu0 0.0
  %3027 = vmatpush1.msra.mxu0 0.0
  %3028 = vmatprep.subr.mxu0 0.0
  %3029 = vmatpush1.msra.mxu0 0.0
  %3030 = vmatprep.subr.mxu0 0.0
  %3031 = vmatpush1.msra.mxu0 0.0
  %3032 = vmatprep.subr.mxu0 0.0
  %3033 = vmatpush1.msra.mxu0 0.0
  %3034 = vmatprep.subr.mxu0 0.0
  %3035 = vmatpush1.msra.mxu0 0.0
  %3036 = vmatprep.mubr.f32.mxu0 0.0
  %3037 = vmatmul.mubr.f32.gmra.mrb[0].mxu0 %v1337
  %v3038 = vpop.f32.mrb[0].mxu0
  %v3039 = vadd.f32 %v2968, %v3038
  %v3040 = vpop.f32.mrb[0].mxu0
  %v3041 = vadd.f32 %v2970, %v3040
  %3042 = vdwg.mxu0
  %3043 = vmatprep.subr.mxu0 0.0
  %3044 = vmatpush1.msra.mxu0 %v29
  %3045 = vmatprep.subr.mxu0 0.0
  %3046 = vmatpush1.msra.mxu0 %v42
  %3047 = vmatprep.subr.mxu0 0.0
  %3048 = vmatpush1.msra.mxu0 %v55
  %3049 = vmatprep.subr.mxu0 0.0
  %3050 = vmatpush1.msra.mxu0 %v68
  %3051 = vmatprep.subr.mxu0 0.0
  %3052 = vmatpush1.msra.mxu0 %v81
  %3053 = vmatprep.subr.mxu0 0.0
  %3054 = vmatpush1.msra.mxu0 %v94
  %3055 = vmatprep.subr.mxu0 0.0
  %3056 = vmatpush1.msra.mxu0 %v107
  %3057 = vmatprep.subr.mxu0 0.0
  %3058 = vmatpush1.msra.mxu0 %v120
  %3059 = vmatprep.subr.mxu0 0.0
  %3060 = vmatpush1.msra.mxu0 %v133
  %3061 = vmatprep.subr.mxu0 0.0
  %3062 = vmatpush1.msra.mxu0 %v146
  %3063 = vmatprep.subr.mxu0 0.0
  %3064 = vmatpush1.msra.mxu0 %v159
  %3065 = vmatprep.subr.mxu0 0.0
  %3066 = vmatpush1.msra.mxu0 %v172
  %3067 = vmatprep.subr.mxu0 0.0
  %3068 = vmatpush1.msra.mxu0 %v185
  %3069 = vmatprep.subr.mxu0 0.0
  %3070 = vmatpush1.msra.mxu0 %v198
  %3071 = vmatprep.subr.mxu0 0.0
  %3072 = vmatpush1.msra.mxu0 %v211
  %3073 = vmatprep.subr.mxu0 0.0
  %3074 = vmatpush1.msra.mxu0 %v224
  %3075 = vmatprep.subr.mxu0 0.0
  %3076 = vmatpush1.msra.mxu0 %v237
  %3077 = vmatprep.subr.mxu0 0.0
  %3078 = vmatpush1.msra.mxu0 %v250
  %3079 = vmatprep.subr.mxu0 0.0
  %3080 = vmatpush1.msra.mxu0 %v263
  %3081 = vmatprep.subr.mxu0 0.0
  %3082 = vmatpush1.msra.mxu0 %v276
  %3083 = vmatprep.subr.mxu0 0.0
  %3084 = vmatpush1.msra.mxu0 %v289
  %3085 = vmatprep.subr.mxu0 0.0
  %3086 = vmatpush1.msra.mxu0 %v302
  %3087 = vmatprep.subr.mxu0 0.0
  %3088 = vmatpush1.msra.mxu0 %v315
  %3089 = vmatprep.subr.mxu0 0.0
  %3090 = vmatpush1.msra.mxu0 %v328
  %3091 = vmatprep.subr.mxu0 0.0
  %3092 = vmatpush1.msra.mxu0 %v341
  %3093 = vmatprep.subr.mxu0 0.0
  %3094 = vmatpush1.msra.mxu0 %v354
  %3095 = vmatprep.subr.mxu0 0.0
  %3096 = vmatpush1.msra.mxu0 %v367
  %3097 = vmatprep.subr.mxu0 0.0
  %3098 = vmatpush1.msra.mxu0 %v380
  %3099 = vmatprep.subr.mxu0 0.0
  %3100 = vmatpush1.msra.mxu0 %v393
  %3101 = vmatprep.subr.mxu0 0.0
  %3102 = vmatpush1.msra.mxu0 %v406
  %3103 = vmatprep.subr.mxu0 0.0
  %3104 = vmatpush1.msra.mxu0 %v419
  %3105 = vmatprep.subr.mxu0 0.0
  %3106 = vmatpush1.msra.mxu0 %v432
  %3107 = vmatprep.mubr.f32.mxu0 %v1309
  %3108 = vmatmul.mubr.f32.gmra.mrb[0].mxu0 %v1305
  %v3109 = vpop.f32.mrb[0].mxu0
  %v3110 = vadd.f32 %v1300, %v3109
  %v3111 = vpop.f32.mrb[0].mxu0
  %3112 = vdwg.mxu0
  %3113 = vmatprep.subr.mxu0 0.0
  %3114 = vmatpush1.msra.mxu0 %v445
  %3115 = vmatprep.subr.mxu0 0.0
  %3116 = vmatpush1.msra.mxu0 %v458
  %3117 = vmatprep.subr.mxu0 0.0
  %3118 = vmatpush1.msra.mxu0 %v471
  %3119 = vmatprep.subr.mxu0 0.0
  %3120 = vmatpush1.msra.mxu0 %v484
  %3121 = vmatprep.subr.mxu0 0.0
  %3122 = vmatpush1.msra.mxu0 %v497
  %3123 = vmatprep.subr.mxu0 0.0
  %3124 = vmatpush1.msra.mxu0 %v510
  %3125 = vmatprep.subr.mxu0 0.0
  %3126 = vmatpush1.msra.mxu0 %v523
  %3127 = vmatprep.subr.mxu0 0.0
  %3128 = vmatpush1.msra.mxu0 %v536
  %3129 = vmatprep.subr.mxu0 0.0
  %3130 = vmatpush1.msra.mxu0 %v549
  %3131 = vmatprep.subr.mxu0 0.0
  %3132 = vmatpush1.msra.mxu0 %v562
  %3133 = vmatprep.subr.mxu0 0.0
  %3134 = vmatpush1.msra.mxu0 %v575
  %3135 = vmatprep.subr.mxu0 0.0
  %3136 = vmatpush1.msra.mxu0 %v588
  %3137 = vmatprep.subr.mxu0 0.0
  %3138 = vmatpush1.msra.mxu0 %v601
  %3139 = vmatprep.subr.mxu0 0.0
  %3140 = vmatpush1.msra.mxu0 %v614
  %3141 = vmatprep.subr.mxu0 0.0
  %3142 = vmatpush1.msra.mxu0 %v627
  %3143 = vmatprep.subr.mxu0 0.0
  %3144 = vmatpush1.msra.mxu0 %v640
  %3145 = vmatprep.subr.mxu0 0.0
  %3146 = vmatpush1.msra.mxu0 %v653
  %3147 = vmatprep.subr.mxu0 0.0
  %3148 = vmatpush1.msra.mxu0 %v666
  %3149 = vmatprep.subr.mxu0 0.0
  %3150 = vmatpush1.msra.mxu0 %v679
  %3151 = vmatprep.subr.mxu0 0.0
  %3152 = vmatpush1.msra.mxu0 %v692
  %3153 = vmatprep.subr.mxu0 0.0
  %3154 = vmatpush1.msra.mxu0 %v705
  %3155 = vmatprep.subr.mxu0 0.0
  %3156 = vmatpush1.msra.mxu0 %v718
  %3157 = vmatprep.subr.mxu0 0.0
  %3158 = vmatpush1.msra.mxu0 %v731
  %3159 = vmatprep.subr.mxu0 0.0
  %3160 = vmatpush1.msra.mxu0 %v744
  %3161 = vmatprep.subr.mxu0 0.0
  %3162 = vmatpush1.msra.mxu0 %v757
  %3163 = vmatprep.subr.mxu0 0.0
  %3164 = vmatpush1.msra.mxu0 %v770
  %3165 = vmatprep.subr.mxu0 0.0
  %3166 = vmatpush1.msra.mxu0 %v783
  %3167 = vmatprep.subr.mxu0 0.0
  %3168 = vmatpush1.msra.mxu0 %v796
  %3169 = vmatprep.subr.mxu0 0.0
  %3170 = vmatpush1.msra.mxu0 %v809
  %3171 = vmatprep.subr.mxu0 0.0
  %3172 = vmatpush1.msra.mxu0 %v822
  %3173 = vmatprep.subr.mxu0 0.0
  %3174 = vmatpush1.msra.mxu0 %v835
  %3175 = vmatprep.subr.mxu0 0.0
  %3176 = vmatpush1.msra.mxu0 %v848
  %3177 = vmatprep.mubr.f32.mxu0 %v1317
  %3178 = vmatmul.mubr.f32.gmra.mrb[0].mxu0 %v1313
  %v3179 = vpop.f32.mrb[0].mxu0
  %v3180 = vadd.f32 %v3110, %v3179
  %v3181 = vpop.f32.mrb[0].mxu0
  %3182 = vdwg.mxu0
  %3183 = vmatprep.subr.mxu0 0.0
  %3184 = vmatpush1.msra.mxu0 %v861
  %3185 = vmatprep.subr.mxu0 0.0
  %3186 = vmatpush1.msra.mxu0 %v874
  %3187 = vmatprep.subr.mxu0 0.0
  %3188 = vmatpush1.msra.mxu0 %v887
  %3189 = vmatprep.subr.mxu0 0.0
  %3190 = vmatpush1.msra.mxu0 %v900
  %3191 = vmatprep.subr.mxu0 0.0
  %3192 = vmatpush1.msra.mxu0 %v913
  %3193 = vmatprep.subr.mxu0 0.0
  %3194 = vmatpush1.msra.mxu0 %v926
  %3195 = vmatprep.subr.mxu0 0.0
  %3196 = vmatpush1.msra.mxu0 %v939
  %3197 = vmatprep.subr.mxu0 0.0
  %3198 = vmatpush1.msra.mxu0 %v952
  %3199 = vmatprep.subr.mxu0 0.0
  %3200 = vmatpush1.msra.mxu0 %v965
  %3201 = vmatprep.subr.mxu0 0.0
  %3202 = vmatpush1.msra.mxu0 %v978
  %3203 = vmatprep.subr.mxu0 0.0
  %3204 = vmatpush1.msra.mxu0 %v991
  %3205 = vmatprep.subr.mxu0 0.0
  %3206 = vmatpush1.msra.mxu0 %v1004
  %3207 = vmatprep.subr.mxu0 0.0
  %3208 = vmatpush1.msra.mxu0 %v1017
  %3209 = vmatprep.subr.mxu0 0.0
  %3210 = vmatpush1.msra.mxu0 %v1030
  %3211 = vmatprep.subr.mxu0 0.0
  %3212 = vmatpush1.msra.mxu0 %v1043
  %3213 = vmatprep.subr.mxu0 0.0
  %3214 = vmatpush1.msra.mxu0 %v1056
  %3215 = vmatprep.subr.mxu0 0.0
  %3216 = vmatpush1.msra.mxu0 %v1069
  %3217 = vmatprep.subr.mxu0 0.0
  %3218 = vmatpush1.msra.mxu0 %v1082
  %3219 = vmatprep.subr.mxu0 0.0
  %3220 = vmatpush1.msra.mxu0 %v1095
  %3221 = vmatprep.subr.mxu0 0.0
  %3222 = vmatpush1.msra.mxu0 %v1108
  %3223 = vmatprep.subr.mxu0 0.0
  %3224 = vmatpush1.msra.mxu0 %v1121
  %3225 = vmatprep.subr.mxu0 0.0
  %3226 = vmatpush1.msra.mxu0 %v1134
  %3227 = vmatprep.subr.mxu0 0.0
  %3228 = vmatpush1.msra.mxu0 %v1147
  %3229 = vmatprep.subr.mxu0 0.0
  %3230 = vmatpush1.msra.mxu0 %v1160
  %3231 = vmatprep.subr.mxu0 0.0
  %3232 = vmatpush1.msra.mxu0 %v1173
  %3233 = vmatprep.subr.mxu0 0.0
  %3234 = vmatpush1.msra.mxu0 %v1186
  %3235 = vmatprep.subr.mxu0 0.0
  %3236 = vmatpush1.msra.mxu0 %v1199
  %3237 = vmatprep.subr.mxu0 0.0
  %3238 = vmatpush1.msra.mxu0 %v1212
  %3239 = vmatprep.subr.mxu0 0.0
  %3240 = vmatpush1.msra.mxu0 %v1225
  %3241 = vmatprep.subr.mxu0 0.0
  %3242 = vmatpush1.msra.mxu0 %v1238
  %3243 = vmatprep.subr.mxu0 0.0
  %3244 = vmatpush1.msra.mxu0 %v1251
  %3245 = vmatprep.subr.mxu0 0.0
  %3246 = vmatpush1.msra.mxu0 %v1264
  %3247 = vmatprep.mubr.f32.mxu0 %v1325
  %3248 = vmatmul.mubr.f32.gmra.mrb[0].mxu0 %v1321
  %v3249 = vpop.f32.mrb[0].mxu0
  %v3250 = vadd.f32 %v3180, %v3249
  %v3251 = vpop.f32.mrb[0].mxu0
  %3252 = vdwg.mxu0
  %3253 = vmatprep.subr.mxu0 0.0
  %3254 = vmatpush1.msra.mxu0 %v1277
  %3255 = vmatprep.subr.mxu0 0.0
  %3256 = vmatpush1.msra.mxu0 %v1290
  %3257 = vmatprep.subr.mxu0 0.0
  %3258 = vmatpush1.msra.mxu0 0.0
  %3259 = vmatprep.subr.mxu0 0.0
  %3260 = vmatpush1.msra.mxu0 0.0
  %3261 = vmatprep.subr.mxu0 0.0
  %3262 = vmatpush1.msra.mxu0 0.0
  %3263 = vmatprep.subr.mxu0 0.0
  %3264 = vmatpush1.msra.mxu0 0.0
  %3265 = vmatprep.subr.mxu0 0.0
  %3266 = vmatpush1.msra.mxu0 0.0
  %3267 = vmatprep.subr.mxu0 0.0
  %3268 = vmatpush1.msra.mxu0 0.0
  %3269 = vmatprep.subr.mxu0 0.0
  %3270 = vmatpush1.msra.mxu0 0.0
  %3271 = vmatprep.subr.mxu0 0.0
  %3272 = vmatpush1.msra.mxu0 0.0
  %3273 = vmatprep.subr.mxu0 0.0
  %3274 = vmatpush1.msra.mxu0 0.0
  %3275 = vmatprep.subr.mxu0 0.0
  %3276 = vmatpush1.msra.mxu0 0.0
  %3277 = vmatprep.subr.mxu0 0.0
  %3278 = vmatpush1.msra.mxu0 0.0
  %3279 = vmatprep.subr.mxu0 0.0
  %3280 = vmatpush1.msra.mxu0 0.0
  %3281 = vmatprep.subr.mxu0 0.0
  %3282 = vmatpush1.msra.mxu0 0.0
  %3283 = vmatprep.subr.mxu0 0.0
  %3284 = vmatpush1.msra.mxu0 0.0
  %3285 = vmatprep.subr.mxu0 0.0
  %3286 = vmatpush1.msra.mxu0 0.0
  %3287 = vmatprep.subr.mxu0 0.0
  %3288 = vmatpush1.msra.mxu0 0.0
  %3289 = vmatprep.subr.mxu0 0.0
  %3290 = vmatpush1.msra.mxu0 0.0
  %3291 = vmatprep.subr.mxu0 0.0
  %3292 = vmatpush1.msra.mxu0 0.0
  %3293 = vmatprep.subr.mxu0 0.0
  %3294 = vmatpush1.msra.mxu0 0.0
  %3295 = vmatprep.subr.mxu0 0.0
  %3296 = vmatpush1.msra.mxu0 0.0
  %3297 = vmatprep.subr.mxu0 0.0
  %3298 = vmatpush1.msra.mxu0 0.0
  %3299 = vmatprep.subr.mxu0 0.0
  %3300 = vmatpush1.msra.mxu0 0.0
  %3301 = vmatprep.subr.mxu0 0.0
  %3302 = vmatpush1.msra.mxu0 0.0
  %3303 = vmatprep.subr.mxu0 0.0
  %3304 = vmatpush1.msra.mxu0 0.0
  %3305 = vmatprep.subr.mxu0 0.0
  %3306 = vmatpush1.msra.mxu0 0.0
  %3307 = vmatprep.subr.mxu0 0.0
  %3308 = vmatpush1.msra.mxu0 0.0
  %3309 = vmatprep.subr.mxu0 0.0
  %3310 = vmatpush1.msra.mxu0 0.0
  %3311 = vmatprep.subr.mxu0 0.0
  %3312 = vmatpush1.msra.mxu0 0.0
  %3313 = vmatprep.subr.mxu0 0.0
  %3314 = vmatpush1.msra.mxu0 0.0
  %3315 = vmatprep.subr.mxu0 0.0
  %3316 = vmatpush1.msra.mxu0 0.0
  %3317 = vmatprep.mubr.f32.mxu0 0.0
  %3318 = vmatmul.mubr.f32.gmra.mrb[0].mxu0 %v1337
  %v3319 = vpop.f32.mrb[0].mxu0
  %v3320 = vadd.f32 %v3250, %v3319
  %v3321 = vpop.f32.mrb[0].mxu0
  %3322 = vdwg.mxu0
  %v3336 = vcombine.low %v1619, %v1621
  %v3337 = vcombine.low %v1903, %v1905
  %v3338 = vcombine.low %v2187, %v2189
  %v3339 = vcombine.low %v2471, %v2473
  %v3341 = vunpack.c.l.s4 1966171168
  %v3342 = vunpack.c.0.s8 %v3341
  %v3343 = vlaneseq
  %v3344 = vshrl.u32 %v3343, 7
  %v3345 = vsub.s32 %v3342, %v3344
  %v3346 = vrot.slane %v3336, %v3345
  %v3348 = vunpack.c.l.s4 1966171168
  %v3349 = vunpack.c.0.s8 %v3348
  %v3350 = vlaneseq
  %v3351 = vshrl.u32 %v3350, 7
  %v3352 = vsub.s32 %v3349, %v3351
  %v3353 = vrot.slane %v3337, %v3352
  %v3355 = vunpack.c.l.s4 1966171168
  %v3356 = vunpack.c.0.s8 %v3355
  %v3357 = vlaneseq
  %v3358 = vshrl.u32 %v3357, 7
  %v3359 = vsub.s32 %v3356, %v3358
  %v3360 = vrot.slane %v3338, %v3359
  %v3362 = vunpack.c.l.s4 1966171168
  %v3363 = vunpack.c.0.s8 %v3362
  %v3364 = vlaneseq
  %v3365 = vshrl.u32 %v3364, 7
  %v3366 = vsub.s32 %v3363, %v3365
  %v3367 = vrot.slane %v3339, %v3366
  %v3368 = vcombine.low %v3346, %v3353
  %v3369 = vcombine.low %v3360, %v3367
  %v3371 = vunpack.c.l.s4 1966171168
  %v3372 = vunpack.c.0.s8 %v3371
  %v3373 = vlaneseq
  %v3374 = vshrl.u32 %v3373, 7
  %v3375 = vsub.s32 %v3372, %v3374
  %v3376 = vrot.slane %v3368, %v3375
  %v3378 = vunpack.c.l.s4 1966171168
  %v3379 = vunpack.c.0.s8 %v3378
  %v3380 = vlaneseq
  %v3381 = vshrl.u32 %v3380, 7
  %v3382 = vsub.s32 %v3379, %v3381
  %v3383 = vrot.slane %v3369, %v3382
  %v3384 = vcombine.low %v3376, %v3383
  %v3385 = vcombine.low %v2755, %v2757
  %v3386 = vcombine.low %v3039, %v3041
  %v3388 = vunpack.c.l.s4 1966171168
  %v3389 = vunpack.c.0.s8 %v3388
  %v3390 = vlaneseq
  %v3391 = vshrl.u32 %v3390, 7
  %v3392 = vsub.s32 %v3389, %v3391
  %v3393 = vrot.slane %v3385, %v3392
  %v3395 = vunpack.c.l.s4 1966171168
  %v3396 = vunpack.c.0.s8 %v3395
  %v3397 = vlaneseq
  %v3398 = vshrl.u32 %v3397, 7
  %v3399 = vsub.s32 %v3396, %v3398
  %v3400 = vrot.slane %v3386, %v3399
  %v3402 = vunpack.c.l.s4 1966171168
  %v3403 = vunpack.c.0.s8 %v3402
  %v3404 = vlaneseq
  %v3405 = vshrl.u32 %v3404, 7
  %v3406 = vsub.s32 %v3403, %v3405
  %v3407 = vrot.slane %v3320, %v3406
  %v3408 = vcombine.low %v3393, %v3400
  %v3410 = vunpack.c.l.s4 1966171168
  %v3411 = vunpack.c.0.s8 %v3410
  %v3412 = vlaneseq
  %v3413 = vshrl.u32 %v3412, 7
  %v3414 = vsub.s32 %v3411, %v3413
  %v3415 = vrot.slane %v3408, %v3414
  %v3417 = vunpack.c.l.s4 1966171168
  %v3418 = vunpack.c.0.s8 %v3417
  %v3419 = vlaneseq
  %v3420 = vshrl.u32 %v3419, 7
  %v3421 = vsub.s32 %v3418, %v3420
  %v3422 = vrot.slane %v3407, %v3421
  %v3423 = vcombine.low %v3415, %v3422
  %3426 = vst [vmem:[%s3] sm:$0xff] %v3384
  %v3427 = vlaneseq
  %vm3428 = vcmp.ge.s32.totalorder %v3427, 0
  %vm3429 = vcmp.lt.s32.totalorder %v3427, 640
  %vm3430 = vmand %vm3428, %vm3429
  %3431 = vst.msk [vmem:[%s3 + $0x8] sm:$0x1f] %vm3430, %v3423
  // Predicated region
  $region14: #{generator_forward.7} parent=0 // pred_check
    _
  $region15: #{generator_forward.7} parent=0 // pred_check_branch
    %3433 = sbr.rel (0) target = $region17
  $region16: #{generator_forward.7} parent=0 // pred_region
    _
  $region17: #{generator_forward.7} parent=0 // pred_fallthru
    _
  // Predicated region
  $region18: #{generator_forward.7} parent=0 // pred_check
    _
  $region19: #{generator_forward.7} parent=0 // pred_check_branch
    %3435 = sbr.rel (0) target = $region21
  $region20: #{generator_forward.7} parent=0 // pred_region
    _
  $region21: #{generator_forward.7} parent=0 // pred_fallthru
    _

</llo_original>
